<compile_context>
chip_gen: v7x
topology: tpu7x:2x2x1
jax: 0.10.0
libtpu: 0.0.40
codegen_flags: <defaults>
</compile_context>

<pallas_src>
import functools

import jax
import jax.numpy as jnp
from jax.experimental import pallas as pl
from jax.experimental.pallas import tpu as pltpu


_WPAD = 8   # sublane-aligned column offset of the interior inside the scratch


# ---------------------------------------------------------------------------
# Fused Bottleneck kernel: conv3x3+BN+SiLU -> conv3x3+BN+SiLU -> (+ residual)
# ---------------------------------------------------------------------------
def _bottleneck_kernel(x_ref, w1_ref, b1_ref, w2_ref, b2_ref, o_ref, h_ref,
                       *, H, W, C_in, C_hid, C_out, add):
    # x_ref : (H+2, W+2, C_in)          bf16  spatially pre-padded input image
    # w1_ref: (9*C_in, C_hid)           bf16  im2col-ordered taps, BN folded
    # b1_ref: (1, C_hid)                f32   folded BN bias
    # w2_ref: (9*C_hid, C_out)          bf16
    # b2_ref: (1, C_out)                f32
    # o_ref : (H, W, C_out)             f32
    # h_ref : (H+2, W+_WPAD+1, C_hid)   bf16  VMEM scratch, zero halo border

    def silu(v):                                  # SiLU in f32, divide on EUP
        return v * pl.reciprocal(1.0 + jnp.exp(-v), approx=True)

    # ---- conv1: one im2col matmul on the MXU (K = 9*C_in) ------------------
    win1 = jnp.concatenate(
        [x_ref[di:di + H, dj:dj + W, :] for di in range(3) for dj in range(3)],
        axis=-1)                                          # (H, W, 9*C_in) bf16
    acc1 = jnp.dot(win1.reshape(H * W, 9 * C_in), w1_ref[...],
                   preferred_element_type=jnp.float32)    # (H*W, C_hid) f32
    h = silu(acc1 + b1_ref[...])

    # ---- store bf16 intermediate; zero ONLY the 1-px halo border -----------
    zc = jnp.zeros((H + 2, 1, C_hid), h_ref.dtype)
    h_ref[:, _WPAD - 1:_WPAD, :] = zc                     # left halo column
    h_ref[:, _WPAD + W:_WPAD + W + 1, :] = zc             # right halo column
    zr = jnp.zeros((1, W + 2, C_hid), h_ref.dtype)
    h_ref[0:1, _WPAD - 1:_WPAD + W + 1, :] = zr           # top halo row
    h_ref[H + 1:H + 2, _WPAD - 1:_WPAD + W + 1, :] = zr   # bottom halo row
    h_ref[1:H + 1, _WPAD:_WPAD + W, :] = (
        h.reshape(H, W, C_hid).astype(h_ref.dtype))       # aligned interior

    # ---- conv2: one im2col matmul over the VMEM intermediate (K = 9*C_hid) -
    win2 = jnp.concatenate(
        [h_ref[di:di + H, _WPAD - 1 + dj:_WPAD - 1 + dj + W, :]
         for di in range(3) for dj in range(3)],
        axis=-1)                                          # (H, W, 9*C_hid) bf16
    acc2 = jnp.dot(win2.reshape(H * W, 9 * C_hid), w2_ref[...],
                   preferred_element_type=jnp.float32)    # (H*W, C_out) f32
    y = silu(acc2 + b2_ref[...]).reshape(H, W, C_out)

    if add:                                    # shortcut and C_in == C_out
        y = y + x_ref[1:H + 1, 1:W + 1, :].astype(jnp.float32)

    o_ref[...] = y.astype(o_ref.dtype)


# ---------------------------------------------------------------------------
# Wrapper: NCHW public interface, NHWC inside, one pallas_call per Bottleneck
# ---------------------------------------------------------------------------
def bottleneck_forward(params, x_nchw, *, shortcut=True):
    x = jnp.transpose(x_nchw, (0, 2, 3, 1))                       # NHWC
    N, H, W, C_in = x.shape
    w1, b1, w2, b2 = params["w1"], params["b1"], params["w2"], params["b2"]
    C_hid = w1.shape[-1]
    C_out = w2.shape[-1]
    add = bool(shortcut) and (C_in == C_out)

    # bf16 activations on the HBM path; autopad(3) = 1
    xp = jnp.pad(x.astype(jnp.bfloat16), ((0, 0), (1, 1), (1, 1), (0, 0)))
    Hp, Wp = H + 2, W + 2

    flops = 2 * N * H * W * 9 * (C_in * C_hid + C_hid * C_out)
    bytes_accessed = (xp.size * 2 + w1.size * 2 + w2.size * 2
                      + b1.size * 4 + b2.size * 4 + N * H * W * C_out * 4)

    out = pl.pallas_call(
        functools.partial(_bottleneck_kernel, H=H, W=W, C_in=C_in,
                          C_hid=C_hid, C_out=C_out, add=add),
        out_shape=jax.ShapeDtypeStruct((N, H, W, C_out), jnp.float32),
        grid_spec=pltpu.PrefetchScalarGridSpec(
            num_scalar_prefetch=0,
            grid=(N,),                       # >=2 parallel steps -> 2 v7x TCs
            in_specs=[
                pl.BlockSpec((None, Hp, Wp, C_in), lambda n: (n, 0, 0, 0)),
                pl.BlockSpec((9 * C_in, C_hid), lambda n: (0, 0)),
                pl.BlockSpec((1, C_hid), lambda n: (0, 0)),
                pl.BlockSpec((9 * C_hid, C_out), lambda n: (0, 0)),
                pl.BlockSpec((1, C_out), lambda n: (0, 0)),
            ],
            out_specs=pl.BlockSpec((None, H, W, C_out), lambda n: (n, 0, 0, 0)),
            scratch_shapes=[
                pltpu.VMEM((H + 2, W + _WPAD + 1, C_hid), jnp.bfloat16)],
        ),
        compiler_params=pltpu.CompilerParams(
            dimension_semantics=("parallel",),
            vmem_limit_bytes=32 * 1024 * 1024),
        cost_estimate=pl.CostEstimate(
            flops=flops,
            transcendentals=N * H * W * (C_hid + C_out),
            bytes_accessed=bytes_accessed),
    )(xp, w1, b1, w2, b2)
    return jnp.transpose(out, (0, 3, 1, 2))                        # back NCHW


# ---------------------------------------------------------------------------
# Parameter preparation: fold eval-mode BN into bf16 weights + f32 bias and
# lay the 3x3 taps out in im2col order: (kh, kw, C_in) flattened along K.
# ---------------------------------------------------------------------------
def prepare_bottleneck_params(raw):
    def fold(w, gamma, beta, mean, var):
        scale = gamma / jnp.sqrt(var + 1e-5)
        w_folded = (w * scale[None, None, None, :]).astype(jnp.bfloat16)
        bias = (beta - mean * scale).astype(jnp.float32)
        kh, kw, ci, co = w.shape
        return w_folded.reshape(kh * kw * ci, co), bias.reshape(1, co)

    w1, b1 = fold(raw["w1"], raw["g1"], raw["b1"], raw["m1"], raw["v1"])
    w2, b2 = fold(raw["w2"], raw["g2"], raw["b2"], raw["m2"], raw["v2"])
    return {"w1": w1, "b1": b1, "w2": w2, "b2": b2}


# ---------------------------------------------------------------------------
# Pure-JAX reference (f32, unfolded BN) for a correctness check
# ---------------------------------------------------------------------------
def _reference_bottleneck(x_nchw, raw, shortcut=True):
    x = jnp.transpose(x_nchw, (0, 2, 3, 1))

    def conv_bn_silu(v, w, g, b, m, var):
        y = jax.lax.conv_general_dilated(
            v, w, window_strides=(1, 1), padding=((1, 1), (1, 1)),
            dimension_numbers=("NHWC", "HWIO", "NHWC"))
        y = (y - m) / jnp.sqrt(var + 1e-5) * g + b
        return y * jax.nn.sigmoid(y)

    h = conv_bn_silu(x, raw["w1"], raw["g1"], raw["b1"], raw["m1"], raw["v1"])
    y = conv_bn_silu(h, raw["w2"], raw["g2"], raw["b2"], raw["m2"], raw["v2"])
    if shortcut and x.shape[-1] == y.shape[-1]:
        y = y + x
    return jnp.transpose(y, (0, 3, 1, 2))


# ---------------------------------------------------------------------------
if __name__ == "__main__":
    N, C, H, W = 2, 128, 16, 16          # Bottleneck(c, c) with e=0.5
    C_hid = int(C * 0.5)

    key = jax.random.PRNGKey(0)
    ks = jax.random.split(key, 11)
    x = jax.random.normal(ks[0], (N, C, H, W), jnp.float32)
    raw = {
        "w1": 0.05 * jax.random.normal(ks[1], (3, 3, C, C_hid), jnp.float32),
        "g1": 1.0 + 0.1 * jax.random.normal(ks[2], (C_hid,), jnp.float32),
        "b1": 0.1 * jax.random.normal(ks[3], (C_hid,), jnp.float32),
        "m1": 0.1 * jax.random.normal(ks[4], (C_hid,), jnp.float32),
        "v1": 0.5 + jax.random.uniform(ks[5], (C_hid,), jnp.float32),
        "w2": 0.05 * jax.random.normal(ks[6], (3, 3, C_hid, C), jnp.float32),
        "g2": 1.0 + 0.1 * jax.random.normal(ks[7], (C,), jnp.float32),
        "b2": 0.1 * jax.random.normal(ks[8], (C,), jnp.float32),
        "m2": 0.1 * jax.random.normal(ks[9], (C,), jnp.float32),
        "v2": 0.5 + jax.random.uniform(ks[10], (C,), jnp.float32),
    }
    params = prepare_bottleneck_params(raw)

    fwd = jax.jit(functools.partial(bottleneck_forward, shortcut=True))
    out = jax.block_until_ready(fwd(params, x))

    assert out.shape == (N, C, H, W), out.shape
    assert bool(jnp.all(jnp.isfinite(out)))

    ref = _reference_bottleneck(x, raw, shortcut=True)
    max_ref = float(jnp.max(jnp.abs(ref)))
    err = float(jnp.max(jnp.abs(out - ref)))
    assert err <= 5e-2 * max(1.0, max_ref), f"max abs err {err} (|ref|max {max_ref})"

    print("KERNEL_OK")
</pallas_src>

<mosaic_0001>
module attributes {stable_mosaic.version = 11 : i64} {
  func.func @_bottleneck_kernel(%arg0: i32, %arg1: memref<1x18x18x128xbf16, #tpu.memory_space<vmem>>, %arg2: memref<1152x64xbf16, #tpu.memory_space<vmem>>, %arg3: memref<1x64xf32, #tpu.memory_space<vmem>>, %arg4: memref<576x128xbf16, #tpu.memory_space<vmem>>, %arg5: memref<1x128xf32, #tpu.memory_space<vmem>>, %arg6: memref<1x16x16x128xf32, #tpu.memory_space<vmem>>, %arg7: memref<18x25x64xbf16, #tpu.memory_space<vmem>>) attributes {dimension_semantics = [#tpu.dimension_semantics<parallel>], iteration_bounds = array<i64: 2>, scalar_prefetch = 0 : i64, scratch_operands = 1 : i64, tpu.core_type = #tpu.core_type<tc>, window_params = [{transform_indices = @transform_0, window_bounds = array<i64: 1, 18, 18, 128>}, {pipeline_mode = #tpu.pipeline_mode<synchronous>, transform_indices = @transform_1, window_bounds = array<i64: 1152, 64>}, {pipeline_mode = #tpu.pipeline_mode<synchronous>, transform_indices = @transform_2, window_bounds = array<i64: 1, 64>}, {pipeline_mode = #tpu.pipeline_mode<synchronous>, transform_indices = @transform_3, window_bounds = array<i64: 576, 128>}, {pipeline_mode = #tpu.pipeline_mode<synchronous>, transform_indices = @transform_4, window_bounds = array<i64: 1, 128>}, {transform_indices = @transform_5, window_bounds = array<i64: 1, 16, 16, 128>}]} {
    %c0 = arith.constant 0 : index
    %c0_0 = arith.constant 0 : index
    %c0_1 = arith.constant 0 : index
    %c0_2 = arith.constant 0 : index
    %0 = vector.load %arg1[%c0, %c0_0, %c0_1, %c0_2] : memref<1x18x18x128xbf16, #tpu.memory_space<vmem>>, vector<1x16x16x128xbf16>
    %1 = vector.shape_cast %0 : vector<1x16x16x128xbf16> to vector<16x16x128xbf16>
    %c0_3 = arith.constant 0 : index
    %c0_4 = arith.constant 0 : index
    %c1 = arith.constant 1 : index
    %c0_5 = arith.constant 0 : index
    %2 = vector.load %arg1[%c0_3, %c0_4, %c1, %c0_5] : memref<1x18x18x128xbf16, #tpu.memory_space<vmem>>, vector<1x16x16x128xbf16>
    %3 = vector.shape_cast %2 : vector<1x16x16x128xbf16> to vector<16x16x128xbf16>
    %c0_6 = arith.constant 0 : index
    %c0_7 = arith.constant 0 : index
    %c2 = arith.constant 2 : index
    %c0_8 = arith.constant 0 : index
    %4 = vector.load %arg1[%c0_6, %c0_7, %c2, %c0_8] : memref<1x18x18x128xbf16, #tpu.memory_space<vmem>>, vector<1x16x16x128xbf16>
    %5 = vector.shape_cast %4 : vector<1x16x16x128xbf16> to vector<16x16x128xbf16>
    %c0_9 = arith.constant 0 : index
    %c1_10 = arith.constant 1 : index
    %c0_11 = arith.constant 0 : index
    %c0_12 = arith.constant 0 : index
    %6 = vector.load %arg1[%c0_9, %c1_10, %c0_11, %c0_12] : memref<1x18x18x128xbf16, #tpu.memory_space<vmem>>, vector<1x16x16x128xbf16>
    %7 = vector.shape_cast %6 : vector<1x16x16x128xbf16> to vector<16x16x128xbf16>
    %c0_13 = arith.constant 0 : index
    %c1_14 = arith.constant 1 : index
    %c1_15 = arith.constant 1 : index
    %c0_16 = arith.constant 0 : index
    %8 = vector.load %arg1[%c0_13, %c1_14, %c1_15, %c0_16] : memref<1x18x18x128xbf16, #tpu.memory_space<vmem>>, vector<1x16x16x128xbf16>
    %9 = vector.shape_cast %8 : vector<1x16x16x128xbf16> to vector<16x16x128xbf16>
    %c0_17 = arith.constant 0 : index
    %c1_18 = arith.constant 1 : index
    %c2_19 = arith.constant 2 : index
    %c0_20 = arith.constant 0 : index
    %10 = vector.load %arg1[%c0_17, %c1_18, %c2_19, %c0_20] : memref<1x18x18x128xbf16, #tpu.memory_space<vmem>>, vector<1x16x16x128xbf16>
    %11 = vector.shape_cast %10 : vector<1x16x16x128xbf16> to vector<16x16x128xbf16>
    %c0_21 = arith.constant 0 : index
    %c2_22 = arith.constant 2 : index
    %c0_23 = arith.constant 0 : index
    %c0_24 = arith.constant 0 : index
    %12 = vector.load %arg1[%c0_21, %c2_22, %c0_23, %c0_24] : memref<1x18x18x128xbf16, #tpu.memory_space<vmem>>, vector<1x16x16x128xbf16>
    %13 = vector.shape_cast %12 : vector<1x16x16x128xbf16> to vector<16x16x128xbf16>
    %c0_25 = arith.constant 0 : index
    %c2_26 = arith.constant 2 : index
    %c1_27 = arith.constant 1 : index
    %c0_28 = arith.constant 0 : index
    %14 = vector.load %arg1[%c0_25, %c2_26, %c1_27, %c0_28] : memref<1x18x18x128xbf16, #tpu.memory_space<vmem>>, vector<1x16x16x128xbf16>
    %15 = vector.shape_cast %14 : vector<1x16x16x128xbf16> to vector<16x16x128xbf16>
    %c0_29 = arith.constant 0 : index
    %c2_30 = arith.constant 2 : index
    %c2_31 = arith.constant 2 : index
    %c0_32 = arith.constant 0 : index
    %16 = vector.load %arg1[%c0_29, %c2_30, %c2_31, %c0_32] : memref<1x18x18x128xbf16, #tpu.memory_space<vmem>>, vector<1x16x16x128xbf16>
    %17 = vector.shape_cast %16 : vector<1x16x16x128xbf16> to vector<16x16x128xbf16>
    %18 = tpu.concatenate %1, %3, %5, %7, %9, %11, %13, %15, %17 in 2 : vector<16x16x128xbf16>, vector<16x16x128xbf16>, vector<16x16x128xbf16>, vector<16x16x128xbf16>, vector<16x16x128xbf16>, vector<16x16x128xbf16>, vector<16x16x128xbf16>, vector<16x16x128xbf16>, vector<16x16x128xbf16> -> vector<16x16x1152xbf16>
    %19 = vector.shape_cast %18 : vector<16x16x1152xbf16> to vector<256x1152xbf16>
    %c0_33 = arith.constant 0 : index
    %c0_34 = arith.constant 0 : index
    %20 = vector.load %arg2[%c0_33, %c0_34] : memref<1152x64xbf16, #tpu.memory_space<vmem>>, vector<1152x64xbf16>
    %cst = arith.constant dense<0.000000e+00> : vector<256x64xf32>
    %21 = tpu.matmul %19, %20, %cst {dimension_numbers = #tpu.dot_dimension_numbers<[1], [0], [0], [1], [0, 0, 1, 1], [], []>} : vector<256x1152xbf16>, vector<1152x64xbf16>, vector<256x64xf32> -> vector<256x64xf32>
    %c0_35 = arith.constant 0 : index
    %c0_36 = arith.constant 0 : index
    %22 = vector.load %arg3[%c0_35, %c0_36] : memref<1x64xf32, #tpu.memory_space<vmem>>, vector<1x64xf32>
    %23 = vector.broadcast %22 : vector<1x64xf32> to vector<256x64xf32>
    %24 = arith.addf %21, %23 : vector<256x64xf32>
    %cst_37 = arith.constant 0.000000e+00 : f32
    %25 = vector.broadcast %cst_37 : f32 to vector<256x64xf32>
    %26 = arith.subf %25, %24 : vector<256x64xf32>
    %27 = math.exp %26 : vector<256x64xf32>
    %cst_38 = arith.constant 1.000000e+00 : f32
    %28 = vector.broadcast %cst_38 : f32 to vector<256x64xf32>
    %29 = arith.addf %28, %27 : vector<256x64xf32>
    %30 = tpu.reciprocal %29 {approx = true} : vector<256x64xf32> -> vector<256x64xf32>
    %31 = arith.mulf %24, %30 : vector<256x64xf32>
    %cst_39 = arith.constant 0.000000e+00 : bf16
    %32 = vector.broadcast %cst_39 : bf16 to vector<18x1x64xbf16>
    %c0_40 = arith.constant 0 : index
    %c7 = arith.constant 7 : index
    %c0_41 = arith.constant 0 : index
    %33 = vector.load %arg7[%c0_40, %c7, %c0_41] : memref<18x25x64xbf16, #tpu.memory_space<vmem>>, vector<18x1x64xbf16>
    tpu.vector_store %arg7[%c0_40, %c7, %c0_41], %32 {strides = array<i32>} : memref<18x25x64xbf16, #tpu.memory_space<vmem>>, vector<18x1x64xbf16>,
    %c0_42 = arith.constant 0 : index
    %c24 = arith.constant 24 : index
    %c0_43 = arith.constant 0 : index
    %34 = vector.load %arg7[%c0_42, %c24, %c0_43] : memref<18x25x64xbf16, #tpu.memory_space<vmem>>, vector<18x1x64xbf16>
    tpu.vector_store %arg7[%c0_42, %c24, %c0_43], %32 {strides = array<i32>} : memref<18x25x64xbf16, #tpu.memory_space<vmem>>, vector<18x1x64xbf16>,
    %cst_44 = arith.constant 0.000000e+00 : bf16
    %35 = vector.broadcast %cst_44 : bf16 to vector<1x18x64xbf16>
    %c0_45 = arith.constant 0 : index
    %c7_46 = arith.constant 7 : index
    %c0_47 = arith.constant 0 : index
    %36 = vector.load %arg7[%c0_45, %c7_46, %c0_47] : memref<18x25x64xbf16, #tpu.memory_space<vmem>>, vector<1x18x64xbf16>
    tpu.vector_store %arg7[%c0_45, %c7_46, %c0_47], %35 {strides = array<i32>} : memref<18x25x64xbf16, #tpu.memory_space<vmem>>, vector<1x18x64xbf16>,
    %c17 = arith.constant 17 : index
    %c7_48 = arith.constant 7 : index
    %c0_49 = arith.constant 0 : index
    %37 = vector.load %arg7[%c17, %c7_48, %c0_49] : memref<18x25x64xbf16, #tpu.memory_space<vmem>>, vector<1x18x64xbf16>
    tpu.vector_store %arg7[%c17, %c7_48, %c0_49], %35 {strides = array<i32>} : memref<18x25x64xbf16, #tpu.memory_space<vmem>>, vector<1x18x64xbf16>,
    %38 = vector.shape_cast %31 : vector<256x64xf32> to vector<16x16x64xf32>
    %39 = arith.truncf %38 : vector<16x16x64xf32> to vector<16x16x64xbf16>
    %c1_50 = arith.constant 1 : index
    %c8 = arith.constant 8 : index
    %c0_51 = arith.constant 0 : index
    %40 = vector.load %arg7[%c1_50, %c8, %c0_51] : memref<18x25x64xbf16, #tpu.memory_space<vmem>>, vector<16x16x64xbf16>
    tpu.vector_store %arg7[%c1_50, %c8, %c0_51], %39 {strides = array<i32>} : memref<18x25x64xbf16, #tpu.memory_space<vmem>>, vector<16x16x64xbf16>,
    %c0_52 = arith.constant 0 : index
    %c7_53 = arith.constant 7 : index
    %c0_54 = arith.constant 0 : index
    %41 = vector.load %arg7[%c0_52, %c7_53, %c0_54] : memref<18x25x64xbf16, #tpu.memory_space<vmem>>, vector<16x16x64xbf16>
    %c0_55 = arith.constant 0 : index
    %c8_56 = arith.constant 8 : index
    %c0_57 = arith.constant 0 : index
    %42 = vector.load %arg7[%c0_55, %c8_56, %c0_57] : memref<18x25x64xbf16, #tpu.memory_space<vmem>>, vector<16x16x64xbf16>
    %c0_58 = arith.constant 0 : index
    %c9 = arith.constant 9 : index
    %c0_59 = arith.constant 0 : index
    %43 = vector.load %arg7[%c0_58, %c9, %c0_59] : memref<18x25x64xbf16, #tpu.memory_space<vmem>>, vector<16x16x64xbf16>
    %c1_60 = arith.constant 1 : index
    %c7_61 = arith.constant 7 : index
    %c0_62 = arith.constant 0 : index
    %44 = vector.load %arg7[%c1_60, %c7_61, %c0_62] : memref<18x25x64xbf16, #tpu.memory_space<vmem>>, vector<16x16x64xbf16>
    %c1_63 = arith.constant 1 : index
    %c8_64 = arith.constant 8 : index
    %c0_65 = arith.constant 0 : index
    %45 = vector.load %arg7[%c1_63, %c8_64, %c0_65] : memref<18x25x64xbf16, #tpu.memory_space<vmem>>, vector<16x16x64xbf16>
    %c1_66 = arith.constant 1 : index
    %c9_67 = arith.constant 9 : index
    %c0_68 = arith.constant 0 : index
    %46 = vector.load %arg7[%c1_66, %c9_67, %c0_68] : memref<18x25x64xbf16, #tpu.memory_space<vmem>>, vector<16x16x64xbf16>
    %c2_69 = arith.constant 2 : index
    %c7_70 = arith.constant 7 : index
    %c0_71 = arith.constant 0 : index
    %47 = vector.load %arg7[%c2_69, %c7_70, %c0_71] : memref<18x25x64xbf16, #tpu.memory_space<vmem>>, vector<16x16x64xbf16>
    %c2_72 = arith.constant 2 : index
    %c8_73 = arith.constant 8 : index
    %c0_74 = arith.constant 0 : index
    %48 = vector.load %arg7[%c2_72, %c8_73, %c0_74] : memref<18x25x64xbf16, #tpu.memory_space<vmem>>, vector<16x16x64xbf16>
    %c2_75 = arith.constant 2 : index
    %c9_76 = arith.constant 9 : index
    %c0_77 = arith.constant 0 : index
    %49 = vector.load %arg7[%c2_75, %c9_76, %c0_77] : memref<18x25x64xbf16, #tpu.memory_space<vmem>>, vector<16x16x64xbf16>
    %50 = tpu.concatenate %41, %42, %43, %44, %45, %46, %47, %48, %49 in 2 : vector<16x16x64xbf16>, vector<16x16x64xbf16>, vector<16x16x64xbf16>, vector<16x16x64xbf16>, vector<16x16x64xbf16>, vector<16x16x64xbf16>, vector<16x16x64xbf16>, vector<16x16x64xbf16>, vector<16x16x64xbf16> -> vector<16x16x576xbf16>
    %51 = vector.shape_cast %50 : vector<16x16x576xbf16> to vector<256x576xbf16>
    %c0_78 = arith.constant 0 : index
    %c0_79 = arith.constant 0 : index
    %52 = vector.load %arg4[%c0_78, %c0_79] : memref<576x128xbf16, #tpu.memory_space<vmem>>, vector<576x128xbf16>
    %cst_80 = arith.constant dense<0.000000e+00> : vector<256x128xf32>
    %53 = tpu.matmul %51, %52, %cst_80 {dimension_numbers = #tpu.dot_dimension_numbers<[1], [0], [0], [1], [0, 0, 1, 1], [], []>} : vector<256x576xbf16>, vector<576x128xbf16>, vector<256x128xf32> -> vector<256x128xf32>
    %c0_81 = arith.constant 0 : index
    %c0_82 = arith.constant 0 : index
    %54 = vector.load %arg5[%c0_81, %c0_82] : memref<1x128xf32, #tpu.memory_space<vmem>>, vector<1x128xf32>
    %55 = vector.broadcast %54 : vector<1x128xf32> to vector<256x128xf32>
    %56 = arith.addf %53, %55 : vector<256x128xf32>
    %cst_83 = arith.constant 0.000000e+00 : f32
    %57 = vector.broadcast %cst_83 : f32 to vector<256x128xf32>
    %58 = arith.subf %57, %56 : vector<256x128xf32>
    %59 = math.exp %58 : vector<256x128xf32>
    %cst_84 = arith.constant 1.000000e+00 : f32
    %60 = vector.broadcast %cst_84 : f32 to vector<256x128xf32>
    %61 = arith.addf %60, %59 : vector<256x128xf32>
    %62 = tpu.reciprocal %61 {approx = true} : vector<256x128xf32> -> vector<256x128xf32>
    %63 = arith.mulf %56, %62 : vector<256x128xf32>
    %64 = vector.shape_cast %63 : vector<256x128xf32> to vector<16x16x128xf32>
    %c0_85 = arith.constant 0 : index
    %c1_86 = arith.constant 1 : index
    %c1_87 = arith.constant 1 : index
    %c0_88 = arith.constant 0 : index
    %65 = vector.load %arg1[%c0_85, %c1_86, %c1_87, %c0_88] : memref<1x18x18x128xbf16, #tpu.memory_space<vmem>>, vector<1x16x16x128xbf16>
    %66 = vector.shape_cast %65 : vector<1x16x16x128xbf16> to vector<16x16x128xbf16>
    %67 = arith.extf %66 : vector<16x16x128xbf16> to vector<16x16x128xf32>
    %68 = arith.addf %64, %67 : vector<16x16x128xf32>
    %c0_89 = arith.constant 0 : index
    %c0_90 = arith.constant 0 : index
    %c0_91 = arith.constant 0 : index
    %c0_92 = arith.constant 0 : index
    %69 = vector.load %arg6[%c0_89, %c0_90, %c0_91, %c0_92] : memref<1x16x16x128xf32, #tpu.memory_space<vmem>>, vector<1x16x16x128xf32>
    %70 = vector.shape_cast %69 : vector<1x16x16x128xf32> to vector<16x16x128xf32>
    %71 = vector.shape_cast %68 : vector<16x16x128xf32> to vector<1x16x16x128xf32>
    tpu.vector_store %arg6[%c0_89, %c0_90, %c0_91, %c0_92], %71 {strides = array<i32>} : memref<1x16x16x128xf32, #tpu.memory_space<vmem>>, vector<1x16x16x128xf32>,
    return
  }
  func.func @transform_0(%arg0: i32) -> (i32, i32, i32, i32) {
    %c0_i32 = arith.constant 0 : i32
    %c0_i32_0 = arith.constant 0 : i32
    %c0_i32_1 = arith.constant 0 : i32
    %c0_i32_2 = arith.constant 0 : i32
    return %arg0, %c0_i32, %c0_i32_0, %c0_i32_1 : i32, i32, i32, i32
  }
  func.func @transform_1(%arg0: i32) -> (i32, i32) {
    %c0_i32 = arith.constant 0 : i32
    %c0_i32_0 = arith.constant 0 : i32
    %c0_i32_1 = arith.constant 0 : i32
    return %c0_i32, %c0_i32_0 : i32, i32
  }
  func.func @transform_2(%arg0: i32) -> (i32, i32) {
    %c0_i32 = arith.constant 0 : i32
    %c0_i32_0 = arith.constant 0 : i32
    %c0_i32_1 = arith.constant 0 : i32
    return %c0_i32, %c0_i32_0 : i32, i32
  }
  func.func @transform_3(%arg0: i32) -> (i32, i32) {
    %c0_i32 = arith.constant 0 : i32
    %c0_i32_0 = arith.constant 0 : i32
    %c0_i32_1 = arith.constant 0 : i32
    return %c0_i32, %c0_i32_0 : i32, i32
  }
  func.func @transform_4(%arg0: i32) -> (i32, i32) {
    %c0_i32 = arith.constant 0 : i32
    %c0_i32_0 = arith.constant 0 : i32
    %c0_i32_1 = arith.constant 0 : i32
    return %c0_i32, %c0_i32_0 : i32, i32
  }
  func.func @transform_5(%arg0: i32) -> (i32, i32, i32, i32) {
    %c0_i32 = arith.constant 0 : i32
    %c0_i32_0 = arith.constant 0 : i32
    %c0_i32_1 = arith.constant 0 : i32
    %c0_i32_2 = arith.constant 0 : i32
    return %arg0, %c0_i32, %c0_i32_0, %c0_i32_1 : i32, i32, i32, i32
  }
}

</mosaic_0001>

<llo_original>
// kernel: bottleneck_forward.1
$region0: #{bottleneck_forward.1}
  #allocation0 [shape = 'u32[]', space=smem, size = 0x4, offset = 0x4, fixed_abs, tag = 'smem constant byte address 0x4 - core index']
  #allocation1 [shape = 'u32[144,128]{1,0:T(1,128)}', space=vmem, size = 0x12000, scoped, tag = 'internal scratch']
  #allocation2 [shape = 'bf16[18,25,64]{2,1,0:T(8,128)(2,1)}', space=vmem, size = 0x24000, scoped, tag = 'scratch operand']
  %s0 = inlined_call_operand.vmem [shape: bf16[2,18,18,128], index: 0, kind: input, shape index: {}]
  %s1 = inlined_call_operand.vmem [shape: bf16[1152,64], index: 1, kind: input, shape index: {}]
  %s2 = inlined_call_operand.vmem [shape: f32[1,64], index: 2, kind: input, shape index: {}]
  %s3 = inlined_call_operand.vmem [shape: bf16[576,128], index: 3, kind: input, shape index: {}]
  %s4 = inlined_call_operand.vmem [shape: f32[1,128], index: 4, kind: input, shape index: {}]
  %s5 = inlined_call_operand.hbm [shape: f32[2,16,16,128], index: 5, kind: output, shape index: {}]
  %s6 = sld [smem:[#allocation0]]
  $region53: #{bottleneck_forward.1} parent=0
    _
  %s8 = ssub.s32 1, %s6
  %s9 = scalar_select 0, %s8, %s6
  $region1: #{bottleneck_forward.1} parent=0
    #allocation3 [shape = 'u8[262144]{0}', space=vmem, size = 0x40000, scoped, tag = 'output window, operand 0']
    #allocation4 [shape = 's32[2]{0}', space=sflag, size = 0x8, scoped, tag = 'scoped memory for bottleneck_forward.1']
    %10 = vsyncpa [#allocation4], 0
    %s11 = scalar_lea.sflag [#allocation4], 1
    %12 = vsyncpa %s11, 0
    loop: start=0, step=1, limit=4
    $region2: #{bottleneck_forward.1} parent=1 // loop_pre_header
      _
    $region3: #{bottleneck_forward.1} parent=1 // loop_header
      %s14 = sphi 0, %s18
      %p15 = scmp.ge.s32.totalorder %s14, 4
      %s24 = sphi 0, %s26
      %s27 = sphi 0, %s24
      %s28 = sphi 0, %s27
      %s44 = sphi 0, %s28
      %s48 = sphi 0, %s48
      %s50 = sphi 0, %s48
      %s51 = sphi 0, %s50
      %s65 = sphi 0, %s51
      %s69 = sphi 0, %s69
      %s71 = sphi 0, %s69
      %s72 = sphi 0, %s71
      %s86 = sphi 0, %s72
      %s90 = sphi 0, %s90
      %s92 = sphi 0, %s90
      %s93 = sphi 0, %s92
      %s107 = sphi 0, %s93
      %s111 = sphi 0, %s111
      %s113 = sphi 0, %s111
      %s114 = sphi 0, %s113
      %s128 = sphi 0, %s114
      %s134 = sphi 0, %s136
      %s137 = sphi 0, %s134
      %s138 = sphi 0, %s137
      %s154 = sphi 0, %s138
    $region4: #{bottleneck_forward.1} parent=1 // loop_header_branch
      %17 = sbr.rel (%p15) target = $region8
    $region5: #{bottleneck_forward.1} parent=1 // loop_body
      %s19 = ssub.s32 %s14, 1
      %s20 = ssub.s32 %s14, 2
      %s21 = sadd.s32 %s14, 1
      %s22 = ssub.s32 %s14, %s21
      %p23 = scmp.eq.s32.totalorder %s22, 0
      %s25 = sadd.s32 %s24, 1
      %s26 = scalar_select %p23, %s24, %s25
      %p29 = pneg %p23
      %p30 = scmp.eq.s32.totalorder %s14, 1
      %p31 = por %p29, %p30
      %p32 = scmp.ne.s32.totalorder %s24, %s27
      %p33 = scmp.eq.s32.totalorder %s14, 0
      %p34 = por %p32, %p33
      %p35 = scmp.ne.s32.totalorder %s24, %s27
      %p36 = scmp.eq.s32.totalorder %s19, 1
      %p37 = por %p35, %p36
      %p38 = scmp.ne.s32.totalorder %s27, %s28
      %p39 = scmp.eq.s32.totalorder %s19, 0
      %p40 = por %p38, %p39
      %p41 = scmp.ne.s32.totalorder %s27, %s28
      %p42 = scmp.eq.s32.totalorder %s20, 1
      %p43 = por %p41, %p42
      %p45 = scmp.ne.s32.totalorder %s28, %s44
      %p46 = scmp.eq.s32.totalorder %s20, 0
      %p47 = por %p45, %p46
      %s49 = sadd.s32 %s48, 1
      %p52 = scmp.eq.s32.totalorder %s14, 1
      %p53 = scmp.ne.s32.totalorder %s48, %s50
      %p54 = scmp.eq.s32.totalorder %s14, 0
      %p55 = por %p53, %p54
      %p56 = scmp.ne.s32.totalorder %s48, %s50
      %p57 = scmp.eq.s32.totalorder %s19, 1
      %p58 = por %p56, %p57
      %p59 = scmp.ne.s32.totalorder %s50, %s51
      %p60 = scmp.eq.s32.totalorder %s19, 0
      %p61 = por %p59, %p60
      %p62 = scmp.ne.s32.totalorder %s50, %s51
      %p63 = scmp.eq.s32.totalorder %s20, 1
      %p64 = por %p62, %p63
      %p66 = scmp.ne.s32.totalorder %s51, %s65
      %p67 = scmp.eq.s32.totalorder %s20, 0
      %p68 = por %p66, %p67
      %s70 = sadd.s32 %s69, 1
      %p73 = scmp.eq.s32.totalorder %s14, 1
      %p74 = scmp.ne.s32.totalorder %s69, %s71
      %p75 = scmp.eq.s32.totalorder %s14, 0
      %p76 = por %p74, %p75
      %p77 = scmp.ne.s32.totalorder %s69, %s71
      %p78 = scmp.eq.s32.totalorder %s19, 1
      %p79 = por %p77, %p78
      %p80 = scmp.ne.s32.totalorder %s71, %s72
      %p81 = scmp.eq.s32.totalorder %s19, 0
      %p82 = por %p80, %p81
      %p83 = scmp.ne.s32.totalorder %s71, %s72
      %p84 = scmp.eq.s32.totalorder %s20, 1
      %p85 = por %p83, %p84
      %p87 = scmp.ne.s32.totalorder %s72, %s86
      %p88 = scmp.eq.s32.totalorder %s20, 0
      %p89 = por %p87, %p88
      %s91 = sadd.s32 %s90, 1
      %p94 = scmp.eq.s32.totalorder %s14, 1
      %p95 = scmp.ne.s32.totalorder %s90, %s92
      %p96 = scmp.eq.s32.totalorder %s14, 0
      %p97 = por %p95, %p96
      %p98 = scmp.ne.s32.totalorder %s90, %s92
      %p99 = scmp.eq.s32.totalorder %s19, 1
      %p100 = por %p98, %p99
      %p101 = scmp.ne.s32.totalorder %s92, %s93
      %p102 = scmp.eq.s32.totalorder %s19, 0
      %p103 = por %p101, %p102
      %p104 = scmp.ne.s32.totalorder %s92, %s93
      %p105 = scmp.eq.s32.totalorder %s20, 1
      %p106 = por %p104, %p105
      %p108 = scmp.ne.s32.totalorder %s93, %s107
      %p109 = scmp.eq.s32.totalorder %s20, 0
      %p110 = por %p108, %p109
      %s112 = sadd.s32 %s111, 1
      %p115 = scmp.eq.s32.totalorder %s14, 1
      %p116 = scmp.ne.s32.totalorder %s111, %s113
      %p117 = scmp.eq.s32.totalorder %s14, 0
      %p118 = por %p116, %p117
      %p119 = scmp.ne.s32.totalorder %s111, %s113
      %p120 = scmp.eq.s32.totalorder %s19, 1
      %p121 = por %p119, %p120
      %p122 = scmp.ne.s32.totalorder %s113, %s114
      %p123 = scmp.eq.s32.totalorder %s19, 0
      %p124 = por %p122, %p123
      %p125 = scmp.ne.s32.totalorder %s113, %s114
      %p126 = scmp.eq.s32.totalorder %s20, 1
      %p127 = por %p125, %p126
      %p129 = scmp.ne.s32.totalorder %s114, %s128
      %p130 = scmp.eq.s32.totalorder %s20, 0
      %p131 = por %p129, %p130
      %s132 = ssub.s32 %s14, %s21
      %p133 = scmp.eq.s32.totalorder %s132, 0
      %s135 = sadd.s32 %s134, 1
      %s136 = scalar_select %p133, %s134, %s135
      %p139 = pneg %p133
      %p140 = scmp.eq.s32.totalorder %s14, 1
      %p141 = por %p139, %p140
      %p142 = scmp.ne.s32.totalorder %s134, %s137
      %p143 = scmp.eq.s32.totalorder %s14, 0
      %p144 = por %p142, %p143
      %p145 = scmp.ne.s32.totalorder %s134, %s137
      %p146 = scmp.eq.s32.totalorder %s19, 1
      %p147 = por %p145, %p146
      %p148 = scmp.ne.s32.totalorder %s137, %s138
      %p149 = scmp.eq.s32.totalorder %s19, 0
      %p150 = por %p148, %p149
      %p151 = scmp.ne.s32.totalorder %s137, %s138
      %p152 = scmp.eq.s32.totalorder %s20, 1
      %p153 = por %p151, %p152
      %p155 = scmp.ne.s32.totalorder %s138, %s154
      %p156 = scmp.eq.s32.totalorder %s20, 0
      %p157 = por %p155, %p156
      %p158 = scmp.le.s32.totalorder 1, %s14
      %p159 = scmp.lt.s32.totalorder %s14, 3
      %p160 = pnand %p158, %p159
      %p161 = pneg %p160
      // Predicated region
      $region9: #{bottleneck_forward.1} parent=5 // pred_check
        _
      $region10: #{bottleneck_forward.1} parent=5 // pred_check_branch
        %163 = sbr.rel (%p160) target = $region12
      $region11: #{bottleneck_forward.1} parent=5 // pred_region
        %s164 = ssub.s32 %s14, 1
        // Predicated region
        $region13: #{bottleneck_forward.1} parent=11 // pred_check
          %p165 = pneg %p61
        $region14: #{bottleneck_forward.1} parent=11 // pred_check_branch
          %167 = sbr.rel (%p165) target = $region16
        $region15: #{bottleneck_forward.1} parent=11 // pred_region
          _
        $region16: #{bottleneck_forward.1} parent=11 // pred_fallthru
          _
        // Predicated region
        $region17: #{bottleneck_forward.1} parent=11 // pred_check
          %p168 = pneg %p82
        $region18: #{bottleneck_forward.1} parent=11 // pred_check_branch
          %170 = sbr.rel (%p168) target = $region20
        $region19: #{bottleneck_forward.1} parent=11 // pred_region
          _
        $region20: #{bottleneck_forward.1} parent=11 // pred_fallthru
          _
        // Predicated region
        $region21: #{bottleneck_forward.1} parent=11 // pred_check
          %p171 = pneg %p103
        $region22: #{bottleneck_forward.1} parent=11 // pred_check_branch
          %173 = sbr.rel (%p171) target = $region24
        $region23: #{bottleneck_forward.1} parent=11 // pred_region
          _
        $region24: #{bottleneck_forward.1} parent=11 // pred_fallthru
          _
        // Predicated region
        $region25: #{bottleneck_forward.1} parent=11 // pred_check
          %p174 = pneg %p124
        $region26: #{bottleneck_forward.1} parent=11 // pred_check_branch
          %176 = sbr.rel (%p174) target = $region28
        $region27: #{bottleneck_forward.1} parent=11 // pred_region
          _
        $region28: #{bottleneck_forward.1} parent=11 // pred_fallthru
          _
      $region12: #{bottleneck_forward.1} parent=5 // pred_fallthru
        _
      %p177 = scmp.lt.s32.totalorder %s14, 2
      // Predicated region
      $region29: #{bottleneck_forward.1} parent=5 // pred_check
        %p178 = pneg %p177
      $region30: #{bottleneck_forward.1} parent=5 // pred_check_branch
        %180 = sbr.rel (%p178) target = $region32
      $region31: #{bottleneck_forward.1} parent=5 // pred_region
        // Predicated region
        $region33: #{bottleneck_forward.1} parent=31 // pred_check
          %p181 = pneg %p34
        $region34: #{bottleneck_forward.1} parent=31 // pred_check_branch
          %183 = sbr.rel (%p181) target = $region36
        $region35: #{bottleneck_forward.1} parent=31 // pred_region
          %p184 = scmp.lt.s32.totalorder %s14, 1
          %s185 = scalar_select %p184, %s14, 1
          %s186 = smul.addr %s185, 54
          %s187 = smul.addr %s186, 4
          %s188 = scalar_lea.vmem %s0, %s187
        $region36: #{bottleneck_forward.1} parent=31 // pred_fallthru
          _
      $region32: #{bottleneck_forward.1} parent=5 // pred_fallthru
        _
      %p189 = scmp.le.s32.totalorder 1, %s14
      %p190 = scmp.lt.s32.totalorder %s14, 3
      %p191 = pnand %p189, %p190
      %p192 = pneg %p191
      // Predicated region
      $region37: #{bottleneck_forward.1} parent=5 // pred_check
        _
      $region38: #{bottleneck_forward.1} parent=5 // pred_check_branch
        %194 = sbr.rel (%p191) target = $region40
      $region39: #{bottleneck_forward.1} parent=5 // pred_region
        %s195 = ssub.s32 %s14, 1
        %p196 = scmp.lt.s32.totalorder %s19, 1
        %s197 = scalar_select %p196, %s19, 1
        %s198 = smul.addr %s197, 54
        %s199 = smul.addr %s198, 4
        %s200 = scalar_lea.vmem %s0, %s199
        %p201 = pneg %p40
        %p202 = pneg %p37
        %p203 = pneg %p61
        %p204 = pneg %p58
        %p205 = pneg %p82
        %p206 = pneg %p79
        %p207 = pneg %p103
        %p208 = pneg %p100
        %p209 = pneg %p124
        %p210 = pneg %p121
        %p211 = pneg %p150
        %p212 = pneg %p147
        %s213 = sand.u32 %s137, 1
        %s214 = scalar_lea.sflag [#allocation4], %s213
        %s215 = sand.u32 %s137, 1
        %s216 = smul.addr %s215, 256
        %s217 = scalar_lea.vmem [#allocation3], %s216
        %p218 = scmp.lt.s32.totalorder %s19, 1
        %s219 = scalar_select %p218, %s19, 1
        %s220 = smul.addr %s219, 54
        %s221 = smul.addr %s220, 4
        %s222 = scalar_lea.vmem %s0, %s221
        %v224 = vld [vmem:[%s222] sm:$0xf]
        %v225 = vld [vmem:[%s222 + $0x4] sm:$0xf]
        %v226 = vld [vmem:[%s222 + $0xc] sm:$0xf]
        %v227 = vld [vmem:[%s222 + $0x10] sm:$0xf]
        %v228 = vld [vmem:[%s222 + $0x18] sm:$0xf]
        %v229 = vld [vmem:[%s222 + $0x1c] sm:$0xf]
        %v230 = vld [vmem:[%s222 + $0x24] sm:$0xf]
        %v231 = vld [vmem:[%s222 + $0x28] sm:$0xf]
        %v232 = vld [vmem:[%s222 + $0x30] sm:$0xf]
        %v233 = vld [vmem:[%s222 + $0x34] sm:$0xf]
        %v234 = vld [vmem:[%s222 + $0x3c] sm:$0xf]
        %v235 = vld [vmem:[%s222 + $0x40] sm:$0xf]
        %v236 = vld [vmem:[%s222 + $0x48] sm:$0xf]
        %v237 = vld [vmem:[%s222 + $0x4c] sm:$0xf]
        %v238 = vld [vmem:[%s222 + $0x54] sm:$0xf]
        %v239 = vld [vmem:[%s222 + $0x58] sm:$0xf]
        %v240 = vld [vmem:[%s222 + $0x60] sm:$0xf]
        %v241 = vld [vmem:[%s222 + $0x64] sm:$0xf]
        %v242 = vld [vmem:[%s222 + $0x6c] sm:$0xf]
        %v243 = vld [vmem:[%s222 + $0x70] sm:$0xf]
        %v244 = vld [vmem:[%s222 + $0x78] sm:$0xf]
        %v245 = vld [vmem:[%s222 + $0x7c] sm:$0xf]
        %v246 = vld [vmem:[%s222 + $0x84] sm:$0xf]
        %v247 = vld [vmem:[%s222 + $0x88] sm:$0xf]
        %v248 = vld [vmem:[%s222 + $0x90] sm:$0xf]
        %v249 = vld [vmem:[%s222 + $0x94] sm:$0xf]
        %v250 = vld [vmem:[%s222 + $0x9c] sm:$0xf]
        %v251 = vld [vmem:[%s222 + $0xa0] sm:$0xf]
        %v252 = vld [vmem:[%s222 + $0xa8] sm:$0xf]
        %v253 = vld [vmem:[%s222 + $0xac] sm:$0xf]
        %v254 = vld [vmem:[%s222 + $0xb4] sm:$0xf]
        %v255 = vld [vmem:[%s222 + $0xb8] sm:$0xf]
        %v256 = vld [vmem:[%s222 + $0x8] sm:$0x1]
        %v257 = vld [vmem:[%s222 + $0x14] sm:$0x1]
        %v258 = vld [vmem:[%s222 + $0x20] sm:$0x1]
        %v259 = vld [vmem:[%s222 + $0x2c] sm:$0x1]
        %v260 = vld [vmem:[%s222 + $0x38] sm:$0x1]
        %v261 = vld [vmem:[%s222 + $0x44] sm:$0x1]
        %v262 = vld [vmem:[%s222 + $0x50] sm:$0x1]
        %v263 = vld [vmem:[%s222 + $0x5c] sm:$0x1]
        %v264 = vld [vmem:[%s222 + $0x68] sm:$0x1]
        %v265 = vld [vmem:[%s222 + $0x74] sm:$0x1]
        %v266 = vld [vmem:[%s222 + $0x80] sm:$0x1]
        %v267 = vld [vmem:[%s222 + $0x8c] sm:$0x1]
        %v268 = vld [vmem:[%s222 + $0x98] sm:$0x1]
        %v269 = vld [vmem:[%s222 + $0xa4] sm:$0x1]
        %v270 = vld [vmem:[%s222 + $0xb0] sm:$0x1]
        %v271 = vld [vmem:[%s222 + $0xbc] sm:$0x1]
        %v272 = vld [vmem:[%s222] sm:$0xe]
        %v273 = vld [vmem:[%s222 + $0xc] sm:$0xe]
        %v274 = vld [vmem:[%s222 + $0x18] sm:$0xe]
        %v275 = vld [vmem:[%s222 + $0x24] sm:$0xe]
        %v276 = vld [vmem:[%s222 + $0x30] sm:$0xe]
        %v277 = vld [vmem:[%s222 + $0x3c] sm:$0xe]
        %v278 = vld [vmem:[%s222 + $0x48] sm:$0xe]
        %v279 = vld [vmem:[%s222 + $0x54] sm:$0xe]
        %v280 = vld [vmem:[%s222 + $0x60] sm:$0xe]
        %v281 = vld [vmem:[%s222 + $0x6c] sm:$0xe]
        %v282 = vld [vmem:[%s222 + $0x78] sm:$0xe]
        %v283 = vld [vmem:[%s222 + $0x84] sm:$0xe]
        %v284 = vld [vmem:[%s222 + $0x90] sm:$0xe]
        %v285 = vld [vmem:[%s222 + $0x9c] sm:$0xe]
        %v286 = vld [vmem:[%s222 + $0xa8] sm:$0xe]
        %v287 = vld [vmem:[%s222 + $0xb4] sm:$0xe]
        %s288 = scalar_lea.vmem %s222, 12
        %v289 = vld [vmem:[%s288] sm:$0xf]
        %v290 = vld [vmem:[%s288 + $0x4] sm:$0xf]
        %v291 = vld [vmem:[%s288 + $0xc] sm:$0xf]
        %v292 = vld [vmem:[%s288 + $0x10] sm:$0xf]
        %v293 = vld [vmem:[%s288 + $0x18] sm:$0xf]
        %v294 = vld [vmem:[%s288 + $0x1c] sm:$0xf]
        %v295 = vld [vmem:[%s288 + $0x24] sm:$0xf]
        %v296 = vld [vmem:[%s288 + $0x28] sm:$0xf]
        %v297 = vld [vmem:[%s288 + $0x30] sm:$0xf]
        %v298 = vld [vmem:[%s288 + $0x34] sm:$0xf]
        %v299 = vld [vmem:[%s288 + $0x3c] sm:$0xf]
        %v300 = vld [vmem:[%s288 + $0x40] sm:$0xf]
        %v301 = vld [vmem:[%s288 + $0x48] sm:$0xf]
        %v302 = vld [vmem:[%s288 + $0x4c] sm:$0xf]
        %v303 = vld [vmem:[%s288 + $0x54] sm:$0xf]
        %v304 = vld [vmem:[%s288 + $0x58] sm:$0xf]
        %v305 = vld [vmem:[%s288 + $0x60] sm:$0xf]
        %v306 = vld [vmem:[%s288 + $0x64] sm:$0xf]
        %v307 = vld [vmem:[%s288 + $0x6c] sm:$0xf]
        %v308 = vld [vmem:[%s288 + $0x70] sm:$0xf]
        %v309 = vld [vmem:[%s288 + $0x78] sm:$0xf]
        %v310 = vld [vmem:[%s288 + $0x7c] sm:$0xf]
        %v311 = vld [vmem:[%s288 + $0x84] sm:$0xf]
        %v312 = vld [vmem:[%s288 + $0x88] sm:$0xf]
        %v313 = vld [vmem:[%s288 + $0x90] sm:$0xf]
        %v314 = vld [vmem:[%s288 + $0x94] sm:$0xf]
        %v315 = vld [vmem:[%s288 + $0x9c] sm:$0xf]
        %v316 = vld [vmem:[%s288 + $0xa0] sm:$0xf]
        %v317 = vld [vmem:[%s288 + $0xa8] sm:$0xf]
        %v318 = vld [vmem:[%s288 + $0xac] sm:$0xf]
        %v319 = vld [vmem:[%s288 + $0xb4] sm:$0xf]
        %v320 = vld [vmem:[%s288 + $0xb8] sm:$0xf]
        %v321 = vld [vmem:[%s288 + $0x8] sm:$0x1]
        %v322 = vld [vmem:[%s288 + $0x14] sm:$0x1]
        %v323 = vld [vmem:[%s288 + $0x20] sm:$0x1]
        %v324 = vld [vmem:[%s288 + $0x2c] sm:$0x1]
        %v325 = vld [vmem:[%s288 + $0x38] sm:$0x1]
        %v326 = vld [vmem:[%s288 + $0x44] sm:$0x1]
        %v327 = vld [vmem:[%s288 + $0x50] sm:$0x1]
        %v328 = vld [vmem:[%s288 + $0x5c] sm:$0x1]
        %v329 = vld [vmem:[%s288 + $0x68] sm:$0x1]
        %v330 = vld [vmem:[%s288 + $0x74] sm:$0x1]
        %v331 = vld [vmem:[%s288 + $0x80] sm:$0x1]
        %v332 = vld [vmem:[%s288 + $0x8c] sm:$0x1]
        %v333 = vld [vmem:[%s288 + $0x98] sm:$0x1]
        %v334 = vld [vmem:[%s288 + $0xa4] sm:$0x1]
        %v335 = vld [vmem:[%s288 + $0xb0] sm:$0x1]
        %v336 = vld [vmem:[%s288 + $0xbc] sm:$0x1]
        %v337 = vld [vmem:[%s288] sm:$0xe]
        %v338 = vld [vmem:[%s288 + $0xc] sm:$0xe]
        %v339 = vld [vmem:[%s288 + $0x18] sm:$0xe]
        %v340 = vld [vmem:[%s288 + $0x24] sm:$0xe]
        %v341 = vld [vmem:[%s288 + $0x30] sm:$0xe]
        %v342 = vld [vmem:[%s288 + $0x3c] sm:$0xe]
        %v343 = vld [vmem:[%s288 + $0x48] sm:$0xe]
        %v344 = vld [vmem:[%s288 + $0x54] sm:$0xe]
        %v345 = vld [vmem:[%s288 + $0x60] sm:$0xe]
        %v346 = vld [vmem:[%s288 + $0x6c] sm:$0xe]
        %v347 = vld [vmem:[%s288 + $0x78] sm:$0xe]
        %v348 = vld [vmem:[%s288 + $0x84] sm:$0xe]
        %v349 = vld [vmem:[%s288 + $0x90] sm:$0xe]
        %v350 = vld [vmem:[%s288 + $0x9c] sm:$0xe]
        %v351 = vld [vmem:[%s288 + $0xa8] sm:$0xe]
        %v352 = vld [vmem:[%s288 + $0xb4] sm:$0xe]
        %s353 = scalar_lea.vmem %s222, 24
        %v354 = vld [vmem:[%s353] sm:$0xf]
        %v355 = vld [vmem:[%s353 + $0x4] sm:$0xf]
        %v356 = vld [vmem:[%s353 + $0xc] sm:$0xf]
        %v357 = vld [vmem:[%s353 + $0x10] sm:$0xf]
        %v358 = vld [vmem:[%s353 + $0x18] sm:$0xf]
        %v359 = vld [vmem:[%s353 + $0x1c] sm:$0xf]
        %v360 = vld [vmem:[%s353 + $0x24] sm:$0xf]
        %v361 = vld [vmem:[%s353 + $0x28] sm:$0xf]
        %v362 = vld [vmem:[%s353 + $0x30] sm:$0xf]
        %v363 = vld [vmem:[%s353 + $0x34] sm:$0xf]
        %v364 = vld [vmem:[%s353 + $0x3c] sm:$0xf]
        %v365 = vld [vmem:[%s353 + $0x40] sm:$0xf]
        %v366 = vld [vmem:[%s353 + $0x48] sm:$0xf]
        %v367 = vld [vmem:[%s353 + $0x4c] sm:$0xf]
        %v368 = vld [vmem:[%s353 + $0x54] sm:$0xf]
        %v369 = vld [vmem:[%s353 + $0x58] sm:$0xf]
        %v370 = vld [vmem:[%s353 + $0x60] sm:$0xf]
        %v371 = vld [vmem:[%s353 + $0x64] sm:$0xf]
        %v372 = vld [vmem:[%s353 + $0x6c] sm:$0xf]
        %v373 = vld [vmem:[%s353 + $0x70] sm:$0xf]
        %v374 = vld [vmem:[%s353 + $0x78] sm:$0xf]
        %v375 = vld [vmem:[%s353 + $0x7c] sm:$0xf]
        %v376 = vld [vmem:[%s353 + $0x84] sm:$0xf]
        %v377 = vld [vmem:[%s353 + $0x88] sm:$0xf]
        %v378 = vld [vmem:[%s353 + $0x90] sm:$0xf]
        %v379 = vld [vmem:[%s353 + $0x94] sm:$0xf]
        %v380 = vld [vmem:[%s353 + $0x9c] sm:$0xf]
        %v381 = vld [vmem:[%s353 + $0xa0] sm:$0xf]
        %v382 = vld [vmem:[%s353 + $0xa8] sm:$0xf]
        %v383 = vld [vmem:[%s353 + $0xac] sm:$0xf]
        %v384 = vld [vmem:[%s353 + $0xb4] sm:$0xf]
        %v385 = vld [vmem:[%s353 + $0xb8] sm:$0xf]
        %v386 = vld [vmem:[%s353 + $0x8] sm:$0x1]
        %v387 = vld [vmem:[%s353 + $0x14] sm:$0x1]
        %v388 = vld [vmem:[%s353 + $0x20] sm:$0x1]
        %v389 = vld [vmem:[%s353 + $0x2c] sm:$0x1]
        %v390 = vld [vmem:[%s353 + $0x38] sm:$0x1]
        %v391 = vld [vmem:[%s353 + $0x44] sm:$0x1]
        %v392 = vld [vmem:[%s353 + $0x50] sm:$0x1]
        %v393 = vld [vmem:[%s353 + $0x5c] sm:$0x1]
        %v394 = vld [vmem:[%s353 + $0x68] sm:$0x1]
        %v395 = vld [vmem:[%s353 + $0x74] sm:$0x1]
        %v396 = vld [vmem:[%s353 + $0x80] sm:$0x1]
        %v397 = vld [vmem:[%s353 + $0x8c] sm:$0x1]
        %v398 = vld [vmem:[%s353 + $0x98] sm:$0x1]
        %v399 = vld [vmem:[%s353 + $0xa4] sm:$0x1]
        %v400 = vld [vmem:[%s353 + $0xb0] sm:$0x1]
        %v401 = vld [vmem:[%s353 + $0xbc] sm:$0x1]
        %v402 = vld [vmem:[%s353] sm:$0xe]
        %v403 = vld [vmem:[%s353 + $0xc] sm:$0xe]
        %v404 = vld [vmem:[%s353 + $0x18] sm:$0xe]
        %v405 = vld [vmem:[%s353 + $0x24] sm:$0xe]
        %v406 = vld [vmem:[%s353 + $0x30] sm:$0xe]
        %v407 = vld [vmem:[%s353 + $0x3c] sm:$0xe]
        %v408 = vld [vmem:[%s353 + $0x48] sm:$0xe]
        %v409 = vld [vmem:[%s353 + $0x54] sm:$0xe]
        %v410 = vld [vmem:[%s353 + $0x60] sm:$0xe]
        %v411 = vld [vmem:[%s353 + $0x6c] sm:$0xe]
        %v412 = vld [vmem:[%s353 + $0x78] sm:$0xe]
        %v413 = vld [vmem:[%s353 + $0x84] sm:$0xe]
        %v414 = vld [vmem:[%s353 + $0x90] sm:$0xe]
        %v415 = vld [vmem:[%s353 + $0x9c] sm:$0xe]
        %v416 = vld [vmem:[%s353 + $0xa8] sm:$0xe]
        %v417 = vld [vmem:[%s353 + $0xb4] sm:$0xe]
        %v450 = vunpack.c.l.b16 %v224
        %v451 = vunpack.c.l.b16 %v225
        %v452 = vunpack.c.l.b16 %v226
        %v453 = vunpack.c.l.b16 %v227
        %v454 = vunpack.c.l.b16 %v228
        %v455 = vunpack.c.l.b16 %v229
        %v456 = vunpack.c.l.b16 %v230
        %v457 = vunpack.c.l.b16 %v231
        %v458 = vunpack.c.l.b16 %v232
        %v459 = vunpack.c.l.b16 %v233
        %v460 = vunpack.c.l.b16 %v234
        %v461 = vunpack.c.l.b16 %v235
        %v462 = vunpack.c.l.b16 %v236
        %v463 = vunpack.c.l.b16 %v237
        %v464 = vunpack.c.l.b16 %v238
        %v465 = vunpack.c.l.b16 %v239
        %v466 = vunpack.c.l.b16 %v240
        %v467 = vunpack.c.l.b16 %v241
        %v468 = vunpack.c.l.b16 %v242
        %v469 = vunpack.c.l.b16 %v243
        %v470 = vunpack.c.l.b16 %v244
        %v471 = vunpack.c.l.b16 %v245
        %v472 = vunpack.c.l.b16 %v246
        %v473 = vunpack.c.l.b16 %v247
        %v474 = vunpack.c.l.b16 %v248
        %v475 = vunpack.c.l.b16 %v249
        %v476 = vunpack.c.l.b16 %v250
        %v477 = vunpack.c.l.b16 %v251
        %v478 = vunpack.c.l.b16 %v252
        %v479 = vunpack.c.l.b16 %v253
        %v480 = vunpack.c.l.b16 %v254
        %v481 = vunpack.c.l.b16 %v255
        %v482 = vpack.c.b16 %v451, %v450
        %v483 = vpack.c.b16 %v453, %v452
        %v484 = vpack.c.b16 %v455, %v454
        %v485 = vpack.c.b16 %v457, %v456
        %v486 = vpack.c.b16 %v459, %v458
        %v487 = vpack.c.b16 %v461, %v460
        %v488 = vpack.c.b16 %v463, %v462
        %v489 = vpack.c.b16 %v465, %v464
        %v490 = vpack.c.b16 %v467, %v466
        %v491 = vpack.c.b16 %v469, %v468
        %v492 = vpack.c.b16 %v471, %v470
        %v493 = vpack.c.b16 %v473, %v472
        %v494 = vpack.c.b16 %v475, %v474
        %v495 = vpack.c.b16 %v477, %v476
        %v496 = vpack.c.b16 %v479, %v478
        %v497 = vpack.c.b16 %v481, %v480
        %v530 = vunpack.c.l.b16 %v256
        %v531 = vunpack.c.l.b16 %v257
        %v532 = vunpack.c.l.b16 %v258
        %v533 = vunpack.c.l.b16 %v259
        %v534 = vunpack.c.l.b16 %v260
        %v535 = vunpack.c.l.b16 %v261
        %v536 = vunpack.c.l.b16 %v262
        %v537 = vunpack.c.l.b16 %v263
        %v538 = vunpack.c.l.b16 %v264
        %v539 = vunpack.c.l.b16 %v265
        %v540 = vunpack.c.l.b16 %v266
        %v541 = vunpack.c.l.b16 %v267
        %v542 = vunpack.c.l.b16 %v268
        %v543 = vunpack.c.l.b16 %v269
        %v544 = vunpack.c.l.b16 %v270
        %v545 = vunpack.c.l.b16 %v271
        %v546 = vpack.c.b16 %v530, %v530
        %v547 = vpack.c.b16 %v531, %v531
        %v548 = vpack.c.b16 %v532, %v532
        %v549 = vpack.c.b16 %v533, %v533
        %v550 = vpack.c.b16 %v534, %v534
        %v551 = vpack.c.b16 %v535, %v535
        %v552 = vpack.c.b16 %v536, %v536
        %v553 = vpack.c.b16 %v537, %v537
        %v554 = vpack.c.b16 %v538, %v538
        %v555 = vpack.c.b16 %v539, %v539
        %v556 = vpack.c.b16 %v540, %v540
        %v557 = vpack.c.b16 %v541, %v541
        %v558 = vpack.c.b16 %v542, %v542
        %v559 = vpack.c.b16 %v543, %v543
        %v560 = vpack.c.b16 %v544, %v544
        %v561 = vpack.c.b16 %v545, %v545
        %vm562 = vsmask.f32 7424
        %v564 = vshrl.u32 %v482, 16
        %v566 = vshll.u32 %v482, 16
        %v568 = vrot.slane %v566, 1
        %v569 = vor.u32 %v564, %v568
        %v571 = vshll.u32 %v546, 16
        %v573 = vrot.slane %v571, 1
        %v574 = vsel %vm562, %v569, %v573
        %v576 = vshrl.u32 %v483, 16
        %v578 = vshll.u32 %v483, 16
        %v580 = vrot.slane %v578, 1
        %v581 = vor.u32 %v576, %v580
        %v583 = vshll.u32 %v547, 16
        %v585 = vrot.slane %v583, 1
        %v586 = vsel %vm562, %v581, %v585
        %v588 = vshrl.u32 %v484, 16
        %v590 = vshll.u32 %v484, 16
        %v592 = vrot.slane %v590, 1
        %v593 = vor.u32 %v588, %v592
        %v595 = vshll.u32 %v548, 16
        %v597 = vrot.slane %v595, 1
        %v598 = vsel %vm562, %v593, %v597
        %v600 = vshrl.u32 %v485, 16
        %v602 = vshll.u32 %v485, 16
        %v604 = vrot.slane %v602, 1
        %v605 = vor.u32 %v600, %v604
        %v607 = vshll.u32 %v549, 16
        %v609 = vrot.slane %v607, 1
        %v610 = vsel %vm562, %v605, %v609
        %v612 = vshrl.u32 %v486, 16
        %v614 = vshll.u32 %v486, 16
        %v616 = vrot.slane %v614, 1
        %v617 = vor.u32 %v612, %v616
        %v619 = vshll.u32 %v550, 16
        %v621 = vrot.slane %v619, 1
        %v622 = vsel %vm562, %v617, %v621
        %v624 = vshrl.u32 %v487, 16
        %v626 = vshll.u32 %v487, 16
        %v628 = vrot.slane %v626, 1
        %v629 = vor.u32 %v624, %v628
        %v631 = vshll.u32 %v551, 16
        %v633 = vrot.slane %v631, 1
        %v634 = vsel %vm562, %v629, %v633
        %v636 = vshrl.u32 %v488, 16
        %v638 = vshll.u32 %v488, 16
        %v640 = vrot.slane %v638, 1
        %v641 = vor.u32 %v636, %v640
        %v643 = vshll.u32 %v552, 16
        %v645 = vrot.slane %v643, 1
        %v646 = vsel %vm562, %v641, %v645
        %v648 = vshrl.u32 %v489, 16
        %v650 = vshll.u32 %v489, 16
        %v652 = vrot.slane %v650, 1
        %v653 = vor.u32 %v648, %v652
        %v655 = vshll.u32 %v553, 16
        %v657 = vrot.slane %v655, 1
        %v658 = vsel %vm562, %v653, %v657
        %v660 = vshrl.u32 %v490, 16
        %v662 = vshll.u32 %v490, 16
        %v664 = vrot.slane %v662, 1
        %v665 = vor.u32 %v660, %v664
        %v667 = vshll.u32 %v554, 16
        %v669 = vrot.slane %v667, 1
        %v670 = vsel %vm562, %v665, %v669
        %v672 = vshrl.u32 %v491, 16
        %v674 = vshll.u32 %v491, 16
        %v676 = vrot.slane %v674, 1
        %v677 = vor.u32 %v672, %v676
        %v679 = vshll.u32 %v555, 16
        %v681 = vrot.slane %v679, 1
        %v682 = vsel %vm562, %v677, %v681
        %v684 = vshrl.u32 %v492, 16
        %v686 = vshll.u32 %v492, 16
        %v688 = vrot.slane %v686, 1
        %v689 = vor.u32 %v684, %v688
        %v691 = vshll.u32 %v556, 16
        %v693 = vrot.slane %v691, 1
        %v694 = vsel %vm562, %v689, %v693
        %v696 = vshrl.u32 %v493, 16
        %v698 = vshll.u32 %v493, 16
        %v700 = vrot.slane %v698, 1
        %v701 = vor.u32 %v696, %v700
        %v703 = vshll.u32 %v557, 16
        %v705 = vrot.slane %v703, 1
        %v706 = vsel %vm562, %v701, %v705
        %v708 = vshrl.u32 %v494, 16
        %v710 = vshll.u32 %v494, 16
        %v712 = vrot.slane %v710, 1
        %v713 = vor.u32 %v708, %v712
        %v715 = vshll.u32 %v558, 16
        %v717 = vrot.slane %v715, 1
        %v718 = vsel %vm562, %v713, %v717
        %v720 = vshrl.u32 %v495, 16
        %v722 = vshll.u32 %v495, 16
        %v724 = vrot.slane %v722, 1
        %v725 = vor.u32 %v720, %v724
        %v727 = vshll.u32 %v559, 16
        %v729 = vrot.slane %v727, 1
        %v730 = vsel %vm562, %v725, %v729
        %v732 = vshrl.u32 %v496, 16
        %v734 = vshll.u32 %v496, 16
        %v736 = vrot.slane %v734, 1
        %v737 = vor.u32 %v732, %v736
        %v739 = vshll.u32 %v560, 16
        %v741 = vrot.slane %v739, 1
        %v742 = vsel %vm562, %v737, %v741
        %v744 = vshrl.u32 %v497, 16
        %v746 = vshll.u32 %v497, 16
        %v748 = vrot.slane %v746, 1
        %v749 = vor.u32 %v744, %v748
        %v751 = vshll.u32 %v561, 16
        %v753 = vrot.slane %v751, 1
        %v754 = vsel %vm562, %v749, %v753
        %v787 = vunpack.c.l.b16 %v272
        %v788 = vunpack.c.l.b16 %v273
        %v789 = vunpack.c.l.b16 %v274
        %v790 = vunpack.c.l.b16 %v275
        %v791 = vunpack.c.l.b16 %v276
        %v792 = vunpack.c.l.b16 %v277
        %v793 = vunpack.c.l.b16 %v278
        %v794 = vunpack.c.l.b16 %v279
        %v795 = vunpack.c.l.b16 %v280
        %v796 = vunpack.c.l.b16 %v281
        %v797 = vunpack.c.l.b16 %v282
        %v798 = vunpack.c.l.b16 %v283
        %v799 = vunpack.c.l.b16 %v284
        %v800 = vunpack.c.l.b16 %v285
        %v801 = vunpack.c.l.b16 %v286
        %v802 = vunpack.c.l.b16 %v287
        %v803 = vpack.c.b16 %v451, %v787
        %v804 = vpack.c.b16 %v453, %v788
        %v805 = vpack.c.b16 %v455, %v789
        %v806 = vpack.c.b16 %v457, %v790
        %v807 = vpack.c.b16 %v459, %v791
        %v808 = vpack.c.b16 %v461, %v792
        %v809 = vpack.c.b16 %v463, %v793
        %v810 = vpack.c.b16 %v465, %v794
        %v811 = vpack.c.b16 %v467, %v795
        %v812 = vpack.c.b16 %v469, %v796
        %v813 = vpack.c.b16 %v471, %v797
        %v814 = vpack.c.b16 %v473, %v798
        %v815 = vpack.c.b16 %v475, %v799
        %v816 = vpack.c.b16 %v477, %v800
        %v817 = vpack.c.b16 %v479, %v801
        %v818 = vpack.c.b16 %v481, %v802
        %vm819 = vcmask 1046528
        %v820 = vrot.slane %v803, 1
        %v821 = vrot.slane %v546, 1
        %v822 = vsel %vm819, %v820, %v821
        %v823 = vrot.slane %v804, 1
        %v824 = vrot.slane %v547, 1
        %v825 = vsel %vm819, %v823, %v824
        %v826 = vrot.slane %v805, 1
        %v827 = vrot.slane %v548, 1
        %v828 = vsel %vm819, %v826, %v827
        %v829 = vrot.slane %v806, 1
        %v830 = vrot.slane %v549, 1
        %v831 = vsel %vm819, %v829, %v830
        %v832 = vrot.slane %v807, 1
        %v833 = vrot.slane %v550, 1
        %v834 = vsel %vm819, %v832, %v833
        %v835 = vrot.slane %v808, 1
        %v836 = vrot.slane %v551, 1
        %v837 = vsel %vm819, %v835, %v836
        %v838 = vrot.slane %v809, 1
        %v839 = vrot.slane %v552, 1
        %v840 = vsel %vm819, %v838, %v839
        %v841 = vrot.slane %v810, 1
        %v842 = vrot.slane %v553, 1
        %v843 = vsel %vm819, %v841, %v842
        %v844 = vrot.slane %v811, 1
        %v845 = vrot.slane %v554, 1
        %v846 = vsel %vm819, %v844, %v845
        %v847 = vrot.slane %v812, 1
        %v848 = vrot.slane %v555, 1
        %v849 = vsel %vm819, %v847, %v848
        %v850 = vrot.slane %v813, 1
        %v851 = vrot.slane %v556, 1
        %v852 = vsel %vm819, %v850, %v851
        %v853 = vrot.slane %v814, 1
        %v854 = vrot.slane %v557, 1
        %v855 = vsel %vm819, %v853, %v854
        %v856 = vrot.slane %v815, 1
        %v857 = vrot.slane %v558, 1
        %v858 = vsel %vm819, %v856, %v857
        %v859 = vrot.slane %v816, 1
        %v860 = vrot.slane %v559, 1
        %v861 = vsel %vm819, %v859, %v860
        %v862 = vrot.slane %v817, 1
        %v863 = vrot.slane %v560, 1
        %v864 = vsel %vm819, %v862, %v863
        %v865 = vrot.slane %v818, 1
        %v866 = vrot.slane %v561, 1
        %v867 = vsel %vm819, %v865, %v866
        %v916 = vunpack.c.l.b16 %v289
        %v917 = vunpack.c.l.b16 %v290
        %v918 = vunpack.c.l.b16 %v291
        %v919 = vunpack.c.l.b16 %v292
        %v920 = vunpack.c.l.b16 %v293
        %v921 = vunpack.c.l.b16 %v294
        %v922 = vunpack.c.l.b16 %v295
        %v923 = vunpack.c.l.b16 %v296
        %v924 = vunpack.c.l.b16 %v297
        %v925 = vunpack.c.l.b16 %v298
        %v926 = vunpack.c.l.b16 %v299
        %v927 = vunpack.c.l.b16 %v300
        %v928 = vunpack.c.l.b16 %v301
        %v929 = vunpack.c.l.b16 %v302
        %v930 = vunpack.c.l.b16 %v303
        %v931 = vunpack.c.l.b16 %v304
        %v932 = vunpack.c.l.b16 %v305
        %v933 = vunpack.c.l.b16 %v306
        %v934 = vunpack.c.l.b16 %v307
        %v935 = vunpack.c.l.b16 %v308
        %v936 = vunpack.c.l.b16 %v309
        %v937 = vunpack.c.l.b16 %v310
        %v938 = vunpack.c.l.b16 %v311
        %v939 = vunpack.c.l.b16 %v312
        %v940 = vunpack.c.l.b16 %v313
        %v941 = vunpack.c.l.b16 %v314
        %v942 = vunpack.c.l.b16 %v315
        %v943 = vunpack.c.l.b16 %v316
        %v944 = vunpack.c.l.b16 %v317
        %v945 = vunpack.c.l.b16 %v318
        %v946 = vunpack.c.l.b16 %v319
        %v947 = vunpack.c.l.b16 %v320
        %v948 = vpack.c.b16 %v917, %v916
        %v949 = vpack.c.b16 %v919, %v918
        %v950 = vpack.c.b16 %v921, %v920
        %v951 = vpack.c.b16 %v923, %v922
        %v952 = vpack.c.b16 %v925, %v924
        %v953 = vpack.c.b16 %v927, %v926
        %v954 = vpack.c.b16 %v929, %v928
        %v955 = vpack.c.b16 %v931, %v930
        %v956 = vpack.c.b16 %v933, %v932
        %v957 = vpack.c.b16 %v935, %v934
        %v958 = vpack.c.b16 %v937, %v936
        %v959 = vpack.c.b16 %v939, %v938
        %v960 = vpack.c.b16 %v941, %v940
        %v961 = vpack.c.b16 %v943, %v942
        %v962 = vpack.c.b16 %v945, %v944
        %v963 = vpack.c.b16 %v947, %v946
        %v996 = vunpack.c.l.b16 %v321
        %v997 = vunpack.c.l.b16 %v322
        %v998 = vunpack.c.l.b16 %v323
        %v999 = vunpack.c.l.b16 %v324
        %v1000 = vunpack.c.l.b16 %v325
        %v1001 = vunpack.c.l.b16 %v326
        %v1002 = vunpack.c.l.b16 %v327
        %v1003 = vunpack.c.l.b16 %v328
        %v1004 = vunpack.c.l.b16 %v329
        %v1005 = vunpack.c.l.b16 %v330
        %v1006 = vunpack.c.l.b16 %v331
        %v1007 = vunpack.c.l.b16 %v332
        %v1008 = vunpack.c.l.b16 %v333
        %v1009 = vunpack.c.l.b16 %v334
        %v1010 = vunpack.c.l.b16 %v335
        %v1011 = vunpack.c.l.b16 %v336
        %v1012 = vpack.c.b16 %v996, %v996
        %v1013 = vpack.c.b16 %v997, %v997
        %v1014 = vpack.c.b16 %v998, %v998
        %v1015 = vpack.c.b16 %v999, %v999
        %v1016 = vpack.c.b16 %v1000, %v1000
        %v1017 = vpack.c.b16 %v1001, %v1001
        %v1018 = vpack.c.b16 %v1002, %v1002
        %v1019 = vpack.c.b16 %v1003, %v1003
        %v1020 = vpack.c.b16 %v1004, %v1004
        %v1021 = vpack.c.b16 %v1005, %v1005
        %v1022 = vpack.c.b16 %v1006, %v1006
        %v1023 = vpack.c.b16 %v1007, %v1007
        %v1024 = vpack.c.b16 %v1008, %v1008
        %v1025 = vpack.c.b16 %v1009, %v1009
        %v1026 = vpack.c.b16 %v1010, %v1010
        %v1027 = vpack.c.b16 %v1011, %v1011
        %v1029 = vshrl.u32 %v948, 16
        %v1031 = vshll.u32 %v948, 16
        %v1033 = vrot.slane %v1031, 1
        %v1034 = vor.u32 %v1029, %v1033
        %v1036 = vshll.u32 %v1012, 16
        %v1038 = vrot.slane %v1036, 1
        %v1039 = vsel %vm562, %v1034, %v1038
        %v1041 = vshrl.u32 %v949, 16
        %v1043 = vshll.u32 %v949, 16
        %v1045 = vrot.slane %v1043, 1
        %v1046 = vor.u32 %v1041, %v1045
        %v1048 = vshll.u32 %v1013, 16
        %v1050 = vrot.slane %v1048, 1
        %v1051 = vsel %vm562, %v1046, %v1050
        %v1053 = vshrl.u32 %v950, 16
        %v1055 = vshll.u32 %v950, 16
        %v1057 = vrot.slane %v1055, 1
        %v1058 = vor.u32 %v1053, %v1057
        %v1060 = vshll.u32 %v1014, 16
        %v1062 = vrot.slane %v1060, 1
        %v1063 = vsel %vm562, %v1058, %v1062
        %v1065 = vshrl.u32 %v951, 16
        %v1067 = vshll.u32 %v951, 16
        %v1069 = vrot.slane %v1067, 1
        %v1070 = vor.u32 %v1065, %v1069
        %v1072 = vshll.u32 %v1015, 16
        %v1074 = vrot.slane %v1072, 1
        %v1075 = vsel %vm562, %v1070, %v1074
        %v1077 = vshrl.u32 %v952, 16
        %v1079 = vshll.u32 %v952, 16
        %v1081 = vrot.slane %v1079, 1
        %v1082 = vor.u32 %v1077, %v1081
        %v1084 = vshll.u32 %v1016, 16
        %v1086 = vrot.slane %v1084, 1
        %v1087 = vsel %vm562, %v1082, %v1086
        %v1089 = vshrl.u32 %v953, 16
        %v1091 = vshll.u32 %v953, 16
        %v1093 = vrot.slane %v1091, 1
        %v1094 = vor.u32 %v1089, %v1093
        %v1096 = vshll.u32 %v1017, 16
        %v1098 = vrot.slane %v1096, 1
        %v1099 = vsel %vm562, %v1094, %v1098
        %v1101 = vshrl.u32 %v954, 16
        %v1103 = vshll.u32 %v954, 16
        %v1105 = vrot.slane %v1103, 1
        %v1106 = vor.u32 %v1101, %v1105
        %v1108 = vshll.u32 %v1018, 16
        %v1110 = vrot.slane %v1108, 1
        %v1111 = vsel %vm562, %v1106, %v1110
        %v1113 = vshrl.u32 %v955, 16
        %v1115 = vshll.u32 %v955, 16
        %v1117 = vrot.slane %v1115, 1
        %v1118 = vor.u32 %v1113, %v1117
        %v1120 = vshll.u32 %v1019, 16
        %v1122 = vrot.slane %v1120, 1
        %v1123 = vsel %vm562, %v1118, %v1122
        %v1125 = vshrl.u32 %v956, 16
        %v1127 = vshll.u32 %v956, 16
        %v1129 = vrot.slane %v1127, 1
        %v1130 = vor.u32 %v1125, %v1129
        %v1132 = vshll.u32 %v1020, 16
        %v1134 = vrot.slane %v1132, 1
        %v1135 = vsel %vm562, %v1130, %v1134
        %v1137 = vshrl.u32 %v957, 16
        %v1139 = vshll.u32 %v957, 16
        %v1141 = vrot.slane %v1139, 1
        %v1142 = vor.u32 %v1137, %v1141
        %v1144 = vshll.u32 %v1021, 16
        %v1146 = vrot.slane %v1144, 1
        %v1147 = vsel %vm562, %v1142, %v1146
        %v1149 = vshrl.u32 %v958, 16
        %v1151 = vshll.u32 %v958, 16
        %v1153 = vrot.slane %v1151, 1
        %v1154 = vor.u32 %v1149, %v1153
        %v1156 = vshll.u32 %v1022, 16
        %v1158 = vrot.slane %v1156, 1
        %v1159 = vsel %vm562, %v1154, %v1158
        %v1161 = vshrl.u32 %v959, 16
        %v1163 = vshll.u32 %v959, 16
        %v1165 = vrot.slane %v1163, 1
        %v1166 = vor.u32 %v1161, %v1165
        %v1168 = vshll.u32 %v1023, 16
        %v1170 = vrot.slane %v1168, 1
        %v1171 = vsel %vm562, %v1166, %v1170
        %v1173 = vshrl.u32 %v960, 16
        %v1175 = vshll.u32 %v960, 16
        %v1177 = vrot.slane %v1175, 1
        %v1178 = vor.u32 %v1173, %v1177
        %v1180 = vshll.u32 %v1024, 16
        %v1182 = vrot.slane %v1180, 1
        %v1183 = vsel %vm562, %v1178, %v1182
        %v1185 = vshrl.u32 %v961, 16
        %v1187 = vshll.u32 %v961, 16
        %v1189 = vrot.slane %v1187, 1
        %v1190 = vor.u32 %v1185, %v1189
        %v1192 = vshll.u32 %v1025, 16
        %v1194 = vrot.slane %v1192, 1
        %v1195 = vsel %vm562, %v1190, %v1194
        %v1197 = vshrl.u32 %v962, 16
        %v1199 = vshll.u32 %v962, 16
        %v1201 = vrot.slane %v1199, 1
        %v1202 = vor.u32 %v1197, %v1201
        %v1204 = vshll.u32 %v1026, 16
        %v1206 = vrot.slane %v1204, 1
        %v1207 = vsel %vm562, %v1202, %v1206
        %v1209 = vshrl.u32 %v963, 16
        %v1211 = vshll.u32 %v963, 16
        %v1213 = vrot.slane %v1211, 1
        %v1214 = vor.u32 %v1209, %v1213
        %v1216 = vshll.u32 %v1027, 16
        %v1218 = vrot.slane %v1216, 1
        %v1219 = vsel %vm562, %v1214, %v1218
        %v1252 = vunpack.c.l.b16 %v337
        %v1253 = vunpack.c.l.b16 %v338
        %v1254 = vunpack.c.l.b16 %v339
        %v1255 = vunpack.c.l.b16 %v340
        %v1256 = vunpack.c.l.b16 %v341
        %v1257 = vunpack.c.l.b16 %v342
        %v1258 = vunpack.c.l.b16 %v343
        %v1259 = vunpack.c.l.b16 %v344
        %v1260 = vunpack.c.l.b16 %v345
        %v1261 = vunpack.c.l.b16 %v346
        %v1262 = vunpack.c.l.b16 %v347
        %v1263 = vunpack.c.l.b16 %v348
        %v1264 = vunpack.c.l.b16 %v349
        %v1265 = vunpack.c.l.b16 %v350
        %v1266 = vunpack.c.l.b16 %v351
        %v1267 = vunpack.c.l.b16 %v352
        %v1268 = vpack.c.b16 %v917, %v1252
        %v1269 = vpack.c.b16 %v919, %v1253
        %v1270 = vpack.c.b16 %v921, %v1254
        %v1271 = vpack.c.b16 %v923, %v1255
        %v1272 = vpack.c.b16 %v925, %v1256
        %v1273 = vpack.c.b16 %v927, %v1257
        %v1274 = vpack.c.b16 %v929, %v1258
        %v1275 = vpack.c.b16 %v931, %v1259
        %v1276 = vpack.c.b16 %v933, %v1260
        %v1277 = vpack.c.b16 %v935, %v1261
        %v1278 = vpack.c.b16 %v937, %v1262
        %v1279 = vpack.c.b16 %v939, %v1263
        %v1280 = vpack.c.b16 %v941, %v1264
        %v1281 = vpack.c.b16 %v943, %v1265
        %v1282 = vpack.c.b16 %v945, %v1266
        %v1283 = vpack.c.b16 %v947, %v1267
        %v1284 = vrot.slane %v1268, 1
        %v1285 = vrot.slane %v1012, 1
        %v1286 = vsel %vm819, %v1284, %v1285
        %v1287 = vrot.slane %v1269, 1
        %v1288 = vrot.slane %v1013, 1
        %v1289 = vsel %vm819, %v1287, %v1288
        %v1290 = vrot.slane %v1270, 1
        %v1291 = vrot.slane %v1014, 1
        %v1292 = vsel %vm819, %v1290, %v1291
        %v1293 = vrot.slane %v1271, 1
        %v1294 = vrot.slane %v1015, 1
        %v1295 = vsel %vm819, %v1293, %v1294
        %v1296 = vrot.slane %v1272, 1
        %v1297 = vrot.slane %v1016, 1
        %v1298 = vsel %vm819, %v1296, %v1297
        %v1299 = vrot.slane %v1273, 1
        %v1300 = vrot.slane %v1017, 1
        %v1301 = vsel %vm819, %v1299, %v1300
        %v1302 = vrot.slane %v1274, 1
        %v1303 = vrot.slane %v1018, 1
        %v1304 = vsel %vm819, %v1302, %v1303
        %v1305 = vrot.slane %v1275, 1
        %v1306 = vrot.slane %v1019, 1
        %v1307 = vsel %vm819, %v1305, %v1306
        %v1308 = vrot.slane %v1276, 1
        %v1309 = vrot.slane %v1020, 1
        %v1310 = vsel %vm819, %v1308, %v1309
        %v1311 = vrot.slane %v1277, 1
        %v1312 = vrot.slane %v1021, 1
        %v1313 = vsel %vm819, %v1311, %v1312
        %v1314 = vrot.slane %v1278, 1
        %v1315 = vrot.slane %v1022, 1
        %v1316 = vsel %vm819, %v1314, %v1315
        %v1317 = vrot.slane %v1279, 1
        %v1318 = vrot.slane %v1023, 1
        %v1319 = vsel %vm819, %v1317, %v1318
        %v1320 = vrot.slane %v1280, 1
        %v1321 = vrot.slane %v1024, 1
        %v1322 = vsel %vm819, %v1320, %v1321
        %v1323 = vrot.slane %v1281, 1
        %v1324 = vrot.slane %v1025, 1
        %v1325 = vsel %vm819, %v1323, %v1324
        %v1326 = vrot.slane %v1282, 1
        %v1327 = vrot.slane %v1026, 1
        %v1328 = vsel %vm819, %v1326, %v1327
        %v1329 = vrot.slane %v1283, 1
        %v1330 = vrot.slane %v1027, 1
        %v1331 = vsel %vm819, %v1329, %v1330
        %v1380 = vunpack.c.l.b16 %v354
        %v1381 = vunpack.c.l.b16 %v355
        %v1382 = vunpack.c.l.b16 %v356
        %v1383 = vunpack.c.l.b16 %v357
        %v1384 = vunpack.c.l.b16 %v358
        %v1385 = vunpack.c.l.b16 %v359
        %v1386 = vunpack.c.l.b16 %v360
        %v1387 = vunpack.c.l.b16 %v361
        %v1388 = vunpack.c.l.b16 %v362
        %v1389 = vunpack.c.l.b16 %v363
        %v1390 = vunpack.c.l.b16 %v364
        %v1391 = vunpack.c.l.b16 %v365
        %v1392 = vunpack.c.l.b16 %v366
        %v1393 = vunpack.c.l.b16 %v367
        %v1394 = vunpack.c.l.b16 %v368
        %v1395 = vunpack.c.l.b16 %v369
        %v1396 = vunpack.c.l.b16 %v370
        %v1397 = vunpack.c.l.b16 %v371
        %v1398 = vunpack.c.l.b16 %v372
        %v1399 = vunpack.c.l.b16 %v373
        %v1400 = vunpack.c.l.b16 %v374
        %v1401 = vunpack.c.l.b16 %v375
        %v1402 = vunpack.c.l.b16 %v376
        %v1403 = vunpack.c.l.b16 %v377
        %v1404 = vunpack.c.l.b16 %v378
        %v1405 = vunpack.c.l.b16 %v379
        %v1406 = vunpack.c.l.b16 %v380
        %v1407 = vunpack.c.l.b16 %v381
        %v1408 = vunpack.c.l.b16 %v382
        %v1409 = vunpack.c.l.b16 %v383
        %v1410 = vunpack.c.l.b16 %v384
        %v1411 = vunpack.c.l.b16 %v385
        %v1412 = vpack.c.b16 %v1381, %v1380
        %v1413 = vpack.c.b16 %v1383, %v1382
        %v1414 = vpack.c.b16 %v1385, %v1384
        %v1415 = vpack.c.b16 %v1387, %v1386
        %v1416 = vpack.c.b16 %v1389, %v1388
        %v1417 = vpack.c.b16 %v1391, %v1390
        %v1418 = vpack.c.b16 %v1393, %v1392
        %v1419 = vpack.c.b16 %v1395, %v1394
        %v1420 = vpack.c.b16 %v1397, %v1396
        %v1421 = vpack.c.b16 %v1399, %v1398
        %v1422 = vpack.c.b16 %v1401, %v1400
        %v1423 = vpack.c.b16 %v1403, %v1402
        %v1424 = vpack.c.b16 %v1405, %v1404
        %v1425 = vpack.c.b16 %v1407, %v1406
        %v1426 = vpack.c.b16 %v1409, %v1408
        %v1427 = vpack.c.b16 %v1411, %v1410
        %v1460 = vunpack.c.l.b16 %v386
        %v1461 = vunpack.c.l.b16 %v387
        %v1462 = vunpack.c.l.b16 %v388
        %v1463 = vunpack.c.l.b16 %v389
        %v1464 = vunpack.c.l.b16 %v390
        %v1465 = vunpack.c.l.b16 %v391
        %v1466 = vunpack.c.l.b16 %v392
        %v1467 = vunpack.c.l.b16 %v393
        %v1468 = vunpack.c.l.b16 %v394
        %v1469 = vunpack.c.l.b16 %v395
        %v1470 = vunpack.c.l.b16 %v396
        %v1471 = vunpack.c.l.b16 %v397
        %v1472 = vunpack.c.l.b16 %v398
        %v1473 = vunpack.c.l.b16 %v399
        %v1474 = vunpack.c.l.b16 %v400
        %v1475 = vunpack.c.l.b16 %v401
        %v1476 = vpack.c.b16 %v1460, %v1460
        %v1477 = vpack.c.b16 %v1461, %v1461
        %v1478 = vpack.c.b16 %v1462, %v1462
        %v1479 = vpack.c.b16 %v1463, %v1463
        %v1480 = vpack.c.b16 %v1464, %v1464
        %v1481 = vpack.c.b16 %v1465, %v1465
        %v1482 = vpack.c.b16 %v1466, %v1466
        %v1483 = vpack.c.b16 %v1467, %v1467
        %v1484 = vpack.c.b16 %v1468, %v1468
        %v1485 = vpack.c.b16 %v1469, %v1469
        %v1486 = vpack.c.b16 %v1470, %v1470
        %v1487 = vpack.c.b16 %v1471, %v1471
        %v1488 = vpack.c.b16 %v1472, %v1472
        %v1489 = vpack.c.b16 %v1473, %v1473
        %v1490 = vpack.c.b16 %v1474, %v1474
        %v1491 = vpack.c.b16 %v1475, %v1475
        %v1493 = vshrl.u32 %v1412, 16
        %v1495 = vshll.u32 %v1412, 16
        %v1497 = vrot.slane %v1495, 1
        %v1498 = vor.u32 %v1493, %v1497
        %v1500 = vshll.u32 %v1476, 16
        %v1502 = vrot.slane %v1500, 1
        %v1503 = vsel %vm562, %v1498, %v1502
        %v1505 = vshrl.u32 %v1413, 16
        %v1507 = vshll.u32 %v1413, 16
        %v1509 = vrot.slane %v1507, 1
        %v1510 = vor.u32 %v1505, %v1509
        %v1512 = vshll.u32 %v1477, 16
        %v1514 = vrot.slane %v1512, 1
        %v1515 = vsel %vm562, %v1510, %v1514
        %v1517 = vshrl.u32 %v1414, 16
        %v1519 = vshll.u32 %v1414, 16
        %v1521 = vrot.slane %v1519, 1
        %v1522 = vor.u32 %v1517, %v1521
        %v1524 = vshll.u32 %v1478, 16
        %v1526 = vrot.slane %v1524, 1
        %v1527 = vsel %vm562, %v1522, %v1526
        %v1529 = vshrl.u32 %v1415, 16
        %v1531 = vshll.u32 %v1415, 16
        %v1533 = vrot.slane %v1531, 1
        %v1534 = vor.u32 %v1529, %v1533
        %v1536 = vshll.u32 %v1479, 16
        %v1538 = vrot.slane %v1536, 1
        %v1539 = vsel %vm562, %v1534, %v1538
        %v1541 = vshrl.u32 %v1416, 16
        %v1543 = vshll.u32 %v1416, 16
        %v1545 = vrot.slane %v1543, 1
        %v1546 = vor.u32 %v1541, %v1545
        %v1548 = vshll.u32 %v1480, 16
        %v1550 = vrot.slane %v1548, 1
        %v1551 = vsel %vm562, %v1546, %v1550
        %v1553 = vshrl.u32 %v1417, 16
        %v1555 = vshll.u32 %v1417, 16
        %v1557 = vrot.slane %v1555, 1
        %v1558 = vor.u32 %v1553, %v1557
        %v1560 = vshll.u32 %v1481, 16
        %v1562 = vrot.slane %v1560, 1
        %v1563 = vsel %vm562, %v1558, %v1562
        %v1565 = vshrl.u32 %v1418, 16
        %v1567 = vshll.u32 %v1418, 16
        %v1569 = vrot.slane %v1567, 1
        %v1570 = vor.u32 %v1565, %v1569
        %v1572 = vshll.u32 %v1482, 16
        %v1574 = vrot.slane %v1572, 1
        %v1575 = vsel %vm562, %v1570, %v1574
        %v1577 = vshrl.u32 %v1419, 16
        %v1579 = vshll.u32 %v1419, 16
        %v1581 = vrot.slane %v1579, 1
        %v1582 = vor.u32 %v1577, %v1581
        %v1584 = vshll.u32 %v1483, 16
        %v1586 = vrot.slane %v1584, 1
        %v1587 = vsel %vm562, %v1582, %v1586
        %v1589 = vshrl.u32 %v1420, 16
        %v1591 = vshll.u32 %v1420, 16
        %v1593 = vrot.slane %v1591, 1
        %v1594 = vor.u32 %v1589, %v1593
        %v1596 = vshll.u32 %v1484, 16
        %v1598 = vrot.slane %v1596, 1
        %v1599 = vsel %vm562, %v1594, %v1598
        %v1601 = vshrl.u32 %v1421, 16
        %v1603 = vshll.u32 %v1421, 16
        %v1605 = vrot.slane %v1603, 1
        %v1606 = vor.u32 %v1601, %v1605
        %v1608 = vshll.u32 %v1485, 16
        %v1610 = vrot.slane %v1608, 1
        %v1611 = vsel %vm562, %v1606, %v1610
        %v1613 = vshrl.u32 %v1422, 16
        %v1615 = vshll.u32 %v1422, 16
        %v1617 = vrot.slane %v1615, 1
        %v1618 = vor.u32 %v1613, %v1617
        %v1620 = vshll.u32 %v1486, 16
        %v1622 = vrot.slane %v1620, 1
        %v1623 = vsel %vm562, %v1618, %v1622
        %v1625 = vshrl.u32 %v1423, 16
        %v1627 = vshll.u32 %v1423, 16
        %v1629 = vrot.slane %v1627, 1
        %v1630 = vor.u32 %v1625, %v1629
        %v1632 = vshll.u32 %v1487, 16
        %v1634 = vrot.slane %v1632, 1
        %v1635 = vsel %vm562, %v1630, %v1634
        %v1637 = vshrl.u32 %v1424, 16
        %v1639 = vshll.u32 %v1424, 16
        %v1641 = vrot.slane %v1639, 1
        %v1642 = vor.u32 %v1637, %v1641
        %v1644 = vshll.u32 %v1488, 16
        %v1646 = vrot.slane %v1644, 1
        %v1647 = vsel %vm562, %v1642, %v1646
        %v1649 = vshrl.u32 %v1425, 16
        %v1651 = vshll.u32 %v1425, 16
        %v1653 = vrot.slane %v1651, 1
        %v1654 = vor.u32 %v1649, %v1653
        %v1656 = vshll.u32 %v1489, 16
        %v1658 = vrot.slane %v1656, 1
        %v1659 = vsel %vm562, %v1654, %v1658
        %v1661 = vshrl.u32 %v1426, 16
        %v1663 = vshll.u32 %v1426, 16
        %v1665 = vrot.slane %v1663, 1
        %v1666 = vor.u32 %v1661, %v1665
        %v1668 = vshll.u32 %v1490, 16
        %v1670 = vrot.slane %v1668, 1
        %v1671 = vsel %vm562, %v1666, %v1670
        %v1673 = vshrl.u32 %v1427, 16
        %v1675 = vshll.u32 %v1427, 16
        %v1677 = vrot.slane %v1675, 1
        %v1678 = vor.u32 %v1673, %v1677
        %v1680 = vshll.u32 %v1491, 16
        %v1682 = vrot.slane %v1680, 1
        %v1683 = vsel %vm562, %v1678, %v1682
        %v1716 = vunpack.c.l.b16 %v402
        %v1717 = vunpack.c.l.b16 %v403
        %v1718 = vunpack.c.l.b16 %v404
        %v1719 = vunpack.c.l.b16 %v405
        %v1720 = vunpack.c.l.b16 %v406
        %v1721 = vunpack.c.l.b16 %v407
        %v1722 = vunpack.c.l.b16 %v408
        %v1723 = vunpack.c.l.b16 %v409
        %v1724 = vunpack.c.l.b16 %v410
        %v1725 = vunpack.c.l.b16 %v411
        %v1726 = vunpack.c.l.b16 %v412
        %v1727 = vunpack.c.l.b16 %v413
        %v1728 = vunpack.c.l.b16 %v414
        %v1729 = vunpack.c.l.b16 %v415
        %v1730 = vunpack.c.l.b16 %v416
        %v1731 = vunpack.c.l.b16 %v417
        %v1732 = vpack.c.b16 %v1381, %v1716
        %v1733 = vpack.c.b16 %v1383, %v1717
        %v1734 = vpack.c.b16 %v1385, %v1718
        %v1735 = vpack.c.b16 %v1387, %v1719
        %v1736 = vpack.c.b16 %v1389, %v1720
        %v1737 = vpack.c.b16 %v1391, %v1721
        %v1738 = vpack.c.b16 %v1393, %v1722
        %v1739 = vpack.c.b16 %v1395, %v1723
        %v1740 = vpack.c.b16 %v1397, %v1724
        %v1741 = vpack.c.b16 %v1399, %v1725
        %v1742 = vpack.c.b16 %v1401, %v1726
        %v1743 = vpack.c.b16 %v1403, %v1727
        %v1744 = vpack.c.b16 %v1405, %v1728
        %v1745 = vpack.c.b16 %v1407, %v1729
        %v1746 = vpack.c.b16 %v1409, %v1730
        %v1747 = vpack.c.b16 %v1411, %v1731
        %v1748 = vrot.slane %v1732, 1
        %v1749 = vrot.slane %v1476, 1
        %v1750 = vsel %vm819, %v1748, %v1749
        %v1751 = vrot.slane %v1733, 1
        %v1752 = vrot.slane %v1477, 1
        %v1753 = vsel %vm819, %v1751, %v1752
        %v1754 = vrot.slane %v1734, 1
        %v1755 = vrot.slane %v1478, 1
        %v1756 = vsel %vm819, %v1754, %v1755
        %v1757 = vrot.slane %v1735, 1
        %v1758 = vrot.slane %v1479, 1
        %v1759 = vsel %vm819, %v1757, %v1758
        %v1760 = vrot.slane %v1736, 1
        %v1761 = vrot.slane %v1480, 1
        %v1762 = vsel %vm819, %v1760, %v1761
        %v1763 = vrot.slane %v1737, 1
        %v1764 = vrot.slane %v1481, 1
        %v1765 = vsel %vm819, %v1763, %v1764
        %v1766 = vrot.slane %v1738, 1
        %v1767 = vrot.slane %v1482, 1
        %v1768 = vsel %vm819, %v1766, %v1767
        %v1769 = vrot.slane %v1739, 1
        %v1770 = vrot.slane %v1483, 1
        %v1771 = vsel %vm819, %v1769, %v1770
        %v1772 = vrot.slane %v1740, 1
        %v1773 = vrot.slane %v1484, 1
        %v1774 = vsel %vm819, %v1772, %v1773
        %v1775 = vrot.slane %v1741, 1
        %v1776 = vrot.slane %v1485, 1
        %v1777 = vsel %vm819, %v1775, %v1776
        %v1778 = vrot.slane %v1742, 1
        %v1779 = vrot.slane %v1486, 1
        %v1780 = vsel %vm819, %v1778, %v1779
        %v1781 = vrot.slane %v1743, 1
        %v1782 = vrot.slane %v1487, 1
        %v1783 = vsel %vm819, %v1781, %v1782
        %v1784 = vrot.slane %v1744, 1
        %v1785 = vrot.slane %v1488, 1
        %v1786 = vsel %vm819, %v1784, %v1785
        %v1787 = vrot.slane %v1745, 1
        %v1788 = vrot.slane %v1489, 1
        %v1789 = vsel %vm819, %v1787, %v1788
        %v1790 = vrot.slane %v1746, 1
        %v1791 = vrot.slane %v1490, 1
        %v1792 = vsel %vm819, %v1790, %v1791
        %v1793 = vrot.slane %v1747, 1
        %v1794 = vrot.slane %v1491, 1
        %v1795 = vsel %vm819, %v1793, %v1794
        %v1812 = vld [vmem:[%s1] sm:$0xf]
        %v1813 = vld [vmem:[%s1 + $0x4] sm:$0xf]
        %v1814 = vld [vmem:[%s1 + $0x8] sm:$0xf]
        %v1815 = vld [vmem:[%s1 + $0xc] sm:$0xf]
        %v1816 = vld [vmem:[%s1 + $0x10] sm:$0xf]
        %v1817 = vld [vmem:[%s1 + $0x14] sm:$0xf]
        %v1818 = vld [vmem:[%s1 + $0x18] sm:$0xf]
        %v1819 = vld [vmem:[%s1 + $0x1c] sm:$0xf]
        %v1820 = vld [vmem:[%s1 + $0x20] sm:$0xf]
        %v1821 = vld [vmem:[%s1 + $0x24] sm:$0xf]
        %v1822 = vld [vmem:[%s1 + $0x28] sm:$0xf]
        %v1823 = vld [vmem:[%s1 + $0x2c] sm:$0xf]
        %v1824 = vld [vmem:[%s1 + $0x30] sm:$0xf]
        %v1825 = vld [vmem:[%s1 + $0x34] sm:$0xf]
        %v1826 = vld [vmem:[%s1 + $0x38] sm:$0xf]
        %v1827 = vld [vmem:[%s1 + $0x3c] sm:$0xf]
        %v1828 = vld [vmem:[%s1 + $0x40] sm:$0xf]
        %v1829 = vld [vmem:[%s1 + $0x44] sm:$0xf]
        %v1830 = vld [vmem:[%s1 + $0x48] sm:$0xf]
        %v1831 = vld [vmem:[%s1 + $0x4c] sm:$0xf]
        %v1832 = vld [vmem:[%s1 + $0x50] sm:$0xf]
        %v1833 = vld [vmem:[%s1 + $0x54] sm:$0xf]
        %v1834 = vld [vmem:[%s1 + $0x58] sm:$0xf]
        %v1835 = vld [vmem:[%s1 + $0x5c] sm:$0xf]
        %v1836 = vld [vmem:[%s1 + $0x60] sm:$0xf]
        %v1837 = vld [vmem:[%s1 + $0x64] sm:$0xf]
        %v1838 = vld [vmem:[%s1 + $0x68] sm:$0xf]
        %v1839 = vld [vmem:[%s1 + $0x6c] sm:$0xf]
        %v1840 = vld [vmem:[%s1 + $0x70] sm:$0xf]
        %v1841 = vld [vmem:[%s1 + $0x74] sm:$0xf]
        %v1842 = vld [vmem:[%s1 + $0x78] sm:$0xf]
        %v1843 = vld [vmem:[%s1 + $0x7c] sm:$0xf]
        %v1844 = vld [vmem:[%s1 + $0x80] sm:$0xf]
        %v1845 = vld [vmem:[%s1 + $0x84] sm:$0xf]
        %v1846 = vld [vmem:[%s1 + $0x88] sm:$0xf]
        %v1847 = vld [vmem:[%s1 + $0x8c] sm:$0xf]
        %v1848 = vld [vmem:[%s1 + $0x90] sm:$0xf]
        %v1849 = vld [vmem:[%s1 + $0x94] sm:$0xf]
        %v1850 = vld [vmem:[%s1 + $0x98] sm:$0xf]
        %v1851 = vld [vmem:[%s1 + $0x9c] sm:$0xf]
        %v1852 = vld [vmem:[%s1 + $0xa0] sm:$0xf]
        %v1853 = vld [vmem:[%s1 + $0xa4] sm:$0xf]
        %v1854 = vld [vmem:[%s1 + $0xa8] sm:$0xf]
        %v1855 = vld [vmem:[%s1 + $0xac] sm:$0xf]
        %v1856 = vld [vmem:[%s1 + $0xb0] sm:$0xf]
        %v1857 = vld [vmem:[%s1 + $0xb4] sm:$0xf]
        %v1858 = vld [vmem:[%s1 + $0xb8] sm:$0xf]
        %v1859 = vld [vmem:[%s1 + $0xbc] sm:$0xf]
        %v1860 = vld [vmem:[%s1 + $0xc0] sm:$0xf]
        %v1861 = vld [vmem:[%s1 + $0xc4] sm:$0xf]
        %v1862 = vld [vmem:[%s1 + $0xc8] sm:$0xf]
        %v1863 = vld [vmem:[%s1 + $0xcc] sm:$0xf]
        %v1864 = vld [vmem:[%s1 + $0xd0] sm:$0xf]
        %v1865 = vld [vmem:[%s1 + $0xd4] sm:$0xf]
        %v1866 = vld [vmem:[%s1 + $0xd8] sm:$0xf]
        %v1867 = vld [vmem:[%s1 + $0xdc] sm:$0xf]
        %v1868 = vld [vmem:[%s1 + $0xe0] sm:$0xf]
        %v1869 = vld [vmem:[%s1 + $0xe4] sm:$0xf]
        %v1870 = vld [vmem:[%s1 + $0xe8] sm:$0xf]
        %v1871 = vld [vmem:[%s1 + $0xec] sm:$0xf]
        %v1872 = vld [vmem:[%s1 + $0xf0] sm:$0xf]
        %v1873 = vld [vmem:[%s1 + $0xf4] sm:$0xf]
        %v1874 = vld [vmem:[%s1 + $0xf8] sm:$0xf]
        %v1875 = vld [vmem:[%s1 + $0xfc] sm:$0xf]
        %v1876 = vld [vmem:[%s1 + $0x100] sm:$0xf]
        %v1877 = vld [vmem:[%s1 + $0x104] sm:$0xf]
        %v1878 = vld [vmem:[%s1 + $0x108] sm:$0xf]
        %v1879 = vld [vmem:[%s1 + $0x10c] sm:$0xf]
        %v1880 = vld [vmem:[%s1 + $0x110] sm:$0xf]
        %v1881 = vld [vmem:[%s1 + $0x114] sm:$0xf]
        %v1882 = vld [vmem:[%s1 + $0x118] sm:$0xf]
        %v1883 = vld [vmem:[%s1 + $0x11c] sm:$0xf]
        %v1884 = vld [vmem:[%s1 + $0x120] sm:$0xf]
        %v1885 = vld [vmem:[%s1 + $0x124] sm:$0xf]
        %v1886 = vld [vmem:[%s1 + $0x128] sm:$0xf]
        %v1887 = vld [vmem:[%s1 + $0x12c] sm:$0xf]
        %v1888 = vld [vmem:[%s1 + $0x130] sm:$0xf]
        %v1889 = vld [vmem:[%s1 + $0x134] sm:$0xf]
        %v1890 = vld [vmem:[%s1 + $0x138] sm:$0xf]
        %v1891 = vld [vmem:[%s1 + $0x13c] sm:$0xf]
        %v1892 = vld [vmem:[%s1 + $0x140] sm:$0xf]
        %v1893 = vld [vmem:[%s1 + $0x144] sm:$0xf]
        %v1894 = vld [vmem:[%s1 + $0x148] sm:$0xf]
        %v1895 = vld [vmem:[%s1 + $0x14c] sm:$0xf]
        %v1896 = vld [vmem:[%s1 + $0x150] sm:$0xf]
        %v1897 = vld [vmem:[%s1 + $0x154] sm:$0xf]
        %v1898 = vld [vmem:[%s1 + $0x158] sm:$0xf]
        %v1899 = vld [vmem:[%s1 + $0x15c] sm:$0xf]
        %v1900 = vld [vmem:[%s1 + $0x160] sm:$0xf]
        %v1901 = vld [vmem:[%s1 + $0x164] sm:$0xf]
        %v1902 = vld [vmem:[%s1 + $0x168] sm:$0xf]
        %v1903 = vld [vmem:[%s1 + $0x16c] sm:$0xf]
        %v1904 = vld [vmem:[%s1 + $0x170] sm:$0xf]
        %v1905 = vld [vmem:[%s1 + $0x174] sm:$0xf]
        %v1906 = vld [vmem:[%s1 + $0x178] sm:$0xf]
        %v1907 = vld [vmem:[%s1 + $0x17c] sm:$0xf]
        %v1908 = vld [vmem:[%s1 + $0x180] sm:$0xf]
        %v1909 = vld [vmem:[%s1 + $0x184] sm:$0xf]
        %v1910 = vld [vmem:[%s1 + $0x188] sm:$0xf]
        %v1911 = vld [vmem:[%s1 + $0x18c] sm:$0xf]
        %v1912 = vld [vmem:[%s1 + $0x190] sm:$0xf]
        %v1913 = vld [vmem:[%s1 + $0x194] sm:$0xf]
        %v1914 = vld [vmem:[%s1 + $0x198] sm:$0xf]
        %v1915 = vld [vmem:[%s1 + $0x19c] sm:$0xf]
        %v1916 = vld [vmem:[%s1 + $0x1a0] sm:$0xf]
        %v1917 = vld [vmem:[%s1 + $0x1a4] sm:$0xf]
        %v1918 = vld [vmem:[%s1 + $0x1a8] sm:$0xf]
        %v1919 = vld [vmem:[%s1 + $0x1ac] sm:$0xf]
        %v1920 = vld [vmem:[%s1 + $0x1b0] sm:$0xf]
        %v1921 = vld [vmem:[%s1 + $0x1b4] sm:$0xf]
        %v1922 = vld [vmem:[%s1 + $0x1b8] sm:$0xf]
        %v1923 = vld [vmem:[%s1 + $0x1bc] sm:$0xf]
        %v1924 = vld [vmem:[%s1 + $0x1c0] sm:$0xf]
        %v1925 = vld [vmem:[%s1 + $0x1c4] sm:$0xf]
        %v1926 = vld [vmem:[%s1 + $0x1c8] sm:$0xf]
        %v1927 = vld [vmem:[%s1 + $0x1cc] sm:$0xf]
        %v1928 = vld [vmem:[%s1 + $0x1d0] sm:$0xf]
        %v1929 = vld [vmem:[%s1 + $0x1d4] sm:$0xf]
        %v1930 = vld [vmem:[%s1 + $0x1d8] sm:$0xf]
        %v1931 = vld [vmem:[%s1 + $0x1dc] sm:$0xf]
        %v1932 = vld [vmem:[%s1 + $0x1e0] sm:$0xf]
        %v1933 = vld [vmem:[%s1 + $0x1e4] sm:$0xf]
        %v1934 = vld [vmem:[%s1 + $0x1e8] sm:$0xf]
        %v1935 = vld [vmem:[%s1 + $0x1ec] sm:$0xf]
        %v1936 = vld [vmem:[%s1 + $0x1f0] sm:$0xf]
        %v1937 = vld [vmem:[%s1 + $0x1f4] sm:$0xf]
        %v1938 = vld [vmem:[%s1 + $0x1f8] sm:$0xf]
        %v1939 = vld [vmem:[%s1 + $0x1fc] sm:$0xf]
        %v1940 = vld [vmem:[%s1 + $0x200] sm:$0xf]
        %v1941 = vld [vmem:[%s1 + $0x204] sm:$0xf]
        %v1942 = vld [vmem:[%s1 + $0x208] sm:$0xf]
        %v1943 = vld [vmem:[%s1 + $0x20c] sm:$0xf]
        %v1944 = vld [vmem:[%s1 + $0x210] sm:$0xf]
        %v1945 = vld [vmem:[%s1 + $0x214] sm:$0xf]
        %v1946 = vld [vmem:[%s1 + $0x218] sm:$0xf]
        %v1947 = vld [vmem:[%s1 + $0x21c] sm:$0xf]
        %v1948 = vld [vmem:[%s1 + $0x220] sm:$0xf]
        %v1949 = vld [vmem:[%s1 + $0x224] sm:$0xf]
        %v1950 = vld [vmem:[%s1 + $0x228] sm:$0xf]
        %v1951 = vld [vmem:[%s1 + $0x22c] sm:$0xf]
        %v1952 = vld [vmem:[%s1 + $0x230] sm:$0xf]
        %v1953 = vld [vmem:[%s1 + $0x234] sm:$0xf]
        %v1954 = vld [vmem:[%s1 + $0x238] sm:$0xf]
        %v1955 = vld [vmem:[%s1 + $0x23c] sm:$0xf]
        %v1956 = vld [vmem:[%s2] sm:$0x1]
        %v1958 = vlaneseq
        %v1959 = vshrl.u32 %v1958, 7
        %v1960 = vsub.s32 0, %v1959
        %v1961 = vrot.slane %v1956, %v1960
        %v2107 = vunpack.c.l.b16 %v1812
        %v2108 = vunpack.c.l.b16 %v1813
        %v2109 = vunpack.c.l.b16 %v1814
        %v2110 = vunpack.c.l.b16 %v1815
        %v2111 = vunpack.c.l.b16 %v1816
        %v2112 = vunpack.c.l.b16 %v1817
        %v2113 = vunpack.c.l.b16 %v1818
        %v2114 = vunpack.c.l.b16 %v1819
        %v2115 = vunpack.c.l.b16 %v1820
        %v2116 = vunpack.c.l.b16 %v1821
        %v2117 = vunpack.c.l.b16 %v1822
        %v2118 = vunpack.c.l.b16 %v1823
        %v2119 = vunpack.c.l.b16 %v1824
        %v2120 = vunpack.c.l.b16 %v1825
        %v2121 = vunpack.c.l.b16 %v1826
        %v2122 = vunpack.c.l.b16 %v1827
        %v2123 = vunpack.c.l.b16 %v1828
        %v2124 = vunpack.c.l.b16 %v1829
        %v2125 = vunpack.c.l.b16 %v1830
        %v2126 = vunpack.c.l.b16 %v1831
        %v2127 = vunpack.c.l.b16 %v1832
        %v2128 = vunpack.c.l.b16 %v1833
        %v2129 = vunpack.c.l.b16 %v1834
        %v2130 = vunpack.c.l.b16 %v1835
        %v2131 = vunpack.c.l.b16 %v1836
        %v2132 = vunpack.c.l.b16 %v1837
        %v2133 = vunpack.c.l.b16 %v1838
        %v2134 = vunpack.c.l.b16 %v1839
        %v2135 = vunpack.c.l.b16 %v1840
        %v2136 = vunpack.c.l.b16 %v1841
        %v2137 = vunpack.c.l.b16 %v1842
        %v2138 = vunpack.c.l.b16 %v1843
        %v2139 = vunpack.c.l.b16 %v1844
        %v2140 = vunpack.c.l.b16 %v1845
        %v2141 = vunpack.c.l.b16 %v1846
        %v2142 = vunpack.c.l.b16 %v1847
        %v2143 = vunpack.c.l.b16 %v1848
        %v2144 = vunpack.c.l.b16 %v1849
        %v2145 = vunpack.c.l.b16 %v1850
        %v2146 = vunpack.c.l.b16 %v1851
        %v2147 = vunpack.c.l.b16 %v1852
        %v2148 = vunpack.c.l.b16 %v1853
        %v2149 = vunpack.c.l.b16 %v1854
        %v2150 = vunpack.c.l.b16 %v1855
        %v2151 = vunpack.c.l.b16 %v1856
        %v2152 = vunpack.c.l.b16 %v1857
        %v2153 = vunpack.c.l.b16 %v1858
        %v2154 = vunpack.c.l.b16 %v1859
        %v2155 = vunpack.c.l.b16 %v1860
        %v2156 = vunpack.c.l.b16 %v1861
        %v2157 = vunpack.c.l.b16 %v1862
        %v2158 = vunpack.c.l.b16 %v1863
        %v2159 = vunpack.c.l.b16 %v1864
        %v2160 = vunpack.c.l.b16 %v1865
        %v2161 = vunpack.c.l.b16 %v1866
        %v2162 = vunpack.c.l.b16 %v1867
        %v2163 = vunpack.c.l.b16 %v1868
        %v2164 = vunpack.c.l.b16 %v1869
        %v2165 = vunpack.c.l.b16 %v1870
        %v2166 = vunpack.c.l.b16 %v1871
        %v2167 = vunpack.c.l.b16 %v1872
        %v2168 = vunpack.c.l.b16 %v1873
        %v2169 = vunpack.c.l.b16 %v1874
        %v2170 = vunpack.c.l.b16 %v1875
        %v2171 = vunpack.c.l.b16 %v1876
        %v2172 = vunpack.c.l.b16 %v1877
        %v2173 = vunpack.c.l.b16 %v1878
        %v2174 = vunpack.c.l.b16 %v1879
        %v2175 = vunpack.c.l.b16 %v1880
        %v2176 = vunpack.c.l.b16 %v1881
        %v2177 = vunpack.c.l.b16 %v1882
        %v2178 = vunpack.c.l.b16 %v1883
        %v2179 = vunpack.c.l.b16 %v1884
        %v2180 = vunpack.c.l.b16 %v1885
        %v2181 = vunpack.c.l.b16 %v1886
        %v2182 = vunpack.c.l.b16 %v1887
        %v2183 = vunpack.c.l.b16 %v1888
        %v2184 = vunpack.c.l.b16 %v1889
        %v2185 = vunpack.c.l.b16 %v1890
        %v2186 = vunpack.c.l.b16 %v1891
        %v2187 = vunpack.c.l.b16 %v1892
        %v2188 = vunpack.c.l.b16 %v1893
        %v2189 = vunpack.c.l.b16 %v1894
        %v2190 = vunpack.c.l.b16 %v1895
        %v2191 = vunpack.c.l.b16 %v1896
        %v2192 = vunpack.c.l.b16 %v1897
        %v2193 = vunpack.c.l.b16 %v1898
        %v2194 = vunpack.c.l.b16 %v1899
        %v2195 = vunpack.c.l.b16 %v1900
        %v2196 = vunpack.c.l.b16 %v1901
        %v2197 = vunpack.c.l.b16 %v1902
        %v2198 = vunpack.c.l.b16 %v1903
        %v2199 = vunpack.c.l.b16 %v1904
        %v2200 = vunpack.c.l.b16 %v1905
        %v2201 = vunpack.c.l.b16 %v1906
        %v2202 = vunpack.c.l.b16 %v1907
        %v2203 = vunpack.c.l.b16 %v1908
        %v2204 = vunpack.c.l.b16 %v1909
        %v2205 = vunpack.c.l.b16 %v1910
        %v2206 = vunpack.c.l.b16 %v1911
        %v2207 = vunpack.c.l.b16 %v1912
        %v2208 = vunpack.c.l.b16 %v1913
        %v2209 = vunpack.c.l.b16 %v1914
        %v2210 = vunpack.c.l.b16 %v1915
        %v2211 = vunpack.c.l.b16 %v1916
        %v2212 = vunpack.c.l.b16 %v1917
        %v2213 = vunpack.c.l.b16 %v1918
        %v2214 = vunpack.c.l.b16 %v1919
        %v2215 = vunpack.c.l.b16 %v1920
        %v2216 = vunpack.c.l.b16 %v1921
        %v2217 = vunpack.c.l.b16 %v1922
        %v2218 = vunpack.c.l.b16 %v1923
        %v2219 = vunpack.c.l.b16 %v1924
        %v2220 = vunpack.c.l.b16 %v1925
        %v2221 = vunpack.c.l.b16 %v1926
        %v2222 = vunpack.c.l.b16 %v1927
        %v2223 = vunpack.c.l.b16 %v1928
        %v2224 = vunpack.c.l.b16 %v1929
        %v2225 = vunpack.c.l.b16 %v1930
        %v2226 = vunpack.c.l.b16 %v1931
        %v2227 = vunpack.c.l.b16 %v1932
        %v2228 = vunpack.c.l.b16 %v1933
        %v2229 = vunpack.c.l.b16 %v1934
        %v2230 = vunpack.c.l.b16 %v1935
        %v2231 = vunpack.c.l.b16 %v1936
        %v2232 = vunpack.c.l.b16 %v1937
        %v2233 = vunpack.c.l.b16 %v1938
        %v2234 = vunpack.c.l.b16 %v1939
        %v2235 = vunpack.c.l.b16 %v1940
        %v2236 = vunpack.c.l.b16 %v1941
        %v2237 = vunpack.c.l.b16 %v1942
        %v2238 = vunpack.c.l.b16 %v1943
        %v2239 = vunpack.c.l.b16 %v1944
        %v2240 = vunpack.c.l.b16 %v1945
        %v2241 = vunpack.c.l.b16 %v1946
        %v2242 = vunpack.c.l.b16 %v1947
        %v2243 = vunpack.c.l.b16 %v1948
        %v2244 = vunpack.c.l.b16 %v1949
        %v2245 = vunpack.c.l.b16 %v1950
        %v2246 = vunpack.c.l.b16 %v1951
        %v2247 = vunpack.c.l.b16 %v1952
        %v2248 = vunpack.c.l.b16 %v1953
        %v2249 = vunpack.c.l.b16 %v1954
        %v2250 = vunpack.c.l.b16 %v1955
        %v2251 = vpack.c.b16 %v2108, %v2107
        %v2252 = vpack.c.b16 %v2110, %v2109
        %v2253 = vpack.c.b16 %v2112, %v2111
        %v2254 = vpack.c.b16 %v2114, %v2113
        %v2255 = vpack.c.b16 %v2116, %v2115
        %v2256 = vpack.c.b16 %v2118, %v2117
        %v2257 = vpack.c.b16 %v2120, %v2119
        %v2258 = vpack.c.b16 %v2122, %v2121
        %v2259 = vpack.c.b16 %v2124, %v2123
        %v2260 = vpack.c.b16 %v2126, %v2125
        %v2261 = vpack.c.b16 %v2128, %v2127
        %v2262 = vpack.c.b16 %v2130, %v2129
        %v2263 = vpack.c.b16 %v2132, %v2131
        %v2264 = vpack.c.b16 %v2134, %v2133
        %v2265 = vpack.c.b16 %v2136, %v2135
        %v2266 = vpack.c.b16 %v2138, %v2137
        %v2267 = vpack.c.b16 %v2140, %v2139
        %v2268 = vpack.c.b16 %v2142, %v2141
        %v2269 = vpack.c.b16 %v2144, %v2143
        %v2270 = vpack.c.b16 %v2146, %v2145
        %v2271 = vpack.c.b16 %v2148, %v2147
        %v2272 = vpack.c.b16 %v2150, %v2149
        %v2273 = vpack.c.b16 %v2152, %v2151
        %v2274 = vpack.c.b16 %v2154, %v2153
        %v2275 = vpack.c.b16 %v2156, %v2155
        %v2276 = vpack.c.b16 %v2158, %v2157
        %v2277 = vpack.c.b16 %v2160, %v2159
        %v2278 = vpack.c.b16 %v2162, %v2161
        %v2279 = vpack.c.b16 %v2164, %v2163
        %v2280 = vpack.c.b16 %v2166, %v2165
        %v2281 = vpack.c.b16 %v2168, %v2167
        %v2282 = vpack.c.b16 %v2170, %v2169
        %v2283 = vpack.c.b16 %v2172, %v2171
        %v2284 = vpack.c.b16 %v2174, %v2173
        %v2285 = vpack.c.b16 %v2176, %v2175
        %v2286 = vpack.c.b16 %v2178, %v2177
        %v2287 = vpack.c.b16 %v2180, %v2179
        %v2288 = vpack.c.b16 %v2182, %v2181
        %v2289 = vpack.c.b16 %v2184, %v2183
        %v2290 = vpack.c.b16 %v2186, %v2185
        %v2291 = vpack.c.b16 %v2188, %v2187
        %v2292 = vpack.c.b16 %v2190, %v2189
        %v2293 = vpack.c.b16 %v2192, %v2191
        %v2294 = vpack.c.b16 %v2194, %v2193
        %v2295 = vpack.c.b16 %v2196, %v2195
        %v2296 = vpack.c.b16 %v2198, %v2197
        %v2297 = vpack.c.b16 %v2200, %v2199
        %v2298 = vpack.c.b16 %v2202, %v2201
        %v2299 = vpack.c.b16 %v2204, %v2203
        %v2300 = vpack.c.b16 %v2206, %v2205
        %v2301 = vpack.c.b16 %v2208, %v2207
        %v2302 = vpack.c.b16 %v2210, %v2209
        %v2303 = vpack.c.b16 %v2212, %v2211
        %v2304 = vpack.c.b16 %v2214, %v2213
        %v2305 = vpack.c.b16 %v2216, %v2215
        %v2306 = vpack.c.b16 %v2218, %v2217
        %v2307 = vpack.c.b16 %v2220, %v2219
        %v2308 = vpack.c.b16 %v2222, %v2221
        %v2309 = vpack.c.b16 %v2224, %v2223
        %v2310 = vpack.c.b16 %v2226, %v2225
        %v2311 = vpack.c.b16 %v2228, %v2227
        %v2312 = vpack.c.b16 %v2230, %v2229
        %v2313 = vpack.c.b16 %v2232, %v2231
        %v2314 = vpack.c.b16 %v2234, %v2233
        %v2315 = vpack.c.b16 %v2236, %v2235
        %v2316 = vpack.c.b16 %v2238, %v2237
        %v2317 = vpack.c.b16 %v2240, %v2239
        %v2318 = vpack.c.b16 %v2242, %v2241
        %v2319 = vpack.c.b16 %v2244, %v2243
        %v2320 = vpack.c.b16 %v2246, %v2245
        %v2321 = vpack.c.b16 %v2248, %v2247
        %v2322 = vpack.c.b16 %v2250, %v2249
        %2395 = vmatprep.subr.bf16.mxu0 0
        %2396 = vmatpush1.bf16.msra.mxu0 %v2251
        %2397 = vmatprep.subr.bf16.mxu0 0
        %2398 = vmatpush1.bf16.msra.mxu0 %v2252
        %2399 = vmatprep.subr.bf16.mxu0 0
        %2400 = vmatpush1.bf16.msra.mxu0 %v2253
        %2401 = vmatprep.subr.bf16.mxu0 0
        %2402 = vmatpush1.bf16.msra.mxu0 %v2254
        %2403 = vmatprep.subr.bf16.mxu0 0
        %2404 = vmatpush1.bf16.msra.mxu0 %v2255
        %2405 = vmatprep.subr.bf16.mxu0 0
        %2406 = vmatpush1.bf16.msra.mxu0 %v2256
        %2407 = vmatprep.subr.bf16.mxu0 0
        %2408 = vmatpush1.bf16.msra.mxu0 %v2257
        %2409 = vmatprep.subr.bf16.mxu0 0
        %2410 = vmatpush1.bf16.msra.mxu0 %v2258
        %2411 = vmatprep.subr.bf16.mxu0 0
        %2412 = vmatpush1.bf16.msra.mxu0 %v2259
        %2413 = vmatprep.subr.bf16.mxu0 0
        %2414 = vmatpush1.bf16.msra.mxu0 %v2260
        %2415 = vmatprep.subr.bf16.mxu0 0
        %2416 = vmatpush1.bf16.msra.mxu0 %v2261
        %2417 = vmatprep.subr.bf16.mxu0 0
        %2418 = vmatpush1.bf16.msra.mxu0 %v2262
        %2419 = vmatprep.subr.bf16.mxu0 0
        %2420 = vmatpush1.bf16.msra.mxu0 %v2263
        %2421 = vmatprep.subr.bf16.mxu0 0
        %2422 = vmatpush1.bf16.msra.mxu0 %v2264
        %2423 = vmatprep.subr.bf16.mxu0 0
        %2424 = vmatpush1.bf16.msra.mxu0 %v2265
        %2425 = vmatprep.subr.bf16.mxu0 0
        %2426 = vmatpush1.bf16.msra.mxu0 %v2266
        %2427 = vmatprep.mubr.bf16.mxu0 %v574
        %2428 = vmatmul.mubr.bf16.gmra.mrb[0].mxu0 %v482
        %v2429 = vpop.f32.mrb[0].mxu0
        %v2430 = vadd.f32 %v1961, %v2429
        %v2431 = vpop.f32.mrb[0].mxu0
        %v2432 = vpop.f32.mrb[0].mxu0
        %v2433 = vadd.f32 %v1961, %v2432
        %v2434 = vpop.f32.mrb[0].mxu0
        %2435 = vmatprep.mubr.bf16.mxu0 %v586
        %2436 = vmatmul.mubr.bf16.gmra.mrb[0].mxu0 %v483
        %v2437 = vpop.f32.mrb[0].mxu0
        %v2438 = vadd.f32 %v1961, %v2437
        %v2439 = vpop.f32.mrb[0].mxu0
        %v2440 = vpop.f32.mrb[0].mxu0
        %v2441 = vadd.f32 %v1961, %v2440
        %v2442 = vpop.f32.mrb[0].mxu0
        %2443 = vmatprep.mubr.bf16.mxu0 %v598
        %2444 = vmatmul.mubr.bf16.gmra.mrb[0].mxu0 %v484
        %v2445 = vpop.f32.mrb[0].mxu0
        %v2446 = vadd.f32 %v1961, %v2445
        %v2447 = vpop.f32.mrb[0].mxu0
        %v2448 = vpop.f32.mrb[0].mxu0
        %v2449 = vadd.f32 %v1961, %v2448
        %v2450 = vpop.f32.mrb[0].mxu0
        %2451 = vmatprep.mubr.bf16.mxu0 %v610
        %2452 = vmatmul.mubr.bf16.gmra.mrb[0].mxu0 %v485
        %v2453 = vpop.f32.mrb[0].mxu0
        %v2454 = vadd.f32 %v1961, %v2453
        %v2455 = vpop.f32.mrb[0].mxu0
        %v2456 = vpop.f32.mrb[0].mxu0
        %v2457 = vadd.f32 %v1961, %v2456
        %v2458 = vpop.f32.mrb[0].mxu0
        %2459 = vmatprep.mubr.bf16.mxu0 %v622
        %2460 = vmatmul.mubr.bf16.gmra.mrb[0].mxu0 %v486
        %v2461 = vpop.f32.mrb[0].mxu0
        %v2462 = vadd.f32 %v1961, %v2461
        %v2463 = vpop.f32.mrb[0].mxu0
        %v2464 = vpop.f32.mrb[0].mxu0
        %v2465 = vadd.f32 %v1961, %v2464
        %v2466 = vpop.f32.mrb[0].mxu0
        %2467 = vmatprep.mubr.bf16.mxu0 %v634
        %2468 = vmatmul.mubr.bf16.gmra.mrb[0].mxu0 %v487
        %v2469 = vpop.f32.mrb[0].mxu0
        %v2470 = vadd.f32 %v1961, %v2469
        %v2471 = vpop.f32.mrb[0].mxu0
        %v2472 = vpop.f32.mrb[0].mxu0
        %v2473 = vadd.f32 %v1961, %v2472
        %v2474 = vpop.f32.mrb[0].mxu0
        %2475 = vmatprep.mubr.bf16.mxu0 %v646
        %2476 = vmatmul.mubr.bf16.gmra.mrb[0].mxu0 %v488
        %v2477 = vpop.f32.mrb[0].mxu0
        %v2478 = vadd.f32 %v1961, %v2477
        %v2479 = vpop.f32.mrb[0].mxu0
        %v2480 = vpop.f32.mrb[0].mxu0
        %v2481 = vadd.f32 %v1961, %v2480
        %v2482 = vpop.f32.mrb[0].mxu0
        %2483 = vmatprep.mubr.bf16.mxu0 %v658
        %2484 = vmatmul.mubr.bf16.gmra.mrb[0].mxu0 %v489
        %v2485 = vpop.f32.mrb[0].mxu0
        %v2486 = vadd.f32 %v1961, %v2485
        %v2487 = vpop.f32.mrb[0].mxu0
        %v2488 = vpop.f32.mrb[0].mxu0
        %v2489 = vadd.f32 %v1961, %v2488
        %v2490 = vpop.f32.mrb[0].mxu0
        %2491 = vmatprep.mubr.bf16.mxu0 %v670
        %2492 = vmatmul.mubr.bf16.gmra.mrb[0].mxu0 %v490
        %v2493 = vpop.f32.mrb[0].mxu0
        %v2494 = vadd.f32 %v1961, %v2493
        %v2495 = vpop.f32.mrb[0].mxu0
        %v2496 = vpop.f32.mrb[0].mxu0
        %v2497 = vadd.f32 %v1961, %v2496
        %v2498 = vpop.f32.mrb[0].mxu0
        %2499 = vmatprep.mubr.bf16.mxu0 %v682
        %2500 = vmatmul.mubr.bf16.gmra.mrb[0].mxu0 %v491
        %v2501 = vpop.f32.mrb[0].mxu0
        %v2502 = vadd.f32 %v1961, %v2501
        %v2503 = vpop.f32.mrb[0].mxu0
        %v2504 = vpop.f32.mrb[0].mxu0
        %v2505 = vadd.f32 %v1961, %v2504
        %v2506 = vpop.f32.mrb[0].mxu0
        %2507 = vmatprep.mubr.bf16.mxu0 %v694
        %2508 = vmatmul.mubr.bf16.gmra.mrb[0].mxu0 %v492
        %v2509 = vpop.f32.mrb[0].mxu0
        %v2510 = vadd.f32 %v1961, %v2509
        %v2511 = vpop.f32.mrb[0].mxu0
        %v2512 = vpop.f32.mrb[0].mxu0
        %v2513 = vadd.f32 %v1961, %v2512
        %v2514 = vpop.f32.mrb[0].mxu0
        %2515 = vmatprep.mubr.bf16.mxu0 %v706
        %2516 = vmatmul.mubr.bf16.gmra.mrb[0].mxu0 %v493
        %v2517 = vpop.f32.mrb[0].mxu0
        %v2518 = vadd.f32 %v1961, %v2517
        %v2519 = vpop.f32.mrb[0].mxu0
        %v2520 = vpop.f32.mrb[0].mxu0
        %v2521 = vadd.f32 %v1961, %v2520
        %v2522 = vpop.f32.mrb[0].mxu0
        %2523 = vmatprep.mubr.bf16.mxu0 %v718
        %2524 = vmatmul.mubr.bf16.gmra.mrb[0].mxu0 %v494
        %v2525 = vpop.f32.mrb[0].mxu0
        %v2526 = vadd.f32 %v1961, %v2525
        %v2527 = vpop.f32.mrb[0].mxu0
        %v2528 = vpop.f32.mrb[0].mxu0
        %v2529 = vadd.f32 %v1961, %v2528
        %v2530 = vpop.f32.mrb[0].mxu0
        %2531 = vmatprep.mubr.bf16.mxu0 %v730
        %2532 = vmatmul.mubr.bf16.gmra.mrb[0].mxu0 %v495
        %v2533 = vpop.f32.mrb[0].mxu0
        %v2534 = vadd.f32 %v1961, %v2533
        %v2535 = vpop.f32.mrb[0].mxu0
        %v2536 = vpop.f32.mrb[0].mxu0
        %v2537 = vadd.f32 %v1961, %v2536
        %v2538 = vpop.f32.mrb[0].mxu0
        %2539 = vmatprep.mubr.bf16.mxu0 %v742
        %2540 = vmatmul.mubr.bf16.gmra.mrb[0].mxu0 %v496
        %v2541 = vpop.f32.mrb[0].mxu0
        %v2542 = vadd.f32 %v1961, %v2541
        %v2543 = vpop.f32.mrb[0].mxu0
        %v2544 = vpop.f32.mrb[0].mxu0
        %v2545 = vadd.f32 %v1961, %v2544
        %v2546 = vpop.f32.mrb[0].mxu0
        %2547 = vmatprep.mubr.bf16.mxu0 %v754
        %2548 = vmatmul.mubr.bf16.gmra.mrb[0].mxu0 %v497
        %v2549 = vpop.f32.mrb[0].mxu0
        %v2550 = vadd.f32 %v1961, %v2549
        %v2551 = vpop.f32.mrb[0].mxu0
        %v2552 = vpop.f32.mrb[0].mxu0
        %v2553 = vadd.f32 %v1961, %v2552
        %v2554 = vpop.f32.mrb[0].mxu0
        %2555 = vdwg.mxu0
        %2556 = vmatprep.subr.bf16.mxu0 0
        %2557 = vmatpush1.bf16.msra.mxu0 %v2267
        %2558 = vmatprep.subr.bf16.mxu0 0
        %2559 = vmatpush1.bf16.msra.mxu0 %v2268
        %2560 = vmatprep.subr.bf16.mxu0 0
        %2561 = vmatpush1.bf16.msra.mxu0 %v2269
        %2562 = vmatprep.subr.bf16.mxu0 0
        %2563 = vmatpush1.bf16.msra.mxu0 %v2270
        %2564 = vmatprep.subr.bf16.mxu0 0
        %2565 = vmatpush1.bf16.msra.mxu0 %v2271
        %2566 = vmatprep.subr.bf16.mxu0 0
        %2567 = vmatpush1.bf16.msra.mxu0 %v2272
        %2568 = vmatprep.subr.bf16.mxu0 0
        %2569 = vmatpush1.bf16.msra.mxu0 %v2273
        %2570 = vmatprep.subr.bf16.mxu0 0
        %2571 = vmatpush1.bf16.msra.mxu0 %v2274
        %2572 = vmatprep.subr.bf16.mxu0 0
        %2573 = vmatpush1.bf16.msra.mxu0 %v2275
        %2574 = vmatprep.subr.bf16.mxu0 0
        %2575 = vmatpush1.bf16.msra.mxu0 %v2276
        %2576 = vmatprep.subr.bf16.mxu0 0
        %2577 = vmatpush1.bf16.msra.mxu0 %v2277
        %2578 = vmatprep.subr.bf16.mxu0 0
        %2579 = vmatpush1.bf16.msra.mxu0 %v2278
        %2580 = vmatprep.subr.bf16.mxu0 0
        %2581 = vmatpush1.bf16.msra.mxu0 %v2279
        %2582 = vmatprep.subr.bf16.mxu0 0
        %2583 = vmatpush1.bf16.msra.mxu0 %v2280
        %2584 = vmatprep.subr.bf16.mxu0 0
        %2585 = vmatpush1.bf16.msra.mxu0 %v2281
        %2586 = vmatprep.subr.bf16.mxu0 0
        %2587 = vmatpush1.bf16.msra.mxu0 %v2282
        %2588 = vmatprep.mubr.bf16.mxu0 %v948
        %2589 = vmatmul.mubr.bf16.gmra.mrb[0].mxu0 %v822
        %v2590 = vpop.f32.mrb[0].mxu0
        %v2591 = vadd.f32 %v2430, %v2590
        %v2592 = vpop.f32.mrb[0].mxu0
        %v2593 = vpop.f32.mrb[0].mxu0
        %v2594 = vadd.f32 %v2433, %v2593
        %v2595 = vpop.f32.mrb[0].mxu0
        %2596 = vmatprep.mubr.bf16.mxu0 %v949
        %2597 = vmatmul.mubr.bf16.gmra.mrb[0].mxu0 %v825
        %v2598 = vpop.f32.mrb[0].mxu0
        %v2599 = vadd.f32 %v2438, %v2598
        %v2600 = vpop.f32.mrb[0].mxu0
        %v2601 = vpop.f32.mrb[0].mxu0
        %v2602 = vadd.f32 %v2441, %v2601
        %v2603 = vpop.f32.mrb[0].mxu0
        %2604 = vmatprep.mubr.bf16.mxu0 %v950
        %2605 = vmatmul.mubr.bf16.gmra.mrb[0].mxu0 %v828
        %v2606 = vpop.f32.mrb[0].mxu0
        %v2607 = vadd.f32 %v2446, %v2606
        %v2608 = vpop.f32.mrb[0].mxu0
        %v2609 = vpop.f32.mrb[0].mxu0
        %v2610 = vadd.f32 %v2449, %v2609
        %v2611 = vpop.f32.mrb[0].mxu0
        %2612 = vmatprep.mubr.bf16.mxu0 %v951
        %2613 = vmatmul.mubr.bf16.gmra.mrb[0].mxu0 %v831
        %v2614 = vpop.f32.mrb[0].mxu0
        %v2615 = vadd.f32 %v2454, %v2614
        %v2616 = vpop.f32.mrb[0].mxu0
        %v2617 = vpop.f32.mrb[0].mxu0
        %v2618 = vadd.f32 %v2457, %v2617
        %v2619 = vpop.f32.mrb[0].mxu0
        %2620 = vmatprep.mubr.bf16.mxu0 %v952
        %2621 = vmatmul.mubr.bf16.gmra.mrb[0].mxu0 %v834
        %v2622 = vpop.f32.mrb[0].mxu0
        %v2623 = vadd.f32 %v2462, %v2622
        %v2624 = vpop.f32.mrb[0].mxu0
        %v2625 = vpop.f32.mrb[0].mxu0
        %v2626 = vadd.f32 %v2465, %v2625
        %v2627 = vpop.f32.mrb[0].mxu0
        %2628 = vmatprep.mubr.bf16.mxu0 %v953
        %2629 = vmatmul.mubr.bf16.gmra.mrb[0].mxu0 %v837
        %v2630 = vpop.f32.mrb[0].mxu0
        %v2631 = vadd.f32 %v2470, %v2630
        %v2632 = vpop.f32.mrb[0].mxu0
        %v2633 = vpop.f32.mrb[0].mxu0
        %v2634 = vadd.f32 %v2473, %v2633
        %v2635 = vpop.f32.mrb[0].mxu0
        %2636 = vmatprep.mubr.bf16.mxu0 %v954
        %2637 = vmatmul.mubr.bf16.gmra.mrb[0].mxu0 %v840
        %v2638 = vpop.f32.mrb[0].mxu0
        %v2639 = vadd.f32 %v2478, %v2638
        %v2640 = vpop.f32.mrb[0].mxu0
        %v2641 = vpop.f32.mrb[0].mxu0
        %v2642 = vadd.f32 %v2481, %v2641
        %v2643 = vpop.f32.mrb[0].mxu0
        %2644 = vmatprep.mubr.bf16.mxu0 %v955
        %2645 = vmatmul.mubr.bf16.gmra.mrb[0].mxu0 %v843
        %v2646 = vpop.f32.mrb[0].mxu0
        %v2647 = vadd.f32 %v2486, %v2646
        %v2648 = vpop.f32.mrb[0].mxu0
        %v2649 = vpop.f32.mrb[0].mxu0
        %v2650 = vadd.f32 %v2489, %v2649
        %v2651 = vpop.f32.mrb[0].mxu0
        %2652 = vmatprep.mubr.bf16.mxu0 %v956
        %2653 = vmatmul.mubr.bf16.gmra.mrb[0].mxu0 %v846
        %v2654 = vpop.f32.mrb[0].mxu0
        %v2655 = vadd.f32 %v2494, %v2654
        %v2656 = vpop.f32.mrb[0].mxu0
        %v2657 = vpop.f32.mrb[0].mxu0
        %v2658 = vadd.f32 %v2497, %v2657
        %v2659 = vpop.f32.mrb[0].mxu0
        %2660 = vmatprep.mubr.bf16.mxu0 %v957
        %2661 = vmatmul.mubr.bf16.gmra.mrb[0].mxu0 %v849
        %v2662 = vpop.f32.mrb[0].mxu0
        %v2663 = vadd.f32 %v2502, %v2662
        %v2664 = vpop.f32.mrb[0].mxu0
        %v2665 = vpop.f32.mrb[0].mxu0
        %v2666 = vadd.f32 %v2505, %v2665
        %v2667 = vpop.f32.mrb[0].mxu0
        %2668 = vmatprep.mubr.bf16.mxu0 %v958
        %2669 = vmatmul.mubr.bf16.gmra.mrb[0].mxu0 %v852
        %v2670 = vpop.f32.mrb[0].mxu0
        %v2671 = vadd.f32 %v2510, %v2670
        %v2672 = vpop.f32.mrb[0].mxu0
        %v2673 = vpop.f32.mrb[0].mxu0
        %v2674 = vadd.f32 %v2513, %v2673
        %v2675 = vpop.f32.mrb[0].mxu0
        %2676 = vmatprep.mubr.bf16.mxu0 %v959
        %2677 = vmatmul.mubr.bf16.gmra.mrb[0].mxu0 %v855
        %v2678 = vpop.f32.mrb[0].mxu0
        %v2679 = vadd.f32 %v2518, %v2678
        %v2680 = vpop.f32.mrb[0].mxu0
        %v2681 = vpop.f32.mrb[0].mxu0
        %v2682 = vadd.f32 %v2521, %v2681
        %v2683 = vpop.f32.mrb[0].mxu0
        %2684 = vmatprep.mubr.bf16.mxu0 %v960
        %2685 = vmatmul.mubr.bf16.gmra.mrb[0].mxu0 %v858
        %v2686 = vpop.f32.mrb[0].mxu0
        %v2687 = vadd.f32 %v2526, %v2686
        %v2688 = vpop.f32.mrb[0].mxu0
        %v2689 = vpop.f32.mrb[0].mxu0
        %v2690 = vadd.f32 %v2529, %v2689
        %v2691 = vpop.f32.mrb[0].mxu0
        %2692 = vmatprep.mubr.bf16.mxu0 %v961
        %2693 = vmatmul.mubr.bf16.gmra.mrb[0].mxu0 %v861
        %v2694 = vpop.f32.mrb[0].mxu0
        %v2695 = vadd.f32 %v2534, %v2694
        %v2696 = vpop.f32.mrb[0].mxu0
        %v2697 = vpop.f32.mrb[0].mxu0
        %v2698 = vadd.f32 %v2537, %v2697
        %v2699 = vpop.f32.mrb[0].mxu0
        %2700 = vmatprep.mubr.bf16.mxu0 %v962
        %2701 = vmatmul.mubr.bf16.gmra.mrb[0].mxu0 %v864
        %v2702 = vpop.f32.mrb[0].mxu0
        %v2703 = vadd.f32 %v2542, %v2702
        %v2704 = vpop.f32.mrb[0].mxu0
        %v2705 = vpop.f32.mrb[0].mxu0
        %v2706 = vadd.f32 %v2545, %v2705
        %v2707 = vpop.f32.mrb[0].mxu0
        %2708 = vmatprep.mubr.bf16.mxu0 %v963
        %2709 = vmatmul.mubr.bf16.gmra.mrb[0].mxu0 %v867
        %v2710 = vpop.f32.mrb[0].mxu0
        %v2711 = vadd.f32 %v2550, %v2710
        %v2712 = vpop.f32.mrb[0].mxu0
        %v2713 = vpop.f32.mrb[0].mxu0
        %v2714 = vadd.f32 %v2553, %v2713
        %v2715 = vpop.f32.mrb[0].mxu0
        %2716 = vdwg.mxu0
        %2717 = vmatprep.subr.bf16.mxu0 0
        %2718 = vmatpush1.bf16.msra.mxu0 %v2283
        %2719 = vmatprep.subr.bf16.mxu0 0
        %2720 = vmatpush1.bf16.msra.mxu0 %v2284
        %2721 = vmatprep.subr.bf16.mxu0 0
        %2722 = vmatpush1.bf16.msra.mxu0 %v2285
        %2723 = vmatprep.subr.bf16.mxu0 0
        %2724 = vmatpush1.bf16.msra.mxu0 %v2286
        %2725 = vmatprep.subr.bf16.mxu0 0
        %2726 = vmatpush1.bf16.msra.mxu0 %v2287
        %2727 = vmatprep.subr.bf16.mxu0 0
        %2728 = vmatpush1.bf16.msra.mxu0 %v2288
        %2729 = vmatprep.subr.bf16.mxu0 0
        %2730 = vmatpush1.bf16.msra.mxu0 %v2289
        %2731 = vmatprep.subr.bf16.mxu0 0
        %2732 = vmatpush1.bf16.msra.mxu0 %v2290
        %2733 = vmatprep.subr.bf16.mxu0 0
        %2734 = vmatpush1.bf16.msra.mxu0 %v2291
        %2735 = vmatprep.subr.bf16.mxu0 0
        %2736 = vmatpush1.bf16.msra.mxu0 %v2292
        %2737 = vmatprep.subr.bf16.mxu0 0
        %2738 = vmatpush1.bf16.msra.mxu0 %v2293
        %2739 = vmatprep.subr.bf16.mxu0 0
        %2740 = vmatpush1.bf16.msra.mxu0 %v2294
        %2741 = vmatprep.subr.bf16.mxu0 0
        %2742 = vmatpush1.bf16.msra.mxu0 %v2295
        %2743 = vmatprep.subr.bf16.mxu0 0
        %2744 = vmatpush1.bf16.msra.mxu0 %v2296
        %2745 = vmatprep.subr.bf16.mxu0 0
        %2746 = vmatpush1.bf16.msra.mxu0 %v2297
        %2747 = vmatprep.subr.bf16.mxu0 0
        %2748 = vmatpush1.bf16.msra.mxu0 %v2298
        %2749 = vmatprep.mubr.bf16.mxu0 %v1286
        %2750 = vmatmul.mubr.bf16.gmra.mrb[0].mxu0 %v1039
        %v2751 = vpop.f32.mrb[0].mxu0
        %v2752 = vadd.f32 %v2591, %v2751
        %v2753 = vpop.f32.mrb[0].mxu0
        %v2754 = vpop.f32.mrb[0].mxu0
        %v2755 = vadd.f32 %v2594, %v2754
        %v2756 = vpop.f32.mrb[0].mxu0
        %2757 = vmatprep.mubr.bf16.mxu0 %v1289
        %2758 = vmatmul.mubr.bf16.gmra.mrb[0].mxu0 %v1051
        %v2759 = vpop.f32.mrb[0].mxu0
        %v2760 = vadd.f32 %v2599, %v2759
        %v2761 = vpop.f32.mrb[0].mxu0
        %v2762 = vpop.f32.mrb[0].mxu0
        %v2763 = vadd.f32 %v2602, %v2762
        %v2764 = vpop.f32.mrb[0].mxu0
        %2765 = vmatprep.mubr.bf16.mxu0 %v1292
        %2766 = vmatmul.mubr.bf16.gmra.mrb[0].mxu0 %v1063
        %v2767 = vpop.f32.mrb[0].mxu0
        %v2768 = vadd.f32 %v2607, %v2767
        %v2769 = vpop.f32.mrb[0].mxu0
        %v2770 = vpop.f32.mrb[0].mxu0
        %v2771 = vadd.f32 %v2610, %v2770
        %v2772 = vpop.f32.mrb[0].mxu0
        %2773 = vmatprep.mubr.bf16.mxu0 %v1295
        %2774 = vmatmul.mubr.bf16.gmra.mrb[0].mxu0 %v1075
        %v2775 = vpop.f32.mrb[0].mxu0
        %v2776 = vadd.f32 %v2615, %v2775
        %v2777 = vpop.f32.mrb[0].mxu0
        %v2778 = vpop.f32.mrb[0].mxu0
        %v2779 = vadd.f32 %v2618, %v2778
        %v2780 = vpop.f32.mrb[0].mxu0
        %2781 = vmatprep.mubr.bf16.mxu0 %v1298
        %2782 = vmatmul.mubr.bf16.gmra.mrb[0].mxu0 %v1087
        %v2783 = vpop.f32.mrb[0].mxu0
        %v2784 = vadd.f32 %v2623, %v2783
        %v2785 = vpop.f32.mrb[0].mxu0
        %v2786 = vpop.f32.mrb[0].mxu0
        %v2787 = vadd.f32 %v2626, %v2786
        %v2788 = vpop.f32.mrb[0].mxu0
        %2789 = vmatprep.mubr.bf16.mxu0 %v1301
        %2790 = vmatmul.mubr.bf16.gmra.mrb[0].mxu0 %v1099
        %v2791 = vpop.f32.mrb[0].mxu0
        %v2792 = vadd.f32 %v2631, %v2791
        %v2793 = vpop.f32.mrb[0].mxu0
        %v2794 = vpop.f32.mrb[0].mxu0
        %v2795 = vadd.f32 %v2634, %v2794
        %v2796 = vpop.f32.mrb[0].mxu0
        %2797 = vmatprep.mubr.bf16.mxu0 %v1304
        %2798 = vmatmul.mubr.bf16.gmra.mrb[0].mxu0 %v1111
        %v2799 = vpop.f32.mrb[0].mxu0
        %v2800 = vadd.f32 %v2639, %v2799
        %v2801 = vpop.f32.mrb[0].mxu0
        %v2802 = vpop.f32.mrb[0].mxu0
        %v2803 = vadd.f32 %v2642, %v2802
        %v2804 = vpop.f32.mrb[0].mxu0
        %2805 = vmatprep.mubr.bf16.mxu0 %v1307
        %2806 = vmatmul.mubr.bf16.gmra.mrb[0].mxu0 %v1123
        %v2807 = vpop.f32.mrb[0].mxu0
        %v2808 = vadd.f32 %v2647, %v2807
        %v2809 = vpop.f32.mrb[0].mxu0
        %v2810 = vpop.f32.mrb[0].mxu0
        %v2811 = vadd.f32 %v2650, %v2810
        %v2812 = vpop.f32.mrb[0].mxu0
        %2813 = vmatprep.mubr.bf16.mxu0 %v1310
        %2814 = vmatmul.mubr.bf16.gmra.mrb[0].mxu0 %v1135
        %v2815 = vpop.f32.mrb[0].mxu0
        %v2816 = vadd.f32 %v2655, %v2815
        %v2817 = vpop.f32.mrb[0].mxu0
        %v2818 = vpop.f32.mrb[0].mxu0
        %v2819 = vadd.f32 %v2658, %v2818
        %v2820 = vpop.f32.mrb[0].mxu0
        %2821 = vmatprep.mubr.bf16.mxu0 %v1313
        %2822 = vmatmul.mubr.bf16.gmra.mrb[0].mxu0 %v1147
        %v2823 = vpop.f32.mrb[0].mxu0
        %v2824 = vadd.f32 %v2663, %v2823
        %v2825 = vpop.f32.mrb[0].mxu0
        %v2826 = vpop.f32.mrb[0].mxu0
        %v2827 = vadd.f32 %v2666, %v2826
        %v2828 = vpop.f32.mrb[0].mxu0
        %2829 = vmatprep.mubr.bf16.mxu0 %v1316
        %2830 = vmatmul.mubr.bf16.gmra.mrb[0].mxu0 %v1159
        %v2831 = vpop.f32.mrb[0].mxu0
        %v2832 = vadd.f32 %v2671, %v2831
        %v2833 = vpop.f32.mrb[0].mxu0
        %v2834 = vpop.f32.mrb[0].mxu0
        %v2835 = vadd.f32 %v2674, %v2834
        %v2836 = vpop.f32.mrb[0].mxu0
        %2837 = vmatprep.mubr.bf16.mxu0 %v1319
        %2838 = vmatmul.mubr.bf16.gmra.mrb[0].mxu0 %v1171
        %v2839 = vpop.f32.mrb[0].mxu0
        %v2840 = vadd.f32 %v2679, %v2839
        %v2841 = vpop.f32.mrb[0].mxu0
        %v2842 = vpop.f32.mrb[0].mxu0
        %v2843 = vadd.f32 %v2682, %v2842
        %v2844 = vpop.f32.mrb[0].mxu0
        %2845 = vmatprep.mubr.bf16.mxu0 %v1322
        %2846 = vmatmul.mubr.bf16.gmra.mrb[0].mxu0 %v1183
        %v2847 = vpop.f32.mrb[0].mxu0
        %v2848 = vadd.f32 %v2687, %v2847
        %v2849 = vpop.f32.mrb[0].mxu0
        %v2850 = vpop.f32.mrb[0].mxu0
        %v2851 = vadd.f32 %v2690, %v2850
        %v2852 = vpop.f32.mrb[0].mxu0
        %2853 = vmatprep.mubr.bf16.mxu0 %v1325
        %2854 = vmatmul.mubr.bf16.gmra.mrb[0].mxu0 %v1195
        %v2855 = vpop.f32.mrb[0].mxu0
        %v2856 = vadd.f32 %v2695, %v2855
        %v2857 = vpop.f32.mrb[0].mxu0
        %v2858 = vpop.f32.mrb[0].mxu0
        %v2859 = vadd.f32 %v2698, %v2858
        %v2860 = vpop.f32.mrb[0].mxu0
        %2861 = vmatprep.mubr.bf16.mxu0 %v1328
        %2862 = vmatmul.mubr.bf16.gmra.mrb[0].mxu0 %v1207
        %v2863 = vpop.f32.mrb[0].mxu0
        %v2864 = vadd.f32 %v2703, %v2863
        %v2865 = vpop.f32.mrb[0].mxu0
        %v2866 = vpop.f32.mrb[0].mxu0
        %v2867 = vadd.f32 %v2706, %v2866
        %v2868 = vpop.f32.mrb[0].mxu0
        %2869 = vmatprep.mubr.bf16.mxu0 %v1331
        %2870 = vmatmul.mubr.bf16.gmra.mrb[0].mxu0 %v1219
        %v2871 = vpop.f32.mrb[0].mxu0
        %v2872 = vadd.f32 %v2711, %v2871
        %v2873 = vpop.f32.mrb[0].mxu0
        %v2874 = vpop.f32.mrb[0].mxu0
        %v2875 = vadd.f32 %v2714, %v2874
        %v2876 = vpop.f32.mrb[0].mxu0
        %2877 = vdwg.mxu0
        %2878 = vmatprep.subr.bf16.mxu0 0
        %2879 = vmatpush1.bf16.msra.mxu0 %v2299
        %2880 = vmatprep.subr.bf16.mxu0 0
        %2881 = vmatpush1.bf16.msra.mxu0 %v2300
        %2882 = vmatprep.subr.bf16.mxu0 0
        %2883 = vmatpush1.bf16.msra.mxu0 %v2301
        %2884 = vmatprep.subr.bf16.mxu0 0
        %2885 = vmatpush1.bf16.msra.mxu0 %v2302
        %2886 = vmatprep.subr.bf16.mxu0 0
        %2887 = vmatpush1.bf16.msra.mxu0 %v2303
        %2888 = vmatprep.subr.bf16.mxu0 0
        %2889 = vmatpush1.bf16.msra.mxu0 %v2304
        %2890 = vmatprep.subr.bf16.mxu0 0
        %2891 = vmatpush1.bf16.msra.mxu0 %v2305
        %2892 = vmatprep.subr.bf16.mxu0 0
        %2893 = vmatpush1.bf16.msra.mxu0 %v2306
        %2894 = vmatprep.subr.bf16.mxu0 0
        %2895 = vmatpush1.bf16.msra.mxu0 %v2307
        %2896 = vmatprep.subr.bf16.mxu0 0
        %2897 = vmatpush1.bf16.msra.mxu0 %v2308
        %2898 = vmatprep.subr.bf16.mxu0 0
        %2899 = vmatpush1.bf16.msra.mxu0 %v2309
        %2900 = vmatprep.subr.bf16.mxu0 0
        %2901 = vmatpush1.bf16.msra.mxu0 %v2310
        %2902 = vmatprep.subr.bf16.mxu0 0
        %2903 = vmatpush1.bf16.msra.mxu0 %v2311
        %2904 = vmatprep.subr.bf16.mxu0 0
        %2905 = vmatpush1.bf16.msra.mxu0 %v2312
        %2906 = vmatprep.subr.bf16.mxu0 0
        %2907 = vmatpush1.bf16.msra.mxu0 %v2313
        %2908 = vmatprep.subr.bf16.mxu0 0
        %2909 = vmatpush1.bf16.msra.mxu0 %v2314
        %2910 = vmatprep.mubr.bf16.mxu0 %v1503
        %2911 = vmatmul.mubr.bf16.gmra.mrb[0].mxu0 %v1412
        %v2912 = vpop.f32.mrb[0].mxu0
        %v2913 = vadd.f32 %v2752, %v2912
        %v2914 = vpop.f32.mrb[0].mxu0
        %v2915 = vpop.f32.mrb[0].mxu0
        %v2916 = vadd.f32 %v2755, %v2915
        %v2917 = vpop.f32.mrb[0].mxu0
        %2918 = vmatprep.mubr.bf16.mxu0 %v1515
        %2919 = vmatmul.mubr.bf16.gmra.mrb[0].mxu0 %v1413
        %v2920 = vpop.f32.mrb[0].mxu0
        %v2921 = vadd.f32 %v2760, %v2920
        %v2922 = vpop.f32.mrb[0].mxu0
        %v2923 = vpop.f32.mrb[0].mxu0
        %v2924 = vadd.f32 %v2763, %v2923
        %v2925 = vpop.f32.mrb[0].mxu0
        %2926 = vmatprep.mubr.bf16.mxu0 %v1527
        %2927 = vmatmul.mubr.bf16.gmra.mrb[0].mxu0 %v1414
        %v2928 = vpop.f32.mrb[0].mxu0
        %v2929 = vadd.f32 %v2768, %v2928
        %v2930 = vpop.f32.mrb[0].mxu0
        %v2931 = vpop.f32.mrb[0].mxu0
        %v2932 = vadd.f32 %v2771, %v2931
        %v2933 = vpop.f32.mrb[0].mxu0
        %2934 = vmatprep.mubr.bf16.mxu0 %v1539
        %2935 = vmatmul.mubr.bf16.gmra.mrb[0].mxu0 %v1415
        %v2936 = vpop.f32.mrb[0].mxu0
        %v2937 = vadd.f32 %v2776, %v2936
        %v2938 = vpop.f32.mrb[0].mxu0
        %v2939 = vpop.f32.mrb[0].mxu0
        %v2940 = vadd.f32 %v2779, %v2939
        %v2941 = vpop.f32.mrb[0].mxu0
        %2942 = vmatprep.mubr.bf16.mxu0 %v1551
        %2943 = vmatmul.mubr.bf16.gmra.mrb[0].mxu0 %v1416
        %v2944 = vpop.f32.mrb[0].mxu0
        %v2945 = vadd.f32 %v2784, %v2944
        %v2946 = vpop.f32.mrb[0].mxu0
        %v2947 = vpop.f32.mrb[0].mxu0
        %v2948 = vadd.f32 %v2787, %v2947
        %v2949 = vpop.f32.mrb[0].mxu0
        %2950 = vmatprep.mubr.bf16.mxu0 %v1563
        %2951 = vmatmul.mubr.bf16.gmra.mrb[0].mxu0 %v1417
        %v2952 = vpop.f32.mrb[0].mxu0
        %v2953 = vadd.f32 %v2792, %v2952
        %v2954 = vpop.f32.mrb[0].mxu0
        %v2955 = vpop.f32.mrb[0].mxu0
        %v2956 = vadd.f32 %v2795, %v2955
        %v2957 = vpop.f32.mrb[0].mxu0
        %2958 = vmatprep.mubr.bf16.mxu0 %v1575
        %2959 = vmatmul.mubr.bf16.gmra.mrb[0].mxu0 %v1418
        %v2960 = vpop.f32.mrb[0].mxu0
        %v2961 = vadd.f32 %v2800, %v2960
        %v2962 = vpop.f32.mrb[0].mxu0
        %v2963 = vpop.f32.mrb[0].mxu0
        %v2964 = vadd.f32 %v2803, %v2963
        %v2965 = vpop.f32.mrb[0].mxu0
        %2966 = vmatprep.mubr.bf16.mxu0 %v1587
        %2967 = vmatmul.mubr.bf16.gmra.mrb[0].mxu0 %v1419
        %v2968 = vpop.f32.mrb[0].mxu0
        %v2969 = vadd.f32 %v2808, %v2968
        %v2970 = vpop.f32.mrb[0].mxu0
        %v2971 = vpop.f32.mrb[0].mxu0
        %v2972 = vadd.f32 %v2811, %v2971
        %v2973 = vpop.f32.mrb[0].mxu0
        %2974 = vmatprep.mubr.bf16.mxu0 %v1599
        %2975 = vmatmul.mubr.bf16.gmra.mrb[0].mxu0 %v1420
        %v2976 = vpop.f32.mrb[0].mxu0
        %v2977 = vadd.f32 %v2816, %v2976
        %v2978 = vpop.f32.mrb[0].mxu0
        %v2979 = vpop.f32.mrb[0].mxu0
        %v2980 = vadd.f32 %v2819, %v2979
        %v2981 = vpop.f32.mrb[0].mxu0
        %2982 = vmatprep.mubr.bf16.mxu0 %v1611
        %2983 = vmatmul.mubr.bf16.gmra.mrb[0].mxu0 %v1421
        %v2984 = vpop.f32.mrb[0].mxu0
        %v2985 = vadd.f32 %v2824, %v2984
        %v2986 = vpop.f32.mrb[0].mxu0
        %v2987 = vpop.f32.mrb[0].mxu0
        %v2988 = vadd.f32 %v2827, %v2987
        %v2989 = vpop.f32.mrb[0].mxu0
        %2990 = vmatprep.mubr.bf16.mxu0 %v1623
        %2991 = vmatmul.mubr.bf16.gmra.mrb[0].mxu0 %v1422
        %v2992 = vpop.f32.mrb[0].mxu0
        %v2993 = vadd.f32 %v2832, %v2992
        %v2994 = vpop.f32.mrb[0].mxu0
        %v2995 = vpop.f32.mrb[0].mxu0
        %v2996 = vadd.f32 %v2835, %v2995
        %v2997 = vpop.f32.mrb[0].mxu0
        %2998 = vmatprep.mubr.bf16.mxu0 %v1635
        %2999 = vmatmul.mubr.bf16.gmra.mrb[0].mxu0 %v1423
        %v3000 = vpop.f32.mrb[0].mxu0
        %v3001 = vadd.f32 %v2840, %v3000
        %v3002 = vpop.f32.mrb[0].mxu0
        %v3003 = vpop.f32.mrb[0].mxu0
        %v3004 = vadd.f32 %v2843, %v3003
        %v3005 = vpop.f32.mrb[0].mxu0
        %3006 = vmatprep.mubr.bf16.mxu0 %v1647
        %3007 = vmatmul.mubr.bf16.gmra.mrb[0].mxu0 %v1424
        %v3008 = vpop.f32.mrb[0].mxu0
        %v3009 = vadd.f32 %v2848, %v3008
        %v3010 = vpop.f32.mrb[0].mxu0
        %v3011 = vpop.f32.mrb[0].mxu0
        %v3012 = vadd.f32 %v2851, %v3011
        %v3013 = vpop.f32.mrb[0].mxu0
        %3014 = vmatprep.mubr.bf16.mxu0 %v1659
        %3015 = vmatmul.mubr.bf16.gmra.mrb[0].mxu0 %v1425
        %v3016 = vpop.f32.mrb[0].mxu0
        %v3017 = vadd.f32 %v2856, %v3016
        %v3018 = vpop.f32.mrb[0].mxu0
        %v3019 = vpop.f32.mrb[0].mxu0
        %v3020 = vadd.f32 %v2859, %v3019
        %v3021 = vpop.f32.mrb[0].mxu0
        %3022 = vmatprep.mubr.bf16.mxu0 %v1671
        %3023 = vmatmul.mubr.bf16.gmra.mrb[0].mxu0 %v1426
        %v3024 = vpop.f32.mrb[0].mxu0
        %v3025 = vadd.f32 %v2864, %v3024
        %v3026 = vpop.f32.mrb[0].mxu0
        %v3027 = vpop.f32.mrb[0].mxu0
        %v3028 = vadd.f32 %v2867, %v3027
        %v3029 = vpop.f32.mrb[0].mxu0
        %3030 = vmatprep.mubr.bf16.mxu0 %v1683
        %3031 = vmatmul.mubr.bf16.gmra.mrb[0].mxu0 %v1427
        %v3032 = vpop.f32.mrb[0].mxu0
        %v3033 = vadd.f32 %v2872, %v3032
        %v3034 = vpop.f32.mrb[0].mxu0
        %v3035 = vpop.f32.mrb[0].mxu0
        %v3036 = vadd.f32 %v2875, %v3035
        %v3037 = vpop.f32.mrb[0].mxu0
        %3038 = vdwg.mxu0
        %3039 = vmatprep.subr.bf16.mxu0 0
        %3040 = vmatpush1.bf16.msra.mxu0 %v2315
        %3041 = vmatprep.subr.bf16.mxu0 0
        %3042 = vmatpush1.bf16.msra.mxu0 %v2316
        %3043 = vmatprep.subr.bf16.mxu0 0
        %3044 = vmatpush1.bf16.msra.mxu0 %v2317
        %3045 = vmatprep.subr.bf16.mxu0 0
        %3046 = vmatpush1.bf16.msra.mxu0 %v2318
        %3047 = vmatprep.subr.bf16.mxu0 0
        %3048 = vmatpush1.bf16.msra.mxu0 %v2319
        %3049 = vmatprep.subr.bf16.mxu0 0
        %3050 = vmatpush1.bf16.msra.mxu0 %v2320
        %3051 = vmatprep.subr.bf16.mxu0 0
        %3052 = vmatpush1.bf16.msra.mxu0 %v2321
        %3053 = vmatprep.subr.bf16.mxu0 0
        %3054 = vmatpush1.bf16.msra.mxu0 %v2322
        %3055 = vmatprep.subr.bf16.mxu0 0
        %3056 = vmatpush1.bf16.msra.mxu0 0
        %3057 = vmatprep.subr.bf16.mxu0 0
        %3058 = vmatpush1.bf16.msra.mxu0 0
        %3059 = vmatprep.subr.bf16.mxu0 0
        %3060 = vmatpush1.bf16.msra.mxu0 0
        %3061 = vmatprep.subr.bf16.mxu0 0
        %3062 = vmatpush1.bf16.msra.mxu0 0
        %3063 = vmatprep.subr.bf16.mxu0 0
        %3064 = vmatpush1.bf16.msra.mxu0 0
        %3065 = vmatprep.subr.bf16.mxu0 0
        %3066 = vmatpush1.bf16.msra.mxu0 0
        %3067 = vmatprep.subr.bf16.mxu0 0
        %3068 = vmatpush1.bf16.msra.mxu0 0
        %3069 = vmatprep.subr.bf16.mxu0 0
        %3070 = vmatpush1.bf16.msra.mxu0 0
        %3071 = vmatprep.mubr.bf16.mxu0 0
        %3072 = vmatmul.mubr.bf16.gmra.mrb[0].mxu0 %v1750
        %v3073 = vpop.f32.mrb[0].mxu0
        %v3074 = vadd.f32 %v2913, %v3073
        %v3075 = vpop.f32.mrb[0].mxu0
        %v3076 = vpop.f32.mrb[0].mxu0
        %v3077 = vadd.f32 %v2916, %v3076
        %v3078 = vpop.f32.mrb[0].mxu0
        %3079 = vmatprep.mubr.bf16.mxu0 0
        %3080 = vmatmul.mubr.bf16.gmra.mrb[0].mxu0 %v1753
        %v3081 = vpop.f32.mrb[0].mxu0
        %v3082 = vadd.f32 %v2921, %v3081
        %v3083 = vpop.f32.mrb[0].mxu0
        %v3084 = vpop.f32.mrb[0].mxu0
        %v3085 = vadd.f32 %v2924, %v3084
        %v3086 = vpop.f32.mrb[0].mxu0
        %3087 = vmatprep.mubr.bf16.mxu0 0
        %3088 = vmatmul.mubr.bf16.gmra.mrb[0].mxu0 %v1756
        %v3089 = vpop.f32.mrb[0].mxu0
        %v3090 = vadd.f32 %v2929, %v3089
        %v3091 = vpop.f32.mrb[0].mxu0
        %v3092 = vpop.f32.mrb[0].mxu0
        %v3093 = vadd.f32 %v2932, %v3092
        %v3094 = vpop.f32.mrb[0].mxu0
        %3095 = vmatprep.mubr.bf16.mxu0 0
        %3096 = vmatmul.mubr.bf16.gmra.mrb[0].mxu0 %v1759
        %v3097 = vpop.f32.mrb[0].mxu0
        %v3098 = vadd.f32 %v2937, %v3097
        %v3099 = vpop.f32.mrb[0].mxu0
        %v3100 = vpop.f32.mrb[0].mxu0
        %v3101 = vadd.f32 %v2940, %v3100
        %v3102 = vpop.f32.mrb[0].mxu0
        %3103 = vmatprep.mubr.bf16.mxu0 0
        %3104 = vmatmul.mubr.bf16.gmra.mrb[0].mxu0 %v1762
        %v3105 = vpop.f32.mrb[0].mxu0
        %v3106 = vadd.f32 %v2945, %v3105
        %v3107 = vpop.f32.mrb[0].mxu0
        %v3108 = vpop.f32.mrb[0].mxu0
        %v3109 = vadd.f32 %v2948, %v3108
        %v3110 = vpop.f32.mrb[0].mxu0
        %3111 = vmatprep.mubr.bf16.mxu0 0
        %3112 = vmatmul.mubr.bf16.gmra.mrb[0].mxu0 %v1765
        %v3113 = vpop.f32.mrb[0].mxu0
        %v3114 = vadd.f32 %v2953, %v3113
        %v3115 = vpop.f32.mrb[0].mxu0
        %v3116 = vpop.f32.mrb[0].mxu0
        %v3117 = vadd.f32 %v2956, %v3116
        %v3118 = vpop.f32.mrb[0].mxu0
        %3119 = vmatprep.mubr.bf16.mxu0 0
        %3120 = vmatmul.mubr.bf16.gmra.mrb[0].mxu0 %v1768
        %v3121 = vpop.f32.mrb[0].mxu0
        %v3122 = vadd.f32 %v2961, %v3121
        %v3123 = vpop.f32.mrb[0].mxu0
        %v3124 = vpop.f32.mrb[0].mxu0
        %v3125 = vadd.f32 %v2964, %v3124
        %v3126 = vpop.f32.mrb[0].mxu0
        %3127 = vmatprep.mubr.bf16.mxu0 0
        %3128 = vmatmul.mubr.bf16.gmra.mrb[0].mxu0 %v1771
        %v3129 = vpop.f32.mrb[0].mxu0
        %v3130 = vadd.f32 %v2969, %v3129
        %v3131 = vpop.f32.mrb[0].mxu0
        %v3132 = vpop.f32.mrb[0].mxu0
        %v3133 = vadd.f32 %v2972, %v3132
        %v3134 = vpop.f32.mrb[0].mxu0
        %3135 = vmatprep.mubr.bf16.mxu0 0
        %3136 = vmatmul.mubr.bf16.gmra.mrb[0].mxu0 %v1774
        %v3137 = vpop.f32.mrb[0].mxu0
        %v3138 = vadd.f32 %v2977, %v3137
        %v3139 = vpop.f32.mrb[0].mxu0
        %v3140 = vpop.f32.mrb[0].mxu0
        %v3141 = vadd.f32 %v2980, %v3140
        %v3142 = vpop.f32.mrb[0].mxu0
        %3143 = vmatprep.mubr.bf16.mxu0 0
        %3144 = vmatmul.mubr.bf16.gmra.mrb[0].mxu0 %v1777
        %v3145 = vpop.f32.mrb[0].mxu0
        %v3146 = vadd.f32 %v2985, %v3145
        %v3147 = vpop.f32.mrb[0].mxu0
        %v3148 = vpop.f32.mrb[0].mxu0
        %v3149 = vadd.f32 %v2988, %v3148
        %v3150 = vpop.f32.mrb[0].mxu0
        %3151 = vmatprep.mubr.bf16.mxu0 0
        %3152 = vmatmul.mubr.bf16.gmra.mrb[0].mxu0 %v1780
        %v3153 = vpop.f32.mrb[0].mxu0
        %v3154 = vadd.f32 %v2993, %v3153
        %v3155 = vpop.f32.mrb[0].mxu0
        %v3156 = vpop.f32.mrb[0].mxu0
        %v3157 = vadd.f32 %v2996, %v3156
        %v3158 = vpop.f32.mrb[0].mxu0
        %3159 = vmatprep.mubr.bf16.mxu0 0
        %3160 = vmatmul.mubr.bf16.gmra.mrb[0].mxu0 %v1783
        %v3161 = vpop.f32.mrb[0].mxu0
        %v3162 = vadd.f32 %v3001, %v3161
        %v3163 = vpop.f32.mrb[0].mxu0
        %v3164 = vpop.f32.mrb[0].mxu0
        %v3165 = vadd.f32 %v3004, %v3164
        %v3166 = vpop.f32.mrb[0].mxu0
        %3167 = vmatprep.mubr.bf16.mxu0 0
        %3168 = vmatmul.mubr.bf16.gmra.mrb[0].mxu0 %v1786
        %v3169 = vpop.f32.mrb[0].mxu0
        %v3170 = vadd.f32 %v3009, %v3169
        %v3171 = vpop.f32.mrb[0].mxu0
        %v3172 = vpop.f32.mrb[0].mxu0
        %v3173 = vadd.f32 %v3012, %v3172
        %v3174 = vpop.f32.mrb[0].mxu0
        %3175 = vmatprep.mubr.bf16.mxu0 0
        %3176 = vmatmul.mubr.bf16.gmra.mrb[0].mxu0 %v1789
        %v3177 = vpop.f32.mrb[0].mxu0
        %v3178 = vadd.f32 %v3017, %v3177
        %v3179 = vpop.f32.mrb[0].mxu0
        %v3180 = vpop.f32.mrb[0].mxu0
        %v3181 = vadd.f32 %v3020, %v3180
        %v3182 = vpop.f32.mrb[0].mxu0
        %3183 = vmatprep.mubr.bf16.mxu0 0
        %3184 = vmatmul.mubr.bf16.gmra.mrb[0].mxu0 %v1792
        %v3185 = vpop.f32.mrb[0].mxu0
        %v3186 = vadd.f32 %v3025, %v3185
        %v3187 = vpop.f32.mrb[0].mxu0
        %v3188 = vpop.f32.mrb[0].mxu0
        %v3189 = vadd.f32 %v3028, %v3188
        %v3190 = vpop.f32.mrb[0].mxu0
        %3191 = vmatprep.mubr.bf16.mxu0 0
        %3192 = vmatmul.mubr.bf16.gmra.mrb[0].mxu0 %v1795
        %v3193 = vpop.f32.mrb[0].mxu0
        %v3194 = vadd.f32 %v3033, %v3193
        %v3195 = vpop.f32.mrb[0].mxu0
        %v3196 = vpop.f32.mrb[0].mxu0
        %v3197 = vadd.f32 %v3036, %v3196
        %v3198 = vpop.f32.mrb[0].mxu0
        %3199 = vdwg.mxu0
        %v3200 = vsub.f32 0.0, %v3074
        %v3201 = vsub.f32 0.0, %v3077
        %v3202 = vsub.f32 0.0, %v3082
        %v3203 = vsub.f32 0.0, %v3085
        %v3204 = vsub.f32 0.0, %v3090
        %v3205 = vsub.f32 0.0, %v3093
        %v3206 = vsub.f32 0.0, %v3098
        %v3207 = vsub.f32 0.0, %v3101
        %v3208 = vsub.f32 0.0, %v3106
        %v3209 = vsub.f32 0.0, %v3109
        %v3210 = vsub.f32 0.0, %v3114
        %v3211 = vsub.f32 0.0, %v3117
        %v3212 = vsub.f32 0.0, %v3122
        %v3213 = vsub.f32 0.0, %v3125
        %v3214 = vsub.f32 0.0, %v3130
        %v3215 = vsub.f32 0.0, %v3133
        %v3216 = vsub.f32 0.0, %v3138
        %v3217 = vsub.f32 0.0, %v3141
        %v3218 = vsub.f32 0.0, %v3146
        %v3219 = vsub.f32 0.0, %v3149
        %v3220 = vsub.f32 0.0, %v3154
        %v3221 = vsub.f32 0.0, %v3157
        %v3222 = vsub.f32 0.0, %v3162
        %v3223 = vsub.f32 0.0, %v3165
        %v3224 = vsub.f32 0.0, %v3170
        %v3225 = vsub.f32 0.0, %v3173
        %v3226 = vsub.f32 0.0, %v3178
        %v3227 = vsub.f32 0.0, %v3181
        %v3228 = vsub.f32 0.0, %v3186
        %v3229 = vsub.f32 0.0, %v3189
        %v3230 = vsub.f32 0.0, %v3194
        %v3231 = vsub.f32 0.0, %v3197
        %v3232 = vmul.f32 %v3200, 1.442695
        %v3233 = vpow.pop %v3232
        %v3234 = vmul.f32 %v3201, 1.442695
        %v3235 = vpow.pop %v3234
        %v3236 = vmul.f32 %v3202, 1.442695
        %v3237 = vpow.pop %v3236
        %v3238 = vmul.f32 %v3203, 1.442695
        %v3239 = vpow.pop %v3238
        %v3240 = vmul.f32 %v3204, 1.442695
        %v3241 = vpow.pop %v3240
        %v3242 = vmul.f32 %v3205, 1.442695
        %v3243 = vpow.pop %v3242
        %v3244 = vmul.f32 %v3206, 1.442695
        %v3245 = vpow.pop %v3244
        %v3246 = vmul.f32 %v3207, 1.442695
        %v3247 = vpow.pop %v3246
        %v3248 = vmul.f32 %v3208, 1.442695
        %v3249 = vpow.pop %v3248
        %v3250 = vmul.f32 %v3209, 1.442695
        %v3251 = vpow.pop %v3250
        %v3252 = vmul.f32 %v3210, 1.442695
        %v3253 = vpow.pop %v3252
        %v3254 = vmul.f32 %v3211, 1.442695
        %v3255 = vpow.pop %v3254
        %v3256 = vmul.f32 %v3212, 1.442695
        %v3257 = vpow.pop %v3256
        %v3258 = vmul.f32 %v3213, 1.442695
        %v3259 = vpow.pop %v3258
        %v3260 = vmul.f32 %v3214, 1.442695
        %v3261 = vpow.pop %v3260
        %v3262 = vmul.f32 %v3215, 1.442695
        %v3263 = vpow.pop %v3262
        %v3264 = vmul.f32 %v3216, 1.442695
        %v3265 = vpow.pop %v3264
        %v3266 = vmul.f32 %v3217, 1.442695
        %v3267 = vpow.pop %v3266
        %v3268 = vmul.f32 %v3218, 1.442695
        %v3269 = vpow.pop %v3268
        %v3270 = vmul.f32 %v3219, 1.442695
        %v3271 = vpow.pop %v3270
        %v3272 = vmul.f32 %v3220, 1.442695
        %v3273 = vpow.pop %v3272
        %v3274 = vmul.f32 %v3221, 1.442695
        %v3275 = vpow.pop %v3274
        %v3276 = vmul.f32 %v3222, 1.442695
        %v3277 = vpow.pop %v3276
        %v3278 = vmul.f32 %v3223, 1.442695
        %v3279 = vpow.pop %v3278
        %v3280 = vmul.f32 %v3224, 1.442695
        %v3281 = vpow.pop %v3280
        %v3282 = vmul.f32 %v3225, 1.442695
        %v3283 = vpow.pop %v3282
        %v3284 = vmul.f32 %v3226, 1.442695
        %v3285 = vpow.pop %v3284
        %v3286 = vmul.f32 %v3227, 1.442695
        %v3287 = vpow.pop %v3286
        %v3288 = vmul.f32 %v3228, 1.442695
        %v3289 = vpow.pop %v3288
        %v3290 = vmul.f32 %v3229, 1.442695
        %v3291 = vpow.pop %v3290
        %v3292 = vmul.f32 %v3230, 1.442695
        %v3293 = vpow.pop %v3292
        %v3294 = vmul.f32 %v3231, 1.442695
        %v3295 = vpow.pop %v3294
        %v3296 = vadd.f32 %v3233, 1.0
        %v3297 = vadd.f32 %v3235, 1.0
        %v3298 = vadd.f32 %v3237, 1.0
        %v3299 = vadd.f32 %v3239, 1.0
        %v3300 = vadd.f32 %v3241, 1.0
        %v3301 = vadd.f32 %v3243, 1.0
        %v3302 = vadd.f32 %v3245, 1.0
        %v3303 = vadd.f32 %v3247, 1.0
        %v3304 = vadd.f32 %v3249, 1.0
        %v3305 = vadd.f32 %v3251, 1.0
        %v3306 = vadd.f32 %v3253, 1.0
        %v3307 = vadd.f32 %v3255, 1.0
        %v3308 = vadd.f32 %v3257, 1.0
        %v3309 = vadd.f32 %v3259, 1.0
        %v3310 = vadd.f32 %v3261, 1.0
        %v3311 = vadd.f32 %v3263, 1.0
        %v3312 = vadd.f32 %v3265, 1.0
        %v3313 = vadd.f32 %v3267, 1.0
        %v3314 = vadd.f32 %v3269, 1.0
        %v3315 = vadd.f32 %v3271, 1.0
        %v3316 = vadd.f32 %v3273, 1.0
        %v3317 = vadd.f32 %v3275, 1.0
        %v3318 = vadd.f32 %v3277, 1.0
        %v3319 = vadd.f32 %v3279, 1.0
        %v3320 = vadd.f32 %v3281, 1.0
        %v3321 = vadd.f32 %v3283, 1.0
        %v3322 = vadd.f32 %v3285, 1.0
        %v3323 = vadd.f32 %v3287, 1.0
        %v3324 = vadd.f32 %v3289, 1.0
        %v3325 = vadd.f32 %v3291, 1.0
        %v3326 = vadd.f32 %v3293, 1.0
        %v3327 = vadd.f32 %v3295, 1.0
        %v3328 = vrcp.pop %v3296
        %v3329 = vrcp.pop %v3297
        %v3330 = vrcp.pop %v3298
        %v3331 = vrcp.pop %v3299
        %v3332 = vrcp.pop %v3300
        %v3333 = vrcp.pop %v3301
        %v3334 = vrcp.pop %v3302
        %v3335 = vrcp.pop %v3303
        %v3336 = vrcp.pop %v3304
        %v3337 = vrcp.pop %v3305
        %v3338 = vrcp.pop %v3306
        %v3339 = vrcp.pop %v3307
        %v3340 = vrcp.pop %v3308
        %v3341 = vrcp.pop %v3309
        %v3342 = vrcp.pop %v3310
        %v3343 = vrcp.pop %v3311
        %v3344 = vrcp.pop %v3312
        %v3345 = vrcp.pop %v3313
        %v3346 = vrcp.pop %v3314
        %v3347 = vrcp.pop %v3315
        %v3348 = vrcp.pop %v3316
        %v3349 = vrcp.pop %v3317
        %v3350 = vrcp.pop %v3318
        %v3351 = vrcp.pop %v3319
        %v3352 = vrcp.pop %v3320
        %v3353 = vrcp.pop %v3321
        %v3354 = vrcp.pop %v3322
        %v3355 = vrcp.pop %v3323
        %v3356 = vrcp.pop %v3324
        %v3357 = vrcp.pop %v3325
        %v3358 = vrcp.pop %v3326
        %v3359 = vrcp.pop %v3327
        %v3360 = vmul.f32 %v3074, %v3328
        %v3361 = vmul.f32 %v3077, %v3329
        %v3362 = vmul.f32 %v3082, %v3330
        %v3363 = vmul.f32 %v3085, %v3331
        %v3364 = vmul.f32 %v3090, %v3332
        %v3365 = vmul.f32 %v3093, %v3333
        %v3366 = vmul.f32 %v3098, %v3334
        %v3367 = vmul.f32 %v3101, %v3335
        %v3368 = vmul.f32 %v3106, %v3336
        %v3369 = vmul.f32 %v3109, %v3337
        %v3370 = vmul.f32 %v3114, %v3338
        %v3371 = vmul.f32 %v3117, %v3339
        %v3372 = vmul.f32 %v3122, %v3340
        %v3373 = vmul.f32 %v3125, %v3341
        %v3374 = vmul.f32 %v3130, %v3342
        %v3375 = vmul.f32 %v3133, %v3343
        %v3376 = vmul.f32 %v3138, %v3344
        %v3377 = vmul.f32 %v3141, %v3345
        %v3378 = vmul.f32 %v3146, %v3346
        %v3379 = vmul.f32 %v3149, %v3347
        %v3380 = vmul.f32 %v3154, %v3348
        %v3381 = vmul.f32 %v3157, %v3349
        %v3382 = vmul.f32 %v3162, %v3350
        %v3383 = vmul.f32 %v3165, %v3351
        %v3384 = vmul.f32 %v3170, %v3352
        %v3385 = vmul.f32 %v3173, %v3353
        %v3386 = vmul.f32 %v3178, %v3354
        %v3387 = vmul.f32 %v3181, %v3355
        %v3388 = vmul.f32 %v3186, %v3356
        %v3389 = vmul.f32 %v3189, %v3357
        %v3390 = vmul.f32 %v3194, %v3358
        %v3391 = vmul.f32 %v3197, %v3359
        %vm3392 = vcmask 519171
        %vm3393 = vsmask.f32 7950
        %vm3394 = vmand %vm3392, %vm3393
        %v3395 = vld [vmem:[#allocation2] sm:$0x8]
        %v3396 = vsel %vm3394, 0, %v3395
        %3397 = vst [vmem:[#allocation2] sm:$0x8] %v3396
        %v3398 = vld [vmem:[#allocation2 + $0x10] sm:$0x8]
        %v3399 = vsel %vm3394, 0, %v3398
        %3400 = vst [vmem:[#allocation2 + $0x10] sm:$0x8] %v3399
        %v3401 = vld [vmem:[#allocation2 + $0x20] sm:$0x8]
        %v3402 = vsel %vm3394, 0, %v3401
        %3403 = vst [vmem:[#allocation2 + $0x20] sm:$0x8] %v3402
        %v3404 = vld [vmem:[#allocation2 + $0x30] sm:$0x8]
        %v3405 = vsel %vm3394, 0, %v3404
        %3406 = vst [vmem:[#allocation2 + $0x30] sm:$0x8] %v3405
        %v3407 = vld [vmem:[#allocation2 + $0x40] sm:$0x8]
        %v3408 = vsel %vm3394, 0, %v3407
        %3409 = vst [vmem:[#allocation2 + $0x40] sm:$0x8] %v3408
        %v3410 = vld [vmem:[#allocation2 + $0x50] sm:$0x8]
        %v3411 = vsel %vm3394, 0, %v3410
        %3412 = vst [vmem:[#allocation2 + $0x50] sm:$0x8] %v3411
        %v3413 = vld [vmem:[#allocation2 + $0x60] sm:$0x8]
        %v3414 = vsel %vm3394, 0, %v3413
        %3415 = vst [vmem:[#allocation2 + $0x60] sm:$0x8] %v3414
        %v3416 = vld [vmem:[#allocation2 + $0x70] sm:$0x8]
        %v3417 = vsel %vm3394, 0, %v3416
        %3418 = vst [vmem:[#allocation2 + $0x70] sm:$0x8] %v3417
        %v3419 = vld [vmem:[#allocation2 + $0x80] sm:$0x8]
        %v3420 = vsel %vm3394, 0, %v3419
        %3421 = vst [vmem:[#allocation2 + $0x80] sm:$0x8] %v3420
        %v3422 = vld [vmem:[#allocation2 + $0x90] sm:$0x8]
        %v3423 = vsel %vm3394, 0, %v3422
        %3424 = vst [vmem:[#allocation2 + $0x90] sm:$0x8] %v3423
        %v3425 = vld [vmem:[#allocation2 + $0xa0] sm:$0x8]
        %v3426 = vsel %vm3394, 0, %v3425
        %3427 = vst [vmem:[#allocation2 + $0xa0] sm:$0x8] %v3426
        %v3428 = vld [vmem:[#allocation2 + $0xb0] sm:$0x8]
        %v3429 = vsel %vm3394, 0, %v3428
        %3430 = vst [vmem:[#allocation2 + $0xb0] sm:$0x8] %v3429
        %v3431 = vld [vmem:[#allocation2 + $0xc0] sm:$0x8]
        %v3432 = vsel %vm3394, 0, %v3431
        %3433 = vst [vmem:[#allocation2 + $0xc0] sm:$0x8] %v3432
        %v3434 = vld [vmem:[#allocation2 + $0xd0] sm:$0x8]
        %v3435 = vsel %vm3394, 0, %v3434
        %3436 = vst [vmem:[#allocation2 + $0xd0] sm:$0x8] %v3435
        %v3437 = vld [vmem:[#allocation2 + $0xe0] sm:$0x8]
        %v3438 = vsel %vm3394, 0, %v3437
        %3439 = vst [vmem:[#allocation2 + $0xe0] sm:$0x8] %v3438
        %v3440 = vld [vmem:[#allocation2 + $0xf0] sm:$0x8]
        %v3441 = vsel %vm3394, 0, %v3440
        %3442 = vst [vmem:[#allocation2 + $0xf0] sm:$0x8] %v3441
        %v3443 = vld [vmem:[#allocation2 + $0x100] sm:$0x8]
        %v3444 = vsel %vm3394, 0, %v3443
        %3445 = vst [vmem:[#allocation2 + $0x100] sm:$0x8] %v3444
        %v3446 = vld [vmem:[#allocation2 + $0x110] sm:$0x8]
        %v3447 = vsel %vm3394, 0, %v3446
        %3448 = vst [vmem:[#allocation2 + $0x110] sm:$0x8] %v3447
        %vm3449 = vcmask 516096
        %vm3450 = vsmask.f32 256
        %vm3451 = vmand %vm3449, %vm3450
        %v3452 = vld [vmem:[#allocation2 + $0xc] sm:$0x1]
        %v3453 = vsel %vm3451, 0, %v3452
        %3454 = vst [vmem:[#allocation2 + $0xc] sm:$0x1] %v3453
        %v3455 = vld [vmem:[#allocation2 + $0x1c] sm:$0x1]
        %v3456 = vsel %vm3451, 0, %v3455
        %3457 = vst [vmem:[#allocation2 + $0x1c] sm:$0x1] %v3456
        %v3458 = vld [vmem:[#allocation2 + $0x2c] sm:$0x1]
        %v3459 = vsel %vm3451, 0, %v3458
        %3460 = vst [vmem:[#allocation2 + $0x2c] sm:$0x1] %v3459
        %v3461 = vld [vmem:[#allocation2 + $0x3c] sm:$0x1]
        %v3462 = vsel %vm3451, 0, %v3461
        %3463 = vst [vmem:[#allocation2 + $0x3c] sm:$0x1] %v3462
        %v3464 = vld [vmem:[#allocation2 + $0x4c] sm:$0x1]
        %v3465 = vsel %vm3451, 0, %v3464
        %3466 = vst [vmem:[#allocation2 + $0x4c] sm:$0x1] %v3465
        %v3467 = vld [vmem:[#allocation2 + $0x5c] sm:$0x1]
        %v3468 = vsel %vm3451, 0, %v3467
        %3469 = vst [vmem:[#allocation2 + $0x5c] sm:$0x1] %v3468
        %v3470 = vld [vmem:[#allocation2 + $0x6c] sm:$0x1]
        %v3471 = vsel %vm3451, 0, %v3470
        %3472 = vst [vmem:[#allocation2 + $0x6c] sm:$0x1] %v3471
        %v3473 = vld [vmem:[#allocation2 + $0x7c] sm:$0x1]
        %v3474 = vsel %vm3451, 0, %v3473
        %3475 = vst [vmem:[#allocation2 + $0x7c] sm:$0x1] %v3474
        %v3476 = vld [vmem:[#allocation2 + $0x8c] sm:$0x1]
        %v3477 = vsel %vm3451, 0, %v3476
        %3478 = vst [vmem:[#allocation2 + $0x8c] sm:$0x1] %v3477
        %v3479 = vld [vmem:[#allocation2 + $0x9c] sm:$0x1]
        %v3480 = vsel %vm3451, 0, %v3479
        %3481 = vst [vmem:[#allocation2 + $0x9c] sm:$0x1] %v3480
        %v3482 = vld [vmem:[#allocation2 + $0xac] sm:$0x1]
        %v3483 = vsel %vm3451, 0, %v3482
        %3484 = vst [vmem:[#allocation2 + $0xac] sm:$0x1] %v3483
        %v3485 = vld [vmem:[#allocation2 + $0xbc] sm:$0x1]
        %v3486 = vsel %vm3451, 0, %v3485
        %3487 = vst [vmem:[#allocation2 + $0xbc] sm:$0x1] %v3486
        %v3488 = vld [vmem:[#allocation2 + $0xcc] sm:$0x1]
        %v3489 = vsel %vm3451, 0, %v3488
        %3490 = vst [vmem:[#allocation2 + $0xcc] sm:$0x1] %v3489
        %v3491 = vld [vmem:[#allocation2 + $0xdc] sm:$0x1]
        %v3492 = vsel %vm3451, 0, %v3491
        %3493 = vst [vmem:[#allocation2 + $0xdc] sm:$0x1] %v3492
        %v3494 = vld [vmem:[#allocation2 + $0xec] sm:$0x1]
        %v3495 = vsel %vm3451, 0, %v3494
        %3496 = vst [vmem:[#allocation2 + $0xec] sm:$0x1] %v3495
        %v3497 = vld [vmem:[#allocation2 + $0xfc] sm:$0x1]
        %v3498 = vsel %vm3451, 0, %v3497
        %3499 = vst [vmem:[#allocation2 + $0xfc] sm:$0x1] %v3498
        %v3500 = vld [vmem:[#allocation2 + $0x10c] sm:$0x1]
        %v3501 = vsel %vm3451, 0, %v3500
        %3502 = vst [vmem:[#allocation2 + $0x10c] sm:$0x1] %v3501
        %v3503 = vld [vmem:[#allocation2 + $0x11c] sm:$0x1]
        %v3504 = vsel %vm3451, 0, %v3503
        %3505 = vst [vmem:[#allocation2 + $0x11c] sm:$0x1] %v3504
        %v3506 = vld [vmem:[#allocation2] sm:$0x8]
        %v3507 = vsel %vm3394, 0, %v3506
        %3508 = vst [vmem:[#allocation2] sm:$0x8] %v3507
        %vm3509 = vcmask 519168
        %3510 = vst.msk [vmem:[#allocation2 + $0x4] sm:$0xf] %vm3509, 0
        %3511 = vst.msk [vmem:[#allocation2 + $0x8] sm:$0xf] %vm3509, 0
        %v3512 = vld [vmem:[#allocation2 + $0xc] sm:$0x1]
        %v3513 = vsel %vm3451, 0, %v3512
        %3514 = vst [vmem:[#allocation2 + $0xc] sm:$0x1] %v3513
        %s3515 = scalar_lea.vmem [#allocation2], 272
        %v3516 = vld [vmem:[%s3515] sm:$0x8]
        %v3517 = vsel %vm3394, 0, %v3516
        %3518 = vst [vmem:[%s3515] sm:$0x8] %v3517
        %3519 = vst.msk [vmem:[%s3515 + $0x4] sm:$0xf] %vm3509, 0
        %3520 = vst.msk [vmem:[%s3515 + $0x8] sm:$0xf] %vm3509, 0
        %v3521 = vld [vmem:[%s3515 + $0xc] sm:$0x1]
        %v3522 = vsel %vm3451, 0, %v3521
        %3523 = vst [vmem:[%s3515 + $0xc] sm:$0x1] %v3522
        %v3524 = vpack.c.bf16 %v3361, %v3360
        %v3525 = vpack.c.bf16 %v3363, %v3362
        %v3526 = vpack.c.bf16 %v3365, %v3364
        %v3527 = vpack.c.bf16 %v3367, %v3366
        %v3528 = vpack.c.bf16 %v3369, %v3368
        %v3529 = vpack.c.bf16 %v3371, %v3370
        %v3530 = vpack.c.bf16 %v3373, %v3372
        %v3531 = vpack.c.bf16 %v3375, %v3374
        %v3532 = vpack.c.bf16 %v3377, %v3376
        %v3533 = vpack.c.bf16 %v3379, %v3378
        %v3534 = vpack.c.bf16 %v3381, %v3380
        %v3535 = vpack.c.bf16 %v3383, %v3382
        %v3536 = vpack.c.bf16 %v3385, %v3384
        %v3537 = vpack.c.bf16 %v3387, %v3386
        %v3538 = vpack.c.bf16 %v3389, %v3388
        %v3539 = vpack.c.bf16 %v3391, %v3390
        %v3556 = vunpack.c.l.b16 %v3524
        %v3557 = vunpack.c.h.b16 %v3524
        %v3558 = vunpack.c.l.b16 %v3525
        %v3559 = vunpack.c.h.b16 %v3525
        %v3560 = vunpack.c.l.b16 %v3526
        %v3561 = vunpack.c.h.b16 %v3526
        %v3562 = vunpack.c.l.b16 %v3527
        %v3563 = vunpack.c.h.b16 %v3527
        %v3564 = vunpack.c.l.b16 %v3528
        %v3565 = vunpack.c.h.b16 %v3528
        %v3566 = vunpack.c.l.b16 %v3529
        %v3567 = vunpack.c.h.b16 %v3529
        %v3568 = vunpack.c.l.b16 %v3530
        %v3569 = vunpack.c.h.b16 %v3530
        %v3570 = vunpack.c.l.b16 %v3531
        %v3571 = vunpack.c.h.b16 %v3531
        %v3572 = vunpack.c.l.b16 %v3532
        %v3573 = vunpack.c.h.b16 %v3532
        %v3574 = vunpack.c.l.b16 %v3533
        %v3575 = vunpack.c.h.b16 %v3533
        %v3576 = vunpack.c.l.b16 %v3534
        %v3577 = vunpack.c.h.b16 %v3534
        %v3578 = vunpack.c.l.b16 %v3535
        %v3579 = vunpack.c.h.b16 %v3535
        %v3580 = vunpack.c.l.b16 %v3536
        %v3581 = vunpack.c.h.b16 %v3536
        %v3582 = vunpack.c.l.b16 %v3537
        %v3583 = vunpack.c.h.b16 %v3537
        %v3584 = vunpack.c.l.b16 %v3538
        %v3585 = vunpack.c.h.b16 %v3538
        %v3586 = vunpack.c.l.b16 %v3539
        %v3587 = vunpack.c.h.b16 %v3539
        %v3588 = vpack.c.b16 %v3556, %v3556
        %v3589 = vpack.c.b16 %v3557, %v3557
        %v3590 = vpack.c.b16 %v3558, %v3558
        %v3591 = vpack.c.b16 %v3559, %v3559
        %v3592 = vpack.c.b16 %v3560, %v3560
        %v3593 = vpack.c.b16 %v3561, %v3561
        %v3594 = vpack.c.b16 %v3562, %v3562
        %v3595 = vpack.c.b16 %v3563, %v3563
        %v3596 = vpack.c.b16 %v3564, %v3564
        %v3597 = vpack.c.b16 %v3565, %v3565
        %v3598 = vpack.c.b16 %v3566, %v3566
        %v3599 = vpack.c.b16 %v3567, %v3567
        %v3600 = vpack.c.b16 %v3568, %v3568
        %v3601 = vpack.c.b16 %v3569, %v3569
        %v3602 = vpack.c.b16 %v3570, %v3570
        %v3603 = vpack.c.b16 %v3571, %v3571
        %v3604 = vpack.c.b16 %v3572, %v3572
        %v3605 = vpack.c.b16 %v3573, %v3573
        %v3606 = vpack.c.b16 %v3574, %v3574
        %v3607 = vpack.c.b16 %v3575, %v3575
        %v3608 = vpack.c.b16 %v3576, %v3576
        %v3609 = vpack.c.b16 %v3577, %v3577
        %v3610 = vpack.c.b16 %v3578, %v3578
        %v3611 = vpack.c.b16 %v3579, %v3579
        %v3612 = vpack.c.b16 %v3580, %v3580
        %v3613 = vpack.c.b16 %v3581, %v3581
        %v3614 = vpack.c.b16 %v3582, %v3582
        %v3615 = vpack.c.b16 %v3583, %v3583
        %v3616 = vpack.c.b16 %v3584, %v3584
        %v3617 = vpack.c.b16 %v3585, %v3585
        %v3618 = vpack.c.b16 %v3586, %v3586
        %v3619 = vpack.c.b16 %v3587, %v3587
        %s3652 = scalar_lea.vmem [#allocation2], 16
        %3653 = vst.msk [vmem:[%s3652 + $0x4] sm:$0xf] %vm3509, %v3588
        %3654 = vst.msk [vmem:[%s3652 + $0x8] sm:$0xf] %vm3509, %v3589
        %3655 = vst.msk [vmem:[%s3652 + $0x14] sm:$0xf] %vm3509, %v3590
        %3656 = vst.msk [vmem:[%s3652 + $0x18] sm:$0xf] %vm3509, %v3591
        %3657 = vst.msk [vmem:[%s3652 + $0x24] sm:$0xf] %vm3509, %v3592
        %3658 = vst.msk [vmem:[%s3652 + $0x28] sm:$0xf] %vm3509, %v3593
        %3659 = vst.msk [vmem:[%s3652 + $0x34] sm:$0xf] %vm3509, %v3594
        %3660 = vst.msk [vmem:[%s3652 + $0x38] sm:$0xf] %vm3509, %v3595
        %3661 = vst.msk [vmem:[%s3652 + $0x44] sm:$0xf] %vm3509, %v3596
        %3662 = vst.msk [vmem:[%s3652 + $0x48] sm:$0xf] %vm3509, %v3597
        %3663 = vst.msk [vmem:[%s3652 + $0x54] sm:$0xf] %vm3509, %v3598
        %3664 = vst.msk [vmem:[%s3652 + $0x58] sm:$0xf] %vm3509, %v3599
        %3665 = vst.msk [vmem:[%s3652 + $0x64] sm:$0xf] %vm3509, %v3600
        %3666 = vst.msk [vmem:[%s3652 + $0x68] sm:$0xf] %vm3509, %v3601
        %3667 = vst.msk [vmem:[%s3652 + $0x74] sm:$0xf] %vm3509, %v3602
        %3668 = vst.msk [vmem:[%s3652 + $0x78] sm:$0xf] %vm3509, %v3603
        %3669 = vst.msk [vmem:[%s3652 + $0x84] sm:$0xf] %vm3509, %v3604
        %3670 = vst.msk [vmem:[%s3652 + $0x88] sm:$0xf] %vm3509, %v3605
        %3671 = vst.msk [vmem:[%s3652 + $0x94] sm:$0xf] %vm3509, %v3606
        %3672 = vst.msk [vmem:[%s3652 + $0x98] sm:$0xf] %vm3509, %v3607
        %3673 = vst.msk [vmem:[%s3652 + $0xa4] sm:$0xf] %vm3509, %v3608
        %3674 = vst.msk [vmem:[%s3652 + $0xa8] sm:$0xf] %vm3509, %v3609
        %3675 = vst.msk [vmem:[%s3652 + $0xb4] sm:$0xf] %vm3509, %v3610
        %3676 = vst.msk [vmem:[%s3652 + $0xb8] sm:$0xf] %vm3509, %v3611
        %3677 = vst.msk [vmem:[%s3652 + $0xc4] sm:$0xf] %vm3509, %v3612
        %3678 = vst.msk [vmem:[%s3652 + $0xc8] sm:$0xf] %vm3509, %v3613
        %3679 = vst.msk [vmem:[%s3652 + $0xd4] sm:$0xf] %vm3509, %v3614
        %3680 = vst.msk [vmem:[%s3652 + $0xd8] sm:$0xf] %vm3509, %v3615
        %3681 = vst.msk [vmem:[%s3652 + $0xe4] sm:$0xf] %vm3509, %v3616
        %3682 = vst.msk [vmem:[%s3652 + $0xe8] sm:$0xf] %vm3509, %v3617
        %3683 = vst.msk [vmem:[%s3652 + $0xf4] sm:$0xf] %vm3509, %v3618
        %3684 = vst.msk [vmem:[%s3652 + $0xf8] sm:$0xf] %vm3509, %v3619
        %v3685 = vld [vmem:[#allocation2] sm:$0x8]
        %v3686 = vld [vmem:[#allocation2 + $0x4] sm:$0xf]
        %v3687 = vld [vmem:[#allocation2 + $0x8] sm:$0xf]
        %v3688 = vld [vmem:[#allocation2 + $0x10] sm:$0x8]
        %v3689 = vld [vmem:[#allocation2 + $0x14] sm:$0xf]
        %v3690 = vld [vmem:[#allocation2 + $0x18] sm:$0xf]
        %v3691 = vld [vmem:[#allocation2 + $0x20] sm:$0x8]
        %v3692 = vld [vmem:[#allocation2 + $0x24] sm:$0xf]
        %v3693 = vld [vmem:[#allocation2 + $0x28] sm:$0xf]
        %v3694 = vld [vmem:[#allocation2 + $0x30] sm:$0x8]
        %v3695 = vld [vmem:[#allocation2 + $0x34] sm:$0xf]
        %v3696 = vld [vmem:[#allocation2 + $0x38] sm:$0xf]
        %v3697 = vld [vmem:[#allocation2 + $0x40] sm:$0x8]
        %v3698 = vld [vmem:[#allocation2 + $0x44] sm:$0xf]
        %v3699 = vld [vmem:[#allocation2 + $0x48] sm:$0xf]
        %v3700 = vld [vmem:[#allocation2 + $0x50] sm:$0x8]
        %v3701 = vld [vmem:[#allocation2 + $0x54] sm:$0xf]
        %v3702 = vld [vmem:[#allocation2 + $0x58] sm:$0xf]
        %v3703 = vld [vmem:[#allocation2 + $0x60] sm:$0x8]
        %v3704 = vld [vmem:[#allocation2 + $0x64] sm:$0xf]
        %v3705 = vld [vmem:[#allocation2 + $0x68] sm:$0xf]
        %v3706 = vld [vmem:[#allocation2 + $0x70] sm:$0x8]
        %v3707 = vld [vmem:[#allocation2 + $0x74] sm:$0xf]
        %v3708 = vld [vmem:[#allocation2 + $0x78] sm:$0xf]
        %v3709 = vld [vmem:[#allocation2 + $0x80] sm:$0x8]
        %v3710 = vld [vmem:[#allocation2 + $0x84] sm:$0xf]
        %v3711 = vld [vmem:[#allocation2 + $0x88] sm:$0xf]
        %v3712 = vld [vmem:[#allocation2 + $0x90] sm:$0x8]
        %v3713 = vld [vmem:[#allocation2 + $0x94] sm:$0xf]
        %v3714 = vld [vmem:[#allocation2 + $0x98] sm:$0xf]
        %v3715 = vld [vmem:[#allocation2 + $0xa0] sm:$0x8]
        %v3716 = vld [vmem:[#allocation2 + $0xa4] sm:$0xf]
        %v3717 = vld [vmem:[#allocation2 + $0xa8] sm:$0xf]
        %v3718 = vld [vmem:[#allocation2 + $0xb0] sm:$0x8]
        %v3719 = vld [vmem:[#allocation2 + $0xb4] sm:$0xf]
        %v3720 = vld [vmem:[#allocation2 + $0xb8] sm:$0xf]
        %v3721 = vld [vmem:[#allocation2 + $0xc0] sm:$0x8]
        %v3722 = vld [vmem:[#allocation2 + $0xc4] sm:$0xf]
        %v3723 = vld [vmem:[#allocation2 + $0xc8] sm:$0xf]
        %v3724 = vld [vmem:[#allocation2 + $0xd0] sm:$0x8]
        %v3725 = vld [vmem:[#allocation2 + $0xd4] sm:$0xf]
        %v3726 = vld [vmem:[#allocation2 + $0xd8] sm:$0xf]
        %v3727 = vld [vmem:[#allocation2 + $0xe0] sm:$0x8]
        %v3728 = vld [vmem:[#allocation2 + $0xe4] sm:$0xf]
        %v3729 = vld [vmem:[#allocation2 + $0xe8] sm:$0xf]
        %v3730 = vld [vmem:[#allocation2 + $0xf0] sm:$0x8]
        %v3731 = vld [vmem:[#allocation2 + $0xf4] sm:$0xf]
        %v3732 = vld [vmem:[#allocation2 + $0xf8] sm:$0xf]
        %v3733 = vld [vmem:[#allocation2 + $0xc] sm:$0x1]
        %v3734 = vld [vmem:[#allocation2 + $0x1c] sm:$0x1]
        %v3735 = vld [vmem:[#allocation2 + $0x2c] sm:$0x1]
        %v3736 = vld [vmem:[#allocation2 + $0x3c] sm:$0x1]
        %v3737 = vld [vmem:[#allocation2 + $0x4c] sm:$0x1]
        %v3738 = vld [vmem:[#allocation2 + $0x5c] sm:$0x1]
        %v3739 = vld [vmem:[#allocation2 + $0x6c] sm:$0x1]
        %v3740 = vld [vmem:[#allocation2 + $0x7c] sm:$0x1]
        %v3741 = vld [vmem:[#allocation2 + $0x8c] sm:$0x1]
        %v3742 = vld [vmem:[#allocation2 + $0x9c] sm:$0x1]
        %v3743 = vld [vmem:[#allocation2 + $0xac] sm:$0x1]
        %v3744 = vld [vmem:[#allocation2 + $0xbc] sm:$0x1]
        %v3745 = vld [vmem:[#allocation2 + $0xcc] sm:$0x1]
        %v3746 = vld [vmem:[#allocation2 + $0xdc] sm:$0x1]
        %v3747 = vld [vmem:[#allocation2 + $0xec] sm:$0x1]
        %v3748 = vld [vmem:[#allocation2 + $0xfc] sm:$0x1]
        %v3749 = vld [vmem:[%s3652] sm:$0x8]
        %v3750 = vld [vmem:[%s3652 + $0x4] sm:$0xf]
        %v3751 = vld [vmem:[%s3652 + $0x8] sm:$0xf]
        %v3752 = vld [vmem:[%s3652 + $0x10] sm:$0x8]
        %v3753 = vld [vmem:[%s3652 + $0x14] sm:$0xf]
        %v3754 = vld [vmem:[%s3652 + $0x18] sm:$0xf]
        %v3755 = vld [vmem:[%s3652 + $0x20] sm:$0x8]
        %v3756 = vld [vmem:[%s3652 + $0x24] sm:$0xf]
        %v3757 = vld [vmem:[%s3652 + $0x28] sm:$0xf]
        %v3758 = vld [vmem:[%s3652 + $0x30] sm:$0x8]
        %v3759 = vld [vmem:[%s3652 + $0x34] sm:$0xf]
        %v3760 = vld [vmem:[%s3652 + $0x38] sm:$0xf]
        %v3761 = vld [vmem:[%s3652 + $0x40] sm:$0x8]
        %v3762 = vld [vmem:[%s3652 + $0x44] sm:$0xf]
        %v3763 = vld [vmem:[%s3652 + $0x48] sm:$0xf]
        %v3764 = vld [vmem:[%s3652 + $0x50] sm:$0x8]
        %v3765 = vld [vmem:[%s3652 + $0x54] sm:$0xf]
        %v3766 = vld [vmem:[%s3652 + $0x58] sm:$0xf]
        %v3767 = vld [vmem:[%s3652 + $0x60] sm:$0x8]
        %v3768 = vld [vmem:[%s3652 + $0x64] sm:$0xf]
        %v3769 = vld [vmem:[%s3652 + $0x68] sm:$0xf]
        %v3770 = vld [vmem:[%s3652 + $0x70] sm:$0x8]
        %v3771 = vld [vmem:[%s3652 + $0x74] sm:$0xf]
        %v3772 = vld [vmem:[%s3652 + $0x78] sm:$0xf]
        %v3773 = vld [vmem:[%s3652 + $0x80] sm:$0x8]
        %v3774 = vld [vmem:[%s3652 + $0x84] sm:$0xf]
        %v3775 = vld [vmem:[%s3652 + $0x88] sm:$0xf]
        %v3776 = vld [vmem:[%s3652 + $0x90] sm:$0x8]
        %v3777 = vld [vmem:[%s3652 + $0x94] sm:$0xf]
        %v3778 = vld [vmem:[%s3652 + $0x98] sm:$0xf]
        %v3779 = vld [vmem:[%s3652 + $0xa0] sm:$0x8]
        %v3780 = vld [vmem:[%s3652 + $0xa4] sm:$0xf]
        %v3781 = vld [vmem:[%s3652 + $0xa8] sm:$0xf]
        %v3782 = vld [vmem:[%s3652 + $0xb0] sm:$0x8]
        %v3783 = vld [vmem:[%s3652 + $0xb4] sm:$0xf]
        %v3784 = vld [vmem:[%s3652 + $0xb8] sm:$0xf]
        %v3785 = vld [vmem:[%s3652 + $0xc0] sm:$0x8]
        %v3786 = vld [vmem:[%s3652 + $0xc4] sm:$0xf]
        %v3787 = vld [vmem:[%s3652 + $0xc8] sm:$0xf]
        %v3788 = vld [vmem:[%s3652 + $0xd0] sm:$0x8]
        %v3789 = vld [vmem:[%s3652 + $0xd4] sm:$0xf]
        %v3790 = vld [vmem:[%s3652 + $0xd8] sm:$0xf]
        %v3791 = vld [vmem:[%s3652 + $0xe0] sm:$0x8]
        %v3792 = vld [vmem:[%s3652 + $0xe4] sm:$0xf]
        %v3793 = vld [vmem:[%s3652 + $0xe8] sm:$0xf]
        %v3794 = vld [vmem:[%s3652 + $0xf0] sm:$0x8]
        %v3795 = vld [vmem:[%s3652 + $0xf4] sm:$0xf]
        %v3796 = vld [vmem:[%s3652 + $0xf8] sm:$0xf]
        %v3797 = vld [vmem:[%s3652 + $0xc] sm:$0x1]
        %v3798 = vld [vmem:[%s3652 + $0x1c] sm:$0x1]
        %v3799 = vld [vmem:[%s3652 + $0x2c] sm:$0x1]
        %v3800 = vld [vmem:[%s3652 + $0x3c] sm:$0x1]
        %v3801 = vld [vmem:[%s3652 + $0x4c] sm:$0x1]
        %v3802 = vld [vmem:[%s3652 + $0x5c] sm:$0x1]
        %v3803 = vld [vmem:[%s3652 + $0x6c] sm:$0x1]
        %v3804 = vld [vmem:[%s3652 + $0x7c] sm:$0x1]
        %v3805 = vld [vmem:[%s3652 + $0x8c] sm:$0x1]
        %v3806 = vld [vmem:[%s3652 + $0x9c] sm:$0x1]
        %v3807 = vld [vmem:[%s3652 + $0xac] sm:$0x1]
        %v3808 = vld [vmem:[%s3652 + $0xbc] sm:$0x1]
        %v3809 = vld [vmem:[%s3652 + $0xcc] sm:$0x1]
        %v3810 = vld [vmem:[%s3652 + $0xdc] sm:$0x1]
        %v3811 = vld [vmem:[%s3652 + $0xec] sm:$0x1]
        %v3812 = vld [vmem:[%s3652 + $0xfc] sm:$0x1]
        %s3813 = scalar_lea.vmem [#allocation2], 32
        %v3814 = vld [vmem:[%s3813] sm:$0x8]
        %v3815 = vld [vmem:[%s3813 + $0x4] sm:$0xf]
        %v3816 = vld [vmem:[%s3813 + $0x8] sm:$0xf]
        %v3817 = vld [vmem:[%s3813 + $0x10] sm:$0x8]
        %v3818 = vld [vmem:[%s3813 + $0x14] sm:$0xf]
        %v3819 = vld [vmem:[%s3813 + $0x18] sm:$0xf]
        %v3820 = vld [vmem:[%s3813 + $0x20] sm:$0x8]
        %v3821 = vld [vmem:[%s3813 + $0x24] sm:$0xf]
        %v3822 = vld [vmem:[%s3813 + $0x28] sm:$0xf]
        %v3823 = vld [vmem:[%s3813 + $0x30] sm:$0x8]
        %v3824 = vld [vmem:[%s3813 + $0x34] sm:$0xf]
        %v3825 = vld [vmem:[%s3813 + $0x38] sm:$0xf]
        %v3826 = vld [vmem:[%s3813 + $0x40] sm:$0x8]
        %v3827 = vld [vmem:[%s3813 + $0x44] sm:$0xf]
        %v3828 = vld [vmem:[%s3813 + $0x48] sm:$0xf]
        %v3829 = vld [vmem:[%s3813 + $0x50] sm:$0x8]
        %v3830 = vld [vmem:[%s3813 + $0x54] sm:$0xf]
        %v3831 = vld [vmem:[%s3813 + $0x58] sm:$0xf]
        %v3832 = vld [vmem:[%s3813 + $0x60] sm:$0x8]
        %v3833 = vld [vmem:[%s3813 + $0x64] sm:$0xf]
        %v3834 = vld [vmem:[%s3813 + $0x68] sm:$0xf]
        %v3835 = vld [vmem:[%s3813 + $0x70] sm:$0x8]
        %v3836 = vld [vmem:[%s3813 + $0x74] sm:$0xf]
        %v3837 = vld [vmem:[%s3813 + $0x78] sm:$0xf]
        %v3838 = vld [vmem:[%s3813 + $0x80] sm:$0x8]
        %v3839 = vld [vmem:[%s3813 + $0x84] sm:$0xf]
        %v3840 = vld [vmem:[%s3813 + $0x88] sm:$0xf]
        %v3841 = vld [vmem:[%s3813 + $0x90] sm:$0x8]
        %v3842 = vld [vmem:[%s3813 + $0x94] sm:$0xf]
        %v3843 = vld [vmem:[%s3813 + $0x98] sm:$0xf]
        %v3844 = vld [vmem:[%s3813 + $0xa0] sm:$0x8]
        %v3845 = vld [vmem:[%s3813 + $0xa4] sm:$0xf]
        %v3846 = vld [vmem:[%s3813 + $0xa8] sm:$0xf]
        %v3847 = vld [vmem:[%s3813 + $0xb0] sm:$0x8]
        %v3848 = vld [vmem:[%s3813 + $0xb4] sm:$0xf]
        %v3849 = vld [vmem:[%s3813 + $0xb8] sm:$0xf]
        %v3850 = vld [vmem:[%s3813 + $0xc0] sm:$0x8]
        %v3851 = vld [vmem:[%s3813 + $0xc4] sm:$0xf]
        %v3852 = vld [vmem:[%s3813 + $0xc8] sm:$0xf]
        %v3853 = vld [vmem:[%s3813 + $0xd0] sm:$0x8]
        %v3854 = vld [vmem:[%s3813 + $0xd4] sm:$0xf]
        %v3855 = vld [vmem:[%s3813 + $0xd8] sm:$0xf]
        %v3856 = vld [vmem:[%s3813 + $0xe0] sm:$0x8]
        %v3857 = vld [vmem:[%s3813 + $0xe4] sm:$0xf]
        %v3858 = vld [vmem:[%s3813 + $0xe8] sm:$0xf]
        %v3859 = vld [vmem:[%s3813 + $0xf0] sm:$0x8]
        %v3860 = vld [vmem:[%s3813 + $0xf4] sm:$0xf]
        %v3861 = vld [vmem:[%s3813 + $0xf8] sm:$0xf]
        %v3862 = vld [vmem:[%s3813 + $0xc] sm:$0x1]
        %v3863 = vld [vmem:[%s3813 + $0x1c] sm:$0x1]
        %v3864 = vld [vmem:[%s3813 + $0x2c] sm:$0x1]
        %v3865 = vld [vmem:[%s3813 + $0x3c] sm:$0x1]
        %v3866 = vld [vmem:[%s3813 + $0x4c] sm:$0x1]
        %v3867 = vld [vmem:[%s3813 + $0x5c] sm:$0x1]
        %v3868 = vld [vmem:[%s3813 + $0x6c] sm:$0x1]
        %v3869 = vld [vmem:[%s3813 + $0x7c] sm:$0x1]
        %v3870 = vld [vmem:[%s3813 + $0x8c] sm:$0x1]
        %v3871 = vld [vmem:[%s3813 + $0x9c] sm:$0x1]
        %v3872 = vld [vmem:[%s3813 + $0xac] sm:$0x1]
        %v3873 = vld [vmem:[%s3813 + $0xbc] sm:$0x1]
        %v3874 = vld [vmem:[%s3813 + $0xcc] sm:$0x1]
        %v3875 = vld [vmem:[%s3813 + $0xdc] sm:$0x1]
        %v3876 = vld [vmem:[%s3813 + $0xec] sm:$0x1]
        %v3877 = vld [vmem:[%s3813 + $0xfc] sm:$0x1]
        %v3926 = vunpack.c.l.b16 %v3685
        %v3927 = vunpack.c.l.b16 %v3686
        %v3928 = vunpack.c.l.b16 %v3687
        %v3929 = vunpack.c.l.b16 %v3688
        %v3930 = vunpack.c.l.b16 %v3689
        %v3931 = vunpack.c.l.b16 %v3690
        %v3932 = vunpack.c.l.b16 %v3691
        %v3933 = vunpack.c.l.b16 %v3692
        %v3934 = vunpack.c.l.b16 %v3693
        %v3935 = vunpack.c.l.b16 %v3694
        %v3936 = vunpack.c.l.b16 %v3695
        %v3937 = vunpack.c.l.b16 %v3696
        %v3938 = vunpack.c.l.b16 %v3697
        %v3939 = vunpack.c.l.b16 %v3698
        %v3940 = vunpack.c.l.b16 %v3699
        %v3941 = vunpack.c.l.b16 %v3700
        %v3942 = vunpack.c.l.b16 %v3701
        %v3943 = vunpack.c.l.b16 %v3702
        %v3944 = vunpack.c.l.b16 %v3703
        %v3945 = vunpack.c.l.b16 %v3704
        %v3946 = vunpack.c.l.b16 %v3705
        %v3947 = vunpack.c.l.b16 %v3706
        %v3948 = vunpack.c.l.b16 %v3707
        %v3949 = vunpack.c.l.b16 %v3708
        %v3950 = vunpack.c.l.b16 %v3709
        %v3951 = vunpack.c.l.b16 %v3710
        %v3952 = vunpack.c.l.b16 %v3711
        %v3953 = vunpack.c.l.b16 %v3712
        %v3954 = vunpack.c.l.b16 %v3713
        %v3955 = vunpack.c.l.b16 %v3714
        %v3956 = vunpack.c.l.b16 %v3715
        %v3957 = vunpack.c.l.b16 %v3716
        %v3958 = vunpack.c.l.b16 %v3717
        %v3959 = vunpack.c.l.b16 %v3718
        %v3960 = vunpack.c.l.b16 %v3719
        %v3961 = vunpack.c.l.b16 %v3720
        %v3962 = vunpack.c.l.b16 %v3721
        %v3963 = vunpack.c.l.b16 %v3722
        %v3964 = vunpack.c.l.b16 %v3723
        %v3965 = vunpack.c.l.b16 %v3724
        %v3966 = vunpack.c.l.b16 %v3725
        %v3967 = vunpack.c.l.b16 %v3726
        %v3968 = vunpack.c.l.b16 %v3727
        %v3969 = vunpack.c.l.b16 %v3728
        %v3970 = vunpack.c.l.b16 %v3729
        %v3971 = vunpack.c.l.b16 %v3730
        %v3972 = vunpack.c.l.b16 %v3731
        %v3973 = vunpack.c.l.b16 %v3732
        %v3974 = vpack.c.b16 %v3927, %v3926
        %v3975 = vpack.c.b16 %v3928, %v3928
        %v3976 = vpack.c.b16 %v3930, %v3929
        %v3977 = vpack.c.b16 %v3931, %v3931
        %v3978 = vpack.c.b16 %v3933, %v3932
        %v3979 = vpack.c.b16 %v3934, %v3934
        %v3980 = vpack.c.b16 %v3936, %v3935
        %v3981 = vpack.c.b16 %v3937, %v3937
        %v3982 = vpack.c.b16 %v3939, %v3938
        %v3983 = vpack.c.b16 %v3940, %v3940
        %v3984 = vpack.c.b16 %v3942, %v3941
        %v3985 = vpack.c.b16 %v3943, %v3943
        %v3986 = vpack.c.b16 %v3945, %v3944
        %v3987 = vpack.c.b16 %v3946, %v3946
        %v3988 = vpack.c.b16 %v3948, %v3947
        %v3989 = vpack.c.b16 %v3949, %v3949
        %v3990 = vpack.c.b16 %v3951, %v3950
        %v3991 = vpack.c.b16 %v3952, %v3952
        %v3992 = vpack.c.b16 %v3954, %v3953
        %v3993 = vpack.c.b16 %v3955, %v3955
        %v3994 = vpack.c.b16 %v3957, %v3956
        %v3995 = vpack.c.b16 %v3958, %v3958
        %v3996 = vpack.c.b16 %v3960, %v3959
        %v3997 = vpack.c.b16 %v3961, %v3961
        %v3998 = vpack.c.b16 %v3963, %v3962
        %v3999 = vpack.c.b16 %v3964, %v3964
        %v4000 = vpack.c.b16 %v3966, %v3965
        %v4001 = vpack.c.b16 %v3967, %v3967
        %v4002 = vpack.c.b16 %v3969, %v3968
        %v4003 = vpack.c.b16 %v3970, %v3970
        %v4004 = vpack.c.b16 %v3972, %v3971
        %v4005 = vpack.c.b16 %v3973, %v3973
        %v4006 = vpack.c.b16 %v3928, %v3927
        %v4007 = vpack.c.b16 %v3931, %v3930
        %v4008 = vpack.c.b16 %v3934, %v3933
        %v4009 = vpack.c.b16 %v3937, %v3936
        %v4010 = vpack.c.b16 %v3940, %v3939
        %v4011 = vpack.c.b16 %v3943, %v3942
        %v4012 = vpack.c.b16 %v3946, %v3945
        %v4013 = vpack.c.b16 %v3949, %v3948
        %v4014 = vpack.c.b16 %v3952, %v3951
        %v4015 = vpack.c.b16 %v3955, %v3954
        %v4016 = vpack.c.b16 %v3958, %v3957
        %v4017 = vpack.c.b16 %v3961, %v3960
        %v4018 = vpack.c.b16 %v3964, %v3963
        %v4019 = vpack.c.b16 %v3967, %v3966
        %v4020 = vpack.c.b16 %v3970, %v3969
        %v4021 = vpack.c.b16 %v3973, %v3972
        %v4023 = vshrl.u32 %v4006, 16
        %v4025 = vrot.slane %v4023, 4
        %v4026 = vshll.u32 %v4006, 16
        %v4028 = vrot.slane %v4026, 5
        %v4029 = vor.u32 %v4025, %v4028
        %v4031 = vshrl.u32 %v4007, 16
        %v4033 = vrot.slane %v4031, 4
        %v4034 = vshll.u32 %v4007, 16
        %v4036 = vrot.slane %v4034, 5
        %v4037 = vor.u32 %v4033, %v4036
        %v4039 = vshrl.u32 %v4008, 16
        %v4041 = vrot.slane %v4039, 4
        %v4042 = vshll.u32 %v4008, 16
        %v4044 = vrot.slane %v4042, 5
        %v4045 = vor.u32 %v4041, %v4044
        %v4047 = vshrl.u32 %v4009, 16
        %v4049 = vrot.slane %v4047, 4
        %v4050 = vshll.u32 %v4009, 16
        %v4052 = vrot.slane %v4050, 5
        %v4053 = vor.u32 %v4049, %v4052
        %v4055 = vshrl.u32 %v4010, 16
        %v4057 = vrot.slane %v4055, 4
        %v4058 = vshll.u32 %v4010, 16
        %v4060 = vrot.slane %v4058, 5
        %v4061 = vor.u32 %v4057, %v4060
        %v4063 = vshrl.u32 %v4011, 16
        %v4065 = vrot.slane %v4063, 4
        %v4066 = vshll.u32 %v4011, 16
        %v4068 = vrot.slane %v4066, 5
        %v4069 = vor.u32 %v4065, %v4068
        %v4071 = vshrl.u32 %v4012, 16
        %v4073 = vrot.slane %v4071, 4
        %v4074 = vshll.u32 %v4012, 16
        %v4076 = vrot.slane %v4074, 5
        %v4077 = vor.u32 %v4073, %v4076
        %v4079 = vshrl.u32 %v4013, 16
        %v4081 = vrot.slane %v4079, 4
        %v4082 = vshll.u32 %v4013, 16
        %v4084 = vrot.slane %v4082, 5
        %v4085 = vor.u32 %v4081, %v4084
        %v4087 = vshrl.u32 %v4014, 16
        %v4089 = vrot.slane %v4087, 4
        %v4090 = vshll.u32 %v4014, 16
        %v4092 = vrot.slane %v4090, 5
        %v4093 = vor.u32 %v4089, %v4092
        %v4095 = vshrl.u32 %v4015, 16
        %v4097 = vrot.slane %v4095, 4
        %v4098 = vshll.u32 %v4015, 16
        %v4100 = vrot.slane %v4098, 5
        %v4101 = vor.u32 %v4097, %v4100
        %v4103 = vshrl.u32 %v4016, 16
        %v4105 = vrot.slane %v4103, 4
        %v4106 = vshll.u32 %v4016, 16
        %v4108 = vrot.slane %v4106, 5
        %v4109 = vor.u32 %v4105, %v4108
        %v4111 = vshrl.u32 %v4017, 16
        %v4113 = vrot.slane %v4111, 4
        %v4114 = vshll.u32 %v4017, 16
        %v4116 = vrot.slane %v4114, 5
        %v4117 = vor.u32 %v4113, %v4116
        %v4119 = vshrl.u32 %v4018, 16
        %v4121 = vrot.slane %v4119, 4
        %v4122 = vshll.u32 %v4018, 16
        %v4124 = vrot.slane %v4122, 5
        %v4125 = vor.u32 %v4121, %v4124
        %v4127 = vshrl.u32 %v4019, 16
        %v4129 = vrot.slane %v4127, 4
        %v4130 = vshll.u32 %v4019, 16
        %v4132 = vrot.slane %v4130, 5
        %v4133 = vor.u32 %v4129, %v4132
        %v4135 = vshrl.u32 %v4020, 16
        %v4137 = vrot.slane %v4135, 4
        %v4138 = vshll.u32 %v4020, 16
        %v4140 = vrot.slane %v4138, 5
        %v4141 = vor.u32 %v4137, %v4140
        %v4143 = vshrl.u32 %v4021, 16
        %v4145 = vrot.slane %v4143, 4
        %v4146 = vshll.u32 %v4021, 16
        %v4148 = vrot.slane %v4146, 5
        %v4149 = vor.u32 %v4145, %v4148
        %4150 = vrot.lane.b32.xlu0 %v4029, 64
        %v4151 = vpop.permute.xlu0 %4150
        %4152 = vrot.lane.b32.xlu0 %v4037, 64
        %v4153 = vpop.permute.xlu0 %4152
        %4154 = vrot.lane.b32.xlu0 %v4045, 64
        %v4155 = vpop.permute.xlu0 %4154
        %4156 = vrot.lane.b32.xlu0 %v4053, 64
        %v4157 = vpop.permute.xlu0 %4156
        %4158 = vrot.lane.b32.xlu0 %v4061, 64
        %v4159 = vpop.permute.xlu0 %4158
        %4160 = vrot.lane.b32.xlu0 %v4069, 64
        %v4161 = vpop.permute.xlu0 %4160
        %4162 = vrot.lane.b32.xlu0 %v4077, 64
        %v4163 = vpop.permute.xlu0 %4162
        %4164 = vrot.lane.b32.xlu0 %v4085, 64
        %v4165 = vpop.permute.xlu0 %4164
        %4166 = vrot.lane.b32.xlu0 %v4093, 64
        %v4167 = vpop.permute.xlu0 %4166
        %4168 = vrot.lane.b32.xlu0 %v4101, 64
        %v4169 = vpop.permute.xlu0 %4168
        %4170 = vrot.lane.b32.xlu0 %v4109, 64
        %v4171 = vpop.permute.xlu0 %4170
        %4172 = vrot.lane.b32.xlu0 %v4117, 64
        %v4173 = vpop.permute.xlu0 %4172
        %4174 = vrot.lane.b32.xlu0 %v4125, 64
        %v4175 = vpop.permute.xlu0 %4174
        %4176 = vrot.lane.b32.xlu0 %v4133, 64
        %v4177 = vpop.permute.xlu0 %4176
        %4178 = vrot.lane.b32.xlu0 %v4141, 64
        %v4179 = vpop.permute.xlu0 %4178
        %4180 = vrot.lane.b32.xlu0 %v4149, 64
        %v4181 = vpop.permute.xlu0 %4180
        %v4198 = vunpack.c.l.b16 %v3733
        %v4199 = vunpack.c.l.b16 %v3734
        %v4200 = vunpack.c.l.b16 %v3735
        %v4201 = vunpack.c.l.b16 %v3736
        %v4202 = vunpack.c.l.b16 %v3737
        %v4203 = vunpack.c.l.b16 %v3738
        %v4204 = vunpack.c.l.b16 %v3739
        %v4205 = vunpack.c.l.b16 %v3740
        %v4206 = vunpack.c.l.b16 %v3741
        %v4207 = vunpack.c.l.b16 %v3742
        %v4208 = vunpack.c.l.b16 %v3743
        %v4209 = vunpack.c.l.b16 %v3744
        %v4210 = vunpack.c.l.b16 %v3745
        %v4211 = vunpack.c.l.b16 %v3746
        %v4212 = vunpack.c.l.b16 %v3747
        %v4213 = vunpack.c.l.b16 %v3748
        %v4214 = vpack.c.b16 %v4198, %v4198
        %v4215 = vpack.c.b16 %v4199, %v4199
        %v4216 = vpack.c.b16 %v4200, %v4200
        %v4217 = vpack.c.b16 %v4201, %v4201
        %v4218 = vpack.c.b16 %v4202, %v4202
        %v4219 = vpack.c.b16 %v4203, %v4203
        %v4220 = vpack.c.b16 %v4204, %v4204
        %v4221 = vpack.c.b16 %v4205, %v4205
        %v4222 = vpack.c.b16 %v4206, %v4206
        %v4223 = vpack.c.b16 %v4207, %v4207
        %v4224 = vpack.c.b16 %v4208, %v4208
        %v4225 = vpack.c.b16 %v4209, %v4209
        %v4226 = vpack.c.b16 %v4210, %v4210
        %v4227 = vpack.c.b16 %v4211, %v4211
        %v4228 = vpack.c.b16 %v4212, %v4212
        %v4229 = vpack.c.b16 %v4213, %v4213
        %vm4230 = vcmask 1042432
        %v4231 = vrot.slane %v4006, 5
        %v4232 = vrot.slane %v4214, 5
        %v4233 = vsel %vm4230, %v4231, %v4232
        %v4234 = vrot.slane %v4007, 5
        %v4235 = vrot.slane %v4215, 5
        %v4236 = vsel %vm4230, %v4234, %v4235
        %v4237 = vrot.slane %v4008, 5
        %v4238 = vrot.slane %v4216, 5
        %v4239 = vsel %vm4230, %v4237, %v4238
        %v4240 = vrot.slane %v4009, 5
        %v4241 = vrot.slane %v4217, 5
        %v4242 = vsel %vm4230, %v4240, %v4241
        %v4243 = vrot.slane %v4010, 5
        %v4244 = vrot.slane %v4218, 5
        %v4245 = vsel %vm4230, %v4243, %v4244
        %v4246 = vrot.slane %v4011, 5
        %v4247 = vrot.slane %v4219, 5
        %v4248 = vsel %vm4230, %v4246, %v4247
        %v4249 = vrot.slane %v4012, 5
        %v4250 = vrot.slane %v4220, 5
        %v4251 = vsel %vm4230, %v4249, %v4250
        %v4252 = vrot.slane %v4013, 5
        %v4253 = vrot.slane %v4221, 5
        %v4254 = vsel %vm4230, %v4252, %v4253
        %v4255 = vrot.slane %v4014, 5
        %v4256 = vrot.slane %v4222, 5
        %v4257 = vsel %vm4230, %v4255, %v4256
        %v4258 = vrot.slane %v4015, 5
        %v4259 = vrot.slane %v4223, 5
        %v4260 = vsel %vm4230, %v4258, %v4259
        %v4261 = vrot.slane %v4016, 5
        %v4262 = vrot.slane %v4224, 5
        %v4263 = vsel %vm4230, %v4261, %v4262
        %v4264 = vrot.slane %v4017, 5
        %v4265 = vrot.slane %v4225, 5
        %v4266 = vsel %vm4230, %v4264, %v4265
        %v4267 = vrot.slane %v4018, 5
        %v4268 = vrot.slane %v4226, 5
        %v4269 = vsel %vm4230, %v4267, %v4268
        %v4270 = vrot.slane %v4019, 5
        %v4271 = vrot.slane %v4227, 5
        %v4272 = vsel %vm4230, %v4270, %v4271
        %v4273 = vrot.slane %v4020, 5
        %v4274 = vrot.slane %v4228, 5
        %v4275 = vsel %vm4230, %v4273, %v4274
        %v4276 = vrot.slane %v4021, 5
        %v4277 = vrot.slane %v4229, 5
        %v4278 = vsel %vm4230, %v4276, %v4277
        %v4327 = vunpack.c.l.b16 %v3749
        %v4328 = vunpack.c.l.b16 %v3750
        %v4329 = vunpack.c.l.b16 %v3751
        %v4330 = vunpack.c.l.b16 %v3752
        %v4331 = vunpack.c.l.b16 %v3753
        %v4332 = vunpack.c.l.b16 %v3754
        %v4333 = vunpack.c.l.b16 %v3755
        %v4334 = vunpack.c.l.b16 %v3756
        %v4335 = vunpack.c.l.b16 %v3757
        %v4336 = vunpack.c.l.b16 %v3758
        %v4337 = vunpack.c.l.b16 %v3759
        %v4338 = vunpack.c.l.b16 %v3760
        %v4339 = vunpack.c.l.b16 %v3761
        %v4340 = vunpack.c.l.b16 %v3762
        %v4341 = vunpack.c.l.b16 %v3763
        %v4342 = vunpack.c.l.b16 %v3764
        %v4343 = vunpack.c.l.b16 %v3765
        %v4344 = vunpack.c.l.b16 %v3766
        %v4345 = vunpack.c.l.b16 %v3767
        %v4346 = vunpack.c.l.b16 %v3768
        %v4347 = vunpack.c.l.b16 %v3769
        %v4348 = vunpack.c.l.b16 %v3770
        %v4349 = vunpack.c.l.b16 %v3771
        %v4350 = vunpack.c.l.b16 %v3772
        %v4351 = vunpack.c.l.b16 %v3773
        %v4352 = vunpack.c.l.b16 %v3774
        %v4353 = vunpack.c.l.b16 %v3775
        %v4354 = vunpack.c.l.b16 %v3776
        %v4355 = vunpack.c.l.b16 %v3777
        %v4356 = vunpack.c.l.b16 %v3778
        %v4357 = vunpack.c.l.b16 %v3779
        %v4358 = vunpack.c.l.b16 %v3780
        %v4359 = vunpack.c.l.b16 %v3781
        %v4360 = vunpack.c.l.b16 %v3782
        %v4361 = vunpack.c.l.b16 %v3783
        %v4362 = vunpack.c.l.b16 %v3784
        %v4363 = vunpack.c.l.b16 %v3785
        %v4364 = vunpack.c.l.b16 %v3786
        %v4365 = vunpack.c.l.b16 %v3787
        %v4366 = vunpack.c.l.b16 %v3788
        %v4367 = vunpack.c.l.b16 %v3789
        %v4368 = vunpack.c.l.b16 %v3790
        %v4369 = vunpack.c.l.b16 %v3791
        %v4370 = vunpack.c.l.b16 %v3792
        %v4371 = vunpack.c.l.b16 %v3793
        %v4372 = vunpack.c.l.b16 %v3794
        %v4373 = vunpack.c.l.b16 %v3795
        %v4374 = vunpack.c.l.b16 %v3796
        %v4375 = vpack.c.b16 %v4328, %v4327
        %v4376 = vpack.c.b16 %v4329, %v4329
        %v4377 = vpack.c.b16 %v4331, %v4330
        %v4378 = vpack.c.b16 %v4332, %v4332
        %v4379 = vpack.c.b16 %v4334, %v4333
        %v4380 = vpack.c.b16 %v4335, %v4335
        %v4381 = vpack.c.b16 %v4337, %v4336
        %v4382 = vpack.c.b16 %v4338, %v4338
        %v4383 = vpack.c.b16 %v4340, %v4339
        %v4384 = vpack.c.b16 %v4341, %v4341
        %v4385 = vpack.c.b16 %v4343, %v4342
        %v4386 = vpack.c.b16 %v4344, %v4344
        %v4387 = vpack.c.b16 %v4346, %v4345
        %v4388 = vpack.c.b16 %v4347, %v4347
        %v4389 = vpack.c.b16 %v4349, %v4348
        %v4390 = vpack.c.b16 %v4350, %v4350
        %v4391 = vpack.c.b16 %v4352, %v4351
        %v4392 = vpack.c.b16 %v4353, %v4353
        %v4393 = vpack.c.b16 %v4355, %v4354
        %v4394 = vpack.c.b16 %v4356, %v4356
        %v4395 = vpack.c.b16 %v4358, %v4357
        %v4396 = vpack.c.b16 %v4359, %v4359
        %v4397 = vpack.c.b16 %v4361, %v4360
        %v4398 = vpack.c.b16 %v4362, %v4362
        %v4399 = vpack.c.b16 %v4364, %v4363
        %v4400 = vpack.c.b16 %v4365, %v4365
        %v4401 = vpack.c.b16 %v4367, %v4366
        %v4402 = vpack.c.b16 %v4368, %v4368
        %v4403 = vpack.c.b16 %v4370, %v4369
        %v4404 = vpack.c.b16 %v4371, %v4371
        %v4405 = vpack.c.b16 %v4373, %v4372
        %v4406 = vpack.c.b16 %v4374, %v4374
        %4407 = vrot.lane.b32.xlu0 %v4375, 64
        %v4408 = vpop.permute.xlu0 %4407
        %4409 = vrot.lane.b32.xlu0 %v4376, 64
        %v4410 = vpop.permute.xlu0 %4409
        %4411 = vrot.lane.b32.xlu0 %v4377, 64
        %v4412 = vpop.permute.xlu0 %4411
        %4413 = vrot.lane.b32.xlu0 %v4378, 64
        %v4414 = vpop.permute.xlu0 %4413
        %4415 = vrot.lane.b32.xlu0 %v4379, 64
        %v4416 = vpop.permute.xlu0 %4415
        %4417 = vrot.lane.b32.xlu0 %v4380, 64
        %v4418 = vpop.permute.xlu0 %4417
        %4419 = vrot.lane.b32.xlu0 %v4381, 64
        %v4420 = vpop.permute.xlu0 %4419
        %4421 = vrot.lane.b32.xlu0 %v4382, 64
        %v4422 = vpop.permute.xlu0 %4421
        %4423 = vrot.lane.b32.xlu0 %v4383, 64
        %v4424 = vpop.permute.xlu0 %4423
        %4425 = vrot.lane.b32.xlu0 %v4384, 64
        %v4426 = vpop.permute.xlu0 %4425
        %4427 = vrot.lane.b32.xlu0 %v4385, 64
        %v4428 = vpop.permute.xlu0 %4427
        %4429 = vrot.lane.b32.xlu0 %v4386, 64
        %v4430 = vpop.permute.xlu0 %4429
        %4431 = vrot.lane.b32.xlu0 %v4387, 64
        %v4432 = vpop.permute.xlu0 %4431
        %4433 = vrot.lane.b32.xlu0 %v4388, 64
        %v4434 = vpop.permute.xlu0 %4433
        %4435 = vrot.lane.b32.xlu0 %v4389, 64
        %v4436 = vpop.permute.xlu0 %4435
        %4437 = vrot.lane.b32.xlu0 %v4390, 64
        %v4438 = vpop.permute.xlu0 %4437
        %4439 = vrot.lane.b32.xlu0 %v4391, 64
        %v4440 = vpop.permute.xlu0 %4439
        %4441 = vrot.lane.b32.xlu0 %v4392, 64
        %v4442 = vpop.permute.xlu0 %4441
        %4443 = vrot.lane.b32.xlu0 %v4393, 64
        %v4444 = vpop.permute.xlu0 %4443
        %4445 = vrot.lane.b32.xlu0 %v4394, 64
        %v4446 = vpop.permute.xlu0 %4445
        %4447 = vrot.lane.b32.xlu0 %v4395, 64
        %v4448 = vpop.permute.xlu0 %4447
        %4449 = vrot.lane.b32.xlu0 %v4396, 64
        %v4450 = vpop.permute.xlu0 %4449
        %4451 = vrot.lane.b32.xlu0 %v4397, 64
        %v4452 = vpop.permute.xlu0 %4451
        %4453 = vrot.lane.b32.xlu0 %v4398, 64
        %v4454 = vpop.permute.xlu0 %4453
        %4455 = vrot.lane.b32.xlu0 %v4399, 64
        %v4456 = vpop.permute.xlu0 %4455
        %4457 = vrot.lane.b32.xlu0 %v4400, 64
        %v4458 = vpop.permute.xlu0 %4457
        %4459 = vrot.lane.b32.xlu0 %v4401, 64
        %v4460 = vpop.permute.xlu0 %4459
        %4461 = vrot.lane.b32.xlu0 %v4402, 64
        %v4462 = vpop.permute.xlu0 %4461
        %4463 = vrot.lane.b32.xlu0 %v4403, 64
        %v4464 = vpop.permute.xlu0 %4463
        %4465 = vrot.lane.b32.xlu0 %v4404, 64
        %v4466 = vpop.permute.xlu0 %4465
        %4467 = vrot.lane.b32.xlu0 %v4405, 64
        %v4468 = vpop.permute.xlu0 %4467
        %4469 = vrot.lane.b32.xlu0 %v4406, 64
        %v4470 = vpop.permute.xlu0 %4469
        %v4471 = vpack.c.b16 %v4329, %v4328
        %v4472 = vpack.c.b16 %v4332, %v4331
        %v4473 = vpack.c.b16 %v4335, %v4334
        %v4474 = vpack.c.b16 %v4338, %v4337
        %v4475 = vpack.c.b16 %v4341, %v4340
        %v4476 = vpack.c.b16 %v4344, %v4343
        %v4477 = vpack.c.b16 %v4347, %v4346
        %v4478 = vpack.c.b16 %v4350, %v4349
        %v4479 = vpack.c.b16 %v4353, %v4352
        %v4480 = vpack.c.b16 %v4356, %v4355
        %v4481 = vpack.c.b16 %v4359, %v4358
        %v4482 = vpack.c.b16 %v4362, %v4361
        %v4483 = vpack.c.b16 %v4365, %v4364
        %v4484 = vpack.c.b16 %v4368, %v4367
        %v4485 = vpack.c.b16 %v4371, %v4370
        %v4486 = vpack.c.b16 %v4374, %v4373
        %v4488 = vshrl.u32 %v4471, 16
        %v4490 = vrot.slane %v4488, 4
        %v4491 = vshll.u32 %v4471, 16
        %v4493 = vrot.slane %v4491, 5
        %v4494 = vor.u32 %v4490, %v4493
        %v4496 = vshrl.u32 %v4472, 16
        %v4498 = vrot.slane %v4496, 4
        %v4499 = vshll.u32 %v4472, 16
        %v4501 = vrot.slane %v4499, 5
        %v4502 = vor.u32 %v4498, %v4501
        %v4504 = vshrl.u32 %v4473, 16
        %v4506 = vrot.slane %v4504, 4
        %v4507 = vshll.u32 %v4473, 16
        %v4509 = vrot.slane %v4507, 5
        %v4510 = vor.u32 %v4506, %v4509
        %v4512 = vshrl.u32 %v4474, 16
        %v4514 = vrot.slane %v4512, 4
        %v4515 = vshll.u32 %v4474, 16
        %v4517 = vrot.slane %v4515, 5
        %v4518 = vor.u32 %v4514, %v4517
        %v4520 = vshrl.u32 %v4475, 16
        %v4522 = vrot.slane %v4520, 4
        %v4523 = vshll.u32 %v4475, 16
        %v4525 = vrot.slane %v4523, 5
        %v4526 = vor.u32 %v4522, %v4525
        %v4528 = vshrl.u32 %v4476, 16
        %v4530 = vrot.slane %v4528, 4
        %v4531 = vshll.u32 %v4476, 16
        %v4533 = vrot.slane %v4531, 5
        %v4534 = vor.u32 %v4530, %v4533
        %v4536 = vshrl.u32 %v4477, 16
        %v4538 = vrot.slane %v4536, 4
        %v4539 = vshll.u32 %v4477, 16
        %v4541 = vrot.slane %v4539, 5
        %v4542 = vor.u32 %v4538, %v4541
        %v4544 = vshrl.u32 %v4478, 16
        %v4546 = vrot.slane %v4544, 4
        %v4547 = vshll.u32 %v4478, 16
        %v4549 = vrot.slane %v4547, 5
        %v4550 = vor.u32 %v4546, %v4549
        %v4552 = vshrl.u32 %v4479, 16
        %v4554 = vrot.slane %v4552, 4
        %v4555 = vshll.u32 %v4479, 16
        %v4557 = vrot.slane %v4555, 5
        %v4558 = vor.u32 %v4554, %v4557
        %v4560 = vshrl.u32 %v4480, 16
        %v4562 = vrot.slane %v4560, 4
        %v4563 = vshll.u32 %v4480, 16
        %v4565 = vrot.slane %v4563, 5
        %v4566 = vor.u32 %v4562, %v4565
        %v4568 = vshrl.u32 %v4481, 16
        %v4570 = vrot.slane %v4568, 4
        %v4571 = vshll.u32 %v4481, 16
        %v4573 = vrot.slane %v4571, 5
        %v4574 = vor.u32 %v4570, %v4573
        %v4576 = vshrl.u32 %v4482, 16
        %v4578 = vrot.slane %v4576, 4
        %v4579 = vshll.u32 %v4482, 16
        %v4581 = vrot.slane %v4579, 5
        %v4582 = vor.u32 %v4578, %v4581
        %v4584 = vshrl.u32 %v4483, 16
        %v4586 = vrot.slane %v4584, 4
        %v4587 = vshll.u32 %v4483, 16
        %v4589 = vrot.slane %v4587, 5
        %v4590 = vor.u32 %v4586, %v4589
        %v4592 = vshrl.u32 %v4484, 16
        %v4594 = vrot.slane %v4592, 4
        %v4595 = vshll.u32 %v4484, 16
        %v4597 = vrot.slane %v4595, 5
        %v4598 = vor.u32 %v4594, %v4597
        %v4600 = vshrl.u32 %v4485, 16
        %v4602 = vrot.slane %v4600, 4
        %v4603 = vshll.u32 %v4485, 16
        %v4605 = vrot.slane %v4603, 5
        %v4606 = vor.u32 %v4602, %v4605
        %v4608 = vshrl.u32 %v4486, 16
        %v4610 = vrot.slane %v4608, 4
        %v4611 = vshll.u32 %v4486, 16
        %v4613 = vrot.slane %v4611, 5
        %v4614 = vor.u32 %v4610, %v4613
        %v4631 = vunpack.c.l.b16 %v3797
        %v4632 = vunpack.c.l.b16 %v3798
        %v4633 = vunpack.c.l.b16 %v3799
        %v4634 = vunpack.c.l.b16 %v3800
        %v4635 = vunpack.c.l.b16 %v3801
        %v4636 = vunpack.c.l.b16 %v3802
        %v4637 = vunpack.c.l.b16 %v3803
        %v4638 = vunpack.c.l.b16 %v3804
        %v4639 = vunpack.c.l.b16 %v3805
        %v4640 = vunpack.c.l.b16 %v3806
        %v4641 = vunpack.c.l.b16 %v3807
        %v4642 = vunpack.c.l.b16 %v3808
        %v4643 = vunpack.c.l.b16 %v3809
        %v4644 = vunpack.c.l.b16 %v3810
        %v4645 = vunpack.c.l.b16 %v3811
        %v4646 = vunpack.c.l.b16 %v3812
        %v4647 = vpack.c.b16 %v4631, %v4631
        %v4648 = vpack.c.b16 %v4632, %v4632
        %v4649 = vpack.c.b16 %v4633, %v4633
        %v4650 = vpack.c.b16 %v4634, %v4634
        %v4651 = vpack.c.b16 %v4635, %v4635
        %v4652 = vpack.c.b16 %v4636, %v4636
        %v4653 = vpack.c.b16 %v4637, %v4637
        %v4654 = vpack.c.b16 %v4638, %v4638
        %v4655 = vpack.c.b16 %v4639, %v4639
        %v4656 = vpack.c.b16 %v4640, %v4640
        %v4657 = vpack.c.b16 %v4641, %v4641
        %v4658 = vpack.c.b16 %v4642, %v4642
        %v4659 = vpack.c.b16 %v4643, %v4643
        %v4660 = vpack.c.b16 %v4644, %v4644
        %v4661 = vpack.c.b16 %v4645, %v4645
        %v4662 = vpack.c.b16 %v4646, %v4646
        %v4663 = vrot.slane %v4471, 5
        %v4664 = vrot.slane %v4647, 5
        %v4665 = vsel %vm4230, %v4663, %v4664
        %v4666 = vrot.slane %v4472, 5
        %v4667 = vrot.slane %v4648, 5
        %v4668 = vsel %vm4230, %v4666, %v4667
        %v4669 = vrot.slane %v4473, 5
        %v4670 = vrot.slane %v4649, 5
        %v4671 = vsel %vm4230, %v4669, %v4670
        %v4672 = vrot.slane %v4474, 5
        %v4673 = vrot.slane %v4650, 5
        %v4674 = vsel %vm4230, %v4672, %v4673
        %v4675 = vrot.slane %v4475, 5
        %v4676 = vrot.slane %v4651, 5
        %v4677 = vsel %vm4230, %v4675, %v4676
        %v4678 = vrot.slane %v4476, 5
        %v4679 = vrot.slane %v4652, 5
        %v4680 = vsel %vm4230, %v4678, %v4679
        %v4681 = vrot.slane %v4477, 5
        %v4682 = vrot.slane %v4653, 5
        %v4683 = vsel %vm4230, %v4681, %v4682
        %v4684 = vrot.slane %v4478, 5
        %v4685 = vrot.slane %v4654, 5
        %v4686 = vsel %vm4230, %v4684, %v4685
        %v4687 = vrot.slane %v4479, 5
        %v4688 = vrot.slane %v4655, 5
        %v4689 = vsel %vm4230, %v4687, %v4688
        %v4690 = vrot.slane %v4480, 5
        %v4691 = vrot.slane %v4656, 5
        %v4692 = vsel %vm4230, %v4690, %v4691
        %v4693 = vrot.slane %v4481, 5
        %v4694 = vrot.slane %v4657, 5
        %v4695 = vsel %vm4230, %v4693, %v4694
        %v4696 = vrot.slane %v4482, 5
        %v4697 = vrot.slane %v4658, 5
        %v4698 = vsel %vm4230, %v4696, %v4697
        %v4699 = vrot.slane %v4483, 5
        %v4700 = vrot.slane %v4659, 5
        %v4701 = vsel %vm4230, %v4699, %v4700
        %v4702 = vrot.slane %v4484, 5
        %v4703 = vrot.slane %v4660, 5
        %v4704 = vsel %vm4230, %v4702, %v4703
        %v4705 = vrot.slane %v4485, 5
        %v4706 = vrot.slane %v4661, 5
        %v4707 = vsel %vm4230, %v4705, %v4706
        %v4708 = vrot.slane %v4486, 5
        %v4709 = vrot.slane %v4662, 5
        %v4710 = vsel %vm4230, %v4708, %v4709
        %4711 = vrot.lane.b32.xlu0 %v4663, 64
        %v4712 = vpop.permute.xlu0 %4711
        %4713 = vrot.lane.b32.xlu0 %v4665, 64
        %v4714 = vpop.permute.xlu0 %4713
        %4715 = vrot.lane.b32.xlu0 %v4666, 64
        %v4716 = vpop.permute.xlu0 %4715
        %4717 = vrot.lane.b32.xlu0 %v4668, 64
        %v4718 = vpop.permute.xlu0 %4717
        %4719 = vrot.lane.b32.xlu0 %v4669, 64
        %v4720 = vpop.permute.xlu0 %4719
        %4721 = vrot.lane.b32.xlu0 %v4671, 64
        %v4722 = vpop.permute.xlu0 %4721
        %4723 = vrot.lane.b32.xlu0 %v4672, 64
        %v4724 = vpop.permute.xlu0 %4723
        %4725 = vrot.lane.b32.xlu0 %v4674, 64
        %v4726 = vpop.permute.xlu0 %4725
        %4727 = vrot.lane.b32.xlu0 %v4675, 64
        %v4728 = vpop.permute.xlu0 %4727
        %4729 = vrot.lane.b32.xlu0 %v4677, 64
        %v4730 = vpop.permute.xlu0 %4729
        %4731 = vrot.lane.b32.xlu0 %v4678, 64
        %v4732 = vpop.permute.xlu0 %4731
        %4733 = vrot.lane.b32.xlu0 %v4680, 64
        %v4734 = vpop.permute.xlu0 %4733
        %4735 = vrot.lane.b32.xlu0 %v4681, 64
        %v4736 = vpop.permute.xlu0 %4735
        %4737 = vrot.lane.b32.xlu0 %v4683, 64
        %v4738 = vpop.permute.xlu0 %4737
        %4739 = vrot.lane.b32.xlu0 %v4684, 64
        %v4740 = vpop.permute.xlu0 %4739
        %4741 = vrot.lane.b32.xlu0 %v4686, 64
        %v4742 = vpop.permute.xlu0 %4741
        %4743 = vrot.lane.b32.xlu0 %v4687, 64
        %v4744 = vpop.permute.xlu0 %4743
        %4745 = vrot.lane.b32.xlu0 %v4689, 64
        %v4746 = vpop.permute.xlu0 %4745
        %4747 = vrot.lane.b32.xlu0 %v4690, 64
        %v4748 = vpop.permute.xlu0 %4747
        %4749 = vrot.lane.b32.xlu0 %v4692, 64
        %v4750 = vpop.permute.xlu0 %4749
        %4751 = vrot.lane.b32.xlu0 %v4693, 64
        %v4752 = vpop.permute.xlu0 %4751
        %4753 = vrot.lane.b32.xlu0 %v4695, 64
        %v4754 = vpop.permute.xlu0 %4753
        %4755 = vrot.lane.b32.xlu0 %v4696, 64
        %v4756 = vpop.permute.xlu0 %4755
        %4757 = vrot.lane.b32.xlu0 %v4698, 64
        %v4758 = vpop.permute.xlu0 %4757
        %4759 = vrot.lane.b32.xlu0 %v4699, 64
        %v4760 = vpop.permute.xlu0 %4759
        %4761 = vrot.lane.b32.xlu0 %v4701, 64
        %v4762 = vpop.permute.xlu0 %4761
        %4763 = vrot.lane.b32.xlu0 %v4702, 64
        %v4764 = vpop.permute.xlu0 %4763
        %4765 = vrot.lane.b32.xlu0 %v4704, 64
        %v4766 = vpop.permute.xlu0 %4765
        %4767 = vrot.lane.b32.xlu0 %v4705, 64
        %v4768 = vpop.permute.xlu0 %4767
        %4769 = vrot.lane.b32.xlu0 %v4707, 64
        %v4770 = vpop.permute.xlu0 %4769
        %4771 = vrot.lane.b32.xlu0 %v4708, 64
        %v4772 = vpop.permute.xlu0 %4771
        %4773 = vrot.lane.b32.xlu0 %v4710, 64
        %v4774 = vpop.permute.xlu0 %4773
        %v4823 = vunpack.c.l.b16 %v3814
        %v4824 = vunpack.c.l.b16 %v3815
        %v4825 = vunpack.c.l.b16 %v3816
        %v4826 = vunpack.c.l.b16 %v3817
        %v4827 = vunpack.c.l.b16 %v3818
        %v4828 = vunpack.c.l.b16 %v3819
        %v4829 = vunpack.c.l.b16 %v3820
        %v4830 = vunpack.c.l.b16 %v3821
        %v4831 = vunpack.c.l.b16 %v3822
        %v4832 = vunpack.c.l.b16 %v3823
        %v4833 = vunpack.c.l.b16 %v3824
        %v4834 = vunpack.c.l.b16 %v3825
        %v4835 = vunpack.c.l.b16 %v3826
        %v4836 = vunpack.c.l.b16 %v3827
        %v4837 = vunpack.c.l.b16 %v3828
        %v4838 = vunpack.c.l.b16 %v3829
        %v4839 = vunpack.c.l.b16 %v3830
        %v4840 = vunpack.c.l.b16 %v3831
        %v4841 = vunpack.c.l.b16 %v3832
        %v4842 = vunpack.c.l.b16 %v3833
        %v4843 = vunpack.c.l.b16 %v3834
        %v4844 = vunpack.c.l.b16 %v3835
        %v4845 = vunpack.c.l.b16 %v3836
        %v4846 = vunpack.c.l.b16 %v3837
        %v4847 = vunpack.c.l.b16 %v3838
        %v4848 = vunpack.c.l.b16 %v3839
        %v4849 = vunpack.c.l.b16 %v3840
        %v4850 = vunpack.c.l.b16 %v3841
        %v4851 = vunpack.c.l.b16 %v3842
        %v4852 = vunpack.c.l.b16 %v3843
        %v4853 = vunpack.c.l.b16 %v3844
        %v4854 = vunpack.c.l.b16 %v3845
        %v4855 = vunpack.c.l.b16 %v3846
        %v4856 = vunpack.c.l.b16 %v3847
        %v4857 = vunpack.c.l.b16 %v3848
        %v4858 = vunpack.c.l.b16 %v3849
        %v4859 = vunpack.c.l.b16 %v3850
        %v4860 = vunpack.c.l.b16 %v3851
        %v4861 = vunpack.c.l.b16 %v3852
        %v4862 = vunpack.c.l.b16 %v3853
        %v4863 = vunpack.c.l.b16 %v3854
        %v4864 = vunpack.c.l.b16 %v3855
        %v4865 = vunpack.c.l.b16 %v3856
        %v4866 = vunpack.c.l.b16 %v3857
        %v4867 = vunpack.c.l.b16 %v3858
        %v4868 = vunpack.c.l.b16 %v3859
        %v4869 = vunpack.c.l.b16 %v3860
        %v4870 = vunpack.c.l.b16 %v3861
        %v4871 = vpack.c.b16 %v4824, %v4823
        %v4872 = vpack.c.b16 %v4825, %v4825
        %v4873 = vpack.c.b16 %v4827, %v4826
        %v4874 = vpack.c.b16 %v4828, %v4828
        %v4875 = vpack.c.b16 %v4830, %v4829
        %v4876 = vpack.c.b16 %v4831, %v4831
        %v4877 = vpack.c.b16 %v4833, %v4832
        %v4878 = vpack.c.b16 %v4834, %v4834
        %v4879 = vpack.c.b16 %v4836, %v4835
        %v4880 = vpack.c.b16 %v4837, %v4837
        %v4881 = vpack.c.b16 %v4839, %v4838
        %v4882 = vpack.c.b16 %v4840, %v4840
        %v4883 = vpack.c.b16 %v4842, %v4841
        %v4884 = vpack.c.b16 %v4843, %v4843
        %v4885 = vpack.c.b16 %v4845, %v4844
        %v4886 = vpack.c.b16 %v4846, %v4846
        %v4887 = vpack.c.b16 %v4848, %v4847
        %v4888 = vpack.c.b16 %v4849, %v4849
        %v4889 = vpack.c.b16 %v4851, %v4850
        %v4890 = vpack.c.b16 %v4852, %v4852
        %v4891 = vpack.c.b16 %v4854, %v4853
        %v4892 = vpack.c.b16 %v4855, %v4855
        %v4893 = vpack.c.b16 %v4857, %v4856
        %v4894 = vpack.c.b16 %v4858, %v4858
        %v4895 = vpack.c.b16 %v4860, %v4859
        %v4896 = vpack.c.b16 %v4861, %v4861
        %v4897 = vpack.c.b16 %v4863, %v4862
        %v4898 = vpack.c.b16 %v4864, %v4864
        %v4899 = vpack.c.b16 %v4866, %v4865
        %v4900 = vpack.c.b16 %v4867, %v4867
        %v4901 = vpack.c.b16 %v4869, %v4868
        %v4902 = vpack.c.b16 %v4870, %v4870
        %v4903 = vpack.c.b16 %v4825, %v4824
        %v4904 = vpack.c.b16 %v4828, %v4827
        %v4905 = vpack.c.b16 %v4831, %v4830
        %v4906 = vpack.c.b16 %v4834, %v4833
        %v4907 = vpack.c.b16 %v4837, %v4836
        %v4908 = vpack.c.b16 %v4840, %v4839
        %v4909 = vpack.c.b16 %v4843, %v4842
        %v4910 = vpack.c.b16 %v4846, %v4845
        %v4911 = vpack.c.b16 %v4849, %v4848
        %v4912 = vpack.c.b16 %v4852, %v4851
        %v4913 = vpack.c.b16 %v4855, %v4854
        %v4914 = vpack.c.b16 %v4858, %v4857
        %v4915 = vpack.c.b16 %v4861, %v4860
        %v4916 = vpack.c.b16 %v4864, %v4863
        %v4917 = vpack.c.b16 %v4867, %v4866
        %v4918 = vpack.c.b16 %v4870, %v4869
        %v4920 = vshrl.u32 %v4903, 16
        %v4922 = vrot.slane %v4920, 4
        %v4923 = vshll.u32 %v4903, 16
        %v4925 = vrot.slane %v4923, 5
        %v4926 = vor.u32 %v4922, %v4925
        %v4928 = vshrl.u32 %v4904, 16
        %v4930 = vrot.slane %v4928, 4
        %v4931 = vshll.u32 %v4904, 16
        %v4933 = vrot.slane %v4931, 5
        %v4934 = vor.u32 %v4930, %v4933
        %v4936 = vshrl.u32 %v4905, 16
        %v4938 = vrot.slane %v4936, 4
        %v4939 = vshll.u32 %v4905, 16
        %v4941 = vrot.slane %v4939, 5
        %v4942 = vor.u32 %v4938, %v4941
        %v4944 = vshrl.u32 %v4906, 16
        %v4946 = vrot.slane %v4944, 4
        %v4947 = vshll.u32 %v4906, 16
        %v4949 = vrot.slane %v4947, 5
        %v4950 = vor.u32 %v4946, %v4949
        %v4952 = vshrl.u32 %v4907, 16
        %v4954 = vrot.slane %v4952, 4
        %v4955 = vshll.u32 %v4907, 16
        %v4957 = vrot.slane %v4955, 5
        %v4958 = vor.u32 %v4954, %v4957
        %v4960 = vshrl.u32 %v4908, 16
        %v4962 = vrot.slane %v4960, 4
        %v4963 = vshll.u32 %v4908, 16
        %v4965 = vrot.slane %v4963, 5
        %v4966 = vor.u32 %v4962, %v4965
        %v4968 = vshrl.u32 %v4909, 16
        %v4970 = vrot.slane %v4968, 4
        %v4971 = vshll.u32 %v4909, 16
        %v4973 = vrot.slane %v4971, 5
        %v4974 = vor.u32 %v4970, %v4973
        %v4976 = vshrl.u32 %v4910, 16
        %v4978 = vrot.slane %v4976, 4
        %v4979 = vshll.u32 %v4910, 16
        %v4981 = vrot.slane %v4979, 5
        %v4982 = vor.u32 %v4978, %v4981
        %v4984 = vshrl.u32 %v4911, 16
        %v4986 = vrot.slane %v4984, 4
        %v4987 = vshll.u32 %v4911, 16
        %v4989 = vrot.slane %v4987, 5
        %v4990 = vor.u32 %v4986, %v4989
        %v4992 = vshrl.u32 %v4912, 16
        %v4994 = vrot.slane %v4992, 4
        %v4995 = vshll.u32 %v4912, 16
        %v4997 = vrot.slane %v4995, 5
        %v4998 = vor.u32 %v4994, %v4997
        %v5000 = vshrl.u32 %v4913, 16
        %v5002 = vrot.slane %v5000, 4
        %v5003 = vshll.u32 %v4913, 16
        %v5005 = vrot.slane %v5003, 5
        %v5006 = vor.u32 %v5002, %v5005
        %v5008 = vshrl.u32 %v4914, 16
        %v5010 = vrot.slane %v5008, 4
        %v5011 = vshll.u32 %v4914, 16
        %v5013 = vrot.slane %v5011, 5
        %v5014 = vor.u32 %v5010, %v5013
        %v5016 = vshrl.u32 %v4915, 16
        %v5018 = vrot.slane %v5016, 4
        %v5019 = vshll.u32 %v4915, 16
        %v5021 = vrot.slane %v5019, 5
        %v5022 = vor.u32 %v5018, %v5021
        %v5024 = vshrl.u32 %v4916, 16
        %v5026 = vrot.slane %v5024, 4
        %v5027 = vshll.u32 %v4916, 16
        %v5029 = vrot.slane %v5027, 5
        %v5030 = vor.u32 %v5026, %v5029
        %v5032 = vshrl.u32 %v4917, 16
        %v5034 = vrot.slane %v5032, 4
        %v5035 = vshll.u32 %v4917, 16
        %v5037 = vrot.slane %v5035, 5
        %v5038 = vor.u32 %v5034, %v5037
        %v5040 = vshrl.u32 %v4918, 16
        %v5042 = vrot.slane %v5040, 4
        %v5043 = vshll.u32 %v4918, 16
        %v5045 = vrot.slane %v5043, 5
        %v5046 = vor.u32 %v5042, %v5045
        %5047 = vrot.lane.b32.xlu0 %v4926, 64
        %v5048 = vpop.permute.xlu0 %5047
        %5049 = vrot.lane.b32.xlu0 %v4934, 64
        %v5050 = vpop.permute.xlu0 %5049
        %5051 = vrot.lane.b32.xlu0 %v4942, 64
        %v5052 = vpop.permute.xlu0 %5051
        %5053 = vrot.lane.b32.xlu0 %v4950, 64
        %v5054 = vpop.permute.xlu0 %5053
        %5055 = vrot.lane.b32.xlu0 %v4958, 64
        %v5056 = vpop.permute.xlu0 %5055
        %5057 = vrot.lane.b32.xlu0 %v4966, 64
        %v5058 = vpop.permute.xlu0 %5057
        %5059 = vrot.lane.b32.xlu0 %v4974, 64
        %v5060 = vpop.permute.xlu0 %5059
        %5061 = vrot.lane.b32.xlu0 %v4982, 64
        %v5062 = vpop.permute.xlu0 %5061
        %5063 = vrot.lane.b32.xlu0 %v4990, 64
        %v5064 = vpop.permute.xlu0 %5063
        %5065 = vrot.lane.b32.xlu0 %v4998, 64
        %v5066 = vpop.permute.xlu0 %5065
        %5067 = vrot.lane.b32.xlu0 %v5006, 64
        %v5068 = vpop.permute.xlu0 %5067
        %5069 = vrot.lane.b32.xlu0 %v5014, 64
        %v5070 = vpop.permute.xlu0 %5069
        %5071 = vrot.lane.b32.xlu0 %v5022, 64
        %v5072 = vpop.permute.xlu0 %5071
        %5073 = vrot.lane.b32.xlu0 %v5030, 64
        %v5074 = vpop.permute.xlu0 %5073
        %5075 = vrot.lane.b32.xlu0 %v5038, 64
        %v5076 = vpop.permute.xlu0 %5075
        %5077 = vrot.lane.b32.xlu0 %v5046, 64
        %v5078 = vpop.permute.xlu0 %5077
        %v5095 = vunpack.c.l.b16 %v3862
        %v5096 = vunpack.c.l.b16 %v3863
        %v5097 = vunpack.c.l.b16 %v3864
        %v5098 = vunpack.c.l.b16 %v3865
        %v5099 = vunpack.c.l.b16 %v3866
        %v5100 = vunpack.c.l.b16 %v3867
        %v5101 = vunpack.c.l.b16 %v3868
        %v5102 = vunpack.c.l.b16 %v3869
        %v5103 = vunpack.c.l.b16 %v3870
        %v5104 = vunpack.c.l.b16 %v3871
        %v5105 = vunpack.c.l.b16 %v3872
        %v5106 = vunpack.c.l.b16 %v3873
        %v5107 = vunpack.c.l.b16 %v3874
        %v5108 = vunpack.c.l.b16 %v3875
        %v5109 = vunpack.c.l.b16 %v3876
        %v5110 = vunpack.c.l.b16 %v3877
        %v5111 = vpack.c.b16 %v5095, %v5095
        %v5112 = vpack.c.b16 %v5096, %v5096
        %v5113 = vpack.c.b16 %v5097, %v5097
        %v5114 = vpack.c.b16 %v5098, %v5098
        %v5115 = vpack.c.b16 %v5099, %v5099
        %v5116 = vpack.c.b16 %v5100, %v5100
        %v5117 = vpack.c.b16 %v5101, %v5101
        %v5118 = vpack.c.b16 %v5102, %v5102
        %v5119 = vpack.c.b16 %v5103, %v5103
        %v5120 = vpack.c.b16 %v5104, %v5104
        %v5121 = vpack.c.b16 %v5105, %v5105
        %v5122 = vpack.c.b16 %v5106, %v5106
        %v5123 = vpack.c.b16 %v5107, %v5107
        %v5124 = vpack.c.b16 %v5108, %v5108
        %v5125 = vpack.c.b16 %v5109, %v5109
        %v5126 = vpack.c.b16 %v5110, %v5110
        %v5127 = vrot.slane %v4903, 5
        %v5128 = vrot.slane %v5111, 5
        %v5129 = vsel %vm4230, %v5127, %v5128
        %v5130 = vrot.slane %v4904, 5
        %v5131 = vrot.slane %v5112, 5
        %v5132 = vsel %vm4230, %v5130, %v5131
        %v5133 = vrot.slane %v4905, 5
        %v5134 = vrot.slane %v5113, 5
        %v5135 = vsel %vm4230, %v5133, %v5134
        %v5136 = vrot.slane %v4906, 5
        %v5137 = vrot.slane %v5114, 5
        %v5138 = vsel %vm4230, %v5136, %v5137
        %v5139 = vrot.slane %v4907, 5
        %v5140 = vrot.slane %v5115, 5
        %v5141 = vsel %vm4230, %v5139, %v5140
        %v5142 = vrot.slane %v4908, 5
        %v5143 = vrot.slane %v5116, 5
        %v5144 = vsel %vm4230, %v5142, %v5143
        %v5145 = vrot.slane %v4909, 5
        %v5146 = vrot.slane %v5117, 5
        %v5147 = vsel %vm4230, %v5145, %v5146
        %v5148 = vrot.slane %v4910, 5
        %v5149 = vrot.slane %v5118, 5
        %v5150 = vsel %vm4230, %v5148, %v5149
        %v5151 = vrot.slane %v4911, 5
        %v5152 = vrot.slane %v5119, 5
        %v5153 = vsel %vm4230, %v5151, %v5152
        %v5154 = vrot.slane %v4912, 5
        %v5155 = vrot.slane %v5120, 5
        %v5156 = vsel %vm4230, %v5154, %v5155
        %v5157 = vrot.slane %v4913, 5
        %v5158 = vrot.slane %v5121, 5
        %v5159 = vsel %vm4230, %v5157, %v5158
        %v5160 = vrot.slane %v4914, 5
        %v5161 = vrot.slane %v5122, 5
        %v5162 = vsel %vm4230, %v5160, %v5161
        %v5163 = vrot.slane %v4915, 5
        %v5164 = vrot.slane %v5123, 5
        %v5165 = vsel %vm4230, %v5163, %v5164
        %v5166 = vrot.slane %v4916, 5
        %v5167 = vrot.slane %v5124, 5
        %v5168 = vsel %vm4230, %v5166, %v5167
        %v5169 = vrot.slane %v4917, 5
        %v5170 = vrot.slane %v5125, 5
        %v5171 = vsel %vm4230, %v5169, %v5170
        %v5172 = vrot.slane %v4918, 5
        %v5173 = vrot.slane %v5126, 5
        %v5174 = vsel %vm4230, %v5172, %v5173
        %vm5175 = vcmask 523264
        %v5178 = vsel %vm5175, %v3974, %v4151
        %v5180 = vsel %vm5175, %v3975, %v4151
        %v5183 = vsel %vm5175, %v3976, %v4153
        %v5185 = vsel %vm5175, %v3977, %v4153
        %v5188 = vsel %vm5175, %v3978, %v4155
        %v5190 = vsel %vm5175, %v3979, %v4155
        %v5193 = vsel %vm5175, %v3980, %v4157
        %v5195 = vsel %vm5175, %v3981, %v4157
        %v5198 = vsel %vm5175, %v3982, %v4159
        %v5200 = vsel %vm5175, %v3983, %v4159
        %v5203 = vsel %vm5175, %v3984, %v4161
        %v5205 = vsel %vm5175, %v3985, %v4161
        %v5208 = vsel %vm5175, %v3986, %v4163
        %v5210 = vsel %vm5175, %v3987, %v4163
        %v5213 = vsel %vm5175, %v3988, %v4165
        %v5215 = vsel %vm5175, %v3989, %v4165
        %v5218 = vsel %vm5175, %v3990, %v4167
        %v5220 = vsel %vm5175, %v3991, %v4167
        %v5223 = vsel %vm5175, %v3992, %v4169
        %v5225 = vsel %vm5175, %v3993, %v4169
        %v5228 = vsel %vm5175, %v3994, %v4171
        %v5230 = vsel %vm5175, %v3995, %v4171
        %v5233 = vsel %vm5175, %v3996, %v4173
        %v5235 = vsel %vm5175, %v3997, %v4173
        %v5238 = vsel %vm5175, %v3998, %v4175
        %v5240 = vsel %vm5175, %v3999, %v4175
        %v5243 = vsel %vm5175, %v4000, %v4177
        %v5245 = vsel %vm5175, %v4001, %v4177
        %v5248 = vsel %vm5175, %v4002, %v4179
        %v5250 = vsel %vm5175, %v4003, %v4179
        %v5253 = vsel %vm5175, %v4004, %v4181
        %v5255 = vsel %vm5175, %v4005, %v4181
        %v5258 = vsel %vm5175, %v4231, %v4408
        %v5261 = vsel %vm5175, %v4233, %v4410
        %v5264 = vsel %vm5175, %v4234, %v4412
        %v5267 = vsel %vm5175, %v4236, %v4414
        %v5270 = vsel %vm5175, %v4237, %v4416
        %v5273 = vsel %vm5175, %v4239, %v4418
        %v5276 = vsel %vm5175, %v4240, %v4420
        %v5279 = vsel %vm5175, %v4242, %v4422
        %v5282 = vsel %vm5175, %v4243, %v4424
        %v5285 = vsel %vm5175, %v4245, %v4426
        %v5288 = vsel %vm5175, %v4246, %v4428
        %v5291 = vsel %vm5175, %v4248, %v4430
        %v5294 = vsel %vm5175, %v4249, %v4432
        %v5297 = vsel %vm5175, %v4251, %v4434
        %v5300 = vsel %vm5175, %v4252, %v4436
        %v5303 = vsel %vm5175, %v4254, %v4438
        %v5306 = vsel %vm5175, %v4255, %v4440
        %v5309 = vsel %vm5175, %v4257, %v4442
        %v5312 = vsel %vm5175, %v4258, %v4444
        %v5315 = vsel %vm5175, %v4260, %v4446
        %v5318 = vsel %vm5175, %v4261, %v4448
        %v5321 = vsel %vm5175, %v4263, %v4450
        %v5324 = vsel %vm5175, %v4264, %v4452
        %v5327 = vsel %vm5175, %v4266, %v4454
        %v5330 = vsel %vm5175, %v4267, %v4456
        %v5333 = vsel %vm5175, %v4269, %v4458
        %v5336 = vsel %vm5175, %v4270, %v4460
        %v5339 = vsel %vm5175, %v4272, %v4462
        %v5342 = vsel %vm5175, %v4273, %v4464
        %v5345 = vsel %vm5175, %v4275, %v4466
        %v5348 = vsel %vm5175, %v4276, %v4468
        %v5351 = vsel %vm5175, %v4278, %v4470
        %v5354 = vsel %vm5175, %v4494, %v4712
        %v5356 = vsel %vm5175, %v4494, %v4714
        %v5359 = vsel %vm5175, %v4502, %v4716
        %v5361 = vsel %vm5175, %v4502, %v4718
        %v5364 = vsel %vm5175, %v4510, %v4720
        %v5366 = vsel %vm5175, %v4510, %v4722
        %v5369 = vsel %vm5175, %v4518, %v4724
        %v5371 = vsel %vm5175, %v4518, %v4726
        %v5374 = vsel %vm5175, %v4526, %v4728
        %v5376 = vsel %vm5175, %v4526, %v4730
        %v5379 = vsel %vm5175, %v4534, %v4732
        %v5381 = vsel %vm5175, %v4534, %v4734
        %v5384 = vsel %vm5175, %v4542, %v4736
        %v5386 = vsel %vm5175, %v4542, %v4738
        %v5389 = vsel %vm5175, %v4550, %v4740
        %v5391 = vsel %vm5175, %v4550, %v4742
        %v5394 = vsel %vm5175, %v4558, %v4744
        %v5396 = vsel %vm5175, %v4558, %v4746
        %v5399 = vsel %vm5175, %v4566, %v4748
        %v5401 = vsel %vm5175, %v4566, %v4750
        %v5404 = vsel %vm5175, %v4574, %v4752
        %v5406 = vsel %vm5175, %v4574, %v4754
        %v5409 = vsel %vm5175, %v4582, %v4756
        %v5411 = vsel %vm5175, %v4582, %v4758
        %v5414 = vsel %vm5175, %v4590, %v4760
        %v5416 = vsel %vm5175, %v4590, %v4762
        %v5419 = vsel %vm5175, %v4598, %v4764
        %v5421 = vsel %vm5175, %v4598, %v4766
        %v5424 = vsel %vm5175, %v4606, %v4768
        %v5426 = vsel %vm5175, %v4606, %v4770
        %v5429 = vsel %vm5175, %v4614, %v4772
        %v5431 = vsel %vm5175, %v4614, %v4774
        %v5434 = vsel %vm5175, %v4871, %v5048
        %v5436 = vsel %vm5175, %v4872, %v5048
        %v5439 = vsel %vm5175, %v4873, %v5050
        %v5441 = vsel %vm5175, %v4874, %v5050
        %v5444 = vsel %vm5175, %v4875, %v5052
        %v5446 = vsel %vm5175, %v4876, %v5052
        %v5449 = vsel %vm5175, %v4877, %v5054
        %v5451 = vsel %vm5175, %v4878, %v5054
        %v5454 = vsel %vm5175, %v4879, %v5056
        %v5456 = vsel %vm5175, %v4880, %v5056
        %v5459 = vsel %vm5175, %v4881, %v5058
        %v5461 = vsel %vm5175, %v4882, %v5058
        %v5464 = vsel %vm5175, %v4883, %v5060
        %v5466 = vsel %vm5175, %v4884, %v5060
        %v5469 = vsel %vm5175, %v4885, %v5062
        %v5471 = vsel %vm5175, %v4886, %v5062
        %v5474 = vsel %vm5175, %v4887, %v5064
        %v5476 = vsel %vm5175, %v4888, %v5064
        %v5479 = vsel %vm5175, %v4889, %v5066
        %v5481 = vsel %vm5175, %v4890, %v5066
        %v5484 = vsel %vm5175, %v4891, %v5068
        %v5486 = vsel %vm5175, %v4892, %v5068
        %v5489 = vsel %vm5175, %v4893, %v5070
        %v5491 = vsel %vm5175, %v4894, %v5070
        %v5494 = vsel %vm5175, %v4895, %v5072
        %v5496 = vsel %vm5175, %v4896, %v5072
        %v5499 = vsel %vm5175, %v4897, %v5074
        %v5501 = vsel %vm5175, %v4898, %v5074
        %v5504 = vsel %vm5175, %v4899, %v5076
        %v5506 = vsel %vm5175, %v4900, %v5076
        %v5509 = vsel %vm5175, %v4901, %v5078
        %v5511 = vsel %vm5175, %v4902, %v5078
        %vm5512 = vsmask.f32 4352
        %v5513 = vshrl.u32 %v5178, 16
        %v5515 = vrot.slane %v5513, 3
        %v5516 = vshll.u32 %v5178, 16
        %v5518 = vrot.slane %v5516, 4
        %v5519 = vor.u32 %v5515, %v5518
        %v5520 = vshrl.u32 %v5180, 16
        %v5522 = vrot.slane %v5520, 3
        %v5523 = vshll.u32 %v5180, 16
        %v5525 = vrot.slane %v5523, 4
        %v5526 = vor.u32 %v5522, %v5525
        %v5527 = vsel %vm5512, %v5519, %v5526
        %v5528 = vshrl.u32 %v5258, 16
        %v5530 = vrot.slane %v5528, 3
        %v5531 = vshll.u32 %v5258, 16
        %v5533 = vrot.slane %v5531, 4
        %v5534 = vor.u32 %v5530, %v5533
        %v5535 = vshrl.u32 %v5261, 16
        %v5537 = vrot.slane %v5535, 3
        %v5538 = vshll.u32 %v5261, 16
        %v5540 = vrot.slane %v5538, 4
        %v5541 = vor.u32 %v5537, %v5540
        %v5542 = vsel %vm5512, %v5534, %v5541
        %v5543 = vshrl.u32 %v5354, 16
        %v5545 = vrot.slane %v5543, 3
        %v5546 = vshll.u32 %v5354, 16
        %v5548 = vrot.slane %v5546, 4
        %v5549 = vor.u32 %v5545, %v5548
        %v5550 = vshrl.u32 %v5356, 16
        %v5552 = vrot.slane %v5550, 3
        %v5553 = vshll.u32 %v5356, 16
        %v5555 = vrot.slane %v5553, 4
        %v5556 = vor.u32 %v5552, %v5555
        %v5557 = vsel %vm5512, %v5549, %v5556
        %v5558 = vshrl.u32 %v5434, 16
        %v5560 = vrot.slane %v5558, 3
        %v5561 = vshll.u32 %v5434, 16
        %v5563 = vrot.slane %v5561, 4
        %v5564 = vor.u32 %v5560, %v5563
        %v5565 = vshrl.u32 %v5436, 16
        %v5567 = vrot.slane %v5565, 3
        %v5568 = vshll.u32 %v5436, 16
        %v5570 = vrot.slane %v5568, 4
        %v5571 = vor.u32 %v5567, %v5570
        %v5572 = vsel %vm5512, %v5564, %v5571
        %v5574 = vshrl.u32 %v5127, 16
        %v5576 = vrot.slane %v5574, 3
        %v5577 = vshll.u32 %v5127, 16
        %v5579 = vrot.slane %v5577, 4
        %v5580 = vor.u32 %v5576, %v5579
        %v5582 = vshrl.u32 %v5129, 16
        %v5584 = vrot.slane %v5582, 3
        %v5585 = vshll.u32 %v5129, 16
        %v5587 = vrot.slane %v5585, 4
        %v5588 = vor.u32 %v5584, %v5587
        %v5589 = vsel %vm5512, %v5580, %v5588
        %v5590 = vshrl.u32 %v5183, 16
        %v5592 = vrot.slane %v5590, 3
        %v5593 = vshll.u32 %v5183, 16
        %v5595 = vrot.slane %v5593, 4
        %v5596 = vor.u32 %v5592, %v5595
        %v5597 = vshrl.u32 %v5185, 16
        %v5599 = vrot.slane %v5597, 3
        %v5600 = vshll.u32 %v5185, 16
        %v5602 = vrot.slane %v5600, 4
        %v5603 = vor.u32 %v5599, %v5602
        %v5604 = vsel %vm5512, %v5596, %v5603
        %v5605 = vshrl.u32 %v5264, 16
        %v5607 = vrot.slane %v5605, 3
        %v5608 = vshll.u32 %v5264, 16
        %v5610 = vrot.slane %v5608, 4
        %v5611 = vor.u32 %v5607, %v5610
        %v5612 = vshrl.u32 %v5267, 16
        %v5614 = vrot.slane %v5612, 3
        %v5615 = vshll.u32 %v5267, 16
        %v5617 = vrot.slane %v5615, 4
        %v5618 = vor.u32 %v5614, %v5617
        %v5619 = vsel %vm5512, %v5611, %v5618
        %v5620 = vshrl.u32 %v5359, 16
        %v5622 = vrot.slane %v5620, 3
        %v5623 = vshll.u32 %v5359, 16
        %v5625 = vrot.slane %v5623, 4
        %v5626 = vor.u32 %v5622, %v5625
        %v5627 = vshrl.u32 %v5361, 16
        %v5629 = vrot.slane %v5627, 3
        %v5630 = vshll.u32 %v5361, 16
        %v5632 = vrot.slane %v5630, 4
        %v5633 = vor.u32 %v5629, %v5632
        %v5634 = vsel %vm5512, %v5626, %v5633
        %v5635 = vshrl.u32 %v5439, 16
        %v5637 = vrot.slane %v5635, 3
        %v5638 = vshll.u32 %v5439, 16
        %v5640 = vrot.slane %v5638, 4
        %v5641 = vor.u32 %v5637, %v5640
        %v5642 = vshrl.u32 %v5441, 16
        %v5644 = vrot.slane %v5642, 3
        %v5645 = vshll.u32 %v5441, 16
        %v5647 = vrot.slane %v5645, 4
        %v5648 = vor.u32 %v5644, %v5647
        %v5649 = vsel %vm5512, %v5641, %v5648
        %v5651 = vshrl.u32 %v5130, 16
        %v5653 = vrot.slane %v5651, 3
        %v5654 = vshll.u32 %v5130, 16
        %v5656 = vrot.slane %v5654, 4
        %v5657 = vor.u32 %v5653, %v5656
        %v5659 = vshrl.u32 %v5132, 16
        %v5661 = vrot.slane %v5659, 3
        %v5662 = vshll.u32 %v5132, 16
        %v5664 = vrot.slane %v5662, 4
        %v5665 = vor.u32 %v5661, %v5664
        %v5666 = vsel %vm5512, %v5657, %v5665
        %v5667 = vshrl.u32 %v5188, 16
        %v5669 = vrot.slane %v5667, 3
        %v5670 = vshll.u32 %v5188, 16
        %v5672 = vrot.slane %v5670, 4
        %v5673 = vor.u32 %v5669, %v5672
        %v5674 = vshrl.u32 %v5190, 16
        %v5676 = vrot.slane %v5674, 3
        %v5677 = vshll.u32 %v5190, 16
        %v5679 = vrot.slane %v5677, 4
        %v5680 = vor.u32 %v5676, %v5679
        %v5681 = vsel %vm5512, %v5673, %v5680
        %v5682 = vshrl.u32 %v5270, 16
        %v5684 = vrot.slane %v5682, 3
        %v5685 = vshll.u32 %v5270, 16
        %v5687 = vrot.slane %v5685, 4
        %v5688 = vor.u32 %v5684, %v5687
        %v5689 = vshrl.u32 %v5273, 16
        %v5691 = vrot.slane %v5689, 3
        %v5692 = vshll.u32 %v5273, 16
        %v5694 = vrot.slane %v5692, 4
        %v5695 = vor.u32 %v5691, %v5694
        %v5696 = vsel %vm5512, %v5688, %v5695
        %v5697 = vshrl.u32 %v5364, 16
        %v5699 = vrot.slane %v5697, 3
        %v5700 = vshll.u32 %v5364, 16
        %v5702 = vrot.slane %v5700, 4
        %v5703 = vor.u32 %v5699, %v5702
        %v5704 = vshrl.u32 %v5366, 16
        %v5706 = vrot.slane %v5704, 3
        %v5707 = vshll.u32 %v5366, 16
        %v5709 = vrot.slane %v5707, 4
        %v5710 = vor.u32 %v5706, %v5709
        %v5711 = vsel %vm5512, %v5703, %v5710
        %v5712 = vshrl.u32 %v5444, 16
        %v5714 = vrot.slane %v5712, 3
        %v5715 = vshll.u32 %v5444, 16
        %v5717 = vrot.slane %v5715, 4
        %v5718 = vor.u32 %v5714, %v5717
        %v5719 = vshrl.u32 %v5446, 16
        %v5721 = vrot.slane %v5719, 3
        %v5722 = vshll.u32 %v5446, 16
        %v5724 = vrot.slane %v5722, 4
        %v5725 = vor.u32 %v5721, %v5724
        %v5726 = vsel %vm5512, %v5718, %v5725
        %v5728 = vshrl.u32 %v5133, 16
        %v5730 = vrot.slane %v5728, 3
        %v5731 = vshll.u32 %v5133, 16
        %v5733 = vrot.slane %v5731, 4
        %v5734 = vor.u32 %v5730, %v5733
        %v5736 = vshrl.u32 %v5135, 16
        %v5738 = vrot.slane %v5736, 3
        %v5739 = vshll.u32 %v5135, 16
        %v5741 = vrot.slane %v5739, 4
        %v5742 = vor.u32 %v5738, %v5741
        %v5743 = vsel %vm5512, %v5734, %v5742
        %v5744 = vshrl.u32 %v5193, 16
        %v5746 = vrot.slane %v5744, 3
        %v5747 = vshll.u32 %v5193, 16
        %v5749 = vrot.slane %v5747, 4
        %v5750 = vor.u32 %v5746, %v5749
        %v5751 = vshrl.u32 %v5195, 16
        %v5753 = vrot.slane %v5751, 3
        %v5754 = vshll.u32 %v5195, 16
        %v5756 = vrot.slane %v5754, 4
        %v5757 = vor.u32 %v5753, %v5756
        %v5758 = vsel %vm5512, %v5750, %v5757
        %v5759 = vshrl.u32 %v5276, 16
        %v5761 = vrot.slane %v5759, 3
        %v5762 = vshll.u32 %v5276, 16
        %v5764 = vrot.slane %v5762, 4
        %v5765 = vor.u32 %v5761, %v5764
        %v5766 = vshrl.u32 %v5279, 16
        %v5768 = vrot.slane %v5766, 3
        %v5769 = vshll.u32 %v5279, 16
        %v5771 = vrot.slane %v5769, 4
        %v5772 = vor.u32 %v5768, %v5771
        %v5773 = vsel %vm5512, %v5765, %v5772
        %v5774 = vshrl.u32 %v5369, 16
        %v5776 = vrot.slane %v5774, 3
        %v5777 = vshll.u32 %v5369, 16
        %v5779 = vrot.slane %v5777, 4
        %v5780 = vor.u32 %v5776, %v5779
        %v5781 = vshrl.u32 %v5371, 16
        %v5783 = vrot.slane %v5781, 3
        %v5784 = vshll.u32 %v5371, 16
        %v5786 = vrot.slane %v5784, 4
        %v5787 = vor.u32 %v5783, %v5786
        %v5788 = vsel %vm5512, %v5780, %v5787
        %v5789 = vshrl.u32 %v5449, 16
        %v5791 = vrot.slane %v5789, 3
        %v5792 = vshll.u32 %v5449, 16
        %v5794 = vrot.slane %v5792, 4
        %v5795 = vor.u32 %v5791, %v5794
        %v5796 = vshrl.u32 %v5451, 16
        %v5798 = vrot.slane %v5796, 3
        %v5799 = vshll.u32 %v5451, 16
        %v5801 = vrot.slane %v5799, 4
        %v5802 = vor.u32 %v5798, %v5801
        %v5803 = vsel %vm5512, %v5795, %v5802
        %v5805 = vshrl.u32 %v5136, 16
        %v5807 = vrot.slane %v5805, 3
        %v5808 = vshll.u32 %v5136, 16
        %v5810 = vrot.slane %v5808, 4
        %v5811 = vor.u32 %v5807, %v5810
        %v5813 = vshrl.u32 %v5138, 16
        %v5815 = vrot.slane %v5813, 3
        %v5816 = vshll.u32 %v5138, 16
        %v5818 = vrot.slane %v5816, 4
        %v5819 = vor.u32 %v5815, %v5818
        %v5820 = vsel %vm5512, %v5811, %v5819
        %v5821 = vshrl.u32 %v5198, 16
        %v5823 = vrot.slane %v5821, 3
        %v5824 = vshll.u32 %v5198, 16
        %v5826 = vrot.slane %v5824, 4
        %v5827 = vor.u32 %v5823, %v5826
        %v5828 = vshrl.u32 %v5200, 16
        %v5830 = vrot.slane %v5828, 3
        %v5831 = vshll.u32 %v5200, 16
        %v5833 = vrot.slane %v5831, 4
        %v5834 = vor.u32 %v5830, %v5833
        %v5835 = vsel %vm5512, %v5827, %v5834
        %v5836 = vshrl.u32 %v5282, 16
        %v5838 = vrot.slane %v5836, 3
        %v5839 = vshll.u32 %v5282, 16
        %v5841 = vrot.slane %v5839, 4
        %v5842 = vor.u32 %v5838, %v5841
        %v5843 = vshrl.u32 %v5285, 16
        %v5845 = vrot.slane %v5843, 3
        %v5846 = vshll.u32 %v5285, 16
        %v5848 = vrot.slane %v5846, 4
        %v5849 = vor.u32 %v5845, %v5848
        %v5850 = vsel %vm5512, %v5842, %v5849
        %v5851 = vshrl.u32 %v5374, 16
        %v5853 = vrot.slane %v5851, 3
        %v5854 = vshll.u32 %v5374, 16
        %v5856 = vrot.slane %v5854, 4
        %v5857 = vor.u32 %v5853, %v5856
        %v5858 = vshrl.u32 %v5376, 16
        %v5860 = vrot.slane %v5858, 3
        %v5861 = vshll.u32 %v5376, 16
        %v5863 = vrot.slane %v5861, 4
        %v5864 = vor.u32 %v5860, %v5863
        %v5865 = vsel %vm5512, %v5857, %v5864
        %v5866 = vshrl.u32 %v5454, 16
        %v5868 = vrot.slane %v5866, 3
        %v5869 = vshll.u32 %v5454, 16
        %v5871 = vrot.slane %v5869, 4
        %v5872 = vor.u32 %v5868, %v5871
        %v5873 = vshrl.u32 %v5456, 16
        %v5875 = vrot.slane %v5873, 3
        %v5876 = vshll.u32 %v5456, 16
        %v5878 = vrot.slane %v5876, 4
        %v5879 = vor.u32 %v5875, %v5878
        %v5880 = vsel %vm5512, %v5872, %v5879
        %v5882 = vshrl.u32 %v5139, 16
        %v5884 = vrot.slane %v5882, 3
        %v5885 = vshll.u32 %v5139, 16
        %v5887 = vrot.slane %v5885, 4
        %v5888 = vor.u32 %v5884, %v5887
        %v5890 = vshrl.u32 %v5141, 16
        %v5892 = vrot.slane %v5890, 3
        %v5893 = vshll.u32 %v5141, 16
        %v5895 = vrot.slane %v5893, 4
        %v5896 = vor.u32 %v5892, %v5895
        %v5897 = vsel %vm5512, %v5888, %v5896
        %v5898 = vshrl.u32 %v5203, 16
        %v5900 = vrot.slane %v5898, 3
        %v5901 = vshll.u32 %v5203, 16
        %v5903 = vrot.slane %v5901, 4
        %v5904 = vor.u32 %v5900, %v5903
        %v5905 = vshrl.u32 %v5205, 16
        %v5907 = vrot.slane %v5905, 3
        %v5908 = vshll.u32 %v5205, 16
        %v5910 = vrot.slane %v5908, 4
        %v5911 = vor.u32 %v5907, %v5910
        %v5912 = vsel %vm5512, %v5904, %v5911
        %v5913 = vshrl.u32 %v5288, 16
        %v5915 = vrot.slane %v5913, 3
        %v5916 = vshll.u32 %v5288, 16
        %v5918 = vrot.slane %v5916, 4
        %v5919 = vor.u32 %v5915, %v5918
        %v5920 = vshrl.u32 %v5291, 16
        %v5922 = vrot.slane %v5920, 3
        %v5923 = vshll.u32 %v5291, 16
        %v5925 = vrot.slane %v5923, 4
        %v5926 = vor.u32 %v5922, %v5925
        %v5927 = vsel %vm5512, %v5919, %v5926
        %v5928 = vshrl.u32 %v5379, 16
        %v5930 = vrot.slane %v5928, 3
        %v5931 = vshll.u32 %v5379, 16
        %v5933 = vrot.slane %v5931, 4
        %v5934 = vor.u32 %v5930, %v5933
        %v5935 = vshrl.u32 %v5381, 16
        %v5937 = vrot.slane %v5935, 3
        %v5938 = vshll.u32 %v5381, 16
        %v5940 = vrot.slane %v5938, 4
        %v5941 = vor.u32 %v5937, %v5940
        %v5942 = vsel %vm5512, %v5934, %v5941
        %v5943 = vshrl.u32 %v5459, 16
        %v5945 = vrot.slane %v5943, 3
        %v5946 = vshll.u32 %v5459, 16
        %v5948 = vrot.slane %v5946, 4
        %v5949 = vor.u32 %v5945, %v5948
        %v5950 = vshrl.u32 %v5461, 16
        %v5952 = vrot.slane %v5950, 3
        %v5953 = vshll.u32 %v5461, 16
        %v5955 = vrot.slane %v5953, 4
        %v5956 = vor.u32 %v5952, %v5955
        %v5957 = vsel %vm5512, %v5949, %v5956
        %v5959 = vshrl.u32 %v5142, 16
        %v5961 = vrot.slane %v5959, 3
        %v5962 = vshll.u32 %v5142, 16
        %v5964 = vrot.slane %v5962, 4
        %v5965 = vor.u32 %v5961, %v5964
        %v5967 = vshrl.u32 %v5144, 16
        %v5969 = vrot.slane %v5967, 3
        %v5970 = vshll.u32 %v5144, 16
        %v5972 = vrot.slane %v5970, 4
        %v5973 = vor.u32 %v5969, %v5972
        %v5974 = vsel %vm5512, %v5965, %v5973
        %v5975 = vshrl.u32 %v5208, 16
        %v5977 = vrot.slane %v5975, 3
        %v5978 = vshll.u32 %v5208, 16
        %v5980 = vrot.slane %v5978, 4
        %v5981 = vor.u32 %v5977, %v5980
        %v5982 = vshrl.u32 %v5210, 16
        %v5984 = vrot.slane %v5982, 3
        %v5985 = vshll.u32 %v5210, 16
        %v5987 = vrot.slane %v5985, 4
        %v5988 = vor.u32 %v5984, %v5987
        %v5989 = vsel %vm5512, %v5981, %v5988
        %v5990 = vshrl.u32 %v5294, 16
        %v5992 = vrot.slane %v5990, 3
        %v5993 = vshll.u32 %v5294, 16
        %v5995 = vrot.slane %v5993, 4
        %v5996 = vor.u32 %v5992, %v5995
        %v5997 = vshrl.u32 %v5297, 16
        %v5999 = vrot.slane %v5997, 3
        %v6000 = vshll.u32 %v5297, 16
        %v6002 = vrot.slane %v6000, 4
        %v6003 = vor.u32 %v5999, %v6002
        %v6004 = vsel %vm5512, %v5996, %v6003
        %v6005 = vshrl.u32 %v5384, 16
        %v6007 = vrot.slane %v6005, 3
        %v6008 = vshll.u32 %v5384, 16
        %v6010 = vrot.slane %v6008, 4
        %v6011 = vor.u32 %v6007, %v6010
        %v6012 = vshrl.u32 %v5386, 16
        %v6014 = vrot.slane %v6012, 3
        %v6015 = vshll.u32 %v5386, 16
        %v6017 = vrot.slane %v6015, 4
        %v6018 = vor.u32 %v6014, %v6017
        %v6019 = vsel %vm5512, %v6011, %v6018
        %v6020 = vshrl.u32 %v5464, 16
        %v6022 = vrot.slane %v6020, 3
        %v6023 = vshll.u32 %v5464, 16
        %v6025 = vrot.slane %v6023, 4
        %v6026 = vor.u32 %v6022, %v6025
        %v6027 = vshrl.u32 %v5466, 16
        %v6029 = vrot.slane %v6027, 3
        %v6030 = vshll.u32 %v5466, 16
        %v6032 = vrot.slane %v6030, 4
        %v6033 = vor.u32 %v6029, %v6032
        %v6034 = vsel %vm5512, %v6026, %v6033
        %v6036 = vshrl.u32 %v5145, 16
        %v6038 = vrot.slane %v6036, 3
        %v6039 = vshll.u32 %v5145, 16
        %v6041 = vrot.slane %v6039, 4
        %v6042 = vor.u32 %v6038, %v6041
        %v6044 = vshrl.u32 %v5147, 16
        %v6046 = vrot.slane %v6044, 3
        %v6047 = vshll.u32 %v5147, 16
        %v6049 = vrot.slane %v6047, 4
        %v6050 = vor.u32 %v6046, %v6049
        %v6051 = vsel %vm5512, %v6042, %v6050
        %v6052 = vshrl.u32 %v5213, 16
        %v6054 = vrot.slane %v6052, 3
        %v6055 = vshll.u32 %v5213, 16
        %v6057 = vrot.slane %v6055, 4
        %v6058 = vor.u32 %v6054, %v6057
        %v6059 = vshrl.u32 %v5215, 16
        %v6061 = vrot.slane %v6059, 3
        %v6062 = vshll.u32 %v5215, 16
        %v6064 = vrot.slane %v6062, 4
        %v6065 = vor.u32 %v6061, %v6064
        %v6066 = vsel %vm5512, %v6058, %v6065
        %v6067 = vshrl.u32 %v5300, 16
        %v6069 = vrot.slane %v6067, 3
        %v6070 = vshll.u32 %v5300, 16
        %v6072 = vrot.slane %v6070, 4
        %v6073 = vor.u32 %v6069, %v6072
        %v6074 = vshrl.u32 %v5303, 16
        %v6076 = vrot.slane %v6074, 3
        %v6077 = vshll.u32 %v5303, 16
        %v6079 = vrot.slane %v6077, 4
        %v6080 = vor.u32 %v6076, %v6079
        %v6081 = vsel %vm5512, %v6073, %v6080
        %v6082 = vshrl.u32 %v5389, 16
        %v6084 = vrot.slane %v6082, 3
        %v6085 = vshll.u32 %v5389, 16
        %v6087 = vrot.slane %v6085, 4
        %v6088 = vor.u32 %v6084, %v6087
        %v6089 = vshrl.u32 %v5391, 16
        %v6091 = vrot.slane %v6089, 3
        %v6092 = vshll.u32 %v5391, 16
        %v6094 = vrot.slane %v6092, 4
        %v6095 = vor.u32 %v6091, %v6094
        %v6096 = vsel %vm5512, %v6088, %v6095
        %v6097 = vshrl.u32 %v5469, 16
        %v6099 = vrot.slane %v6097, 3
        %v6100 = vshll.u32 %v5469, 16
        %v6102 = vrot.slane %v6100, 4
        %v6103 = vor.u32 %v6099, %v6102
        %v6104 = vshrl.u32 %v5471, 16
        %v6106 = vrot.slane %v6104, 3
        %v6107 = vshll.u32 %v5471, 16
        %v6109 = vrot.slane %v6107, 4
        %v6110 = vor.u32 %v6106, %v6109
        %v6111 = vsel %vm5512, %v6103, %v6110
        %v6113 = vshrl.u32 %v5148, 16
        %v6115 = vrot.slane %v6113, 3
        %v6116 = vshll.u32 %v5148, 16
        %v6118 = vrot.slane %v6116, 4
        %v6119 = vor.u32 %v6115, %v6118
        %v6121 = vshrl.u32 %v5150, 16
        %v6123 = vrot.slane %v6121, 3
        %v6124 = vshll.u32 %v5150, 16
        %v6126 = vrot.slane %v6124, 4
        %v6127 = vor.u32 %v6123, %v6126
        %v6128 = vsel %vm5512, %v6119, %v6127
        %v6129 = vshrl.u32 %v5218, 16
        %v6131 = vrot.slane %v6129, 3
        %v6132 = vshll.u32 %v5218, 16
        %v6134 = vrot.slane %v6132, 4
        %v6135 = vor.u32 %v6131, %v6134
        %v6136 = vshrl.u32 %v5220, 16
        %v6138 = vrot.slane %v6136, 3
        %v6139 = vshll.u32 %v5220, 16
        %v6141 = vrot.slane %v6139, 4
        %v6142 = vor.u32 %v6138, %v6141
        %v6143 = vsel %vm5512, %v6135, %v6142
        %v6144 = vshrl.u32 %v5306, 16
        %v6146 = vrot.slane %v6144, 3
        %v6147 = vshll.u32 %v5306, 16
        %v6149 = vrot.slane %v6147, 4
        %v6150 = vor.u32 %v6146, %v6149
        %v6151 = vshrl.u32 %v5309, 16
        %v6153 = vrot.slane %v6151, 3
        %v6154 = vshll.u32 %v5309, 16
        %v6156 = vrot.slane %v6154, 4
        %v6157 = vor.u32 %v6153, %v6156
        %v6158 = vsel %vm5512, %v6150, %v6157
        %v6159 = vshrl.u32 %v5394, 16
        %v6161 = vrot.slane %v6159, 3
        %v6162 = vshll.u32 %v5394, 16
        %v6164 = vrot.slane %v6162, 4
        %v6165 = vor.u32 %v6161, %v6164
        %v6166 = vshrl.u32 %v5396, 16
        %v6168 = vrot.slane %v6166, 3
        %v6169 = vshll.u32 %v5396, 16
        %v6171 = vrot.slane %v6169, 4
        %v6172 = vor.u32 %v6168, %v6171
        %v6173 = vsel %vm5512, %v6165, %v6172
        %v6174 = vshrl.u32 %v5474, 16
        %v6176 = vrot.slane %v6174, 3
        %v6177 = vshll.u32 %v5474, 16
        %v6179 = vrot.slane %v6177, 4
        %v6180 = vor.u32 %v6176, %v6179
        %v6181 = vshrl.u32 %v5476, 16
        %v6183 = vrot.slane %v6181, 3
        %v6184 = vshll.u32 %v5476, 16
        %v6186 = vrot.slane %v6184, 4
        %v6187 = vor.u32 %v6183, %v6186
        %v6188 = vsel %vm5512, %v6180, %v6187
        %v6190 = vshrl.u32 %v5151, 16
        %v6192 = vrot.slane %v6190, 3
        %v6193 = vshll.u32 %v5151, 16
        %v6195 = vrot.slane %v6193, 4
        %v6196 = vor.u32 %v6192, %v6195
        %v6198 = vshrl.u32 %v5153, 16
        %v6200 = vrot.slane %v6198, 3
        %v6201 = vshll.u32 %v5153, 16
        %v6203 = vrot.slane %v6201, 4
        %v6204 = vor.u32 %v6200, %v6203
        %v6205 = vsel %vm5512, %v6196, %v6204
        %v6206 = vshrl.u32 %v5223, 16
        %v6208 = vrot.slane %v6206, 3
        %v6209 = vshll.u32 %v5223, 16
        %v6211 = vrot.slane %v6209, 4
        %v6212 = vor.u32 %v6208, %v6211
        %v6213 = vshrl.u32 %v5225, 16
        %v6215 = vrot.slane %v6213, 3
        %v6216 = vshll.u32 %v5225, 16
        %v6218 = vrot.slane %v6216, 4
        %v6219 = vor.u32 %v6215, %v6218
        %v6220 = vsel %vm5512, %v6212, %v6219
        %v6221 = vshrl.u32 %v5312, 16
        %v6223 = vrot.slane %v6221, 3
        %v6224 = vshll.u32 %v5312, 16
        %v6226 = vrot.slane %v6224, 4
        %v6227 = vor.u32 %v6223, %v6226
        %v6228 = vshrl.u32 %v5315, 16
        %v6230 = vrot.slane %v6228, 3
        %v6231 = vshll.u32 %v5315, 16
        %v6233 = vrot.slane %v6231, 4
        %v6234 = vor.u32 %v6230, %v6233
        %v6235 = vsel %vm5512, %v6227, %v6234
        %v6236 = vshrl.u32 %v5399, 16
        %v6238 = vrot.slane %v6236, 3
        %v6239 = vshll.u32 %v5399, 16
        %v6241 = vrot.slane %v6239, 4
        %v6242 = vor.u32 %v6238, %v6241
        %v6243 = vshrl.u32 %v5401, 16
        %v6245 = vrot.slane %v6243, 3
        %v6246 = vshll.u32 %v5401, 16
        %v6248 = vrot.slane %v6246, 4
        %v6249 = vor.u32 %v6245, %v6248
        %v6250 = vsel %vm5512, %v6242, %v6249
        %v6251 = vshrl.u32 %v5479, 16
        %v6253 = vrot.slane %v6251, 3
        %v6254 = vshll.u32 %v5479, 16
        %v6256 = vrot.slane %v6254, 4
        %v6257 = vor.u32 %v6253, %v6256
        %v6258 = vshrl.u32 %v5481, 16
        %v6260 = vrot.slane %v6258, 3
        %v6261 = vshll.u32 %v5481, 16
        %v6263 = vrot.slane %v6261, 4
        %v6264 = vor.u32 %v6260, %v6263
        %v6265 = vsel %vm5512, %v6257, %v6264
        %v6267 = vshrl.u32 %v5154, 16
        %v6269 = vrot.slane %v6267, 3
        %v6270 = vshll.u32 %v5154, 16
        %v6272 = vrot.slane %v6270, 4
        %v6273 = vor.u32 %v6269, %v6272
        %v6275 = vshrl.u32 %v5156, 16
        %v6277 = vrot.slane %v6275, 3
        %v6278 = vshll.u32 %v5156, 16
        %v6280 = vrot.slane %v6278, 4
        %v6281 = vor.u32 %v6277, %v6280
        %v6282 = vsel %vm5512, %v6273, %v6281
        %v6283 = vshrl.u32 %v5228, 16
        %v6285 = vrot.slane %v6283, 3
        %v6286 = vshll.u32 %v5228, 16
        %v6288 = vrot.slane %v6286, 4
        %v6289 = vor.u32 %v6285, %v6288
        %v6290 = vshrl.u32 %v5230, 16
        %v6292 = vrot.slane %v6290, 3
        %v6293 = vshll.u32 %v5230, 16
        %v6295 = vrot.slane %v6293, 4
        %v6296 = vor.u32 %v6292, %v6295
        %v6297 = vsel %vm5512, %v6289, %v6296
        %v6298 = vshrl.u32 %v5318, 16
        %v6300 = vrot.slane %v6298, 3
        %v6301 = vshll.u32 %v5318, 16
        %v6303 = vrot.slane %v6301, 4
        %v6304 = vor.u32 %v6300, %v6303
        %v6305 = vshrl.u32 %v5321, 16
        %v6307 = vrot.slane %v6305, 3
        %v6308 = vshll.u32 %v5321, 16
        %v6310 = vrot.slane %v6308, 4
        %v6311 = vor.u32 %v6307, %v6310
        %v6312 = vsel %vm5512, %v6304, %v6311
        %v6313 = vshrl.u32 %v5404, 16
        %v6315 = vrot.slane %v6313, 3
        %v6316 = vshll.u32 %v5404, 16
        %v6318 = vrot.slane %v6316, 4
        %v6319 = vor.u32 %v6315, %v6318
        %v6320 = vshrl.u32 %v5406, 16
        %v6322 = vrot.slane %v6320, 3
        %v6323 = vshll.u32 %v5406, 16
        %v6325 = vrot.slane %v6323, 4
        %v6326 = vor.u32 %v6322, %v6325
        %v6327 = vsel %vm5512, %v6319, %v6326
        %v6328 = vshrl.u32 %v5484, 16
        %v6330 = vrot.slane %v6328, 3
        %v6331 = vshll.u32 %v5484, 16
        %v6333 = vrot.slane %v6331, 4
        %v6334 = vor.u32 %v6330, %v6333
        %v6335 = vshrl.u32 %v5486, 16
        %v6337 = vrot.slane %v6335, 3
        %v6338 = vshll.u32 %v5486, 16
        %v6340 = vrot.slane %v6338, 4
        %v6341 = vor.u32 %v6337, %v6340
        %v6342 = vsel %vm5512, %v6334, %v6341
        %v6344 = vshrl.u32 %v5157, 16
        %v6346 = vrot.slane %v6344, 3
        %v6347 = vshll.u32 %v5157, 16
        %v6349 = vrot.slane %v6347, 4
        %v6350 = vor.u32 %v6346, %v6349
        %v6352 = vshrl.u32 %v5159, 16
        %v6354 = vrot.slane %v6352, 3
        %v6355 = vshll.u32 %v5159, 16
        %v6357 = vrot.slane %v6355, 4
        %v6358 = vor.u32 %v6354, %v6357
        %v6359 = vsel %vm5512, %v6350, %v6358
        %v6360 = vshrl.u32 %v5233, 16
        %v6362 = vrot.slane %v6360, 3
        %v6363 = vshll.u32 %v5233, 16
        %v6365 = vrot.slane %v6363, 4
        %v6366 = vor.u32 %v6362, %v6365
        %v6367 = vshrl.u32 %v5235, 16
        %v6369 = vrot.slane %v6367, 3
        %v6370 = vshll.u32 %v5235, 16
        %v6372 = vrot.slane %v6370, 4
        %v6373 = vor.u32 %v6369, %v6372
        %v6374 = vsel %vm5512, %v6366, %v6373
        %v6375 = vshrl.u32 %v5324, 16
        %v6377 = vrot.slane %v6375, 3
        %v6378 = vshll.u32 %v5324, 16
        %v6380 = vrot.slane %v6378, 4
        %v6381 = vor.u32 %v6377, %v6380
        %v6382 = vshrl.u32 %v5327, 16
        %v6384 = vrot.slane %v6382, 3
        %v6385 = vshll.u32 %v5327, 16
        %v6387 = vrot.slane %v6385, 4
        %v6388 = vor.u32 %v6384, %v6387
        %v6389 = vsel %vm5512, %v6381, %v6388
        %v6390 = vshrl.u32 %v5409, 16
        %v6392 = vrot.slane %v6390, 3
        %v6393 = vshll.u32 %v5409, 16
        %v6395 = vrot.slane %v6393, 4
        %v6396 = vor.u32 %v6392, %v6395
        %v6397 = vshrl.u32 %v5411, 16
        %v6399 = vrot.slane %v6397, 3
        %v6400 = vshll.u32 %v5411, 16
        %v6402 = vrot.slane %v6400, 4
        %v6403 = vor.u32 %v6399, %v6402
        %v6404 = vsel %vm5512, %v6396, %v6403
        %v6405 = vshrl.u32 %v5489, 16
        %v6407 = vrot.slane %v6405, 3
        %v6408 = vshll.u32 %v5489, 16
        %v6410 = vrot.slane %v6408, 4
        %v6411 = vor.u32 %v6407, %v6410
        %v6412 = vshrl.u32 %v5491, 16
        %v6414 = vrot.slane %v6412, 3
        %v6415 = vshll.u32 %v5491, 16
        %v6417 = vrot.slane %v6415, 4
        %v6418 = vor.u32 %v6414, %v6417
        %v6419 = vsel %vm5512, %v6411, %v6418
        %v6421 = vshrl.u32 %v5160, 16
        %v6423 = vrot.slane %v6421, 3
        %v6424 = vshll.u32 %v5160, 16
        %v6426 = vrot.slane %v6424, 4
        %v6427 = vor.u32 %v6423, %v6426
        %v6429 = vshrl.u32 %v5162, 16
        %v6431 = vrot.slane %v6429, 3
        %v6432 = vshll.u32 %v5162, 16
        %v6434 = vrot.slane %v6432, 4
        %v6435 = vor.u32 %v6431, %v6434
        %v6436 = vsel %vm5512, %v6427, %v6435
        %v6437 = vshrl.u32 %v5238, 16
        %v6439 = vrot.slane %v6437, 3
        %v6440 = vshll.u32 %v5238, 16
        %v6442 = vrot.slane %v6440, 4
        %v6443 = vor.u32 %v6439, %v6442
        %v6444 = vshrl.u32 %v5240, 16
        %v6446 = vrot.slane %v6444, 3
        %v6447 = vshll.u32 %v5240, 16
        %v6449 = vrot.slane %v6447, 4
        %v6450 = vor.u32 %v6446, %v6449
        %v6451 = vsel %vm5512, %v6443, %v6450
        %v6452 = vshrl.u32 %v5330, 16
        %v6454 = vrot.slane %v6452, 3
        %v6455 = vshll.u32 %v5330, 16
        %v6457 = vrot.slane %v6455, 4
        %v6458 = vor.u32 %v6454, %v6457
        %v6459 = vshrl.u32 %v5333, 16
        %v6461 = vrot.slane %v6459, 3
        %v6462 = vshll.u32 %v5333, 16
        %v6464 = vrot.slane %v6462, 4
        %v6465 = vor.u32 %v6461, %v6464
        %v6466 = vsel %vm5512, %v6458, %v6465
        %v6467 = vshrl.u32 %v5414, 16
        %v6469 = vrot.slane %v6467, 3
        %v6470 = vshll.u32 %v5414, 16
        %v6472 = vrot.slane %v6470, 4
        %v6473 = vor.u32 %v6469, %v6472
        %v6474 = vshrl.u32 %v5416, 16
        %v6476 = vrot.slane %v6474, 3
        %v6477 = vshll.u32 %v5416, 16
        %v6479 = vrot.slane %v6477, 4
        %v6480 = vor.u32 %v6476, %v6479
        %v6481 = vsel %vm5512, %v6473, %v6480
        %v6482 = vshrl.u32 %v5494, 16
        %v6484 = vrot.slane %v6482, 3
        %v6485 = vshll.u32 %v5494, 16
        %v6487 = vrot.slane %v6485, 4
        %v6488 = vor.u32 %v6484, %v6487
        %v6489 = vshrl.u32 %v5496, 16
        %v6491 = vrot.slane %v6489, 3
        %v6492 = vshll.u32 %v5496, 16
        %v6494 = vrot.slane %v6492, 4
        %v6495 = vor.u32 %v6491, %v6494
        %v6496 = vsel %vm5512, %v6488, %v6495
        %v6498 = vshrl.u32 %v5163, 16
        %v6500 = vrot.slane %v6498, 3
        %v6501 = vshll.u32 %v5163, 16
        %v6503 = vrot.slane %v6501, 4
        %v6504 = vor.u32 %v6500, %v6503
        %v6506 = vshrl.u32 %v5165, 16
        %v6508 = vrot.slane %v6506, 3
        %v6509 = vshll.u32 %v5165, 16
        %v6511 = vrot.slane %v6509, 4
        %v6512 = vor.u32 %v6508, %v6511
        %v6513 = vsel %vm5512, %v6504, %v6512
        %v6514 = vshrl.u32 %v5243, 16
        %v6516 = vrot.slane %v6514, 3
        %v6517 = vshll.u32 %v5243, 16
        %v6519 = vrot.slane %v6517, 4
        %v6520 = vor.u32 %v6516, %v6519
        %v6521 = vshrl.u32 %v5245, 16
        %v6523 = vrot.slane %v6521, 3
        %v6524 = vshll.u32 %v5245, 16
        %v6526 = vrot.slane %v6524, 4
        %v6527 = vor.u32 %v6523, %v6526
        %v6528 = vsel %vm5512, %v6520, %v6527
        %v6529 = vshrl.u32 %v5336, 16
        %v6531 = vrot.slane %v6529, 3
        %v6532 = vshll.u32 %v5336, 16
        %v6534 = vrot.slane %v6532, 4
        %v6535 = vor.u32 %v6531, %v6534
        %v6536 = vshrl.u32 %v5339, 16
        %v6538 = vrot.slane %v6536, 3
        %v6539 = vshll.u32 %v5339, 16
        %v6541 = vrot.slane %v6539, 4
        %v6542 = vor.u32 %v6538, %v6541
        %v6543 = vsel %vm5512, %v6535, %v6542
        %v6544 = vshrl.u32 %v5419, 16
        %v6546 = vrot.slane %v6544, 3
        %v6547 = vshll.u32 %v5419, 16
        %v6549 = vrot.slane %v6547, 4
        %v6550 = vor.u32 %v6546, %v6549
        %v6551 = vshrl.u32 %v5421, 16
        %v6553 = vrot.slane %v6551, 3
        %v6554 = vshll.u32 %v5421, 16
        %v6556 = vrot.slane %v6554, 4
        %v6557 = vor.u32 %v6553, %v6556
        %v6558 = vsel %vm5512, %v6550, %v6557
        %v6559 = vshrl.u32 %v5499, 16
        %v6561 = vrot.slane %v6559, 3
        %v6562 = vshll.u32 %v5499, 16
        %v6564 = vrot.slane %v6562, 4
        %v6565 = vor.u32 %v6561, %v6564
        %v6566 = vshrl.u32 %v5501, 16
        %v6568 = vrot.slane %v6566, 3
        %v6569 = vshll.u32 %v5501, 16
        %v6571 = vrot.slane %v6569, 4
        %v6572 = vor.u32 %v6568, %v6571
        %v6573 = vsel %vm5512, %v6565, %v6572
        %v6575 = vshrl.u32 %v5166, 16
        %v6577 = vrot.slane %v6575, 3
        %v6578 = vshll.u32 %v5166, 16
        %v6580 = vrot.slane %v6578, 4
        %v6581 = vor.u32 %v6577, %v6580
        %v6583 = vshrl.u32 %v5168, 16
        %v6585 = vrot.slane %v6583, 3
        %v6586 = vshll.u32 %v5168, 16
        %v6588 = vrot.slane %v6586, 4
        %v6589 = vor.u32 %v6585, %v6588
        %v6590 = vsel %vm5512, %v6581, %v6589
        %v6591 = vshrl.u32 %v5248, 16
        %v6593 = vrot.slane %v6591, 3
        %v6594 = vshll.u32 %v5248, 16
        %v6596 = vrot.slane %v6594, 4
        %v6597 = vor.u32 %v6593, %v6596
        %v6598 = vshrl.u32 %v5250, 16
        %v6600 = vrot.slane %v6598, 3
        %v6601 = vshll.u32 %v5250, 16
        %v6603 = vrot.slane %v6601, 4
        %v6604 = vor.u32 %v6600, %v6603
        %v6605 = vsel %vm5512, %v6597, %v6604
        %v6606 = vshrl.u32 %v5342, 16
        %v6608 = vrot.slane %v6606, 3
        %v6609 = vshll.u32 %v5342, 16
        %v6611 = vrot.slane %v6609, 4
        %v6612 = vor.u32 %v6608, %v6611
        %v6613 = vshrl.u32 %v5345, 16
        %v6615 = vrot.slane %v6613, 3
        %v6616 = vshll.u32 %v5345, 16
        %v6618 = vrot.slane %v6616, 4
        %v6619 = vor.u32 %v6615, %v6618
        %v6620 = vsel %vm5512, %v6612, %v6619
        %v6621 = vshrl.u32 %v5424, 16
        %v6623 = vrot.slane %v6621, 3
        %v6624 = vshll.u32 %v5424, 16
        %v6626 = vrot.slane %v6624, 4
        %v6627 = vor.u32 %v6623, %v6626
        %v6628 = vshrl.u32 %v5426, 16
        %v6630 = vrot.slane %v6628, 3
        %v6631 = vshll.u32 %v5426, 16
        %v6633 = vrot.slane %v6631, 4
        %v6634 = vor.u32 %v6630, %v6633
        %v6635 = vsel %vm5512, %v6627, %v6634
        %v6636 = vshrl.u32 %v5504, 16
        %v6638 = vrot.slane %v6636, 3
        %v6639 = vshll.u32 %v5504, 16
        %v6641 = vrot.slane %v6639, 4
        %v6642 = vor.u32 %v6638, %v6641
        %v6643 = vshrl.u32 %v5506, 16
        %v6645 = vrot.slane %v6643, 3
        %v6646 = vshll.u32 %v5506, 16
        %v6648 = vrot.slane %v6646, 4
        %v6649 = vor.u32 %v6645, %v6648
        %v6650 = vsel %vm5512, %v6642, %v6649
        %v6652 = vshrl.u32 %v5169, 16
        %v6654 = vrot.slane %v6652, 3
        %v6655 = vshll.u32 %v5169, 16
        %v6657 = vrot.slane %v6655, 4
        %v6658 = vor.u32 %v6654, %v6657
        %v6660 = vshrl.u32 %v5171, 16
        %v6662 = vrot.slane %v6660, 3
        %v6663 = vshll.u32 %v5171, 16
        %v6665 = vrot.slane %v6663, 4
        %v6666 = vor.u32 %v6662, %v6665
        %v6667 = vsel %vm5512, %v6658, %v6666
        %v6668 = vshrl.u32 %v5253, 16
        %v6670 = vrot.slane %v6668, 3
        %v6671 = vshll.u32 %v5253, 16
        %v6673 = vrot.slane %v6671, 4
        %v6674 = vor.u32 %v6670, %v6673
        %v6675 = vshrl.u32 %v5255, 16
        %v6677 = vrot.slane %v6675, 3
        %v6678 = vshll.u32 %v5255, 16
        %v6680 = vrot.slane %v6678, 4
        %v6681 = vor.u32 %v6677, %v6680
        %v6682 = vsel %vm5512, %v6674, %v6681
        %v6683 = vshrl.u32 %v5348, 16
        %v6685 = vrot.slane %v6683, 3
        %v6686 = vshll.u32 %v5348, 16
        %v6688 = vrot.slane %v6686, 4
        %v6689 = vor.u32 %v6685, %v6688
        %v6690 = vshrl.u32 %v5351, 16
        %v6692 = vrot.slane %v6690, 3
        %v6693 = vshll.u32 %v5351, 16
        %v6695 = vrot.slane %v6693, 4
        %v6696 = vor.u32 %v6692, %v6695
        %v6697 = vsel %vm5512, %v6689, %v6696
        %v6698 = vshrl.u32 %v5429, 16
        %v6700 = vrot.slane %v6698, 3
        %v6701 = vshll.u32 %v5429, 16
        %v6703 = vrot.slane %v6701, 4
        %v6704 = vor.u32 %v6700, %v6703
        %v6705 = vshrl.u32 %v5431, 16
        %v6707 = vrot.slane %v6705, 3
        %v6708 = vshll.u32 %v5431, 16
        %v6710 = vrot.slane %v6708, 4
        %v6711 = vor.u32 %v6707, %v6710
        %v6712 = vsel %vm5512, %v6704, %v6711
        %v6713 = vshrl.u32 %v5509, 16
        %v6715 = vrot.slane %v6713, 3
        %v6716 = vshll.u32 %v5509, 16
        %v6718 = vrot.slane %v6716, 4
        %v6719 = vor.u32 %v6715, %v6718
        %v6720 = vshrl.u32 %v5511, 16
        %v6722 = vrot.slane %v6720, 3
        %v6723 = vshll.u32 %v5511, 16
        %v6725 = vrot.slane %v6723, 4
        %v6726 = vor.u32 %v6722, %v6725
        %v6727 = vsel %vm5512, %v6719, %v6726
        %v6729 = vshrl.u32 %v5172, 16
        %v6731 = vrot.slane %v6729, 3
        %v6732 = vshll.u32 %v5172, 16
        %v6734 = vrot.slane %v6732, 4
        %v6735 = vor.u32 %v6731, %v6734
        %v6737 = vshrl.u32 %v5174, 16
        %v6739 = vrot.slane %v6737, 3
        %v6740 = vshll.u32 %v5174, 16
        %v6742 = vrot.slane %v6740, 4
        %v6743 = vor.u32 %v6739, %v6742
        %v6744 = vsel %vm5512, %v6735, %v6743
        %v6809 = vld [vmem:[%s3] sm:$0xf]
        %v6810 = vld [vmem:[%s3 + $0x4] sm:$0xf]
        %v6811 = vld [vmem:[%s3 + $0x8] sm:$0xf]
        %v6812 = vld [vmem:[%s3 + $0xc] sm:$0xf]
        %v6813 = vld [vmem:[%s3 + $0x10] sm:$0xf]
        %v6814 = vld [vmem:[%s3 + $0x14] sm:$0xf]
        %v6815 = vld [vmem:[%s3 + $0x18] sm:$0xf]
        %v6816 = vld [vmem:[%s3 + $0x1c] sm:$0xf]
        %v6817 = vld [vmem:[%s3 + $0x20] sm:$0xf]
        %v6818 = vld [vmem:[%s3 + $0x24] sm:$0xf]
        %v6819 = vld [vmem:[%s3 + $0x28] sm:$0xf]
        %v6820 = vld [vmem:[%s3 + $0x2c] sm:$0xf]
        %v6821 = vld [vmem:[%s3 + $0x30] sm:$0xf]
        %v6822 = vld [vmem:[%s3 + $0x34] sm:$0xf]
        %v6823 = vld [vmem:[%s3 + $0x38] sm:$0xf]
        %v6824 = vld [vmem:[%s3 + $0x3c] sm:$0xf]
        %v6825 = vld [vmem:[%s3 + $0x40] sm:$0xf]
        %v6826 = vld [vmem:[%s3 + $0x44] sm:$0xf]
        %v6827 = vld [vmem:[%s3 + $0x48] sm:$0xf]
        %v6828 = vld [vmem:[%s3 + $0x4c] sm:$0xf]
        %v6829 = vld [vmem:[%s3 + $0x50] sm:$0xf]
        %v6830 = vld [vmem:[%s3 + $0x54] sm:$0xf]
        %v6831 = vld [vmem:[%s3 + $0x58] sm:$0xf]
        %v6832 = vld [vmem:[%s3 + $0x5c] sm:$0xf]
        %v6833 = vld [vmem:[%s3 + $0x60] sm:$0xf]
        %v6834 = vld [vmem:[%s3 + $0x64] sm:$0xf]
        %v6835 = vld [vmem:[%s3 + $0x68] sm:$0xf]
        %v6836 = vld [vmem:[%s3 + $0x6c] sm:$0xf]
        %v6837 = vld [vmem:[%s3 + $0x70] sm:$0xf]
        %v6838 = vld [vmem:[%s3 + $0x74] sm:$0xf]
        %v6839 = vld [vmem:[%s3 + $0x78] sm:$0xf]
        %v6840 = vld [vmem:[%s3 + $0x7c] sm:$0xf]
        %v6841 = vld [vmem:[%s3 + $0x80] sm:$0xf]
        %v6842 = vld [vmem:[%s3 + $0x84] sm:$0xf]
        %v6843 = vld [vmem:[%s3 + $0x88] sm:$0xf]
        %v6844 = vld [vmem:[%s3 + $0x8c] sm:$0xf]
        %v6845 = vld [vmem:[%s3 + $0x90] sm:$0xf]
        %v6846 = vld [vmem:[%s3 + $0x94] sm:$0xf]
        %v6847 = vld [vmem:[%s3 + $0x98] sm:$0xf]
        %v6848 = vld [vmem:[%s3 + $0x9c] sm:$0xf]
        %v6849 = vld [vmem:[%s3 + $0xa0] sm:$0xf]
        %v6850 = vld [vmem:[%s3 + $0xa4] sm:$0xf]
        %v6851 = vld [vmem:[%s3 + $0xa8] sm:$0xf]
        %v6852 = vld [vmem:[%s3 + $0xac] sm:$0xf]
        %v6853 = vld [vmem:[%s3 + $0xb0] sm:$0xf]
        %v6854 = vld [vmem:[%s3 + $0xb4] sm:$0xf]
        %v6855 = vld [vmem:[%s3 + $0xb8] sm:$0xf]
        %v6856 = vld [vmem:[%s3 + $0xbc] sm:$0xf]
        %v6857 = vld [vmem:[%s3 + $0xc0] sm:$0xf]
        %v6858 = vld [vmem:[%s3 + $0xc4] sm:$0xf]
        %v6859 = vld [vmem:[%s3 + $0xc8] sm:$0xf]
        %v6860 = vld [vmem:[%s3 + $0xcc] sm:$0xf]
        %v6861 = vld [vmem:[%s3 + $0xd0] sm:$0xf]
        %v6862 = vld [vmem:[%s3 + $0xd4] sm:$0xf]
        %v6863 = vld [vmem:[%s3 + $0xd8] sm:$0xf]
        %v6864 = vld [vmem:[%s3 + $0xdc] sm:$0xf]
        %v6865 = vld [vmem:[%s3 + $0xe0] sm:$0xf]
        %v6866 = vld [vmem:[%s3 + $0xe4] sm:$0xf]
        %v6867 = vld [vmem:[%s3 + $0xe8] sm:$0xf]
        %v6868 = vld [vmem:[%s3 + $0xec] sm:$0xf]
        %v6869 = vld [vmem:[%s3 + $0xf0] sm:$0xf]
        %v6870 = vld [vmem:[%s3 + $0xf4] sm:$0xf]
        %v6871 = vld [vmem:[%s3 + $0xf8] sm:$0xf]
        %v6872 = vld [vmem:[%s3 + $0xfc] sm:$0xf]
        %v6873 = vld [vmem:[%s3 + $0x100] sm:$0xf]
        %v6874 = vld [vmem:[%s3 + $0x104] sm:$0xf]
        %v6875 = vld [vmem:[%s3 + $0x108] sm:$0xf]
        %v6876 = vld [vmem:[%s3 + $0x10c] sm:$0xf]
        %v6877 = vld [vmem:[%s3 + $0x110] sm:$0xf]
        %v6878 = vld [vmem:[%s3 + $0x114] sm:$0xf]
        %v6879 = vld [vmem:[%s3 + $0x118] sm:$0xf]
        %v6880 = vld [vmem:[%s3 + $0x11c] sm:$0xf]
        %v6881 = vld [vmem:[%s4] sm:$0x1]
        %v6883 = vlaneseq
        %v6884 = vshrl.u32 %v6883, 7
        %v6885 = vsub.s32 0, %v6884
        %v6886 = vrot.slane %v6881, %v6885
        %v6960 = vunpack.c.l.b16 %v6809
        %v6961 = vunpack.c.l.b16 %v6810
        %v6962 = vunpack.c.l.b16 %v6811
        %v6963 = vunpack.c.l.b16 %v6812
        %v6964 = vunpack.c.l.b16 %v6813
        %v6965 = vunpack.c.l.b16 %v6814
        %v6966 = vunpack.c.l.b16 %v6815
        %v6967 = vunpack.c.l.b16 %v6816
        %v6968 = vunpack.c.l.b16 %v6817
        %v6969 = vunpack.c.l.b16 %v6818
        %v6970 = vunpack.c.l.b16 %v6819
        %v6971 = vunpack.c.l.b16 %v6820
        %v6972 = vunpack.c.l.b16 %v6821
        %v6973 = vunpack.c.l.b16 %v6822
        %v6974 = vunpack.c.l.b16 %v6823
        %v6975 = vunpack.c.l.b16 %v6824
        %v6976 = vunpack.c.l.b16 %v6825
        %v6977 = vunpack.c.l.b16 %v6826
        %v6978 = vunpack.c.l.b16 %v6827
        %v6979 = vunpack.c.l.b16 %v6828
        %v6980 = vunpack.c.l.b16 %v6829
        %v6981 = vunpack.c.l.b16 %v6830
        %v6982 = vunpack.c.l.b16 %v6831
        %v6983 = vunpack.c.l.b16 %v6832
        %v6984 = vunpack.c.l.b16 %v6833
        %v6985 = vunpack.c.l.b16 %v6834
        %v6986 = vunpack.c.l.b16 %v6835
        %v6987 = vunpack.c.l.b16 %v6836
        %v6988 = vunpack.c.l.b16 %v6837
        %v6989 = vunpack.c.l.b16 %v6838
        %v6990 = vunpack.c.l.b16 %v6839
        %v6991 = vunpack.c.l.b16 %v6840
        %v6992 = vunpack.c.l.b16 %v6841
        %v6993 = vunpack.c.l.b16 %v6842
        %v6994 = vunpack.c.l.b16 %v6843
        %v6995 = vunpack.c.l.b16 %v6844
        %v6996 = vunpack.c.l.b16 %v6845
        %v6997 = vunpack.c.l.b16 %v6846
        %v6998 = vunpack.c.l.b16 %v6847
        %v6999 = vunpack.c.l.b16 %v6848
        %v7000 = vunpack.c.l.b16 %v6849
        %v7001 = vunpack.c.l.b16 %v6850
        %v7002 = vunpack.c.l.b16 %v6851
        %v7003 = vunpack.c.l.b16 %v6852
        %v7004 = vunpack.c.l.b16 %v6853
        %v7005 = vunpack.c.l.b16 %v6854
        %v7006 = vunpack.c.l.b16 %v6855
        %v7007 = vunpack.c.l.b16 %v6856
        %v7008 = vunpack.c.l.b16 %v6857
        %v7009 = vunpack.c.l.b16 %v6858
        %v7010 = vunpack.c.l.b16 %v6859
        %v7011 = vunpack.c.l.b16 %v6860
        %v7012 = vunpack.c.l.b16 %v6861
        %v7013 = vunpack.c.l.b16 %v6862
        %v7014 = vunpack.c.l.b16 %v6863
        %v7015 = vunpack.c.l.b16 %v6864
        %v7016 = vunpack.c.l.b16 %v6865
        %v7017 = vunpack.c.l.b16 %v6866
        %v7018 = vunpack.c.l.b16 %v6867
        %v7019 = vunpack.c.l.b16 %v6868
        %v7020 = vunpack.c.l.b16 %v6869
        %v7021 = vunpack.c.l.b16 %v6870
        %v7022 = vunpack.c.l.b16 %v6871
        %v7023 = vunpack.c.l.b16 %v6872
        %v7024 = vunpack.c.l.b16 %v6873
        %v7025 = vunpack.c.l.b16 %v6874
        %v7026 = vunpack.c.l.b16 %v6875
        %v7027 = vunpack.c.l.b16 %v6876
        %v7028 = vunpack.c.l.b16 %v6877
        %v7029 = vunpack.c.l.b16 %v6878
        %v7030 = vunpack.c.l.b16 %v6879
        %v7031 = vunpack.c.l.b16 %v6880
        %v7032 = vpack.c.b16 %v6961, %v6960
        %v7033 = vpack.c.b16 %v6963, %v6962
        %v7034 = vpack.c.b16 %v6965, %v6964
        %v7035 = vpack.c.b16 %v6967, %v6966
        %v7036 = vpack.c.b16 %v6969, %v6968
        %v7037 = vpack.c.b16 %v6971, %v6970
        %v7038 = vpack.c.b16 %v6973, %v6972
        %v7039 = vpack.c.b16 %v6975, %v6974
        %v7040 = vpack.c.b16 %v6977, %v6976
        %v7041 = vpack.c.b16 %v6979, %v6978
        %v7042 = vpack.c.b16 %v6981, %v6980
        %v7043 = vpack.c.b16 %v6983, %v6982
        %v7044 = vpack.c.b16 %v6985, %v6984
        %v7045 = vpack.c.b16 %v6987, %v6986
        %v7046 = vpack.c.b16 %v6989, %v6988
        %v7047 = vpack.c.b16 %v6991, %v6990
        %v7048 = vpack.c.b16 %v6993, %v6992
        %v7049 = vpack.c.b16 %v6995, %v6994
        %v7050 = vpack.c.b16 %v6997, %v6996
        %v7051 = vpack.c.b16 %v6999, %v6998
        %v7052 = vpack.c.b16 %v7001, %v7000
        %v7053 = vpack.c.b16 %v7003, %v7002
        %v7054 = vpack.c.b16 %v7005, %v7004
        %v7055 = vpack.c.b16 %v7007, %v7006
        %v7056 = vpack.c.b16 %v7009, %v7008
        %v7057 = vpack.c.b16 %v7011, %v7010
        %v7058 = vpack.c.b16 %v7013, %v7012
        %v7059 = vpack.c.b16 %v7015, %v7014
        %v7060 = vpack.c.b16 %v7017, %v7016
        %v7061 = vpack.c.b16 %v7019, %v7018
        %v7062 = vpack.c.b16 %v7021, %v7020
        %v7063 = vpack.c.b16 %v7023, %v7022
        %v7064 = vpack.c.b16 %v7025, %v7024
        %v7065 = vpack.c.b16 %v7027, %v7026
        %v7066 = vpack.c.b16 %v7029, %v7028
        %v7067 = vpack.c.b16 %v7031, %v7030
        %v7105 = vsel %vm5175, %v5589, 0
        %v7108 = vsel %vm5175, %v5666, 0
        %v7111 = vsel %vm5175, %v5743, 0
        %v7114 = vsel %vm5175, %v5820, 0
        %v7117 = vsel %vm5175, %v5897, 0
        %v7120 = vsel %vm5175, %v5974, 0
        %v7123 = vsel %vm5175, %v6051, 0
        %v7126 = vsel %vm5175, %v6128, 0
        %v7129 = vsel %vm5175, %v6205, 0
        %v7132 = vsel %vm5175, %v6282, 0
        %v7135 = vsel %vm5175, %v6359, 0
        %v7138 = vsel %vm5175, %v6436, 0
        %v7141 = vsel %vm5175, %v6513, 0
        %v7144 = vsel %vm5175, %v6590, 0
        %v7147 = vsel %vm5175, %v6667, 0
        %v7150 = vsel %vm5175, %v6744, 0
        %7152 = vmatprep.subr.bf16.mxu0 0
        %7153 = vmatpush1.bf16.msra.mxu0 %v7032
        %7154 = vmatprep.subr.bf16.mxu0 0
        %7155 = vmatpush1.bf16.msra.mxu0 %v7033
        %7156 = vmatprep.subr.bf16.mxu0 0
        %7157 = vmatpush1.bf16.msra.mxu0 %v7034
        %7158 = vmatprep.subr.bf16.mxu0 0
        %7159 = vmatpush1.bf16.msra.mxu0 %v7035
        %7160 = vmatprep.subr.bf16.mxu0 0
        %7161 = vmatpush1.bf16.msra.mxu0 %v7036
        %7162 = vmatprep.subr.bf16.mxu0 0
        %7163 = vmatpush1.bf16.msra.mxu0 %v7037
        %7164 = vmatprep.subr.bf16.mxu0 0
        %7165 = vmatpush1.bf16.msra.mxu0 %v7038
        %7166 = vmatprep.subr.bf16.mxu0 0
        %7167 = vmatpush1.bf16.msra.mxu0 %v7039
        %7168 = vmatprep.subr.bf16.mxu0 0
        %7169 = vmatpush1.bf16.msra.mxu0 %v7040
        %7170 = vmatprep.subr.bf16.mxu0 0
        %7171 = vmatpush1.bf16.msra.mxu0 %v7041
        %7172 = vmatprep.subr.bf16.mxu0 0
        %7173 = vmatpush1.bf16.msra.mxu0 %v7042
        %7174 = vmatprep.subr.bf16.mxu0 0
        %7175 = vmatpush1.bf16.msra.mxu0 %v7043
        %7176 = vmatprep.subr.bf16.mxu0 0
        %7177 = vmatpush1.bf16.msra.mxu0 %v7044
        %7178 = vmatprep.subr.bf16.mxu0 0
        %7179 = vmatpush1.bf16.msra.mxu0 %v7045
        %7180 = vmatprep.subr.bf16.mxu0 0
        %7181 = vmatpush1.bf16.msra.mxu0 %v7046
        %7182 = vmatprep.subr.bf16.mxu0 0
        %7183 = vmatpush1.bf16.msra.mxu0 %v7047
        %7184 = vmatprep.mubr.bf16.mxu0 %v5542
        %7185 = vmatmul.mubr.bf16.gmra.mrb[0].mxu0 %v5527
        %v7186 = vpop.f32.mrb[0].mxu0
        %v7187 = vadd.f32 %v6886, %v7186
        %v7188 = vpop.f32.mrb[0].mxu0
        %v7189 = vpop.f32.mrb[0].mxu0
        %v7190 = vadd.f32 %v6886, %v7189
        %v7191 = vpop.f32.mrb[0].mxu0
        %7192 = vmatprep.mubr.bf16.mxu0 %v5619
        %7193 = vmatmul.mubr.bf16.gmra.mrb[0].mxu0 %v5604
        %v7194 = vpop.f32.mrb[0].mxu0
        %v7195 = vadd.f32 %v6886, %v7194
        %v7196 = vpop.f32.mrb[0].mxu0
        %v7197 = vpop.f32.mrb[0].mxu0
        %v7198 = vadd.f32 %v6886, %v7197
        %v7199 = vpop.f32.mrb[0].mxu0
        %7200 = vmatprep.mubr.bf16.mxu0 %v5696
        %7201 = vmatmul.mubr.bf16.gmra.mrb[0].mxu0 %v5681
        %v7202 = vpop.f32.mrb[0].mxu0
        %v7203 = vadd.f32 %v6886, %v7202
        %v7204 = vpop.f32.mrb[0].mxu0
        %v7205 = vpop.f32.mrb[0].mxu0
        %v7206 = vadd.f32 %v6886, %v7205
        %v7207 = vpop.f32.mrb[0].mxu0
        %7208 = vmatprep.mubr.bf16.mxu0 %v5773
        %7209 = vmatmul.mubr.bf16.gmra.mrb[0].mxu0 %v5758
        %v7210 = vpop.f32.mrb[0].mxu0
        %v7211 = vadd.f32 %v6886, %v7210
        %v7212 = vpop.f32.mrb[0].mxu0
        %v7213 = vpop.f32.mrb[0].mxu0
        %v7214 = vadd.f32 %v6886, %v7213
        %v7215 = vpop.f32.mrb[0].mxu0
        %7216 = vmatprep.mubr.bf16.mxu0 %v5850
        %7217 = vmatmul.mubr.bf16.gmra.mrb[0].mxu0 %v5835
        %v7218 = vpop.f32.mrb[0].mxu0
        %v7219 = vadd.f32 %v6886, %v7218
        %v7220 = vpop.f32.mrb[0].mxu0
        %v7221 = vpop.f32.mrb[0].mxu0
        %v7222 = vadd.f32 %v6886, %v7221
        %v7223 = vpop.f32.mrb[0].mxu0
        %7224 = vmatprep.mubr.bf16.mxu0 %v5927
        %7225 = vmatmul.mubr.bf16.gmra.mrb[0].mxu0 %v5912
        %v7226 = vpop.f32.mrb[0].mxu0
        %v7227 = vadd.f32 %v6886, %v7226
        %v7228 = vpop.f32.mrb[0].mxu0
        %v7229 = vpop.f32.mrb[0].mxu0
        %v7230 = vadd.f32 %v6886, %v7229
        %v7231 = vpop.f32.mrb[0].mxu0
        %7232 = vmatprep.mubr.bf16.mxu0 %v6004
        %7233 = vmatmul.mubr.bf16.gmra.mrb[0].mxu0 %v5989
        %v7234 = vpop.f32.mrb[0].mxu0
        %v7235 = vadd.f32 %v6886, %v7234
        %v7236 = vpop.f32.mrb[0].mxu0
        %v7237 = vpop.f32.mrb[0].mxu0
        %v7238 = vadd.f32 %v6886, %v7237
        %v7239 = vpop.f32.mrb[0].mxu0
        %7240 = vmatprep.mubr.bf16.mxu0 %v6081
        %7241 = vmatmul.mubr.bf16.gmra.mrb[0].mxu0 %v6066
        %v7242 = vpop.f32.mrb[0].mxu0
        %v7243 = vadd.f32 %v6886, %v7242
        %v7244 = vpop.f32.mrb[0].mxu0
        %v7245 = vpop.f32.mrb[0].mxu0
        %v7246 = vadd.f32 %v6886, %v7245
        %v7247 = vpop.f32.mrb[0].mxu0
        %7248 = vmatprep.mubr.bf16.mxu0 %v6158
        %7249 = vmatmul.mubr.bf16.gmra.mrb[0].mxu0 %v6143
        %v7250 = vpop.f32.mrb[0].mxu0
        %v7251 = vadd.f32 %v6886, %v7250
        %v7252 = vpop.f32.mrb[0].mxu0
        %v7253 = vpop.f32.mrb[0].mxu0
        %v7254 = vadd.f32 %v6886, %v7253
        %v7255 = vpop.f32.mrb[0].mxu0
        %7256 = vmatprep.mubr.bf16.mxu0 %v6235
        %7257 = vmatmul.mubr.bf16.gmra.mrb[0].mxu0 %v6220
        %v7258 = vpop.f32.mrb[0].mxu0
        %v7259 = vadd.f32 %v6886, %v7258
        %v7260 = vpop.f32.mrb[0].mxu0
        %v7261 = vpop.f32.mrb[0].mxu0
        %v7262 = vadd.f32 %v6886, %v7261
        %v7263 = vpop.f32.mrb[0].mxu0
        %7264 = vmatprep.mubr.bf16.mxu0 %v6312
        %7265 = vmatmul.mubr.bf16.gmra.mrb[0].mxu0 %v6297
        %v7266 = vpop.f32.mrb[0].mxu0
        %v7267 = vadd.f32 %v6886, %v7266
        %v7268 = vpop.f32.mrb[0].mxu0
        %v7269 = vpop.f32.mrb[0].mxu0
        %v7270 = vadd.f32 %v6886, %v7269
        %v7271 = vpop.f32.mrb[0].mxu0
        %7272 = vmatprep.mubr.bf16.mxu0 %v6389
        %7273 = vmatmul.mubr.bf16.gmra.mrb[0].mxu0 %v6374
        %v7274 = vpop.f32.mrb[0].mxu0
        %v7275 = vadd.f32 %v6886, %v7274
        %v7276 = vpop.f32.mrb[0].mxu0
        %v7277 = vpop.f32.mrb[0].mxu0
        %v7278 = vadd.f32 %v6886, %v7277
        %v7279 = vpop.f32.mrb[0].mxu0
        %7280 = vmatprep.mubr.bf16.mxu0 %v6466
        %7281 = vmatmul.mubr.bf16.gmra.mrb[0].mxu0 %v6451
        %v7282 = vpop.f32.mrb[0].mxu0
        %v7283 = vadd.f32 %v6886, %v7282
        %v7284 = vpop.f32.mrb[0].mxu0
        %v7285 = vpop.f32.mrb[0].mxu0
        %v7286 = vadd.f32 %v6886, %v7285
        %v7287 = vpop.f32.mrb[0].mxu0
        %7288 = vmatprep.mubr.bf16.mxu0 %v6543
        %7289 = vmatmul.mubr.bf16.gmra.mrb[0].mxu0 %v6528
        %v7290 = vpop.f32.mrb[0].mxu0
        %v7291 = vadd.f32 %v6886, %v7290
        %v7292 = vpop.f32.mrb[0].mxu0
        %v7293 = vpop.f32.mrb[0].mxu0
        %v7294 = vadd.f32 %v6886, %v7293
        %v7295 = vpop.f32.mrb[0].mxu0
        %7296 = vmatprep.mubr.bf16.mxu0 %v6620
        %7297 = vmatmul.mubr.bf16.gmra.mrb[0].mxu0 %v6605
        %v7298 = vpop.f32.mrb[0].mxu0
        %v7299 = vadd.f32 %v6886, %v7298
        %v7300 = vpop.f32.mrb[0].mxu0
        %v7301 = vpop.f32.mrb[0].mxu0
        %v7302 = vadd.f32 %v6886, %v7301
        %v7303 = vpop.f32.mrb[0].mxu0
        %7304 = vmatprep.mubr.bf16.mxu0 %v6697
        %7305 = vmatmul.mubr.bf16.gmra.mrb[0].mxu0 %v6682
        %v7306 = vpop.f32.mrb[0].mxu0
        %v7307 = vadd.f32 %v6886, %v7306
        %v7308 = vpop.f32.mrb[0].mxu0
        %v7309 = vpop.f32.mrb[0].mxu0
        %v7310 = vadd.f32 %v6886, %v7309
        %v7311 = vpop.f32.mrb[0].mxu0
        %7312 = vdwg.mxu0
        %7313 = vmatprep.subr.bf16.mxu0 0
        %7314 = vmatpush1.bf16.msra.mxu0 %v7048
        %7315 = vmatprep.subr.bf16.mxu0 0
        %7316 = vmatpush1.bf16.msra.mxu0 %v7049
        %7317 = vmatprep.subr.bf16.mxu0 0
        %7318 = vmatpush1.bf16.msra.mxu0 %v7050
        %7319 = vmatprep.subr.bf16.mxu0 0
        %7320 = vmatpush1.bf16.msra.mxu0 %v7051
        %7321 = vmatprep.subr.bf16.mxu0 0
        %7322 = vmatpush1.bf16.msra.mxu0 %v7052
        %7323 = vmatprep.subr.bf16.mxu0 0
        %7324 = vmatpush1.bf16.msra.mxu0 %v7053
        %7325 = vmatprep.subr.bf16.mxu0 0
        %7326 = vmatpush1.bf16.msra.mxu0 %v7054
        %7327 = vmatprep.subr.bf16.mxu0 0
        %7328 = vmatpush1.bf16.msra.mxu0 %v7055
        %7329 = vmatprep.subr.bf16.mxu0 0
        %7330 = vmatpush1.bf16.msra.mxu0 %v7056
        %7331 = vmatprep.subr.bf16.mxu0 0
        %7332 = vmatpush1.bf16.msra.mxu0 %v7057
        %7333 = vmatprep.subr.bf16.mxu0 0
        %7334 = vmatpush1.bf16.msra.mxu0 %v7058
        %7335 = vmatprep.subr.bf16.mxu0 0
        %7336 = vmatpush1.bf16.msra.mxu0 %v7059
        %7337 = vmatprep.subr.bf16.mxu0 0
        %7338 = vmatpush1.bf16.msra.mxu0 %v7060
        %7339 = vmatprep.subr.bf16.mxu0 0
        %7340 = vmatpush1.bf16.msra.mxu0 %v7061
        %7341 = vmatprep.subr.bf16.mxu0 0
        %7342 = vmatpush1.bf16.msra.mxu0 %v7062
        %7343 = vmatprep.subr.bf16.mxu0 0
        %7344 = vmatpush1.bf16.msra.mxu0 %v7063
        %7345 = vmatprep.mubr.bf16.mxu0 %v5572
        %7346 = vmatmul.mubr.bf16.gmra.mrb[0].mxu0 %v5557
        %v7347 = vpop.f32.mrb[0].mxu0
        %v7348 = vadd.f32 %v7187, %v7347
        %v7349 = vpop.f32.mrb[0].mxu0
        %v7350 = vpop.f32.mrb[0].mxu0
        %v7351 = vadd.f32 %v7190, %v7350
        %v7352 = vpop.f32.mrb[0].mxu0
        %7353 = vmatprep.mubr.bf16.mxu0 %v5649
        %7354 = vmatmul.mubr.bf16.gmra.mrb[0].mxu0 %v5634
        %v7355 = vpop.f32.mrb[0].mxu0
        %v7356 = vadd.f32 %v7195, %v7355
        %v7357 = vpop.f32.mrb[0].mxu0
        %v7358 = vpop.f32.mrb[0].mxu0
        %v7359 = vadd.f32 %v7198, %v7358
        %v7360 = vpop.f32.mrb[0].mxu0
        %7361 = vmatprep.mubr.bf16.mxu0 %v5726
        %7362 = vmatmul.mubr.bf16.gmra.mrb[0].mxu0 %v5711
        %v7363 = vpop.f32.mrb[0].mxu0
        %v7364 = vadd.f32 %v7203, %v7363
        %v7365 = vpop.f32.mrb[0].mxu0
        %v7366 = vpop.f32.mrb[0].mxu0
        %v7367 = vadd.f32 %v7206, %v7366
        %v7368 = vpop.f32.mrb[0].mxu0
        %7369 = vmatprep.mubr.bf16.mxu0 %v5803
        %7370 = vmatmul.mubr.bf16.gmra.mrb[0].mxu0 %v5788
        %v7371 = vpop.f32.mrb[0].mxu0
        %v7372 = vadd.f32 %v7211, %v7371
        %v7373 = vpop.f32.mrb[0].mxu0
        %v7374 = vpop.f32.mrb[0].mxu0
        %v7375 = vadd.f32 %v7214, %v7374
        %v7376 = vpop.f32.mrb[0].mxu0
        %7377 = vmatprep.mubr.bf16.mxu0 %v5880
        %7378 = vmatmul.mubr.bf16.gmra.mrb[0].mxu0 %v5865
        %v7379 = vpop.f32.mrb[0].mxu0
        %v7380 = vadd.f32 %v7219, %v7379
        %v7381 = vpop.f32.mrb[0].mxu0
        %v7382 = vpop.f32.mrb[0].mxu0
        %v7383 = vadd.f32 %v7222, %v7382
        %v7384 = vpop.f32.mrb[0].mxu0
        %7385 = vmatprep.mubr.bf16.mxu0 %v5957
        %7386 = vmatmul.mubr.bf16.gmra.mrb[0].mxu0 %v5942
        %v7387 = vpop.f32.mrb[0].mxu0
        %v7388 = vadd.f32 %v7227, %v7387
        %v7389 = vpop.f32.mrb[0].mxu0
        %v7390 = vpop.f32.mrb[0].mxu0
        %v7391 = vadd.f32 %v7230, %v7390
        %v7392 = vpop.f32.mrb[0].mxu0
        %7393 = vmatprep.mubr.bf16.mxu0 %v6034
        %7394 = vmatmul.mubr.bf16.gmra.mrb[0].mxu0 %v6019
        %v7395 = vpop.f32.mrb[0].mxu0
        %v7396 = vadd.f32 %v7235, %v7395
        %v7397 = vpop.f32.mrb[0].mxu0
        %v7398 = vpop.f32.mrb[0].mxu0
        %v7399 = vadd.f32 %v7238, %v7398
        %v7400 = vpop.f32.mrb[0].mxu0
        %7401 = vmatprep.mubr.bf16.mxu0 %v6111
        %7402 = vmatmul.mubr.bf16.gmra.mrb[0].mxu0 %v6096
        %v7403 = vpop.f32.mrb[0].mxu0
        %v7404 = vadd.f32 %v7243, %v7403
        %v7405 = vpop.f32.mrb[0].mxu0
        %v7406 = vpop.f32.mrb[0].mxu0
        %v7407 = vadd.f32 %v7246, %v7406
        %v7408 = vpop.f32.mrb[0].mxu0
        %7409 = vmatprep.mubr.bf16.mxu0 %v6188
        %7410 = vmatmul.mubr.bf16.gmra.mrb[0].mxu0 %v6173
        %v7411 = vpop.f32.mrb[0].mxu0
        %v7412 = vadd.f32 %v7251, %v7411
        %v7413 = vpop.f32.mrb[0].mxu0
        %v7414 = vpop.f32.mrb[0].mxu0
        %v7415 = vadd.f32 %v7254, %v7414
        %v7416 = vpop.f32.mrb[0].mxu0
        %7417 = vmatprep.mubr.bf16.mxu0 %v6265
        %7418 = vmatmul.mubr.bf16.gmra.mrb[0].mxu0 %v6250
        %v7419 = vpop.f32.mrb[0].mxu0
        %v7420 = vadd.f32 %v7259, %v7419
        %v7421 = vpop.f32.mrb[0].mxu0
        %v7422 = vpop.f32.mrb[0].mxu0
        %v7423 = vadd.f32 %v7262, %v7422
        %v7424 = vpop.f32.mrb[0].mxu0
        %7425 = vmatprep.mubr.bf16.mxu0 %v6342
        %7426 = vmatmul.mubr.bf16.gmra.mrb[0].mxu0 %v6327
        %v7427 = vpop.f32.mrb[0].mxu0
        %v7428 = vadd.f32 %v7267, %v7427
        %v7429 = vpop.f32.mrb[0].mxu0
        %v7430 = vpop.f32.mrb[0].mxu0
        %v7431 = vadd.f32 %v7270, %v7430
        %v7432 = vpop.f32.mrb[0].mxu0
        %7433 = vmatprep.mubr.bf16.mxu0 %v6419
        %7434 = vmatmul.mubr.bf16.gmra.mrb[0].mxu0 %v6404
        %v7435 = vpop.f32.mrb[0].mxu0
        %v7436 = vadd.f32 %v7275, %v7435
        %v7437 = vpop.f32.mrb[0].mxu0
        %v7438 = vpop.f32.mrb[0].mxu0
        %v7439 = vadd.f32 %v7278, %v7438
        %v7440 = vpop.f32.mrb[0].mxu0
        %7441 = vmatprep.mubr.bf16.mxu0 %v6496
        %7442 = vmatmul.mubr.bf16.gmra.mrb[0].mxu0 %v6481
        %v7443 = vpop.f32.mrb[0].mxu0
        %v7444 = vadd.f32 %v7283, %v7443
        %v7445 = vpop.f32.mrb[0].mxu0
        %v7446 = vpop.f32.mrb[0].mxu0
        %v7447 = vadd.f32 %v7286, %v7446
        %v7448 = vpop.f32.mrb[0].mxu0
        %7449 = vmatprep.mubr.bf16.mxu0 %v6573
        %7450 = vmatmul.mubr.bf16.gmra.mrb[0].mxu0 %v6558
        %v7451 = vpop.f32.mrb[0].mxu0
        %v7452 = vadd.f32 %v7291, %v7451
        %v7453 = vpop.f32.mrb[0].mxu0
        %v7454 = vpop.f32.mrb[0].mxu0
        %v7455 = vadd.f32 %v7294, %v7454
        %v7456 = vpop.f32.mrb[0].mxu0
        %7457 = vmatprep.mubr.bf16.mxu0 %v6650
        %7458 = vmatmul.mubr.bf16.gmra.mrb[0].mxu0 %v6635
        %v7459 = vpop.f32.mrb[0].mxu0
        %v7460 = vadd.f32 %v7299, %v7459
        %v7461 = vpop.f32.mrb[0].mxu0
        %v7462 = vpop.f32.mrb[0].mxu0
        %v7463 = vadd.f32 %v7302, %v7462
        %v7464 = vpop.f32.mrb[0].mxu0
        %7465 = vmatprep.mubr.bf16.mxu0 %v6727
        %7466 = vmatmul.mubr.bf16.gmra.mrb[0].mxu0 %v6712
        %v7467 = vpop.f32.mrb[0].mxu0
        %v7468 = vadd.f32 %v7307, %v7467
        %v7469 = vpop.f32.mrb[0].mxu0
        %v7470 = vpop.f32.mrb[0].mxu0
        %v7471 = vadd.f32 %v7310, %v7470
        %v7472 = vpop.f32.mrb[0].mxu0
        %7473 = vdwg.mxu0
        %7474 = vmatprep.subr.bf16.mxu0 0
        %7475 = vmatpush1.bf16.msra.mxu0 %v7064
        %7476 = vmatprep.subr.bf16.mxu0 0
        %7477 = vmatpush1.bf16.msra.mxu0 %v7065
        %7478 = vmatprep.subr.bf16.mxu0 0
        %7479 = vmatpush1.bf16.msra.mxu0 %v7066
        %7480 = vmatprep.subr.bf16.mxu0 0
        %7481 = vmatpush1.bf16.msra.mxu0 %v7067
        %7482 = vmatprep.subr.bf16.mxu0 0
        %7483 = vmatpush1.bf16.msra.mxu0 0
        %7484 = vmatprep.subr.bf16.mxu0 0
        %7485 = vmatpush1.bf16.msra.mxu0 0
        %7486 = vmatprep.subr.bf16.mxu0 0
        %7487 = vmatpush1.bf16.msra.mxu0 0
        %7488 = vmatprep.subr.bf16.mxu0 0
        %7489 = vmatpush1.bf16.msra.mxu0 0
        %7490 = vmatprep.subr.bf16.mxu0 0
        %7491 = vmatpush1.bf16.msra.mxu0 0
        %7492 = vmatprep.subr.bf16.mxu0 0
        %7493 = vmatpush1.bf16.msra.mxu0 0
        %7494 = vmatprep.subr.bf16.mxu0 0
        %7495 = vmatpush1.bf16.msra.mxu0 0
        %7496 = vmatprep.subr.bf16.mxu0 0
        %7497 = vmatpush1.bf16.msra.mxu0 0
        %7498 = vmatprep.subr.bf16.mxu0 0
        %7499 = vmatpush1.bf16.msra.mxu0 0
        %7500 = vmatprep.subr.bf16.mxu0 0
        %7501 = vmatpush1.bf16.msra.mxu0 0
        %7502 = vmatprep.subr.bf16.mxu0 0
        %7503 = vmatpush1.bf16.msra.mxu0 0
        %7504 = vmatprep.subr.bf16.mxu0 0
        %7505 = vmatpush1.bf16.msra.mxu0 0
        %7506 = vmatprep.mubr.bf16.mxu0 0
        %7507 = vmatmul.mubr.bf16.gmra.mrb[0].mxu0 %v7105
        %v7508 = vpop.f32.mrb[0].mxu0
        %v7509 = vadd.f32 %v7348, %v7508
        %v7510 = vpop.f32.mrb[0].mxu0
        %v7511 = vpop.f32.mrb[0].mxu0
        %v7512 = vadd.f32 %v7351, %v7511
        %v7513 = vpop.f32.mrb[0].mxu0
        %7514 = vmatprep.mubr.bf16.mxu0 0
        %7515 = vmatmul.mubr.bf16.gmra.mrb[0].mxu0 %v7108
        %v7516 = vpop.f32.mrb[0].mxu0
        %v7517 = vadd.f32 %v7356, %v7516
        %v7518 = vpop.f32.mrb[0].mxu0
        %v7519 = vpop.f32.mrb[0].mxu0
        %v7520 = vadd.f32 %v7359, %v7519
        %v7521 = vpop.f32.mrb[0].mxu0
        %7522 = vmatprep.mubr.bf16.mxu0 0
        %7523 = vmatmul.mubr.bf16.gmra.mrb[0].mxu0 %v7111
        %v7524 = vpop.f32.mrb[0].mxu0
        %v7525 = vadd.f32 %v7364, %v7524
        %v7526 = vpop.f32.mrb[0].mxu0
        %v7527 = vpop.f32.mrb[0].mxu0
        %v7528 = vadd.f32 %v7367, %v7527
        %v7529 = vpop.f32.mrb[0].mxu0
        %7530 = vmatprep.mubr.bf16.mxu0 0
        %7531 = vmatmul.mubr.bf16.gmra.mrb[0].mxu0 %v7114
        %v7532 = vpop.f32.mrb[0].mxu0
        %v7533 = vadd.f32 %v7372, %v7532
        %v7534 = vpop.f32.mrb[0].mxu0
        %v7535 = vpop.f32.mrb[0].mxu0
        %v7536 = vadd.f32 %v7375, %v7535
        %v7537 = vpop.f32.mrb[0].mxu0
        %7538 = vmatprep.mubr.bf16.mxu0 0
        %7539 = vmatmul.mubr.bf16.gmra.mrb[0].mxu0 %v7117
        %v7540 = vpop.f32.mrb[0].mxu0
        %v7541 = vadd.f32 %v7380, %v7540
        %v7542 = vpop.f32.mrb[0].mxu0
        %v7543 = vpop.f32.mrb[0].mxu0
        %v7544 = vadd.f32 %v7383, %v7543
        %v7545 = vpop.f32.mrb[0].mxu0
        %7546 = vmatprep.mubr.bf16.mxu0 0
        %7547 = vmatmul.mubr.bf16.gmra.mrb[0].mxu0 %v7120
        %v7548 = vpop.f32.mrb[0].mxu0
        %v7549 = vadd.f32 %v7388, %v7548
        %v7550 = vpop.f32.mrb[0].mxu0
        %v7551 = vpop.f32.mrb[0].mxu0
        %v7552 = vadd.f32 %v7391, %v7551
        %v7553 = vpop.f32.mrb[0].mxu0
        %7554 = vmatprep.mubr.bf16.mxu0 0
        %7555 = vmatmul.mubr.bf16.gmra.mrb[0].mxu0 %v7123
        %v7556 = vpop.f32.mrb[0].mxu0
        %v7557 = vadd.f32 %v7396, %v7556
        %v7558 = vpop.f32.mrb[0].mxu0
        %v7559 = vpop.f32.mrb[0].mxu0
        %v7560 = vadd.f32 %v7399, %v7559
        %v7561 = vpop.f32.mrb[0].mxu0
        %7562 = vmatprep.mubr.bf16.mxu0 0
        %7563 = vmatmul.mubr.bf16.gmra.mrb[0].mxu0 %v7126
        %v7564 = vpop.f32.mrb[0].mxu0
        %v7565 = vadd.f32 %v7404, %v7564
        %v7566 = vpop.f32.mrb[0].mxu0
        %v7567 = vpop.f32.mrb[0].mxu0
        %v7568 = vadd.f32 %v7407, %v7567
        %v7569 = vpop.f32.mrb[0].mxu0
        %7570 = vmatprep.mubr.bf16.mxu0 0
        %7571 = vmatmul.mubr.bf16.gmra.mrb[0].mxu0 %v7129
        %v7572 = vpop.f32.mrb[0].mxu0
        %v7573 = vadd.f32 %v7412, %v7572
        %v7574 = vpop.f32.mrb[0].mxu0
        %v7575 = vpop.f32.mrb[0].mxu0
        %v7576 = vadd.f32 %v7415, %v7575
        %v7577 = vpop.f32.mrb[0].mxu0
        %7578 = vmatprep.mubr.bf16.mxu0 0
        %7579 = vmatmul.mubr.bf16.gmra.mrb[0].mxu0 %v7132
        %v7580 = vpop.f32.mrb[0].mxu0
        %v7581 = vadd.f32 %v7420, %v7580
        %v7582 = vpop.f32.mrb[0].mxu0
        %v7583 = vpop.f32.mrb[0].mxu0
        %v7584 = vadd.f32 %v7423, %v7583
        %v7585 = vpop.f32.mrb[0].mxu0
        %7586 = vmatprep.mubr.bf16.mxu0 0
        %7587 = vmatmul.mubr.bf16.gmra.mrb[0].mxu0 %v7135
        %v7588 = vpop.f32.mrb[0].mxu0
        %v7589 = vadd.f32 %v7428, %v7588
        %v7590 = vpop.f32.mrb[0].mxu0
        %v7591 = vpop.f32.mrb[0].mxu0
        %v7592 = vadd.f32 %v7431, %v7591
        %v7593 = vpop.f32.mrb[0].mxu0
        %7594 = vmatprep.mubr.bf16.mxu0 0
        %7595 = vmatmul.mubr.bf16.gmra.mrb[0].mxu0 %v7138
        %v7596 = vpop.f32.mrb[0].mxu0
        %v7597 = vadd.f32 %v7436, %v7596
        %v7598 = vpop.f32.mrb[0].mxu0
        %v7599 = vpop.f32.mrb[0].mxu0
        %v7600 = vadd.f32 %v7439, %v7599
        %v7601 = vpop.f32.mrb[0].mxu0
        %7602 = vmatprep.mubr.bf16.mxu0 0
        %7603 = vmatmul.mubr.bf16.gmra.mrb[0].mxu0 %v7141
        %v7604 = vpop.f32.mrb[0].mxu0
        %v7605 = vadd.f32 %v7444, %v7604
        %v7606 = vpop.f32.mrb[0].mxu0
        %v7607 = vpop.f32.mrb[0].mxu0
        %v7608 = vadd.f32 %v7447, %v7607
        %v7609 = vpop.f32.mrb[0].mxu0
        %7610 = vmatprep.mubr.bf16.mxu0 0
        %7611 = vmatmul.mubr.bf16.gmra.mrb[0].mxu0 %v7144
        %v7612 = vpop.f32.mrb[0].mxu0
        %v7613 = vadd.f32 %v7452, %v7612
        %v7614 = vpop.f32.mrb[0].mxu0
        %v7615 = vpop.f32.mrb[0].mxu0
        %v7616 = vadd.f32 %v7455, %v7615
        %v7617 = vpop.f32.mrb[0].mxu0
        %7618 = vmatprep.mubr.bf16.mxu0 0
        %7619 = vmatmul.mubr.bf16.gmra.mrb[0].mxu0 %v7147
        %v7620 = vpop.f32.mrb[0].mxu0
        %v7621 = vadd.f32 %v7460, %v7620
        %v7622 = vpop.f32.mrb[0].mxu0
        %v7623 = vpop.f32.mrb[0].mxu0
        %v7624 = vadd.f32 %v7463, %v7623
        %v7625 = vpop.f32.mrb[0].mxu0
        %7626 = vmatprep.mubr.bf16.mxu0 0
        %7627 = vmatmul.mubr.bf16.gmra.mrb[0].mxu0 %v7150
        %v7628 = vpop.f32.mrb[0].mxu0
        %v7629 = vadd.f32 %v7468, %v7628
        %v7630 = vpop.f32.mrb[0].mxu0
        %v7631 = vpop.f32.mrb[0].mxu0
        %v7632 = vadd.f32 %v7471, %v7631
        %v7633 = vpop.f32.mrb[0].mxu0
        %7634 = vdwg.mxu0
        %v7635 = vsub.f32 0.0, %v7509
        %v7636 = vsub.f32 0.0, %v7512
        %v7637 = vsub.f32 0.0, %v7517
        %v7638 = vsub.f32 0.0, %v7520
        %v7639 = vsub.f32 0.0, %v7525
        %v7640 = vsub.f32 0.0, %v7528
        %v7641 = vsub.f32 0.0, %v7533
        %v7642 = vsub.f32 0.0, %v7536
        %v7643 = vsub.f32 0.0, %v7541
        %v7644 = vsub.f32 0.0, %v7544
        %v7645 = vsub.f32 0.0, %v7549
        %v7646 = vsub.f32 0.0, %v7552
        %v7647 = vsub.f32 0.0, %v7557
        %v7648 = vsub.f32 0.0, %v7560
        %v7649 = vsub.f32 0.0, %v7565
        %v7650 = vsub.f32 0.0, %v7568
        %v7651 = vsub.f32 0.0, %v7573
        %v7652 = vsub.f32 0.0, %v7576
        %v7653 = vsub.f32 0.0, %v7581
        %v7654 = vsub.f32 0.0, %v7584
        %v7655 = vsub.f32 0.0, %v7589
        %v7656 = vsub.f32 0.0, %v7592
        %v7657 = vsub.f32 0.0, %v7597
        %v7658 = vsub.f32 0.0, %v7600
        %v7659 = vsub.f32 0.0, %v7605
        %v7660 = vsub.f32 0.0, %v7608
        %v7661 = vsub.f32 0.0, %v7613
        %v7662 = vsub.f32 0.0, %v7616
        %v7663 = vsub.f32 0.0, %v7621
        %v7664 = vsub.f32 0.0, %v7624
        %v7665 = vsub.f32 0.0, %v7629
        %v7666 = vsub.f32 0.0, %v7632
        %v7667 = vmul.f32 %v7635, 1.442695
        %v7668 = vpow.pop %v7667
        %v7669 = vmul.f32 %v7636, 1.442695
        %v7670 = vpow.pop %v7669
        %v7671 = vmul.f32 %v7637, 1.442695
        %v7672 = vpow.pop %v7671
        %v7673 = vmul.f32 %v7638, 1.442695
        %v7674 = vpow.pop %v7673
        %v7675 = vmul.f32 %v7639, 1.442695
        %v7676 = vpow.pop %v7675
        %v7677 = vmul.f32 %v7640, 1.442695
        %v7678 = vpow.pop %v7677
        %v7679 = vmul.f32 %v7641, 1.442695
        %v7680 = vpow.pop %v7679
        %v7681 = vmul.f32 %v7642, 1.442695
        %v7682 = vpow.pop %v7681
        %v7683 = vmul.f32 %v7643, 1.442695
        %v7684 = vpow.pop %v7683
        %v7685 = vmul.f32 %v7644, 1.442695
        %v7686 = vpow.pop %v7685
        %v7687 = vmul.f32 %v7645, 1.442695
        %v7688 = vpow.pop %v7687
        %v7689 = vmul.f32 %v7646, 1.442695
        %v7690 = vpow.pop %v7689
        %v7691 = vmul.f32 %v7647, 1.442695
        %v7692 = vpow.pop %v7691
        %v7693 = vmul.f32 %v7648, 1.442695
        %v7694 = vpow.pop %v7693
        %v7695 = vmul.f32 %v7649, 1.442695
        %v7696 = vpow.pop %v7695
        %v7697 = vmul.f32 %v7650, 1.442695
        %v7698 = vpow.pop %v7697
        %v7699 = vmul.f32 %v7651, 1.442695
        %v7700 = vpow.pop %v7699
        %v7701 = vmul.f32 %v7652, 1.442695
        %v7702 = vpow.pop %v7701
        %v7703 = vmul.f32 %v7653, 1.442695
        %v7704 = vpow.pop %v7703
        %v7705 = vmul.f32 %v7654, 1.442695
        %v7706 = vpow.pop %v7705
        %v7707 = vmul.f32 %v7655, 1.442695
        %v7708 = vpow.pop %v7707
        %v7709 = vmul.f32 %v7656, 1.442695
        %v7710 = vpow.pop %v7709
        %v7711 = vmul.f32 %v7657, 1.442695
        %v7712 = vpow.pop %v7711
        %v7713 = vmul.f32 %v7658, 1.442695
        %v7714 = vpow.pop %v7713
        %v7715 = vmul.f32 %v7659, 1.442695
        %v7716 = vpow.pop %v7715
        %v7717 = vmul.f32 %v7660, 1.442695
        %v7718 = vpow.pop %v7717
        %v7719 = vmul.f32 %v7661, 1.442695
        %v7720 = vpow.pop %v7719
        %v7721 = vmul.f32 %v7662, 1.442695
        %v7722 = vpow.pop %v7721
        %v7723 = vmul.f32 %v7663, 1.442695
        %v7724 = vpow.pop %v7723
        %v7725 = vmul.f32 %v7664, 1.442695
        %v7726 = vpow.pop %v7725
        %v7727 = vmul.f32 %v7665, 1.442695
        %v7728 = vpow.pop %v7727
        %v7729 = vmul.f32 %v7666, 1.442695
        %v7730 = vpow.pop %v7729
        %v7731 = vadd.f32 %v7668, 1.0
        %v7732 = vadd.f32 %v7670, 1.0
        %v7733 = vadd.f32 %v7672, 1.0
        %v7734 = vadd.f32 %v7674, 1.0
        %v7735 = vadd.f32 %v7676, 1.0
        %v7736 = vadd.f32 %v7678, 1.0
        %v7737 = vadd.f32 %v7680, 1.0
        %v7738 = vadd.f32 %v7682, 1.0
        %v7739 = vadd.f32 %v7684, 1.0
        %v7740 = vadd.f32 %v7686, 1.0
        %v7741 = vadd.f32 %v7688, 1.0
        %v7742 = vadd.f32 %v7690, 1.0
        %v7743 = vadd.f32 %v7692, 1.0
        %v7744 = vadd.f32 %v7694, 1.0
        %v7745 = vadd.f32 %v7696, 1.0
        %v7746 = vadd.f32 %v7698, 1.0
        %v7747 = vadd.f32 %v7700, 1.0
        %v7748 = vadd.f32 %v7702, 1.0
        %v7749 = vadd.f32 %v7704, 1.0
        %v7750 = vadd.f32 %v7706, 1.0
        %v7751 = vadd.f32 %v7708, 1.0
        %v7752 = vadd.f32 %v7710, 1.0
        %v7753 = vadd.f32 %v7712, 1.0
        %v7754 = vadd.f32 %v7714, 1.0
        %v7755 = vadd.f32 %v7716, 1.0
        %v7756 = vadd.f32 %v7718, 1.0
        %v7757 = vadd.f32 %v7720, 1.0
        %v7758 = vadd.f32 %v7722, 1.0
        %v7759 = vadd.f32 %v7724, 1.0
        %v7760 = vadd.f32 %v7726, 1.0
        %v7761 = vadd.f32 %v7728, 1.0
        %v7762 = vadd.f32 %v7730, 1.0
        %v7763 = vrcp.pop %v7731
        %v7764 = vrcp.pop %v7732
        %v7765 = vrcp.pop %v7733
        %v7766 = vrcp.pop %v7734
        %v7767 = vrcp.pop %v7735
        %v7768 = vrcp.pop %v7736
        %v7769 = vrcp.pop %v7737
        %v7770 = vrcp.pop %v7738
        %v7771 = vrcp.pop %v7739
        %v7772 = vrcp.pop %v7740
        %v7773 = vrcp.pop %v7741
        %v7774 = vrcp.pop %v7742
        %v7775 = vrcp.pop %v7743
        %v7776 = vrcp.pop %v7744
        %v7777 = vrcp.pop %v7745
        %v7778 = vrcp.pop %v7746
        %v7779 = vrcp.pop %v7747
        %v7780 = vrcp.pop %v7748
        %v7781 = vrcp.pop %v7749
        %v7782 = vrcp.pop %v7750
        %v7783 = vrcp.pop %v7751
        %v7784 = vrcp.pop %v7752
        %v7785 = vrcp.pop %v7753
        %v7786 = vrcp.pop %v7754
        %v7787 = vrcp.pop %v7755
        %v7788 = vrcp.pop %v7756
        %v7789 = vrcp.pop %v7757
        %v7790 = vrcp.pop %v7758
        %v7791 = vrcp.pop %v7759
        %v7792 = vrcp.pop %v7760
        %v7793 = vrcp.pop %v7761
        %v7794 = vrcp.pop %v7762
        %v7795 = vmul.f32 %v7509, %v7763
        %v7796 = vmul.f32 %v7512, %v7764
        %v7797 = vmul.f32 %v7517, %v7765
        %v7798 = vmul.f32 %v7520, %v7766
        %v7799 = vmul.f32 %v7525, %v7767
        %v7800 = vmul.f32 %v7528, %v7768
        %v7801 = vmul.f32 %v7533, %v7769
        %v7802 = vmul.f32 %v7536, %v7770
        %v7803 = vmul.f32 %v7541, %v7771
        %v7804 = vmul.f32 %v7544, %v7772
        %v7805 = vmul.f32 %v7549, %v7773
        %v7806 = vmul.f32 %v7552, %v7774
        %v7807 = vmul.f32 %v7557, %v7775
        %v7808 = vmul.f32 %v7560, %v7776
        %v7809 = vmul.f32 %v7565, %v7777
        %v7810 = vmul.f32 %v7568, %v7778
        %v7811 = vmul.f32 %v7573, %v7779
        %v7812 = vmul.f32 %v7576, %v7780
        %v7813 = vmul.f32 %v7581, %v7781
        %v7814 = vmul.f32 %v7584, %v7782
        %v7815 = vmul.f32 %v7589, %v7783
        %v7816 = vmul.f32 %v7592, %v7784
        %v7817 = vmul.f32 %v7597, %v7785
        %v7818 = vmul.f32 %v7600, %v7786
        %v7819 = vmul.f32 %v7605, %v7787
        %v7820 = vmul.f32 %v7608, %v7788
        %v7821 = vmul.f32 %v7613, %v7789
        %v7822 = vmul.f32 %v7616, %v7790
        %v7823 = vmul.f32 %v7621, %v7791
        %v7824 = vmul.f32 %v7624, %v7792
        %v7825 = vmul.f32 %v7629, %v7793
        %v7826 = vmul.f32 %v7632, %v7794
        %v7827 = vld [vmem:[%s288] sm:$0xf]
        %v7828 = vld [vmem:[%s288 + $0x4] sm:$0xf]
        %v7829 = vld [vmem:[%s288 + $0x8] sm:$0x1]
        %v7830 = vld [vmem:[%s288 + $0xc] sm:$0xf]
        %v7831 = vld [vmem:[%s288 + $0x10] sm:$0xf]
        %v7832 = vld [vmem:[%s288 + $0x14] sm:$0x1]
        %v7833 = vld [vmem:[%s288 + $0x18] sm:$0xf]
        %v7834 = vld [vmem:[%s288 + $0x1c] sm:$0xf]
        %v7835 = vld [vmem:[%s288 + $0x20] sm:$0x1]
        %v7836 = vld [vmem:[%s288 + $0x24] sm:$0xf]
        %v7837 = vld [vmem:[%s288 + $0x28] sm:$0xf]
        %v7838 = vld [vmem:[%s288 + $0x2c] sm:$0x1]
        %v7839 = vld [vmem:[%s288 + $0x30] sm:$0xf]
        %v7840 = vld [vmem:[%s288 + $0x34] sm:$0xf]
        %v7841 = vld [vmem:[%s288 + $0x38] sm:$0x1]
        %v7842 = vld [vmem:[%s288 + $0x3c] sm:$0xf]
        %v7843 = vld [vmem:[%s288 + $0x40] sm:$0xf]
        %v7844 = vld [vmem:[%s288 + $0x44] sm:$0x1]
        %v7845 = vld [vmem:[%s288 + $0x48] sm:$0xf]
        %v7846 = vld [vmem:[%s288 + $0x4c] sm:$0xf]
        %v7847 = vld [vmem:[%s288 + $0x50] sm:$0x1]
        %v7848 = vld [vmem:[%s288 + $0x54] sm:$0xf]
        %v7849 = vld [vmem:[%s288 + $0x58] sm:$0xf]
        %v7850 = vld [vmem:[%s288 + $0x5c] sm:$0x1]
        %v7851 = vld [vmem:[%s288 + $0x60] sm:$0xf]
        %v7852 = vld [vmem:[%s288 + $0x64] sm:$0xf]
        %v7853 = vld [vmem:[%s288 + $0x68] sm:$0x1]
        %v7854 = vld [vmem:[%s288 + $0x6c] sm:$0xf]
        %v7855 = vld [vmem:[%s288 + $0x70] sm:$0xf]
        %v7856 = vld [vmem:[%s288 + $0x74] sm:$0x1]
        %v7857 = vld [vmem:[%s288 + $0x78] sm:$0xf]
        %v7858 = vld [vmem:[%s288 + $0x7c] sm:$0xf]
        %v7859 = vld [vmem:[%s288 + $0x80] sm:$0x1]
        %v7860 = vld [vmem:[%s288 + $0x84] sm:$0xf]
        %v7861 = vld [vmem:[%s288 + $0x88] sm:$0xf]
        %v7862 = vld [vmem:[%s288 + $0x8c] sm:$0x1]
        %v7863 = vld [vmem:[%s288 + $0x90] sm:$0xf]
        %v7864 = vld [vmem:[%s288 + $0x94] sm:$0xf]
        %v7865 = vld [vmem:[%s288 + $0x98] sm:$0x1]
        %v7866 = vld [vmem:[%s288 + $0x9c] sm:$0xf]
        %v7867 = vld [vmem:[%s288 + $0xa0] sm:$0xf]
        %v7868 = vld [vmem:[%s288 + $0xa4] sm:$0x1]
        %v7869 = vld [vmem:[%s288 + $0xa8] sm:$0xf]
        %v7870 = vld [vmem:[%s288 + $0xac] sm:$0xf]
        %v7871 = vld [vmem:[%s288 + $0xb0] sm:$0x1]
        %v7872 = vld [vmem:[%s288 + $0xb4] sm:$0xf]
        %v7873 = vld [vmem:[%s288 + $0xb8] sm:$0xf]
        %v7874 = vld [vmem:[%s288 + $0xbc] sm:$0x1]
        %v7875 = vunpack.c.l.bf16 %v7827
        %v7876 = vunpack.c.l.bf16 %v7828
        %v7877 = vunpack.c.l.bf16 %v7829
        %v7878 = vunpack.c.l.bf16 %v7830
        %v7879 = vunpack.c.l.bf16 %v7831
        %v7880 = vunpack.c.l.bf16 %v7832
        %v7881 = vunpack.c.l.bf16 %v7833
        %v7882 = vunpack.c.l.bf16 %v7834
        %v7883 = vunpack.c.l.bf16 %v7835
        %v7884 = vunpack.c.l.bf16 %v7836
        %v7885 = vunpack.c.l.bf16 %v7837
        %v7886 = vunpack.c.l.bf16 %v7838
        %v7887 = vunpack.c.l.bf16 %v7839
        %v7888 = vunpack.c.l.bf16 %v7840
        %v7889 = vunpack.c.l.bf16 %v7841
        %v7890 = vunpack.c.l.bf16 %v7842
        %v7891 = vunpack.c.l.bf16 %v7843
        %v7892 = vunpack.c.l.bf16 %v7844
        %v7893 = vunpack.c.l.bf16 %v7845
        %v7894 = vunpack.c.l.bf16 %v7846
        %v7895 = vunpack.c.l.bf16 %v7847
        %v7896 = vunpack.c.l.bf16 %v7848
        %v7897 = vunpack.c.l.bf16 %v7849
        %v7898 = vunpack.c.l.bf16 %v7850
        %v7899 = vunpack.c.l.bf16 %v7851
        %v7900 = vunpack.c.l.bf16 %v7852
        %v7901 = vunpack.c.l.bf16 %v7853
        %v7902 = vunpack.c.l.bf16 %v7854
        %v7903 = vunpack.c.l.bf16 %v7855
        %v7904 = vunpack.c.l.bf16 %v7856
        %v7905 = vunpack.c.l.bf16 %v7857
        %v7906 = vunpack.c.l.bf16 %v7858
        %v7907 = vunpack.c.l.bf16 %v7859
        %v7908 = vunpack.c.l.bf16 %v7860
        %v7909 = vunpack.c.l.bf16 %v7861
        %v7910 = vunpack.c.l.bf16 %v7862
        %v7911 = vunpack.c.l.bf16 %v7863
        %v7912 = vunpack.c.l.bf16 %v7864
        %v7913 = vunpack.c.l.bf16 %v7865
        %v7914 = vunpack.c.l.bf16 %v7866
        %v7915 = vunpack.c.l.bf16 %v7867
        %v7916 = vunpack.c.l.bf16 %v7868
        %v7917 = vunpack.c.l.bf16 %v7869
        %v7918 = vunpack.c.l.bf16 %v7870
        %v7919 = vunpack.c.l.bf16 %v7871
        %v7920 = vunpack.c.l.bf16 %v7872
        %v7921 = vunpack.c.l.bf16 %v7873
        %v7922 = vunpack.c.l.bf16 %v7874
        %vm7971 = vcmask 1046528
        %v7972 = vrot.slane %v7875, 1
        %v7973 = vrot.slane %v7876, 1
        %v7974 = vsel %vm7971, %v7972, %v7973
        %v7975 = vrot.slane %v7877, 1
        %v7976 = vsel %vm7971, %v7973, %v7975
        %v7977 = vrot.slane %v7878, 1
        %v7978 = vrot.slane %v7879, 1
        %v7979 = vsel %vm7971, %v7977, %v7978
        %v7980 = vrot.slane %v7880, 1
        %v7981 = vsel %vm7971, %v7978, %v7980
        %v7982 = vrot.slane %v7881, 1
        %v7983 = vrot.slane %v7882, 1
        %v7984 = vsel %vm7971, %v7982, %v7983
        %v7985 = vrot.slane %v7883, 1
        %v7986 = vsel %vm7971, %v7983, %v7985
        %v7987 = vrot.slane %v7884, 1
        %v7988 = vrot.slane %v7885, 1
        %v7989 = vsel %vm7971, %v7987, %v7988
        %v7990 = vrot.slane %v7886, 1
        %v7991 = vsel %vm7971, %v7988, %v7990
        %v7992 = vrot.slane %v7887, 1
        %v7993 = vrot.slane %v7888, 1
        %v7994 = vsel %vm7971, %v7992, %v7993
        %v7995 = vrot.slane %v7889, 1
        %v7996 = vsel %vm7971, %v7993, %v7995
        %v7997 = vrot.slane %v7890, 1
        %v7998 = vrot.slane %v7891, 1
        %v7999 = vsel %vm7971, %v7997, %v7998
        %v8000 = vrot.slane %v7892, 1
        %v8001 = vsel %vm7971, %v7998, %v8000
        %v8002 = vrot.slane %v7893, 1
        %v8003 = vrot.slane %v7894, 1
        %v8004 = vsel %vm7971, %v8002, %v8003
        %v8005 = vrot.slane %v7895, 1
        %v8006 = vsel %vm7971, %v8003, %v8005
        %v8007 = vrot.slane %v7896, 1
        %v8008 = vrot.slane %v7897, 1
        %v8009 = vsel %vm7971, %v8007, %v8008
        %v8010 = vrot.slane %v7898, 1
        %v8011 = vsel %vm7971, %v8008, %v8010
        %v8012 = vrot.slane %v7899, 1
        %v8013 = vrot.slane %v7900, 1
        %v8014 = vsel %vm7971, %v8012, %v8013
        %v8015 = vrot.slane %v7901, 1
        %v8016 = vsel %vm7971, %v8013, %v8015
        %v8017 = vrot.slane %v7902, 1
        %v8018 = vrot.slane %v7903, 1
        %v8019 = vsel %vm7971, %v8017, %v8018
        %v8020 = vrot.slane %v7904, 1
        %v8021 = vsel %vm7971, %v8018, %v8020
        %v8022 = vrot.slane %v7905, 1
        %v8023 = vrot.slane %v7906, 1
        %v8024 = vsel %vm7971, %v8022, %v8023
        %v8025 = vrot.slane %v7907, 1
        %v8026 = vsel %vm7971, %v8023, %v8025
        %v8027 = vrot.slane %v7908, 1
        %v8028 = vrot.slane %v7909, 1
        %v8029 = vsel %vm7971, %v8027, %v8028
        %v8030 = vrot.slane %v7910, 1
        %v8031 = vsel %vm7971, %v8028, %v8030
        %v8032 = vrot.slane %v7911, 1
        %v8033 = vrot.slane %v7912, 1
        %v8034 = vsel %vm7971, %v8032, %v8033
        %v8035 = vrot.slane %v7913, 1
        %v8036 = vsel %vm7971, %v8033, %v8035
        %v8037 = vrot.slane %v7914, 1
        %v8038 = vrot.slane %v7915, 1
        %v8039 = vsel %vm7971, %v8037, %v8038
        %v8040 = vrot.slane %v7916, 1
        %v8041 = vsel %vm7971, %v8038, %v8040
        %v8042 = vrot.slane %v7917, 1
        %v8043 = vrot.slane %v7918, 1
        %v8044 = vsel %vm7971, %v8042, %v8043
        %v8045 = vrot.slane %v7919, 1
        %v8046 = vsel %vm7971, %v8043, %v8045
        %v8047 = vrot.slane %v7920, 1
        %v8048 = vrot.slane %v7921, 1
        %v8049 = vsel %vm7971, %v8047, %v8048
        %v8050 = vrot.slane %v7922, 1
        %v8051 = vsel %vm7971, %v8048, %v8050
        %v8084 = vadd.f32 %v7795, %v7974
        %v8085 = vadd.f32 %v7796, %v7976
        %v8086 = vadd.f32 %v7797, %v7979
        %v8087 = vadd.f32 %v7798, %v7981
        %v8088 = vadd.f32 %v7799, %v7984
        %v8089 = vadd.f32 %v7800, %v7986
        %v8090 = vadd.f32 %v7801, %v7989
        %v8091 = vadd.f32 %v7802, %v7991
        %v8092 = vadd.f32 %v7803, %v7994
        %v8093 = vadd.f32 %v7804, %v7996
        %v8094 = vadd.f32 %v7805, %v7999
        %v8095 = vadd.f32 %v7806, %v8001
        %v8096 = vadd.f32 %v7807, %v8004
        %v8097 = vadd.f32 %v7808, %v8006
        %v8098 = vadd.f32 %v7809, %v8009
        %v8099 = vadd.f32 %v7810, %v8011
        %v8100 = vadd.f32 %v7811, %v8014
        %v8101 = vadd.f32 %v7812, %v8016
        %v8102 = vadd.f32 %v7813, %v8019
        %v8103 = vadd.f32 %v7814, %v8021
        %v8104 = vadd.f32 %v7815, %v8024
        %v8105 = vadd.f32 %v7816, %v8026
        %v8106 = vadd.f32 %v7817, %v8029
        %v8107 = vadd.f32 %v7818, %v8031
        %v8108 = vadd.f32 %v7819, %v8034
        %v8109 = vadd.f32 %v7820, %v8036
        %v8110 = vadd.f32 %v7821, %v8039
        %v8111 = vadd.f32 %v7822, %v8041
        %v8112 = vadd.f32 %v7823, %v8044
        %v8113 = vadd.f32 %v7824, %v8046
        %v8114 = vadd.f32 %v7825, %v8049
        %v8115 = vadd.f32 %v7826, %v8051
        %8116 = vst [vmem:[%s217] sm:$0xff] %v8084
        %8117 = vst [vmem:[%s217 + $0x8] sm:$0xff] %v8085
        %8118 = vst [vmem:[%s217 + $0x10] sm:$0xff] %v8086
        %8119 = vst [vmem:[%s217 + $0x18] sm:$0xff] %v8087
        %8120 = vst [vmem:[%s217 + $0x20] sm:$0xff] %v8088
        %8121 = vst [vmem:[%s217 + $0x28] sm:$0xff] %v8089
        %8122 = vst [vmem:[%s217 + $0x30] sm:$0xff] %v8090
        %8123 = vst [vmem:[%s217 + $0x38] sm:$0xff] %v8091
        %8124 = vst [vmem:[%s217 + $0x40] sm:$0xff] %v8092
        %8125 = vst [vmem:[%s217 + $0x48] sm:$0xff] %v8093
        %8126 = vst [vmem:[%s217 + $0x50] sm:$0xff] %v8094
        %8127 = vst [vmem:[%s217 + $0x58] sm:$0xff] %v8095
        %8128 = vst [vmem:[%s217 + $0x60] sm:$0xff] %v8096
        %8129 = vst [vmem:[%s217 + $0x68] sm:$0xff] %v8097
        %8130 = vst [vmem:[%s217 + $0x70] sm:$0xff] %v8098
        %8131 = vst [vmem:[%s217 + $0x78] sm:$0xff] %v8099
        %8132 = vst [vmem:[%s217 + $0x80] sm:$0xff] %v8100
        %8133 = vst [vmem:[%s217 + $0x88] sm:$0xff] %v8101
        %8134 = vst [vmem:[%s217 + $0x90] sm:$0xff] %v8102
        %8135 = vst [vmem:[%s217 + $0x98] sm:$0xff] %v8103
        %8136 = vst [vmem:[%s217 + $0xa0] sm:$0xff] %v8104
        %8137 = vst [vmem:[%s217 + $0xa8] sm:$0xff] %v8105
        %8138 = vst [vmem:[%s217 + $0xb0] sm:$0xff] %v8106
        %8139 = vst [vmem:[%s217 + $0xb8] sm:$0xff] %v8107
        %8140 = vst [vmem:[%s217 + $0xc0] sm:$0xff] %v8108
        %8141 = vst [vmem:[%s217 + $0xc8] sm:$0xff] %v8109
        %8142 = vst [vmem:[%s217 + $0xd0] sm:$0xff] %v8110
        %8143 = vst [vmem:[%s217 + $0xd8] sm:$0xff] %v8111
        %8144 = vst [vmem:[%s217 + $0xe0] sm:$0xff] %v8112
        %8145 = vst [vmem:[%s217 + $0xe8] sm:$0xff] %v8113
        %8146 = vst [vmem:[%s217 + $0xf0] sm:$0xff] %v8114
        %8147 = vst [vmem:[%s217 + $0xf8] sm:$0xff] %v8115
        %s8148 = sand.u32 %s137, 1
        %s8149 = scalar_lea.sflag [#allocation4], %s8148
        %s8150 = sand.u32 %s137, 1
        %s8151 = smul.addr %s8150, 256
        %s8152 = scalar_lea.vmem [#allocation3], %s8151
        // Predicated region
        $region41: #{bottleneck_forward.1} parent=39 // pred_check
          %p8153 = pneg %p147
        $region42: #{bottleneck_forward.1} parent=39 // pred_check_branch
          %8155 = sbr.rel (%p8153) target = $region44
        $region43: #{bottleneck_forward.1} parent=39 // pred_region
          %s8157 = ssub.s32 4096, 4096
          %8158 = vsyncadd %s8149, %s8157
          %s8159 = smul.addr %s19, 32
          %s8160 = smul.addr %s8159, 128
          %s8161 = scalar_lea.hbm %s5, %s8160
          %s8162 = sshll.u32 %s8152, 4
          %s8163 = int_to_ptr.vmem [resolvable:$true] %s8162
          %8168 = dma.vmem_to_hbm [thread:$0]  %s8163, 4096, %s8161, %s8149, 128, 128, 8
        $region44: #{bottleneck_forward.1} parent=39 // pred_fallthru
          _
      $region40: #{bottleneck_forward.1} parent=5 // pred_fallthru
        _
      %p8169 = scmp.le.s32.totalorder 2, %s14
      // Predicated region
      $region45: #{bottleneck_forward.1} parent=5 // pred_check
        %p8170 = pneg %p8169
      $region46: #{bottleneck_forward.1} parent=5 // pred_check_branch
        %8172 = sbr.rel (%p8170) target = $region48
      $region47: #{bottleneck_forward.1} parent=5 // pred_region
        %s8173 = ssub.s32 %s14, 2
        // Predicated region
        $region49: #{bottleneck_forward.1} parent=47 // pred_check
          %p8174 = pneg %p153
        $region50: #{bottleneck_forward.1} parent=47 // pred_check_branch
          %8176 = sbr.rel (%p8174) target = $region52
        $region51: #{bottleneck_forward.1} parent=47 // pred_region
          %s8177 = sand.u32 %s138, 1
          %s8178 = scalar_lea.sflag [#allocation4], %s8177
          %s8179 = sand.u32 %s138, 1
          %s8180 = smul.addr %s8179, 256
          %s8181 = scalar_lea.vmem [#allocation3], %s8180
          %8182 = dma.done %s8178, 4096
        $region52: #{bottleneck_forward.1} parent=47 // pred_fallthru
          _
      $region48: #{bottleneck_forward.1} parent=5 // pred_fallthru
        _
    $region6: #{bottleneck_forward.1} parent=1 // loop_footer
      %s18 = sadd.s32 1, %s14
    $region7: #{bottleneck_forward.1} parent=1 // loop_footer_branch
      %13 = sbr.rel target = $region3
    $region8: #{bottleneck_forward.1} parent=1 // loop_exit
      _
    %8183 = vsyncpa [#allocation4], 1
    %s8184 = scalar_lea.sflag [#allocation4], 1
    %8185 = vsyncpa %s8184, 1

</llo_original>
